<compile_context>
chip_gen: v6e
topology: v6e:2x2x1
jax: 0.10.0
libtpu: 0.0.40
codegen_flags: <defaults>
</compile_context>

<pallas_src>
import functools

import jax
import jax.numpy as jnp
from jax import lax
from jax.experimental import pallas as pl
from jax.experimental.pallas import tpu as pltpu

LANE = 128
SUBLANE_PACK = 16  # bf16 packs 16 sublanes per vreg -> keep row counts %16==0


def _round_up(x, m):
    return (x + m - 1) // m * m


def _double_conv_kernel(x_ref, w1_ref, b1_ref, w2_ref, b2_ref, o_ref,
                        acc_ref, h1_ref, *, th, wp, img_h, img_w):
    """One (batch, row-tile) step.

    x_ref:  (1, Rtot, Cp_in)  bf16 zero-padded, spatially flattened input slab
    w1_ref: (9, Cp_in, Cp_out) bf16 conv1 taps      b1_ref: (1, Cp_out) f32
    w2_ref: (9, Cp_out, Cp_out) bf16 conv2 taps     b2_ref: (1, Cp_out) f32
    o_ref:  (1, th*wp, Cp_out) f32 output tile (interior rows only)
    acc_ref/h1_ref: ((th+2)*wp, Cp_out) f32 VMEM scratch
    """
    t = pl.program_id(1)

    win_rows = (th + 4) * wp    # input rows this tile needs (conv1+conv2 halo)
    h1_rows = (th + 2) * wp     # intermediate rows this tile needs (conv2 halo)
    out_rows = th * wp          # output rows produced by this tile

    # 3x3 tap offsets in flattened (row-major, width=wp) pixel coordinates.
    offs = [(kh - 1) * wp + (kw - 1) for kh in range(3) for kw in range(3)]

    row0 = pl.multiple_of(t * out_rows, out_rows)
    # Upcast once: rolls are done in f32 (safe arbitrary sublane shifts),
    # operands are downcast to bf16 right before each MXU matmul.
    xwin = x_ref[0, pl.ds(row0, win_rows), :].astype(jnp.float32)

    # ---- conv1: nine accumulating MXU matmuls, no materialized im2col. ----
    for k, off in enumerate(offs):
        shift = (-(wp + off)) % win_rows
        tap = pltpu.roll(xwin, shift=shift, axis=0)[:h1_rows]
        contrib = jnp.dot(tap.astype(jnp.bfloat16), w1_ref[k],
                          preferred_element_type=jnp.float32)
        if k == 0:
            acc_ref[...] = contrib
        else:
            acc_ref[...] += contrib

    # Interior mask computed in-kernel (rows 2..H+1, cols 1..W are real data;
    # everything else must be exactly zero so conv2 sees its zero padding).
    r = lax.broadcasted_iota(jnp.int32, (h1_rows, 1), 0)
    # Exact r // wp via f32 multiply (avoids vector integer division).
    q = jnp.floor((r.astype(jnp.float32) + 0.5) * (1.0 / wp)).astype(jnp.int32)
    c = r - q * wp                      # column inside the padded row
    p = q + (1 + t * th)                # global padded image row
    mask = ((p >= 2) & (p <= img_h + 1) & (c >= 1) & (c <= img_w)
            ).astype(jnp.float32)

    h1_ref[...] = mask * jnp.maximum(acc_ref[...] + b1_ref[...], 0.0)

    # ---- conv2 + bias + ReLU (intermediate never leaves VMEM). ------------
    h1 = h1_ref[...]
    out_idx = (pl.ds(0, out_rows), slice(None))
    for k, off in enumerate(offs):
        shift = (-(wp + off)) % h1_rows
        tap = pltpu.roll(h1, shift=shift, axis=0)[:out_rows]
        contrib = jnp.dot(tap.astype(jnp.bfloat16), w2_ref[k],
                          preferred_element_type=jnp.float32)
        if k == 0:
            acc_ref[out_idx] = contrib
        else:
            acc_ref[out_idx] += contrib

    o_ref[0] = jnp.maximum(acc_ref[out_idx] + b2_ref[...], 0.0
                           ).astype(o_ref.dtype)


def _pack_weight(w_oihw, cin_p, cout_p):
    """PyTorch (Cout, Cin, 3, 3) -> (9, cin_p, cout_p) bf16, one tap per index.

    Padded input/output channels are zero so padded lanes stay exactly zero
    downstream (the masking / channel slicing relies on this invariant).
    """
    cout, cin = w_oihw.shape[0], w_oihw.shape[1]
    w = jnp.transpose(w_oihw, (2, 3, 1, 0))                 # (3, 3, Cin, Cout)
    w = jnp.pad(w, ((0, 0), (0, 0), (0, cin_p - cin), (0, cout_p - cout)))
    return w.reshape(9, cin_p, cout_p).astype(jnp.bfloat16)


@functools.partial(jax.jit, static_argnames=("row_tile",))
def double_conv(x_nchw, w1, b1, w2, b2, *, row_tile=8):
    """Forward of DoubleConv.  Input/output are NCHW f32 like PyTorch."""
    N, Cin, H, W = x_nchw.shape
    Cout = w1.shape[0]

    cp_in = _round_up(Cin, LANE)
    cp_out = _round_up(Cout, LANE)

    th = max(1, min(row_tile, H))           # output image rows per grid step
    hr = _round_up(H, th)                   # tiled interior rows
    num_tiles = hr // th
    wp = _round_up(W + 2, SUBLANE_PACK)     # padded width (lane-free axis)
    hp = hr + 4                             # 2 halo rows top and bottom
    rtot = hp * wp                          # flattened padded rows per image

    # Invariants the kernel's roll/mask logic relies on.
    assert wp >= W + 2 and hp >= H + 4 and rtot % SUBLANE_PACK == 0

    # NCHW -> NHWC, pad halo + alignment + channels in ONE pad, flatten
    # spatial dims, cast to bf16 (halves input HBM DMA; MXU runs bf16 anyway).
    x = jnp.transpose(x_nchw, (0, 2, 3, 1))
    x = jnp.pad(x, ((0, 0), (2, hp - H - 2), (1, wp - W - 1), (0, cp_in - Cin)))
    x2 = x.reshape(N, rtot, cp_in).astype(jnp.bfloat16)

    w1m = _pack_weight(w1, cp_in, cp_out)
    w2m = _pack_weight(w2, cp_out, cp_out)
    b1p = jnp.pad(b1, (0, cp_out - Cout)).reshape(1, cp_out).astype(jnp.float32)
    b2p = jnp.pad(b2, (0, cp_out - Cout)).reshape(1, cp_out).astype(jnp.float32)

    kernel = functools.partial(_double_conv_kernel,
                               th=th, wp=wp, img_h=H, img_w=W)

    out_flat = pl.pallas_call(
        kernel,
        out_shape=jax.ShapeDtypeStruct((N, hr * wp, cp_out), jnp.float32),
        grid_spec=pltpu.PrefetchScalarGridSpec(
            num_scalar_prefetch=0,
            grid=(N, num_tiles),
            in_specs=[
                # Whole padded bf16 slab per batch element; re-fetched only
                # when n changes.  NOTE: for very large images one would
                # window this with an overlapping manual DMA (pl.ANY) instead.
                pl.BlockSpec((1, rtot, cp_in), lambda n, t: (n, 0, 0)),
                pl.BlockSpec((9, cp_in, cp_out), lambda n, t: (0, 0, 0)),
                pl.BlockSpec((1, cp_out), lambda n, t: (0, 0)),
                pl.BlockSpec((9, cp_out, cp_out), lambda n, t: (0, 0, 0)),
                pl.BlockSpec((1, cp_out), lambda n, t: (0, 0)),
            ],
            out_specs=pl.BlockSpec((1, th * wp, cp_out), lambda n, t: (n, t, 0)),
            scratch_shapes=[
                pltpu.VMEM(((th + 2) * wp, cp_out), jnp.float32),  # f32 acc
                pltpu.VMEM(((th + 2) * wp, cp_out), jnp.float32),  # masked h1
            ],
        ),
        compiler_params=pltpu.CompilerParams(
            dimension_semantics=("parallel", "parallel")),
    )(x2, w1m, b1p, w2m, b2p)

    # Un-flatten, drop alignment columns / padded channels, back to NCHW.
    out = out_flat.reshape(N, hr, wp, cp_out)[:, :H, 1:W + 1, :Cout]
    return jnp.transpose(out, (0, 3, 1, 2))


def init_double_conv_params(key, in_channels, out_channels):
    """Deterministic synthetic init (PyTorch Conv2d weight shapes)."""
    k1, k2, k3, k4 = jax.random.split(key, 4)
    fan1 = in_channels * 9
    fan2 = out_channels * 9
    w1 = jax.random.normal(k1, (out_channels, in_channels, 3, 3),
                           jnp.float32) * (fan1 ** -0.5)
    b1 = jax.random.normal(k2, (out_channels,), jnp.float32) * 0.01
    w2 = jax.random.normal(k3, (out_channels, out_channels, 3, 3),
                           jnp.float32) * (fan2 ** -0.5)
    b2 = jax.random.normal(k4, (out_channels,), jnp.float32) * 0.01
    return w1, b1, w2, b2


if __name__ == "__main__":
    key = jax.random.PRNGKey(0)
    kx, kp = jax.random.split(key)

    N, C_IN, C_OUT, H, W = 2, 4, 8, 16, 16
    x = jax.random.normal(kx, (N, C_IN, H, W), jnp.float32)
    w1, b1, w2, b2 = init_double_conv_params(kp, C_IN, C_OUT)

    out = jax.block_until_ready(double_conv(x, w1, b1, w2, b2))
    assert out.shape == (N, C_OUT, H, W)

    # The kernel deliberately uses bf16 MXU operands with f32 accumulation
    # (per perf review), so the tight check is against a bf16-operand
    # lax.conv reference.  Callers expecting full f32 Conv2d numerics should
    # note this documented deviation.
    def ref_bf16(x, w, b):
        y = jax.lax.conv_general_dilated(
            x.astype(jnp.bfloat16), w.astype(jnp.bfloat16),
            window_strides=(1, 1), padding="SAME",
            dimension_numbers=("NCHW", "OIHW", "NCHW"),
            preferred_element_type=jnp.float32)
        return jax.nn.relu(y + b[None, :, None, None])

    expected = ref_bf16(ref_bf16(x, w1, b1), w2, b2)
    err = float(jnp.max(jnp.abs(out - expected)))
    assert jnp.allclose(out, expected, atol=1e-2, rtol=1e-2), err

    # Loose sanity check against a full-f32 reference (guards gross errors).
    def ref_f32(x, w, b):
        y = jax.lax.conv_general_dilated(
            x, w, window_strides=(1, 1), padding="SAME",
            dimension_numbers=("NCHW", "OIHW", "NCHW"),
            precision=jax.lax.Precision.HIGHEST)
        return jax.nn.relu(y + b[None, :, None, None])

    expected32 = ref_f32(ref_f32(x, w1, b1), w2, b2)
    assert jnp.allclose(out, expected32, atol=0.25, rtol=0.1)

    print("KERNEL_OK")
</pallas_src>

<mosaic_0001>
module attributes {stable_mosaic.version = 11 : i64} {
  func.func @_double_conv_kernel(%arg0: i32, %arg1: i32, %arg2: memref<1x640x128xbf16, #tpu.memory_space<vmem>>, %arg3: memref<9x128x128xbf16, #tpu.memory_space<vmem>>, %arg4: memref<1x128xf32, #tpu.memory_space<vmem>>, %arg5: memref<9x128x128xbf16, #tpu.memory_space<vmem>>, %arg6: memref<1x128xf32, #tpu.memory_space<vmem>>, %arg7: memref<1x256x128xf32, #tpu.memory_space<vmem>>, %arg8: memref<320x128xf32, #tpu.memory_space<vmem>>, %arg9: memref<320x128xf32, #tpu.memory_space<vmem>>) attributes {dimension_semantics = [#tpu.dimension_semantics<parallel>, #tpu.dimension_semantics<parallel>], iteration_bounds = array<i64: 2, 2>, scalar_prefetch = 0 : i64, scratch_operands = 2 : i64, tpu.core_type = #tpu.core_type<tc>, window_params = [{transform_indices = @transform_0, window_bounds = array<i64: 1, 640, 128>}, {pipeline_mode = #tpu.pipeline_mode<synchronous>, transform_indices = @transform_1, window_bounds = array<i64: 9, 128, 128>}, {pipeline_mode = #tpu.pipeline_mode<synchronous>, transform_indices = @transform_2, window_bounds = array<i64: 1, 128>}, {pipeline_mode = #tpu.pipeline_mode<synchronous>, transform_indices = @transform_3, window_bounds = array<i64: 9, 128, 128>}, {pipeline_mode = #tpu.pipeline_mode<synchronous>, transform_indices = @transform_4, window_bounds = array<i64: 1, 128>}, {transform_indices = @transform_5, window_bounds = array<i64: 1, 256, 128>}]} {
    %c256_i32 = arith.constant 256 : i32
    %0 = arith.muli %arg1, %c256_i32 : i32
    %1 = tpu.assume_multiple %0, 256 : i32
    %c0 = arith.constant 0 : index
    %2 = arith.index_cast %1 : i32 to index
    %c0_0 = arith.constant 0 : index
    %3 = vector.load %arg2[%c0, %2, %c0_0] : memref<1x640x128xbf16, #tpu.memory_space<vmem>>, vector<1x384x128xbf16>
    %4 = vector.shape_cast %3 : vector<1x384x128xbf16> to vector<384x128xbf16>
    %5 = arith.extf %4 : vector<384x128xbf16> to vector<384x128xf32>
    %c1_i32 = arith.constant 1 : i32
    %6 = tpu.dynamic_rotate %5 by %c1_i32 dim 0 : vector<384x128xf32>, i32 -> vector<384x128xf32>
    %7 = vector.extract_strided_slice %6 {offsets = [0, 0], sizes = [320, 128], strides = [1, 1]} : vector<384x128xf32> to vector<320x128xf32>
    %8 = arith.truncf %7 : vector<320x128xf32> to vector<320x128xbf16>
    %c0_1 = arith.constant 0 : index
    %c0_2 = arith.constant 0 : index
    %c0_3 = arith.constant 0 : index
    %9 = vector.load %arg3[%c0_1, %c0_2, %c0_3] : memref<9x128x128xbf16, #tpu.memory_space<vmem>>, vector<1x128x128xbf16>
    %10 = vector.shape_cast %9 : vector<1x128x128xbf16> to vector<128x128xbf16>
    %cst = arith.constant dense<0.000000e+00> : vector<320x128xf32>
    %11 = tpu.matmul %8, %10, %cst {dimension_numbers = #tpu.dot_dimension_numbers<[1], [0], [0], [1], [0, 0, 1, 1], [], []>} : vector<320x128xbf16>, vector<128x128xbf16>, vector<320x128xf32> -> vector<320x128xf32>
    %c0_4 = arith.constant 0 : index
    %c0_5 = arith.constant 0 : index
    %12 = vector.load %arg8[%c0_4, %c0_5] : memref<320x128xf32, #tpu.memory_space<vmem>>, vector<320x128xf32>
    tpu.vector_store %arg8[%c0_4, %c0_5], %11 {strides = array<i32>} : memref<320x128xf32, #tpu.memory_space<vmem>>, vector<320x128xf32>,
    %c0_i32 = arith.constant 0 : i32
    %13 = tpu.dynamic_rotate %5 by %c0_i32 dim 0 : vector<384x128xf32>, i32 -> vector<384x128xf32>
    %14 = vector.extract_strided_slice %13 {offsets = [0, 0], sizes = [320, 128], strides = [1, 1]} : vector<384x128xf32> to vector<320x128xf32>
    %15 = arith.truncf %14 : vector<320x128xf32> to vector<320x128xbf16>
    %c1 = arith.constant 1 : index
    %c0_6 = arith.constant 0 : index
    %c0_7 = arith.constant 0 : index
    %16 = vector.load %arg3[%c1, %c0_6, %c0_7] : memref<9x128x128xbf16, #tpu.memory_space<vmem>>, vector<1x128x128xbf16>
    %17 = vector.shape_cast %16 : vector<1x128x128xbf16> to vector<128x128xbf16>
    %cst_8 = arith.constant dense<0.000000e+00> : vector<320x128xf32>
    %18 = tpu.matmul %15, %17, %cst_8 {dimension_numbers = #tpu.dot_dimension_numbers<[1], [0], [0], [1], [0, 0, 1, 1], [], []>} : vector<320x128xbf16>, vector<128x128xbf16>, vector<320x128xf32> -> vector<320x128xf32>
    %c0_9 = arith.constant 0 : index
    %c0_10 = arith.constant 0 : index
    %19 = vector.load %arg8[%c0_9, %c0_10] : memref<320x128xf32, #tpu.memory_space<vmem>>, vector<320x128xf32>
    %20 = arith.addf %19, %18 : vector<320x128xf32>
    %c0_11 = arith.constant 0 : index
    %c0_12 = arith.constant 0 : index
    %21 = vector.load %arg8[%c0_11, %c0_12] : memref<320x128xf32, #tpu.memory_space<vmem>>, vector<320x128xf32>
    tpu.vector_store %arg8[%c0_11, %c0_12], %20 {strides = array<i32>} : memref<320x128xf32, #tpu.memory_space<vmem>>, vector<320x128xf32>,
    %c383_i32 = arith.constant 383 : i32
    %22 = tpu.dynamic_rotate %5 by %c383_i32 dim 0 : vector<384x128xf32>, i32 -> vector<384x128xf32>
    %23 = vector.extract_strided_slice %22 {offsets = [0, 0], sizes = [320, 128], strides = [1, 1]} : vector<384x128xf32> to vector<320x128xf32>
    %24 = arith.truncf %23 : vector<320x128xf32> to vector<320x128xbf16>
    %c2 = arith.constant 2 : index
    %c0_13 = arith.constant 0 : index
    %c0_14 = arith.constant 0 : index
    %25 = vector.load %arg3[%c2, %c0_13, %c0_14] : memref<9x128x128xbf16, #tpu.memory_space<vmem>>, vector<1x128x128xbf16>
    %26 = vector.shape_cast %25 : vector<1x128x128xbf16> to vector<128x128xbf16>
    %cst_15 = arith.constant dense<0.000000e+00> : vector<320x128xf32>
    %27 = tpu.matmul %24, %26, %cst_15 {dimension_numbers = #tpu.dot_dimension_numbers<[1], [0], [0], [1], [0, 0, 1, 1], [], []>} : vector<320x128xbf16>, vector<128x128xbf16>, vector<320x128xf32> -> vector<320x128xf32>
    %c0_16 = arith.constant 0 : index
    %c0_17 = arith.constant 0 : index
    %28 = vector.load %arg8[%c0_16, %c0_17] : memref<320x128xf32, #tpu.memory_space<vmem>>, vector<320x128xf32>
    %29 = arith.addf %28, %27 : vector<320x128xf32>
    %c0_18 = arith.constant 0 : index
    %c0_19 = arith.constant 0 : index
    %30 = vector.load %arg8[%c0_18, %c0_19] : memref<320x128xf32, #tpu.memory_space<vmem>>, vector<320x128xf32>
    tpu.vector_store %arg8[%c0_18, %c0_19], %29 {strides = array<i32>} : memref<320x128xf32, #tpu.memory_space<vmem>>, vector<320x128xf32>,
    %c353_i32 = arith.constant 353 : i32
    %31 = tpu.dynamic_rotate %5 by %c353_i32 dim 0 : vector<384x128xf32>, i32 -> vector<384x128xf32>
    %32 = vector.extract_strided_slice %31 {offsets = [0, 0], sizes = [320, 128], strides = [1, 1]} : vector<384x128xf32> to vector<320x128xf32>
    %33 = arith.truncf %32 : vector<320x128xf32> to vector<320x128xbf16>
    %c3 = arith.constant 3 : index
    %c0_20 = arith.constant 0 : index
    %c0_21 = arith.constant 0 : index
    %34 = vector.load %arg3[%c3, %c0_20, %c0_21] : memref<9x128x128xbf16, #tpu.memory_space<vmem>>, vector<1x128x128xbf16>
    %35 = vector.shape_cast %34 : vector<1x128x128xbf16> to vector<128x128xbf16>
    %cst_22 = arith.constant dense<0.000000e+00> : vector<320x128xf32>
    %36 = tpu.matmul %33, %35, %cst_22 {dimension_numbers = #tpu.dot_dimension_numbers<[1], [0], [0], [1], [0, 0, 1, 1], [], []>} : vector<320x128xbf16>, vector<128x128xbf16>, vector<320x128xf32> -> vector<320x128xf32>
    %c0_23 = arith.constant 0 : index
    %c0_24 = arith.constant 0 : index
    %37 = vector.load %arg8[%c0_23, %c0_24] : memref<320x128xf32, #tpu.memory_space<vmem>>, vector<320x128xf32>
    %38 = arith.addf %37, %36 : vector<320x128xf32>
    %c0_25 = arith.constant 0 : index
    %c0_26 = arith.constant 0 : index
    %39 = vector.load %arg8[%c0_25, %c0_26] : memref<320x128xf32, #tpu.memory_space<vmem>>, vector<320x128xf32>
    tpu.vector_store %arg8[%c0_25, %c0_26], %38 {strides = array<i32>} : memref<320x128xf32, #tpu.memory_space<vmem>>, vector<320x128xf32>,
    %c352_i32 = arith.constant 352 : i32
    %40 = tpu.dynamic_rotate %5 by %c352_i32 dim 0 : vector<384x128xf32>, i32 -> vector<384x128xf32>
    %41 = vector.extract_strided_slice %40 {offsets = [0, 0], sizes = [320, 128], strides = [1, 1]} : vector<384x128xf32> to vector<320x128xf32>
    %42 = arith.truncf %41 : vector<320x128xf32> to vector<320x128xbf16>
    %c4 = arith.constant 4 : index
    %c0_27 = arith.constant 0 : index
    %c0_28 = arith.constant 0 : index
    %43 = vector.load %arg3[%c4, %c0_27, %c0_28] : memref<9x128x128xbf16, #tpu.memory_space<vmem>>, vector<1x128x128xbf16>
    %44 = vector.shape_cast %43 : vector<1x128x128xbf16> to vector<128x128xbf16>
    %cst_29 = arith.constant dense<0.000000e+00> : vector<320x128xf32>
    %45 = tpu.matmul %42, %44, %cst_29 {dimension_numbers = #tpu.dot_dimension_numbers<[1], [0], [0], [1], [0, 0, 1, 1], [], []>} : vector<320x128xbf16>, vector<128x128xbf16>, vector<320x128xf32> -> vector<320x128xf32>
    %c0_30 = arith.constant 0 : index
    %c0_31 = arith.constant 0 : index
    %46 = vector.load %arg8[%c0_30, %c0_31] : memref<320x128xf32, #tpu.memory_space<vmem>>, vector<320x128xf32>
    %47 = arith.addf %46, %45 : vector<320x128xf32>
    %c0_32 = arith.constant 0 : index
    %c0_33 = arith.constant 0 : index
    %48 = vector.load %arg8[%c0_32, %c0_33] : memref<320x128xf32, #tpu.memory_space<vmem>>, vector<320x128xf32>
    tpu.vector_store %arg8[%c0_32, %c0_33], %47 {strides = array<i32>} : memref<320x128xf32, #tpu.memory_space<vmem>>, vector<320x128xf32>,
    %c351_i32 = arith.constant 351 : i32
    %49 = tpu.dynamic_rotate %5 by %c351_i32 dim 0 : vector<384x128xf32>, i32 -> vector<384x128xf32>
    %50 = vector.extract_strided_slice %49 {offsets = [0, 0], sizes = [320, 128], strides = [1, 1]} : vector<384x128xf32> to vector<320x128xf32>
    %51 = arith.truncf %50 : vector<320x128xf32> to vector<320x128xbf16>
    %c5 = arith.constant 5 : index
    %c0_34 = arith.constant 0 : index
    %c0_35 = arith.constant 0 : index
    %52 = vector.load %arg3[%c5, %c0_34, %c0_35] : memref<9x128x128xbf16, #tpu.memory_space<vmem>>, vector<1x128x128xbf16>
    %53 = vector.shape_cast %52 : vector<1x128x128xbf16> to vector<128x128xbf16>
    %cst_36 = arith.constant dense<0.000000e+00> : vector<320x128xf32>
    %54 = tpu.matmul %51, %53, %cst_36 {dimension_numbers = #tpu.dot_dimension_numbers<[1], [0], [0], [1], [0, 0, 1, 1], [], []>} : vector<320x128xbf16>, vector<128x128xbf16>, vector<320x128xf32> -> vector<320x128xf32>
    %c0_37 = arith.constant 0 : index
    %c0_38 = arith.constant 0 : index
    %55 = vector.load %arg8[%c0_37, %c0_38] : memref<320x128xf32, #tpu.memory_space<vmem>>, vector<320x128xf32>
    %56 = arith.addf %55, %54 : vector<320x128xf32>
    %c0_39 = arith.constant 0 : index
    %c0_40 = arith.constant 0 : index
    %57 = vector.load %arg8[%c0_39, %c0_40] : memref<320x128xf32, #tpu.memory_space<vmem>>, vector<320x128xf32>
    tpu.vector_store %arg8[%c0_39, %c0_40], %56 {strides = array<i32>} : memref<320x128xf32, #tpu.memory_space<vmem>>, vector<320x128xf32>,
    %c321_i32 = arith.constant 321 : i32
    %58 = tpu.dynamic_rotate %5 by %c321_i32 dim 0 : vector<384x128xf32>, i32 -> vector<384x128xf32>
    %59 = vector.extract_strided_slice %58 {offsets = [0, 0], sizes = [320, 128], strides = [1, 1]} : vector<384x128xf32> to vector<320x128xf32>
    %60 = arith.truncf %59 : vector<320x128xf32> to vector<320x128xbf16>
    %c6 = arith.constant 6 : index
    %c0_41 = arith.constant 0 : index
    %c0_42 = arith.constant 0 : index
    %61 = vector.load %arg3[%c6, %c0_41, %c0_42] : memref<9x128x128xbf16, #tpu.memory_space<vmem>>, vector<1x128x128xbf16>
    %62 = vector.shape_cast %61 : vector<1x128x128xbf16> to vector<128x128xbf16>
    %cst_43 = arith.constant dense<0.000000e+00> : vector<320x128xf32>
    %63 = tpu.matmul %60, %62, %cst_43 {dimension_numbers = #tpu.dot_dimension_numbers<[1], [0], [0], [1], [0, 0, 1, 1], [], []>} : vector<320x128xbf16>, vector<128x128xbf16>, vector<320x128xf32> -> vector<320x128xf32>
    %c0_44 = arith.constant 0 : index
    %c0_45 = arith.constant 0 : index
    %64 = vector.load %arg8[%c0_44, %c0_45] : memref<320x128xf32, #tpu.memory_space<vmem>>, vector<320x128xf32>
    %65 = arith.addf %64, %63 : vector<320x128xf32>
    %c0_46 = arith.constant 0 : index
    %c0_47 = arith.constant 0 : index
    %66 = vector.load %arg8[%c0_46, %c0_47] : memref<320x128xf32, #tpu.memory_space<vmem>>, vector<320x128xf32>
    tpu.vector_store %arg8[%c0_46, %c0_47], %65 {strides = array<i32>} : memref<320x128xf32, #tpu.memory_space<vmem>>, vector<320x128xf32>,
    %c320_i32 = arith.constant 320 : i32
    %67 = tpu.dynamic_rotate %5 by %c320_i32 dim 0 : vector<384x128xf32>, i32 -> vector<384x128xf32>
    %68 = vector.extract_strided_slice %67 {offsets = [0, 0], sizes = [320, 128], strides = [1, 1]} : vector<384x128xf32> to vector<320x128xf32>
    %69 = arith.truncf %68 : vector<320x128xf32> to vector<320x128xbf16>
    %c7 = arith.constant 7 : index
    %c0_48 = arith.constant 0 : index
    %c0_49 = arith.constant 0 : index
    %70 = vector.load %arg3[%c7, %c0_48, %c0_49] : memref<9x128x128xbf16, #tpu.memory_space<vmem>>, vector<1x128x128xbf16>
    %71 = vector.shape_cast %70 : vector<1x128x128xbf16> to vector<128x128xbf16>
    %cst_50 = arith.constant dense<0.000000e+00> : vector<320x128xf32>
    %72 = tpu.matmul %69, %71, %cst_50 {dimension_numbers = #tpu.dot_dimension_numbers<[1], [0], [0], [1], [0, 0, 1, 1], [], []>} : vector<320x128xbf16>, vector<128x128xbf16>, vector<320x128xf32> -> vector<320x128xf32>
    %c0_51 = arith.constant 0 : index
    %c0_52 = arith.constant 0 : index
    %73 = vector.load %arg8[%c0_51, %c0_52] : memref<320x128xf32, #tpu.memory_space<vmem>>, vector<320x128xf32>
    %74 = arith.addf %73, %72 : vector<320x128xf32>
    %c0_53 = arith.constant 0 : index
    %c0_54 = arith.constant 0 : index
    %75 = vector.load %arg8[%c0_53, %c0_54] : memref<320x128xf32, #tpu.memory_space<vmem>>, vector<320x128xf32>
    tpu.vector_store %arg8[%c0_53, %c0_54], %74 {strides = array<i32>} : memref<320x128xf32, #tpu.memory_space<vmem>>, vector<320x128xf32>,
    %c319_i32 = arith.constant 319 : i32
    %76 = tpu.dynamic_rotate %5 by %c319_i32 dim 0 : vector<384x128xf32>, i32 -> vector<384x128xf32>
    %77 = vector.extract_strided_slice %76 {offsets = [0, 0], sizes = [320, 128], strides = [1, 1]} : vector<384x128xf32> to vector<320x128xf32>
    %78 = arith.truncf %77 : vector<320x128xf32> to vector<320x128xbf16>
    %c8 = arith.constant 8 : index
    %c0_55 = arith.constant 0 : index
    %c0_56 = arith.constant 0 : index
    %79 = vector.load %arg3[%c8, %c0_55, %c0_56] : memref<9x128x128xbf16, #tpu.memory_space<vmem>>, vector<1x128x128xbf16>
    %80 = vector.shape_cast %79 : vector<1x128x128xbf16> to vector<128x128xbf16>
    %cst_57 = arith.constant dense<0.000000e+00> : vector<320x128xf32>
    %81 = tpu.matmul %78, %80, %cst_57 {dimension_numbers = #tpu.dot_dimension_numbers<[1], [0], [0], [1], [0, 0, 1, 1], [], []>} : vector<320x128xbf16>, vector<128x128xbf16>, vector<320x128xf32> -> vector<320x128xf32>
    %c0_58 = arith.constant 0 : index
    %c0_59 = arith.constant 0 : index
    %82 = vector.load %arg8[%c0_58, %c0_59] : memref<320x128xf32, #tpu.memory_space<vmem>>, vector<320x128xf32>
    %83 = arith.addf %82, %81 : vector<320x128xf32>
    %c0_60 = arith.constant 0 : index
    %c0_61 = arith.constant 0 : index
    %84 = vector.load %arg8[%c0_60, %c0_61] : memref<320x128xf32, #tpu.memory_space<vmem>>, vector<320x128xf32>
    tpu.vector_store %arg8[%c0_60, %c0_61], %83 {strides = array<i32>} : memref<320x128xf32, #tpu.memory_space<vmem>>, vector<320x128xf32>,
    %85 = tpu.iota {dimensions = array<i32: 0>} : vector<320x1xi32>
    %86 = arith.sitofp %85 : vector<320x1xi32> to vector<320x1xf32>
    %cst_62 = arith.constant 5.000000e-01 : f32
    %87 = vector.broadcast %cst_62 : f32 to vector<320x1xf32>
    %88 = arith.addf %86, %87 : vector<320x1xf32>
    %cst_63 = arith.constant 3.125000e-02 : f32
    %89 = vector.broadcast %cst_63 : f32 to vector<320x1xf32>
    %90 = arith.mulf %88, %89 : vector<320x1xf32>
    %91 = math.floor %90 : vector<320x1xf32>
    %92 = arith.fptosi %91 : vector<320x1xf32> to vector<320x1xi32>
    %c32_i32 = arith.constant 32 : i32
    %93 = vector.broadcast %c32_i32 : i32 to vector<320x1xi32>
    %94 = arith.muli %92, %93 : vector<320x1xi32>
    %95 = arith.subi %85, %94 : vector<320x1xi32>
    %c8_i32 = arith.constant 8 : i32
    %96 = arith.muli %arg1, %c8_i32 : i32
    %c1_i32_64 = arith.constant 1 : i32
    %97 = arith.addi %c1_i32_64, %96 : i32
    %98 = vector.broadcast %97 : i32 to vector<320x1xi32>
    %99 = arith.addi %92, %98 : vector<320x1xi32>
    %c2_i32 = arith.constant 2 : i32
    %100 = vector.broadcast %c2_i32 : i32 to vector<320x1xi32>
    %101 = arith.cmpi sge, %99, %100 : vector<320x1xi32>
    %c17_i32 = arith.constant 17 : i32
    %102 = vector.broadcast %c17_i32 : i32 to vector<320x1xi32>
    %103 = arith.cmpi sle, %99, %102 : vector<320x1xi32>
    %104 = arith.andi %101, %103 : vector<320x1xi1>
    %c1_i32_65 = arith.constant 1 : i32
    %105 = vector.broadcast %c1_i32_65 : i32 to vector<320x1xi32>
    %106 = arith.cmpi sge, %95, %105 : vector<320x1xi32>
    %107 = arith.andi %104, %106 : vector<320x1xi1>
    %c16_i32 = arith.constant 16 : i32
    %108 = vector.broadcast %c16_i32 : i32 to vector<320x1xi32>
    %109 = arith.cmpi sle, %95, %108 : vector<320x1xi32>
    %110 = arith.andi %107, %109 : vector<320x1xi1>
    %111 = arith.extui %110 : vector<320x1xi1> to vector<320x1xi32>
    %112 = arith.sitofp %111 : vector<320x1xi32> to vector<320x1xf32>
    %c0_66 = arith.constant 0 : index
    %c0_67 = arith.constant 0 : index
    %113 = vector.load %arg8[%c0_66, %c0_67] : memref<320x128xf32, #tpu.memory_space<vmem>>, vector<320x128xf32>
    %c0_68 = arith.constant 0 : index
    %c0_69 = arith.constant 0 : index
    %114 = vector.load %arg4[%c0_68, %c0_69] : memref<1x128xf32, #tpu.memory_space<vmem>>, vector<1x128xf32>
    %115 = vector.broadcast %114 : vector<1x128xf32> to vector<320x128xf32>
    %116 = arith.addf %113, %115 : vector<320x128xf32>
    %cst_70 = arith.constant 0.000000e+00 : f32
    %117 = vector.broadcast %cst_70 : f32 to vector<320x128xf32>
    %118 = arith.maximumf %116, %117 : vector<320x128xf32>
    %119 = vector.broadcast %112 : vector<320x1xf32> to vector<320x128xf32>
    %120 = arith.mulf %119, %118 : vector<320x128xf32>
    %c0_71 = arith.constant 0 : index
    %c0_72 = arith.constant 0 : index
    %121 = vector.load %arg9[%c0_71, %c0_72] : memref<320x128xf32, #tpu.memory_space<vmem>>, vector<320x128xf32>
    tpu.vector_store %arg9[%c0_71, %c0_72], %120 {strides = array<i32>} : memref<320x128xf32, #tpu.memory_space<vmem>>, vector<320x128xf32>,
    %c0_73 = arith.constant 0 : index
    %c0_74 = arith.constant 0 : index
    %122 = vector.load %arg9[%c0_73, %c0_74] : memref<320x128xf32, #tpu.memory_space<vmem>>, vector<320x128xf32>
    %c1_i32_75 = arith.constant 1 : i32
    %123 = tpu.dynamic_rotate %122 by %c1_i32_75 dim 0 : vector<320x128xf32>, i32 -> vector<320x128xf32>
    %124 = vector.extract_strided_slice %123 {offsets = [0, 0], sizes = [256, 128], strides = [1, 1]} : vector<320x128xf32> to vector<256x128xf32>
    %125 = arith.truncf %124 : vector<256x128xf32> to vector<256x128xbf16>
    %c0_76 = arith.constant 0 : index
    %c0_77 = arith.constant 0 : index
    %c0_78 = arith.constant 0 : index
    %126 = vector.load %arg5[%c0_76, %c0_77, %c0_78] : memref<9x128x128xbf16, #tpu.memory_space<vmem>>, vector<1x128x128xbf16>
    %127 = vector.shape_cast %126 : vector<1x128x128xbf16> to vector<128x128xbf16>
    %cst_79 = arith.constant dense<0.000000e+00> : vector<256x128xf32>
    %128 = tpu.matmul %125, %127, %cst_79 {dimension_numbers = #tpu.dot_dimension_numbers<[1], [0], [0], [1], [0, 0, 1, 1], [], []>} : vector<256x128xbf16>, vector<128x128xbf16>, vector<256x128xf32> -> vector<256x128xf32>
    %c0_80 = arith.constant 0 : index
    %c0_81 = arith.constant 0 : index
    %129 = vector.load %arg8[%c0_80, %c0_81] : memref<320x128xf32, #tpu.memory_space<vmem>>, vector<256x128xf32>
    tpu.vector_store %arg8[%c0_80, %c0_81], %128 {strides = array<i32>} : memref<320x128xf32, #tpu.memory_space<vmem>>, vector<256x128xf32>,
    %c0_i32_82 = arith.constant 0 : i32
    %130 = tpu.dynamic_rotate %122 by %c0_i32_82 dim 0 : vector<320x128xf32>, i32 -> vector<320x128xf32>
    %131 = vector.extract_strided_slice %130 {offsets = [0, 0], sizes = [256, 128], strides = [1, 1]} : vector<320x128xf32> to vector<256x128xf32>
    %132 = arith.truncf %131 : vector<256x128xf32> to vector<256x128xbf16>
    %c1_83 = arith.constant 1 : index
    %c0_84 = arith.constant 0 : index
    %c0_85 = arith.constant 0 : index
    %133 = vector.load %arg5[%c1_83, %c0_84, %c0_85] : memref<9x128x128xbf16, #tpu.memory_space<vmem>>, vector<1x128x128xbf16>
    %134 = vector.shape_cast %133 : vector<1x128x128xbf16> to vector<128x128xbf16>
    %cst_86 = arith.constant dense<0.000000e+00> : vector<256x128xf32>
    %135 = tpu.matmul %132, %134, %cst_86 {dimension_numbers = #tpu.dot_dimension_numbers<[1], [0], [0], [1], [0, 0, 1, 1], [], []>} : vector<256x128xbf16>, vector<128x128xbf16>, vector<256x128xf32> -> vector<256x128xf32>
    %c0_87 = arith.constant 0 : index
    %c0_88 = arith.constant 0 : index
    %136 = vector.load %arg8[%c0_87, %c0_88] : memref<320x128xf32, #tpu.memory_space<vmem>>, vector<256x128xf32>
    %137 = arith.addf %136, %135 : vector<256x128xf32>
    %c0_89 = arith.constant 0 : index
    %c0_90 = arith.constant 0 : index
    %138 = vector.load %arg8[%c0_89, %c0_90] : memref<320x128xf32, #tpu.memory_space<vmem>>, vector<256x128xf32>
    tpu.vector_store %arg8[%c0_89, %c0_90], %137 {strides = array<i32>} : memref<320x128xf32, #tpu.memory_space<vmem>>, vector<256x128xf32>,
    %c319_i32_91 = arith.constant 319 : i32
    %139 = tpu.dynamic_rotate %122 by %c319_i32_91 dim 0 : vector<320x128xf32>, i32 -> vector<320x128xf32>
    %140 = vector.extract_strided_slice %139 {offsets = [0, 0], sizes = [256, 128], strides = [1, 1]} : vector<320x128xf32> to vector<256x128xf32>
    %141 = arith.truncf %140 : vector<256x128xf32> to vector<256x128xbf16>
    %c2_92 = arith.constant 2 : index
    %c0_93 = arith.constant 0 : index
    %c0_94 = arith.constant 0 : index
    %142 = vector.load %arg5[%c2_92, %c0_93, %c0_94] : memref<9x128x128xbf16, #tpu.memory_space<vmem>>, vector<1x128x128xbf16>
    %143 = vector.shape_cast %142 : vector<1x128x128xbf16> to vector<128x128xbf16>
    %cst_95 = arith.constant dense<0.000000e+00> : vector<256x128xf32>
    %144 = tpu.matmul %141, %143, %cst_95 {dimension_numbers = #tpu.dot_dimension_numbers<[1], [0], [0], [1], [0, 0, 1, 1], [], []>} : vector<256x128xbf16>, vector<128x128xbf16>, vector<256x128xf32> -> vector<256x128xf32>
    %c0_96 = arith.constant 0 : index
    %c0_97 = arith.constant 0 : index
    %145 = vector.load %arg8[%c0_96, %c0_97] : memref<320x128xf32, #tpu.memory_space<vmem>>, vector<256x128xf32>
    %146 = arith.addf %145, %144 : vector<256x128xf32>
    %c0_98 = arith.constant 0 : index
    %c0_99 = arith.constant 0 : index
    %147 = vector.load %arg8[%c0_98, %c0_99] : memref<320x128xf32, #tpu.memory_space<vmem>>, vector<256x128xf32>
    tpu.vector_store %arg8[%c0_98, %c0_99], %146 {strides = array<i32>} : memref<320x128xf32, #tpu.memory_space<vmem>>, vector<256x128xf32>,
    %c289_i32 = arith.constant 289 : i32
    %148 = tpu.dynamic_rotate %122 by %c289_i32 dim 0 : vector<320x128xf32>, i32 -> vector<320x128xf32>
    %149 = vector.extract_strided_slice %148 {offsets = [0, 0], sizes = [256, 128], strides = [1, 1]} : vector<320x128xf32> to vector<256x128xf32>
    %150 = arith.truncf %149 : vector<256x128xf32> to vector<256x128xbf16>
    %c3_100 = arith.constant 3 : index
    %c0_101 = arith.constant 0 : index
    %c0_102 = arith.constant 0 : index
    %151 = vector.load %arg5[%c3_100, %c0_101, %c0_102] : memref<9x128x128xbf16, #tpu.memory_space<vmem>>, vector<1x128x128xbf16>
    %152 = vector.shape_cast %151 : vector<1x128x128xbf16> to vector<128x128xbf16>
    %cst_103 = arith.constant dense<0.000000e+00> : vector<256x128xf32>
    %153 = tpu.matmul %150, %152, %cst_103 {dimension_numbers = #tpu.dot_dimension_numbers<[1], [0], [0], [1], [0, 0, 1, 1], [], []>} : vector<256x128xbf16>, vector<128x128xbf16>, vector<256x128xf32> -> vector<256x128xf32>
    %c0_104 = arith.constant 0 : index
    %c0_105 = arith.constant 0 : index
    %154 = vector.load %arg8[%c0_104, %c0_105] : memref<320x128xf32, #tpu.memory_space<vmem>>, vector<256x128xf32>
    %155 = arith.addf %154, %153 : vector<256x128xf32>
    %c0_106 = arith.constant 0 : index
    %c0_107 = arith.constant 0 : index
    %156 = vector.load %arg8[%c0_106, %c0_107] : memref<320x128xf32, #tpu.memory_space<vmem>>, vector<256x128xf32>
    tpu.vector_store %arg8[%c0_106, %c0_107], %155 {strides = array<i32>} : memref<320x128xf32, #tpu.memory_space<vmem>>, vector<256x128xf32>,
    %c288_i32 = arith.constant 288 : i32
    %157 = tpu.dynamic_rotate %122 by %c288_i32 dim 0 : vector<320x128xf32>, i32 -> vector<320x128xf32>
    %158 = vector.extract_strided_slice %157 {offsets = [0, 0], sizes = [256, 128], strides = [1, 1]} : vector<320x128xf32> to vector<256x128xf32>
    %159 = arith.truncf %158 : vector<256x128xf32> to vector<256x128xbf16>
    %c4_108 = arith.constant 4 : index
    %c0_109 = arith.constant 0 : index
    %c0_110 = arith.constant 0 : index
    %160 = vector.load %arg5[%c4_108, %c0_109, %c0_110] : memref<9x128x128xbf16, #tpu.memory_space<vmem>>, vector<1x128x128xbf16>
    %161 = vector.shape_cast %160 : vector<1x128x128xbf16> to vector<128x128xbf16>
    %cst_111 = arith.constant dense<0.000000e+00> : vector<256x128xf32>
    %162 = tpu.matmul %159, %161, %cst_111 {dimension_numbers = #tpu.dot_dimension_numbers<[1], [0], [0], [1], [0, 0, 1, 1], [], []>} : vector<256x128xbf16>, vector<128x128xbf16>, vector<256x128xf32> -> vector<256x128xf32>
    %c0_112 = arith.constant 0 : index
    %c0_113 = arith.constant 0 : index
    %163 = vector.load %arg8[%c0_112, %c0_113] : memref<320x128xf32, #tpu.memory_space<vmem>>, vector<256x128xf32>
    %164 = arith.addf %163, %162 : vector<256x128xf32>
    %c0_114 = arith.constant 0 : index
    %c0_115 = arith.constant 0 : index
    %165 = vector.load %arg8[%c0_114, %c0_115] : memref<320x128xf32, #tpu.memory_space<vmem>>, vector<256x128xf32>
    tpu.vector_store %arg8[%c0_114, %c0_115], %164 {strides = array<i32>} : memref<320x128xf32, #tpu.memory_space<vmem>>, vector<256x128xf32>,
    %c287_i32 = arith.constant 287 : i32
    %166 = tpu.dynamic_rotate %122 by %c287_i32 dim 0 : vector<320x128xf32>, i32 -> vector<320x128xf32>
    %167 = vector.extract_strided_slice %166 {offsets = [0, 0], sizes = [256, 128], strides = [1, 1]} : vector<320x128xf32> to vector<256x128xf32>
    %168 = arith.truncf %167 : vector<256x128xf32> to vector<256x128xbf16>
    %c5_116 = arith.constant 5 : index
    %c0_117 = arith.constant 0 : index
    %c0_118 = arith.constant 0 : index
    %169 = vector.load %arg5[%c5_116, %c0_117, %c0_118] : memref<9x128x128xbf16, #tpu.memory_space<vmem>>, vector<1x128x128xbf16>
    %170 = vector.shape_cast %169 : vector<1x128x128xbf16> to vector<128x128xbf16>
    %cst_119 = arith.constant dense<0.000000e+00> : vector<256x128xf32>
    %171 = tpu.matmul %168, %170, %cst_119 {dimension_numbers = #tpu.dot_dimension_numbers<[1], [0], [0], [1], [0, 0, 1, 1], [], []>} : vector<256x128xbf16>, vector<128x128xbf16>, vector<256x128xf32> -> vector<256x128xf32>
    %c0_120 = arith.constant 0 : index
    %c0_121 = arith.constant 0 : index
    %172 = vector.load %arg8[%c0_120, %c0_121] : memref<320x128xf32, #tpu.memory_space<vmem>>, vector<256x128xf32>
    %173 = arith.addf %172, %171 : vector<256x128xf32>
    %c0_122 = arith.constant 0 : index
    %c0_123 = arith.constant 0 : index
    %174 = vector.load %arg8[%c0_122, %c0_123] : memref<320x128xf32, #tpu.memory_space<vmem>>, vector<256x128xf32>
    tpu.vector_store %arg8[%c0_122, %c0_123], %173 {strides = array<i32>} : memref<320x128xf32, #tpu.memory_space<vmem>>, vector<256x128xf32>,
    %c257_i32 = arith.constant 257 : i32
    %175 = tpu.dynamic_rotate %122 by %c257_i32 dim 0 : vector<320x128xf32>, i32 -> vector<320x128xf32>
    %176 = vector.extract_strided_slice %175 {offsets = [0, 0], sizes = [256, 128], strides = [1, 1]} : vector<320x128xf32> to vector<256x128xf32>
    %177 = arith.truncf %176 : vector<256x128xf32> to vector<256x128xbf16>
    %c6_124 = arith.constant 6 : index
    %c0_125 = arith.constant 0 : index
    %c0_126 = arith.constant 0 : index
    %178 = vector.load %arg5[%c6_124, %c0_125, %c0_126] : memref<9x128x128xbf16, #tpu.memory_space<vmem>>, vector<1x128x128xbf16>
    %179 = vector.shape_cast %178 : vector<1x128x128xbf16> to vector<128x128xbf16>
    %cst_127 = arith.constant dense<0.000000e+00> : vector<256x128xf32>
    %180 = tpu.matmul %177, %179, %cst_127 {dimension_numbers = #tpu.dot_dimension_numbers<[1], [0], [0], [1], [0, 0, 1, 1], [], []>} : vector<256x128xbf16>, vector<128x128xbf16>, vector<256x128xf32> -> vector<256x128xf32>
    %c0_128 = arith.constant 0 : index
    %c0_129 = arith.constant 0 : index
    %181 = vector.load %arg8[%c0_128, %c0_129] : memref<320x128xf32, #tpu.memory_space<vmem>>, vector<256x128xf32>
    %182 = arith.addf %181, %180 : vector<256x128xf32>
    %c0_130 = arith.constant 0 : index
    %c0_131 = arith.constant 0 : index
    %183 = vector.load %arg8[%c0_130, %c0_131] : memref<320x128xf32, #tpu.memory_space<vmem>>, vector<256x128xf32>
    tpu.vector_store %arg8[%c0_130, %c0_131], %182 {strides = array<i32>} : memref<320x128xf32, #tpu.memory_space<vmem>>, vector<256x128xf32>,
    %c256_i32_132 = arith.constant 256 : i32
    %184 = tpu.dynamic_rotate %122 by %c256_i32_132 dim 0 : vector<320x128xf32>, i32 -> vector<320x128xf32>
    %185 = vector.extract_strided_slice %184 {offsets = [0, 0], sizes = [256, 128], strides = [1, 1]} : vector<320x128xf32> to vector<256x128xf32>
    %186 = arith.truncf %185 : vector<256x128xf32> to vector<256x128xbf16>
    %c7_133 = arith.constant 7 : index
    %c0_134 = arith.constant 0 : index
    %c0_135 = arith.constant 0 : index
    %187 = vector.load %arg5[%c7_133, %c0_134, %c0_135] : memref<9x128x128xbf16, #tpu.memory_space<vmem>>, vector<1x128x128xbf16>
    %188 = vector.shape_cast %187 : vector<1x128x128xbf16> to vector<128x128xbf16>
    %cst_136 = arith.constant dense<0.000000e+00> : vector<256x128xf32>
    %189 = tpu.matmul %186, %188, %cst_136 {dimension_numbers = #tpu.dot_dimension_numbers<[1], [0], [0], [1], [0, 0, 1, 1], [], []>} : vector<256x128xbf16>, vector<128x128xbf16>, vector<256x128xf32> -> vector<256x128xf32>
    %c0_137 = arith.constant 0 : index
    %c0_138 = arith.constant 0 : index
    %190 = vector.load %arg8[%c0_137, %c0_138] : memref<320x128xf32, #tpu.memory_space<vmem>>, vector<256x128xf32>
    %191 = arith.addf %190, %189 : vector<256x128xf32>
    %c0_139 = arith.constant 0 : index
    %c0_140 = arith.constant 0 : index
    %192 = vector.load %arg8[%c0_139, %c0_140] : memref<320x128xf32, #tpu.memory_space<vmem>>, vector<256x128xf32>
    tpu.vector_store %arg8[%c0_139, %c0_140], %191 {strides = array<i32>} : memref<320x128xf32, #tpu.memory_space<vmem>>, vector<256x128xf32>,
    %c255_i32 = arith.constant 255 : i32
    %193 = tpu.dynamic_rotate %122 by %c255_i32 dim 0 : vector<320x128xf32>, i32 -> vector<320x128xf32>
    %194 = vector.extract_strided_slice %193 {offsets = [0, 0], sizes = [256, 128], strides = [1, 1]} : vector<320x128xf32> to vector<256x128xf32>
    %195 = arith.truncf %194 : vector<256x128xf32> to vector<256x128xbf16>
    %c8_141 = arith.constant 8 : index
    %c0_142 = arith.constant 0 : index
    %c0_143 = arith.constant 0 : index
    %196 = vector.load %arg5[%c8_141, %c0_142, %c0_143] : memref<9x128x128xbf16, #tpu.memory_space<vmem>>, vector<1x128x128xbf16>
    %197 = vector.shape_cast %196 : vector<1x128x128xbf16> to vector<128x128xbf16>
    %cst_144 = arith.constant dense<0.000000e+00> : vector<256x128xf32>
    %198 = tpu.matmul %195, %197, %cst_144 {dimension_numbers = #tpu.dot_dimension_numbers<[1], [0], [0], [1], [0, 0, 1, 1], [], []>} : vector<256x128xbf16>, vector<128x128xbf16>, vector<256x128xf32> -> vector<256x128xf32>
    %c0_145 = arith.constant 0 : index
    %c0_146 = arith.constant 0 : index
    %199 = vector.load %arg8[%c0_145, %c0_146] : memref<320x128xf32, #tpu.memory_space<vmem>>, vector<256x128xf32>
    %200 = arith.addf %199, %198 : vector<256x128xf32>
    %c0_147 = arith.constant 0 : index
    %c0_148 = arith.constant 0 : index
    %201 = vector.load %arg8[%c0_147, %c0_148] : memref<320x128xf32, #tpu.memory_space<vmem>>, vector<256x128xf32>
    tpu.vector_store %arg8[%c0_147, %c0_148], %200 {strides = array<i32>} : memref<320x128xf32, #tpu.memory_space<vmem>>, vector<256x128xf32>,
    %c0_149 = arith.constant 0 : index
    %c0_150 = arith.constant 0 : index
    %202 = vector.load %arg8[%c0_149, %c0_150] : memref<320x128xf32, #tpu.memory_space<vmem>>, vector<256x128xf32>
    %c0_151 = arith.constant 0 : index
    %c0_152 = arith.constant 0 : index
    %203 = vector.load %arg6[%c0_151, %c0_152] : memref<1x128xf32, #tpu.memory_space<vmem>>, vector<1x128xf32>
    %204 = vector.broadcast %203 : vector<1x128xf32> to vector<256x128xf32>
    %205 = arith.addf %202, %204 : vector<256x128xf32>
    %cst_153 = arith.constant 0.000000e+00 : f32
    %206 = vector.broadcast %cst_153 : f32 to vector<256x128xf32>
    %207 = arith.maximumf %205, %206 : vector<256x128xf32>
    %c0_154 = arith.constant 0 : index
    %c0_155 = arith.constant 0 : index
    %c0_156 = arith.constant 0 : index
    %208 = vector.load %arg7[%c0_154, %c0_155, %c0_156] : memref<1x256x128xf32, #tpu.memory_space<vmem>>, vector<1x256x128xf32>
    %209 = vector.shape_cast %208 : vector<1x256x128xf32> to vector<256x128xf32>
    %210 = vector.shape_cast %207 : vector<256x128xf32> to vector<1x256x128xf32>
    tpu.vector_store %arg7[%c0_154, %c0_155, %c0_156], %210 {strides = array<i32>} : memref<1x256x128xf32, #tpu.memory_space<vmem>>, vector<1x256x128xf32>,
    return
  }
  func.func @transform_0(%arg0: i32, %arg1: i32) -> (i32, i32, i32) {
    %c0_i32 = arith.constant 0 : i32
    %c0_i32_0 = arith.constant 0 : i32
    %c0_i32_1 = arith.constant 0 : i32
    return %arg0, %c0_i32, %c0_i32_0 : i32, i32, i32
  }
  func.func @transform_1(%arg0: i32, %arg1: i32) -> (i32, i32, i32) {
    %c0_i32 = arith.constant 0 : i32
    %c0_i32_0 = arith.constant 0 : i32
    %c0_i32_1 = arith.constant 0 : i32
    %c0_i32_2 = arith.constant 0 : i32
    return %c0_i32, %c0_i32_0, %c0_i32_1 : i32, i32, i32
  }
  func.func @transform_2(%arg0: i32, %arg1: i32) -> (i32, i32) {
    %c0_i32 = arith.constant 0 : i32
    %c0_i32_0 = arith.constant 0 : i32
    %c0_i32_1 = arith.constant 0 : i32
    return %c0_i32, %c0_i32_0 : i32, i32
  }
  func.func @transform_3(%arg0: i32, %arg1: i32) -> (i32, i32, i32) {
    %c0_i32 = arith.constant 0 : i32
    %c0_i32_0 = arith.constant 0 : i32
    %c0_i32_1 = arith.constant 0 : i32
    %c0_i32_2 = arith.constant 0 : i32
    return %c0_i32, %c0_i32_0, %c0_i32_1 : i32, i32, i32
  }
  func.func @transform_4(%arg0: i32, %arg1: i32) -> (i32, i32) {
    %c0_i32 = arith.constant 0 : i32
    %c0_i32_0 = arith.constant 0 : i32
    %c0_i32_1 = arith.constant 0 : i32
    return %c0_i32, %c0_i32_0 : i32, i32
  }
  func.func @transform_5(%arg0: i32, %arg1: i32) -> (i32, i32, i32) {
    %c0_i32 = arith.constant 0 : i32
    %c0_i32_0 = arith.constant 0 : i32
    return %arg0, %arg1, %c0_i32 : i32, i32, i32
  }
}

</mosaic_0001>

<llo_original>
// kernel: double_conv.1
$region0: #{double_conv.1}
  #allocation0 [shape = 'u32[]', space=smem, size = 0x4, offset = 0x4, fixed_abs, tag = 'smem constant byte address 0x4 - core index']
  #allocation1 [shape = 'u32[144,128]{1,0:T(1,128)}', space=vmem, size = 0x12000, scoped, tag = 'internal scratch']
  #allocation2 [shape = 'f32[320,128]{1,0:T(8,128)}', space=vmem, size = 0x28000, scoped, tag = 'scratch operand']
  #allocation3 [shape = 'f32[320,128]{1,0:T(8,128)}', space=vmem, size = 0x28000, scoped, tag = 'scratch operand']
  %s0 = inlined_call_operand.vmem [shape: bf16[2,640,128], index: 0, kind: input, shape index: {}]
  %s1 = inlined_call_operand.vmem [shape: bf16[9,128,128], index: 1, kind: input, shape index: {}]
  %s2 = inlined_call_operand.vmem [shape: f32[1,128], index: 2, kind: input, shape index: {}]
  %s3 = inlined_call_operand.vmem [shape: bf16[9,128,128], index: 3, kind: input, shape index: {}]
  %s4 = inlined_call_operand.vmem [shape: f32[1,128], index: 4, kind: input, shape index: {}]
  %s5 = inlined_call_operand.vmem [shape: f32[2,512,128], index: 5, kind: output, shape index: {}]
  %s6 = sld [smem:[#allocation0]]
  $region53: #{double_conv.1} parent=0
    _
  %s8 = ssub.s32 1, %s6
  %s9 = scalar_select 0, %s8, %s6
  loop: start=0, step=1, limit=6
  $region2: #{double_conv.1} parent=0 // loop_pre_header
    _
  $region3: #{double_conv.1} parent=0 // loop_header
    %s11 = sphi 0, %s15
    %p12 = scmp.ge.s32.totalorder %s11, 6
    %s18 = sphi 0, %s30
    %s19 = sphi 0, %s26
    %s20 = sphi 0, %s18
    %s21 = sphi 0, %s19
    %s22 = sphi 0, %s20
    %s23 = sphi 0, %s21
    %s33 = sphi 0, %s35
    %s36 = sphi 0, %s33
    %s37 = sphi 0, %s36
    %s53 = sphi 0, %s37
    %s57 = sphi 0, %s57
    %s59 = sphi 0, %s57
    %s60 = sphi 0, %s59
    %s74 = sphi 0, %s60
    %s78 = sphi 0, %s78
    %s80 = sphi 0, %s78
    %s81 = sphi 0, %s80
    %s95 = sphi 0, %s81
    %s99 = sphi 0, %s99
    %s101 = sphi 0, %s99
    %s102 = sphi 0, %s101
    %s116 = sphi 0, %s102
    %s120 = sphi 0, %s120
    %s122 = sphi 0, %s120
    %s123 = sphi 0, %s122
    %s137 = sphi 0, %s123
    %s145 = sphi 0, %s147
    %s148 = sphi 0, %s145
    %s149 = sphi 0, %s148
    %s165 = sphi 0, %s149
  $region4: #{double_conv.1} parent=0 // loop_header_branch
    %14 = sbr.rel (%p12) target = $region8
  $region5: #{double_conv.1} parent=0 // loop_body
    %s16 = ssub.s32 %s11, 1
    %s17 = ssub.s32 %s11, 2
    %s24 = sadd.s32 1, %s19
    %p25 = scmp.ge.s32.totalorder %s24, 2
    %s26 = scalar_select %p25, 0, %s24
    %s27 = sadd.s32 1, %s18
    %s28 = scalar_select %p25, %s27, %s18
    %p29 = scmp.ge.s32.totalorder %s28, 2
    %s30 = scalar_select %p29, 0, %s28
    %s31 = ssub.s32 %s18, %s30
    %p32 = scmp.eq.s32.totalorder %s31, 0
    %s34 = sadd.s32 %s33, 1
    %s35 = scalar_select %p32, %s33, %s34
    %p38 = pneg %p32
    %p39 = scmp.eq.s32.totalorder %s11, 3
    %p40 = por %p38, %p39
    %p41 = scmp.ne.s32.totalorder %s33, %s36
    %p42 = scmp.eq.s32.totalorder %s11, 0
    %p43 = por %p41, %p42
    %p44 = scmp.ne.s32.totalorder %s33, %s36
    %p45 = scmp.eq.s32.totalorder %s16, 3
    %p46 = por %p44, %p45
    %p47 = scmp.ne.s32.totalorder %s36, %s37
    %p48 = scmp.eq.s32.totalorder %s16, 0
    %p49 = por %p47, %p48
    %p50 = scmp.ne.s32.totalorder %s36, %s37
    %p51 = scmp.eq.s32.totalorder %s17, 3
    %p52 = por %p50, %p51
    %p54 = scmp.ne.s32.totalorder %s37, %s53
    %p55 = scmp.eq.s32.totalorder %s17, 0
    %p56 = por %p54, %p55
    %s58 = sadd.s32 %s57, 1
    %p61 = scmp.eq.s32.totalorder %s11, 3
    %p62 = scmp.ne.s32.totalorder %s57, %s59
    %p63 = scmp.eq.s32.totalorder %s11, 0
    %p64 = por %p62, %p63
    %p65 = scmp.ne.s32.totalorder %s57, %s59
    %p66 = scmp.eq.s32.totalorder %s16, 3
    %p67 = por %p65, %p66
    %p68 = scmp.ne.s32.totalorder %s59, %s60
    %p69 = scmp.eq.s32.totalorder %s16, 0
    %p70 = por %p68, %p69
    %p71 = scmp.ne.s32.totalorder %s59, %s60
    %p72 = scmp.eq.s32.totalorder %s17, 3
    %p73 = por %p71, %p72
    %p75 = scmp.ne.s32.totalorder %s60, %s74
    %p76 = scmp.eq.s32.totalorder %s17, 0
    %p77 = por %p75, %p76
    %s79 = sadd.s32 %s78, 1
    %p82 = scmp.eq.s32.totalorder %s11, 3
    %p83 = scmp.ne.s32.totalorder %s78, %s80
    %p84 = scmp.eq.s32.totalorder %s11, 0
    %p85 = por %p83, %p84
    %p86 = scmp.ne.s32.totalorder %s78, %s80
    %p87 = scmp.eq.s32.totalorder %s16, 3
    %p88 = por %p86, %p87
    %p89 = scmp.ne.s32.totalorder %s80, %s81
    %p90 = scmp.eq.s32.totalorder %s16, 0
    %p91 = por %p89, %p90
    %p92 = scmp.ne.s32.totalorder %s80, %s81
    %p93 = scmp.eq.s32.totalorder %s17, 3
    %p94 = por %p92, %p93
    %p96 = scmp.ne.s32.totalorder %s81, %s95
    %p97 = scmp.eq.s32.totalorder %s17, 0
    %p98 = por %p96, %p97
    %s100 = sadd.s32 %s99, 1
    %p103 = scmp.eq.s32.totalorder %s11, 3
    %p104 = scmp.ne.s32.totalorder %s99, %s101
    %p105 = scmp.eq.s32.totalorder %s11, 0
    %p106 = por %p104, %p105
    %p107 = scmp.ne.s32.totalorder %s99, %s101
    %p108 = scmp.eq.s32.totalorder %s16, 3
    %p109 = por %p107, %p108
    %p110 = scmp.ne.s32.totalorder %s101, %s102
    %p111 = scmp.eq.s32.totalorder %s16, 0
    %p112 = por %p110, %p111
    %p113 = scmp.ne.s32.totalorder %s101, %s102
    %p114 = scmp.eq.s32.totalorder %s17, 3
    %p115 = por %p113, %p114
    %p117 = scmp.ne.s32.totalorder %s102, %s116
    %p118 = scmp.eq.s32.totalorder %s17, 0
    %p119 = por %p117, %p118
    %s121 = sadd.s32 %s120, 1
    %p124 = scmp.eq.s32.totalorder %s11, 3
    %p125 = scmp.ne.s32.totalorder %s120, %s122
    %p126 = scmp.eq.s32.totalorder %s11, 0
    %p127 = por %p125, %p126
    %p128 = scmp.ne.s32.totalorder %s120, %s122
    %p129 = scmp.eq.s32.totalorder %s16, 3
    %p130 = por %p128, %p129
    %p131 = scmp.ne.s32.totalorder %s122, %s123
    %p132 = scmp.eq.s32.totalorder %s16, 0
    %p133 = por %p131, %p132
    %p134 = scmp.ne.s32.totalorder %s122, %s123
    %p135 = scmp.eq.s32.totalorder %s17, 3
    %p136 = por %p134, %p135
    %p138 = scmp.ne.s32.totalorder %s123, %s137
    %p139 = scmp.eq.s32.totalorder %s17, 0
    %p140 = por %p138, %p139
    %s141 = ssub.s32 %s18, %s30
    %s142 = ssub.s32 %s19, %s26
    %s143 = sor.u32 %s141, %s142
    %p144 = scmp.eq.s32.totalorder %s143, 0
    %s146 = sadd.s32 %s145, 1
    %s147 = scalar_select %p144, %s145, %s146
    %p150 = pneg %p144
    %p151 = scmp.eq.s32.totalorder %s11, 3
    %p152 = por %p150, %p151
    %p153 = scmp.ne.s32.totalorder %s145, %s148
    %p154 = scmp.eq.s32.totalorder %s11, 0
    %p155 = por %p153, %p154
    %p156 = scmp.ne.s32.totalorder %s145, %s148
    %p157 = scmp.eq.s32.totalorder %s16, 3
    %p158 = por %p156, %p157
    %p159 = scmp.ne.s32.totalorder %s148, %s149
    %p160 = scmp.eq.s32.totalorder %s16, 0
    %p161 = por %p159, %p160
    %p162 = scmp.ne.s32.totalorder %s148, %s149
    %p163 = scmp.eq.s32.totalorder %s17, 3
    %p164 = por %p162, %p163
    %p166 = scmp.ne.s32.totalorder %s149, %s165
    %p167 = scmp.eq.s32.totalorder %s17, 0
    %p168 = por %p166, %p167
    %p169 = scmp.le.s32.totalorder 1, %s11
    %p170 = scmp.lt.s32.totalorder %s11, 5
    %p171 = pnand %p169, %p170
    %p172 = pneg %p171
    // Predicated region
    $region9: #{double_conv.1} parent=5 // pred_check
      _
    $region10: #{double_conv.1} parent=5 // pred_check_branch
      %174 = sbr.rel (%p171) target = $region12
    $region11: #{double_conv.1} parent=5 // pred_region
      %s175 = ssub.s32 %s11, 1
      // Predicated region
      $region13: #{double_conv.1} parent=11 // pred_check
        %p176 = pneg %p70
      $region14: #{double_conv.1} parent=11 // pred_check_branch
        %178 = sbr.rel (%p176) target = $region16
      $region15: #{double_conv.1} parent=11 // pred_region
        _
      $region16: #{double_conv.1} parent=11 // pred_fallthru
        _
      // Predicated region
      $region17: #{double_conv.1} parent=11 // pred_check
        %p179 = pneg %p91
      $region18: #{double_conv.1} parent=11 // pred_check_branch
        %181 = sbr.rel (%p179) target = $region20
      $region19: #{double_conv.1} parent=11 // pred_region
        _
      $region20: #{double_conv.1} parent=11 // pred_fallthru
        _
      // Predicated region
      $region21: #{double_conv.1} parent=11 // pred_check
        %p182 = pneg %p112
      $region22: #{double_conv.1} parent=11 // pred_check_branch
        %184 = sbr.rel (%p182) target = $region24
      $region23: #{double_conv.1} parent=11 // pred_region
        _
      $region24: #{double_conv.1} parent=11 // pred_fallthru
        _
      // Predicated region
      $region25: #{double_conv.1} parent=11 // pred_check
        %p185 = pneg %p133
      $region26: #{double_conv.1} parent=11 // pred_check_branch
        %187 = sbr.rel (%p185) target = $region28
      $region27: #{double_conv.1} parent=11 // pred_region
        _
      $region28: #{double_conv.1} parent=11 // pred_fallthru
        _
    $region12: #{double_conv.1} parent=5 // pred_fallthru
      _
    %p188 = scmp.lt.s32.totalorder %s11, 4
    // Predicated region
    $region29: #{double_conv.1} parent=5 // pred_check
      %p189 = pneg %p188
    $region30: #{double_conv.1} parent=5 // pred_check_branch
      %191 = sbr.rel (%p189) target = $region32
    $region31: #{double_conv.1} parent=5 // pred_region
      // Predicated region
      $region33: #{double_conv.1} parent=31 // pred_check
        %p192 = pneg %p43
      $region34: #{double_conv.1} parent=31 // pred_check_branch
        %194 = sbr.rel (%p192) target = $region36
      $region35: #{double_conv.1} parent=31 // pred_region
        %p195 = scmp.lt.s32.totalorder %s18, 1
        %s196 = scalar_select %p195, %s18, 1
        %s197 = smul.addr %s196, 80
        %s198 = smul.addr %s197, 4
        %s199 = scalar_lea.vmem %s0, %s198
      $region36: #{double_conv.1} parent=31 // pred_fallthru
        _
    $region32: #{double_conv.1} parent=5 // pred_fallthru
      _
    %p200 = scmp.le.s32.totalorder 1, %s11
    %p201 = scmp.lt.s32.totalorder %s11, 5
    %p202 = pnand %p200, %p201
    %p203 = pneg %p202
    // Predicated region
    $region37: #{double_conv.1} parent=5 // pred_check
      _
    $region38: #{double_conv.1} parent=5 // pred_check_branch
      %205 = sbr.rel (%p202) target = $region40
    $region39: #{double_conv.1} parent=5 // pred_region
      %s206 = ssub.s32 %s11, 1
      %p207 = scmp.lt.s32.totalorder %s20, 1
      %s208 = scalar_select %p207, %s20, 1
      %s209 = smul.addr %s208, 80
      %s210 = smul.addr %s209, 4
      %s211 = scalar_lea.vmem %s0, %s210
      %p212 = pneg %p49
      %p213 = pneg %p46
      %p214 = pneg %p70
      %p215 = pneg %p67
      %p216 = pneg %p91
      %p217 = pneg %p88
      %p218 = pneg %p112
      %p219 = pneg %p109
      %p220 = pneg %p133
      %p221 = pneg %p130
      %p222 = pneg %p161
      %p223 = pneg %p158
      %s224 = smul.u32 32, %s21
      %p225 = scmp.lt.s32.totalorder %s20, 1
      %s226 = scalar_select %p225, %s20, 1
      %p227 = scmp.lt.s32.totalorder %s224, 63
      %s228 = scalar_select %p227, %s224, 63
      %s229 = smul.addr %s226, 64
      %s230 = sadd.s32 %s228, %s229
      %s231 = smul.addr %s230, 8
      %s232 = scalar_lea.vmem %s5, %s231
      %p233 = scmp.lt.s32.totalorder %s20, 1
      %s234 = scalar_select %p233, %s20, 1
      %s235 = smul.addr %s234, 80
      %s236 = smul.addr %s235, 4
      %s237 = scalar_lea.vmem %s0, %s236
      %s238 = smul.u32 32, %s21
      %p239 = scmp.lt.s32.totalorder %s20, 1
      %s240 = scalar_select %p239, %s20, 1
      %p241 = scmp.lt.s32.totalorder %s238, 63
      %s242 = scalar_select %p241, %s238, 63
      %s243 = smul.addr %s240, 64
      %s244 = sadd.s32 %s242, %s243
      %s245 = smul.addr %s244, 8
      %s246 = scalar_lea.vmem %s5, %s245
      %s247 = smul.u32 32, %s21
      %s249 = smul.u32 %s21, 256
      %s250 = sshra.s32 %s249, 3
      %s251 = sand.u32 %s249, 7
      %s252 = smul.addr %s250, 4
      %s253 = scalar_lea.vmem %s237, %s252
      %v254 = vld [vmem:[%s253] sm:$0xf]
      %v255 = vld [vmem:[%s253 + $0x4] sm:$0xf]
      %v256 = vld [vmem:[%s253 + $0x8] sm:$0xf]
      %v257 = vld [vmem:[%s253 + $0xc] sm:$0xf]
      %v258 = vld [vmem:[%s253 + $0x10] sm:$0xf]
      %v259 = vld [vmem:[%s253 + $0x14] sm:$0xf]
      %v260 = vld [vmem:[%s253 + $0x18] sm:$0xf]
      %v261 = vld [vmem:[%s253 + $0x1c] sm:$0xf]
      %v262 = vld [vmem:[%s253 + $0x20] sm:$0xf]
      %v263 = vld [vmem:[%s253 + $0x24] sm:$0xf]
      %v264 = vld [vmem:[%s253 + $0x28] sm:$0xf]
      %v265 = vld [vmem:[%s253 + $0x2c] sm:$0xf]
      %v266 = vld [vmem:[%s253 + $0x30] sm:$0xf]
      %v267 = vld [vmem:[%s253 + $0x34] sm:$0xf]
      %v268 = vld [vmem:[%s253 + $0x38] sm:$0xf]
      %v269 = vld [vmem:[%s253 + $0x3c] sm:$0xf]
      %v270 = vld [vmem:[%s253 + $0x40] sm:$0xf]
      %v271 = vld [vmem:[%s253 + $0x44] sm:$0xf]
      %v272 = vld [vmem:[%s253 + $0x48] sm:$0xf]
      %v273 = vld [vmem:[%s253 + $0x4c] sm:$0xf]
      %v274 = vld [vmem:[%s253 + $0x50] sm:$0xf]
      %v275 = vld [vmem:[%s253 + $0x54] sm:$0xf]
      %v276 = vld [vmem:[%s253 + $0x58] sm:$0xf]
      %v277 = vld [vmem:[%s253 + $0x5c] sm:$0xf]
      %v278 = vld [vmem:[%s253 + $0x60] sm:$0xf]
      %v279 = vld [vmem:[%s253 + $0x64] sm:$0xf]
      %v280 = vld [vmem:[%s253 + $0x68] sm:$0xf]
      %v281 = vld [vmem:[%s253 + $0x6c] sm:$0xf]
      %v282 = vld [vmem:[%s253 + $0x70] sm:$0xf]
      %v283 = vld [vmem:[%s253 + $0x74] sm:$0xf]
      %v284 = vld [vmem:[%s253 + $0x78] sm:$0xf]
      %v285 = vld [vmem:[%s253 + $0x7c] sm:$0xf]
      %v286 = vld [vmem:[%s253 + $0x80] sm:$0xf]
      %v287 = vld [vmem:[%s253 + $0x84] sm:$0xf]
      %v288 = vld [vmem:[%s253 + $0x88] sm:$0xf]
      %v289 = vld [vmem:[%s253 + $0x8c] sm:$0xf]
      %v290 = vld [vmem:[%s253 + $0x90] sm:$0xf]
      %v291 = vld [vmem:[%s253 + $0x94] sm:$0xf]
      %v292 = vld [vmem:[%s253 + $0x98] sm:$0xf]
      %v293 = vld [vmem:[%s253 + $0x9c] sm:$0xf]
      %v294 = vld [vmem:[%s253 + $0xa0] sm:$0xf]
      %v295 = vld [vmem:[%s253 + $0xa4] sm:$0xf]
      %v296 = vld [vmem:[%s253 + $0xa8] sm:$0xf]
      %v297 = vld [vmem:[%s253 + $0xac] sm:$0xf]
      %v298 = vld [vmem:[%s253 + $0xb0] sm:$0xf]
      %v299 = vld [vmem:[%s253 + $0xb4] sm:$0xf]
      %v300 = vld [vmem:[%s253 + $0xb8] sm:$0xf]
      %v301 = vld [vmem:[%s253 + $0xbc] sm:$0xf]
      %v302 = vunpack.c.l.bf16 %v254
      %v303 = vunpack.c.l.bf16 %v255
      %v304 = vunpack.c.l.bf16 %v256
      %v305 = vunpack.c.l.bf16 %v257
      %v306 = vunpack.c.l.bf16 %v258
      %v307 = vunpack.c.l.bf16 %v259
      %v308 = vunpack.c.l.bf16 %v260
      %v309 = vunpack.c.l.bf16 %v261
      %v310 = vunpack.c.l.bf16 %v262
      %v311 = vunpack.c.l.bf16 %v263
      %v312 = vunpack.c.l.bf16 %v264
      %v313 = vunpack.c.l.bf16 %v265
      %v314 = vunpack.c.l.bf16 %v266
      %v315 = vunpack.c.l.bf16 %v267
      %v316 = vunpack.c.l.bf16 %v268
      %v317 = vunpack.c.l.bf16 %v269
      %v318 = vunpack.c.l.bf16 %v270
      %v319 = vunpack.c.l.bf16 %v271
      %v320 = vunpack.c.l.bf16 %v272
      %v321 = vunpack.c.l.bf16 %v273
      %v322 = vunpack.c.l.bf16 %v274
      %v323 = vunpack.c.l.bf16 %v275
      %v324 = vunpack.c.l.bf16 %v276
      %v325 = vunpack.c.l.bf16 %v277
      %v326 = vunpack.c.l.bf16 %v278
      %v327 = vunpack.c.l.bf16 %v279
      %v328 = vunpack.c.l.bf16 %v280
      %v329 = vunpack.c.l.bf16 %v281
      %v330 = vunpack.c.l.bf16 %v282
      %v331 = vunpack.c.l.bf16 %v283
      %v332 = vunpack.c.l.bf16 %v284
      %v333 = vunpack.c.l.bf16 %v285
      %v334 = vunpack.c.l.bf16 %v286
      %v335 = vunpack.c.l.bf16 %v287
      %v336 = vunpack.c.l.bf16 %v288
      %v337 = vunpack.c.l.bf16 %v289
      %v338 = vunpack.c.l.bf16 %v290
      %v339 = vunpack.c.l.bf16 %v291
      %v340 = vunpack.c.l.bf16 %v292
      %v341 = vunpack.c.l.bf16 %v293
      %v342 = vunpack.c.l.bf16 %v294
      %v343 = vunpack.c.l.bf16 %v295
      %v344 = vunpack.c.l.bf16 %v296
      %v345 = vunpack.c.l.bf16 %v297
      %v346 = vunpack.c.l.bf16 %v298
      %v347 = vunpack.c.l.bf16 %v299
      %v348 = vunpack.c.l.bf16 %v300
      %v349 = vunpack.c.l.bf16 %v301
      %v350 = vrot.slane %v302, 7
      %v351 = vrot.slane %v303, 7
      %v352 = vrot.slane %v304, 7
      %v353 = vrot.slane %v305, 7
      %v354 = vrot.slane %v306, 7
      %v355 = vrot.slane %v307, 7
      %v356 = vrot.slane %v308, 7
      %v357 = vrot.slane %v309, 7
      %v358 = vrot.slane %v310, 7
      %v359 = vrot.slane %v311, 7
      %v360 = vrot.slane %v312, 7
      %v361 = vrot.slane %v313, 7
      %v362 = vrot.slane %v314, 7
      %v363 = vrot.slane %v315, 7
      %v364 = vrot.slane %v316, 7
      %v365 = vrot.slane %v317, 7
      %v366 = vrot.slane %v318, 7
      %v367 = vrot.slane %v319, 7
      %v368 = vrot.slane %v320, 7
      %v369 = vrot.slane %v321, 7
      %v370 = vrot.slane %v322, 7
      %v371 = vrot.slane %v323, 7
      %v372 = vrot.slane %v324, 7
      %v373 = vrot.slane %v325, 7
      %v374 = vrot.slane %v326, 7
      %v375 = vrot.slane %v327, 7
      %v376 = vrot.slane %v328, 7
      %v377 = vrot.slane %v329, 7
      %v378 = vrot.slane %v330, 7
      %v379 = vrot.slane %v331, 7
      %v380 = vrot.slane %v332, 7
      %v381 = vrot.slane %v333, 7
      %v382 = vrot.slane %v334, 7
      %v383 = vrot.slane %v335, 7
      %v384 = vrot.slane %v336, 7
      %v385 = vrot.slane %v337, 7
      %v386 = vrot.slane %v338, 7
      %v387 = vrot.slane %v339, 7
      %v388 = vrot.slane %v340, 7
      %v389 = vrot.slane %v341, 7
      %v390 = vrot.slane %v349, 7
      %v391 = vlaneseq
      %v392 = vshrl.u32 %v391, 7
      %vm393 = vcmp.lt.s32.totalorder %v392, 1
      %v394 = vsel %vm393, %v388, %v389
      %v395 = vsel %vm393, %v387, %v388
      %v396 = vsel %vm393, %v386, %v387
      %v397 = vsel %vm393, %v385, %v386
      %v398 = vsel %vm393, %v384, %v385
      %v399 = vsel %vm393, %v383, %v384
      %v400 = vsel %vm393, %v382, %v383
      %v401 = vsel %vm393, %v381, %v382
      %v402 = vsel %vm393, %v380, %v381
      %v403 = vsel %vm393, %v379, %v380
      %v404 = vsel %vm393, %v378, %v379
      %v405 = vsel %vm393, %v377, %v378
      %v406 = vsel %vm393, %v376, %v377
      %v407 = vsel %vm393, %v375, %v376
      %v408 = vsel %vm393, %v374, %v375
      %v409 = vsel %vm393, %v373, %v374
      %v410 = vsel %vm393, %v372, %v373
      %v411 = vsel %vm393, %v371, %v372
      %v412 = vsel %vm393, %v370, %v371
      %v413 = vsel %vm393, %v369, %v370
      %v414 = vsel %vm393, %v368, %v369
      %v415 = vsel %vm393, %v367, %v368
      %v416 = vsel %vm393, %v366, %v367
      %v417 = vsel %vm393, %v365, %v366
      %v418 = vsel %vm393, %v364, %v365
      %v419 = vsel %vm393, %v363, %v364
      %v420 = vsel %vm393, %v362, %v363
      %v421 = vsel %vm393, %v361, %v362
      %v422 = vsel %vm393, %v360, %v361
      %v423 = vsel %vm393, %v359, %v360
      %v424 = vsel %vm393, %v358, %v359
      %v425 = vsel %vm393, %v357, %v358
      %v426 = vsel %vm393, %v356, %v357
      %v427 = vsel %vm393, %v355, %v356
      %v428 = vsel %vm393, %v354, %v355
      %v429 = vsel %vm393, %v353, %v354
      %v430 = vsel %vm393, %v352, %v353
      %v431 = vsel %vm393, %v351, %v352
      %v432 = vsel %vm393, %v350, %v351
      %v433 = vsel %vm393, %v390, %v350
      %v434 = vpack.c.bf16 %v432, %v433
      %v435 = vpack.c.bf16 %v430, %v431
      %v436 = vpack.c.bf16 %v428, %v429
      %v437 = vpack.c.bf16 %v426, %v427
      %v438 = vpack.c.bf16 %v424, %v425
      %v439 = vpack.c.bf16 %v422, %v423
      %v440 = vpack.c.bf16 %v420, %v421
      %v441 = vpack.c.bf16 %v418, %v419
      %v442 = vpack.c.bf16 %v416, %v417
      %v443 = vpack.c.bf16 %v414, %v415
      %v444 = vpack.c.bf16 %v412, %v413
      %v445 = vpack.c.bf16 %v410, %v411
      %v446 = vpack.c.bf16 %v408, %v409
      %v447 = vpack.c.bf16 %v406, %v407
      %v448 = vpack.c.bf16 %v404, %v405
      %v449 = vpack.c.bf16 %v402, %v403
      %v450 = vpack.c.bf16 %v400, %v401
      %v451 = vpack.c.bf16 %v398, %v399
      %v452 = vpack.c.bf16 %v396, %v397
      %v453 = vpack.c.bf16 %v394, %v395
      %v454 = vld [vmem:[%s1] sm:$0xf]
      %v455 = vld [vmem:[%s1 + $0x4] sm:$0xf]
      %v456 = vld [vmem:[%s1 + $0x8] sm:$0xf]
      %v457 = vld [vmem:[%s1 + $0xc] sm:$0xf]
      %v458 = vld [vmem:[%s1 + $0x10] sm:$0xf]
      %v459 = vld [vmem:[%s1 + $0x14] sm:$0xf]
      %v460 = vld [vmem:[%s1 + $0x18] sm:$0xf]
      %v461 = vld [vmem:[%s1 + $0x1c] sm:$0xf]
      %v462 = vld [vmem:[%s1 + $0x20] sm:$0xf]
      %v463 = vld [vmem:[%s1 + $0x24] sm:$0xf]
      %v464 = vld [vmem:[%s1 + $0x28] sm:$0xf]
      %v465 = vld [vmem:[%s1 + $0x2c] sm:$0xf]
      %v466 = vld [vmem:[%s1 + $0x30] sm:$0xf]
      %v467 = vld [vmem:[%s1 + $0x34] sm:$0xf]
      %v468 = vld [vmem:[%s1 + $0x38] sm:$0xf]
      %v469 = vld [vmem:[%s1 + $0x3c] sm:$0xf]
      %v486 = vunpack.c.l.b16 %v454
      %v487 = vunpack.c.l.b16 %v455
      %v488 = vunpack.c.l.b16 %v456
      %v489 = vunpack.c.l.b16 %v457
      %v490 = vunpack.c.l.b16 %v458
      %v491 = vunpack.c.l.b16 %v459
      %v492 = vunpack.c.l.b16 %v460
      %v493 = vunpack.c.l.b16 %v461
      %v494 = vunpack.c.l.b16 %v462
      %v495 = vunpack.c.l.b16 %v463
      %v496 = vunpack.c.l.b16 %v464
      %v497 = vunpack.c.l.b16 %v465
      %v498 = vunpack.c.l.b16 %v466
      %v499 = vunpack.c.l.b16 %v467
      %v500 = vunpack.c.l.b16 %v468
      %v501 = vunpack.c.l.b16 %v469
      %v502 = vpack.c.b16 %v487, %v486
      %v503 = vpack.c.b16 %v489, %v488
      %v504 = vpack.c.b16 %v491, %v490
      %v505 = vpack.c.b16 %v493, %v492
      %v506 = vpack.c.b16 %v495, %v494
      %v507 = vpack.c.b16 %v497, %v496
      %v508 = vpack.c.b16 %v499, %v498
      %v509 = vpack.c.b16 %v501, %v500
      %518 = vmatprep.subr.bf16.mxu0 0
      %519 = vmatpush1.bf16.msra.mxu0 %v509
      %520 = vmatprep.subr.bf16.mxu0 0
      %521 = vmatpush1.bf16.msra.mxu0 %v508
      %522 = vmatprep.subr.bf16.mxu0 0
      %523 = vmatpush1.bf16.msra.mxu0 %v507
      %524 = vmatprep.subr.bf16.mxu0 0
      %525 = vmatpush1.bf16.msra.mxu0 %v506
      %526 = vmatprep.subr.bf16.mxu0 0
      %527 = vmatpush1.bf16.msra.mxu0 %v505
      %528 = vmatprep.subr.bf16.mxu0 0
      %529 = vmatpush1.bf16.msra.mxu0 %v504
      %530 = vmatprep.subr.bf16.mxu0 0
      %531 = vmatpush1.bf16.msra.mxu0 %v503
      %532 = vmatprep.subr.bf16.mxu0 0
      %533 = vmatpush1.bf16.msra.mxu0 %v502
      %534 = vmatprep.subr.bf16.mxu0 0
      %535 = vmatpush2.bf16.msra.mxu0 0
      %536 = vmatprep.subr.bf16.mxu0 0
      %537 = vmatpush2.bf16.msra.mxu0 0
      %538 = vmatprep.subr.bf16.mxu0 0
      %539 = vmatpush2.bf16.msra.mxu0 0
      %540 = vmatprep.subr.bf16.mxu0 0
      %541 = vmatpush2.bf16.msra.mxu0 0
      %542 = vmatprep.subr.bf16.mxu0 0
      %543 = vmatpush2.bf16.msra.mxu0 0
      %544 = vmatprep.subr.bf16.mxu0 0
      %545 = vmatpush2.bf16.msra.mxu0 0
      %546 = vmatprep.subr.bf16.mxu0 0
      %547 = vmatpush2.bf16.msra.mxu0 0
      %548 = vmatprep.subr.bf16.mxu0 0
      %549 = vmatpush2.bf16.msra.mxu0 0
      %550 = vmatprep.mubr.bf16.mxu0 0
      %551 = vmatmul.mubr.bf16.gmra.mxu0 %v434
      %v552 = vpop.f32.mrf.mxu0
      %v553 = vadd.f32 0.0, %v552
      %v554 = vpop.f32.mrf.mxu0
      %v555 = vpop.f32.mrf.mxu0
      %v556 = vadd.f32 0.0, %v555
      %v557 = vpop.f32.mrf.mxu0
      %558 = vmatprep.mubr.bf16.mxu0 0
      %559 = vmatmul.mubr.bf16.gmra.mxu0 %v435
      %v560 = vpop.f32.mrf.mxu0
      %v561 = vadd.f32 0.0, %v560
      %v562 = vpop.f32.mrf.mxu0
      %v563 = vpop.f32.mrf.mxu0
      %v564 = vadd.f32 0.0, %v563
      %v565 = vpop.f32.mrf.mxu0
      %566 = vmatprep.mubr.bf16.mxu0 0
      %567 = vmatmul.mubr.bf16.gmra.mxu0 %v436
      %v568 = vpop.f32.mrf.mxu0
      %v569 = vadd.f32 0.0, %v568
      %v570 = vpop.f32.mrf.mxu0
      %v571 = vpop.f32.mrf.mxu0
      %v572 = vadd.f32 0.0, %v571
      %v573 = vpop.f32.mrf.mxu0
      %574 = vmatprep.mubr.bf16.mxu0 0
      %575 = vmatmul.mubr.bf16.gmra.mxu0 %v437
      %v576 = vpop.f32.mrf.mxu0
      %v577 = vadd.f32 0.0, %v576
      %v578 = vpop.f32.mrf.mxu0
      %v579 = vpop.f32.mrf.mxu0
      %v580 = vadd.f32 0.0, %v579
      %v581 = vpop.f32.mrf.mxu0
      %582 = vmatprep.mubr.bf16.mxu0 0
      %583 = vmatmul.mubr.bf16.gmra.mxu0 %v438
      %v584 = vpop.f32.mrf.mxu0
      %v585 = vadd.f32 0.0, %v584
      %v586 = vpop.f32.mrf.mxu0
      %v587 = vpop.f32.mrf.mxu0
      %v588 = vadd.f32 0.0, %v587
      %v589 = vpop.f32.mrf.mxu0
      %590 = vmatprep.mubr.bf16.mxu0 0
      %591 = vmatmul.mubr.bf16.gmra.mxu0 %v439
      %v592 = vpop.f32.mrf.mxu0
      %v593 = vadd.f32 0.0, %v592
      %v594 = vpop.f32.mrf.mxu0
      %v595 = vpop.f32.mrf.mxu0
      %v596 = vadd.f32 0.0, %v595
      %v597 = vpop.f32.mrf.mxu0
      %598 = vmatprep.mubr.bf16.mxu0 0
      %599 = vmatmul.mubr.bf16.gmra.mxu0 %v440
      %v600 = vpop.f32.mrf.mxu0
      %v601 = vadd.f32 0.0, %v600
      %v602 = vpop.f32.mrf.mxu0
      %v603 = vpop.f32.mrf.mxu0
      %v604 = vadd.f32 0.0, %v603
      %v605 = vpop.f32.mrf.mxu0
      %606 = vmatprep.mubr.bf16.mxu0 0
      %607 = vmatmul.mubr.bf16.gmra.mxu0 %v441
      %v608 = vpop.f32.mrf.mxu0
      %v609 = vadd.f32 0.0, %v608
      %v610 = vpop.f32.mrf.mxu0
      %v611 = vpop.f32.mrf.mxu0
      %v612 = vadd.f32 0.0, %v611
      %v613 = vpop.f32.mrf.mxu0
      %614 = vmatprep.mubr.bf16.mxu0 0
      %615 = vmatmul.mubr.bf16.gmra.mxu0 %v442
      %v616 = vpop.f32.mrf.mxu0
      %v617 = vadd.f32 0.0, %v616
      %v618 = vpop.f32.mrf.mxu0
      %v619 = vpop.f32.mrf.mxu0
      %v620 = vadd.f32 0.0, %v619
      %v621 = vpop.f32.mrf.mxu0
      %622 = vmatprep.mubr.bf16.mxu0 0
      %623 = vmatmul.mubr.bf16.gmra.mxu0 %v443
      %v624 = vpop.f32.mrf.mxu0
      %v625 = vadd.f32 0.0, %v624
      %v626 = vpop.f32.mrf.mxu0
      %v627 = vpop.f32.mrf.mxu0
      %v628 = vadd.f32 0.0, %v627
      %v629 = vpop.f32.mrf.mxu0
      %630 = vmatprep.mubr.bf16.mxu0 0
      %631 = vmatmul.mubr.bf16.gmra.mxu0 %v444
      %v632 = vpop.f32.mrf.mxu0
      %v633 = vadd.f32 0.0, %v632
      %v634 = vpop.f32.mrf.mxu0
      %v635 = vpop.f32.mrf.mxu0
      %v636 = vadd.f32 0.0, %v635
      %v637 = vpop.f32.mrf.mxu0
      %638 = vmatprep.mubr.bf16.mxu0 0
      %639 = vmatmul.mubr.bf16.gmra.mxu0 %v445
      %v640 = vpop.f32.mrf.mxu0
      %v641 = vadd.f32 0.0, %v640
      %v642 = vpop.f32.mrf.mxu0
      %v643 = vpop.f32.mrf.mxu0
      %v644 = vadd.f32 0.0, %v643
      %v645 = vpop.f32.mrf.mxu0
      %646 = vmatprep.mubr.bf16.mxu0 0
      %647 = vmatmul.mubr.bf16.gmra.mxu0 %v446
      %v648 = vpop.f32.mrf.mxu0
      %v649 = vadd.f32 0.0, %v648
      %v650 = vpop.f32.mrf.mxu0
      %v651 = vpop.f32.mrf.mxu0
      %v652 = vadd.f32 0.0, %v651
      %v653 = vpop.f32.mrf.mxu0
      %654 = vmatprep.mubr.bf16.mxu0 0
      %655 = vmatmul.mubr.bf16.gmra.mxu0 %v447
      %v656 = vpop.f32.mrf.mxu0
      %v657 = vadd.f32 0.0, %v656
      %v658 = vpop.f32.mrf.mxu0
      %v659 = vpop.f32.mrf.mxu0
      %v660 = vadd.f32 0.0, %v659
      %v661 = vpop.f32.mrf.mxu0
      %662 = vmatprep.mubr.bf16.mxu0 0
      %663 = vmatmul.mubr.bf16.gmra.mxu0 %v448
      %v664 = vpop.f32.mrf.mxu0
      %v665 = vadd.f32 0.0, %v664
      %v666 = vpop.f32.mrf.mxu0
      %v667 = vpop.f32.mrf.mxu0
      %v668 = vadd.f32 0.0, %v667
      %v669 = vpop.f32.mrf.mxu0
      %670 = vmatprep.mubr.bf16.mxu0 0
      %671 = vmatmul.mubr.bf16.gmra.mxu0 %v449
      %v672 = vpop.f32.mrf.mxu0
      %v673 = vadd.f32 0.0, %v672
      %v674 = vpop.f32.mrf.mxu0
      %v675 = vpop.f32.mrf.mxu0
      %v676 = vadd.f32 0.0, %v675
      %v677 = vpop.f32.mrf.mxu0
      %678 = vmatprep.mubr.bf16.mxu0 0
      %679 = vmatmul.mubr.bf16.gmra.mxu0 %v450
      %v680 = vpop.f32.mrf.mxu0
      %v681 = vadd.f32 0.0, %v680
      %v682 = vpop.f32.mrf.mxu0
      %v683 = vpop.f32.mrf.mxu0
      %v684 = vadd.f32 0.0, %v683
      %v685 = vpop.f32.mrf.mxu0
      %686 = vmatprep.mubr.bf16.mxu0 0
      %687 = vmatmul.mubr.bf16.gmra.mxu0 %v451
      %v688 = vpop.f32.mrf.mxu0
      %v689 = vadd.f32 0.0, %v688
      %v690 = vpop.f32.mrf.mxu0
      %v691 = vpop.f32.mrf.mxu0
      %v692 = vadd.f32 0.0, %v691
      %v693 = vpop.f32.mrf.mxu0
      %694 = vmatprep.mubr.bf16.mxu0 0
      %695 = vmatmul.mubr.bf16.gmra.mxu0 %v452
      %v696 = vpop.f32.mrf.mxu0
      %v697 = vadd.f32 0.0, %v696
      %v698 = vpop.f32.mrf.mxu0
      %v699 = vpop.f32.mrf.mxu0
      %v700 = vadd.f32 0.0, %v699
      %v701 = vpop.f32.mrf.mxu0
      %702 = vmatprep.mubr.bf16.mxu0 0
      %703 = vmatmul.mubr.bf16.gmra.mxu0 %v453
      %v704 = vpop.f32.mrf.mxu0
      %v705 = vadd.f32 0.0, %v704
      %v706 = vpop.f32.mrf.mxu0
      %v707 = vpop.f32.mrf.mxu0
      %v708 = vadd.f32 0.0, %v707
      %v709 = vpop.f32.mrf.mxu0
      %710 = vdwg.mxu0
      %711 = vst [vmem:[#allocation2] sm:$0xff] %v553
      %712 = vst [vmem:[#allocation2 + $0x8] sm:$0xff] %v556
      %713 = vst [vmem:[#allocation2 + $0x10] sm:$0xff] %v561
      %714 = vst [vmem:[#allocation2 + $0x18] sm:$0xff] %v564
      %715 = vst [vmem:[#allocation2 + $0x20] sm:$0xff] %v569
      %716 = vst [vmem:[#allocation2 + $0x28] sm:$0xff] %v572
      %717 = vst [vmem:[#allocation2 + $0x30] sm:$0xff] %v577
      %718 = vst [vmem:[#allocation2 + $0x38] sm:$0xff] %v580
      %719 = vst [vmem:[#allocation2 + $0x40] sm:$0xff] %v585
      %720 = vst [vmem:[#allocation2 + $0x48] sm:$0xff] %v588
      %721 = vst [vmem:[#allocation2 + $0x50] sm:$0xff] %v593
      %722 = vst [vmem:[#allocation2 + $0x58] sm:$0xff] %v596
      %723 = vst [vmem:[#allocation2 + $0x60] sm:$0xff] %v601
      %724 = vst [vmem:[#allocation2 + $0x68] sm:$0xff] %v604
      %725 = vst [vmem:[#allocation2 + $0x70] sm:$0xff] %v609
      %726 = vst [vmem:[#allocation2 + $0x78] sm:$0xff] %v612
      %727 = vst [vmem:[#allocation2 + $0x80] sm:$0xff] %v617
      %728 = vst [vmem:[#allocation2 + $0x88] sm:$0xff] %v620
      %729 = vst [vmem:[#allocation2 + $0x90] sm:$0xff] %v625
      %730 = vst [vmem:[#allocation2 + $0x98] sm:$0xff] %v628
      %731 = vst [vmem:[#allocation2 + $0xa0] sm:$0xff] %v633
      %732 = vst [vmem:[#allocation2 + $0xa8] sm:$0xff] %v636
      %733 = vst [vmem:[#allocation2 + $0xb0] sm:$0xff] %v641
      %734 = vst [vmem:[#allocation2 + $0xb8] sm:$0xff] %v644
      %735 = vst [vmem:[#allocation2 + $0xc0] sm:$0xff] %v649
      %736 = vst [vmem:[#allocation2 + $0xc8] sm:$0xff] %v652
      %737 = vst [vmem:[#allocation2 + $0xd0] sm:$0xff] %v657
      %738 = vst [vmem:[#allocation2 + $0xd8] sm:$0xff] %v660
      %739 = vst [vmem:[#allocation2 + $0xe0] sm:$0xff] %v665
      %740 = vst [vmem:[#allocation2 + $0xe8] sm:$0xff] %v668
      %741 = vst [vmem:[#allocation2 + $0xf0] sm:$0xff] %v673
      %742 = vst [vmem:[#allocation2 + $0xf8] sm:$0xff] %v676
      %743 = vst [vmem:[#allocation2 + $0x100] sm:$0xff] %v681
      %744 = vst [vmem:[#allocation2 + $0x108] sm:$0xff] %v684
      %745 = vst [vmem:[#allocation2 + $0x110] sm:$0xff] %v689
      %746 = vst [vmem:[#allocation2 + $0x118] sm:$0xff] %v692
      %747 = vst [vmem:[#allocation2 + $0x120] sm:$0xff] %v697
      %748 = vst [vmem:[#allocation2 + $0x128] sm:$0xff] %v700
      %749 = vst [vmem:[#allocation2 + $0x130] sm:$0xff] %v705
      %750 = vst [vmem:[#allocation2 + $0x138] sm:$0xff] %v708
      %v751 = vpack.c.bf16 %v303, %v302
      %v752 = vpack.c.bf16 %v305, %v304
      %v753 = vpack.c.bf16 %v307, %v306
      %v754 = vpack.c.bf16 %v309, %v308
      %v755 = vpack.c.bf16 %v311, %v310
      %v756 = vpack.c.bf16 %v313, %v312
      %v757 = vpack.c.bf16 %v315, %v314
      %v758 = vpack.c.bf16 %v317, %v316
      %v759 = vpack.c.bf16 %v319, %v318
      %v760 = vpack.c.bf16 %v321, %v320
      %v761 = vpack.c.bf16 %v323, %v322
      %v762 = vpack.c.bf16 %v325, %v324
      %v763 = vpack.c.bf16 %v327, %v326
      %v764 = vpack.c.bf16 %v329, %v328
      %v765 = vpack.c.bf16 %v331, %v330
      %v766 = vpack.c.bf16 %v333, %v332
      %v767 = vpack.c.bf16 %v335, %v334
      %v768 = vpack.c.bf16 %v337, %v336
      %v769 = vpack.c.bf16 %v339, %v338
      %v770 = vpack.c.bf16 %v341, %v340
      %s771 = scalar_lea.vmem %s1, 64
      %v772 = vld [vmem:[%s771] sm:$0xf]
      %v773 = vld [vmem:[%s771 + $0x4] sm:$0xf]
      %v774 = vld [vmem:[%s771 + $0x8] sm:$0xf]
      %v775 = vld [vmem:[%s771 + $0xc] sm:$0xf]
      %v776 = vld [vmem:[%s771 + $0x10] sm:$0xf]
      %v777 = vld [vmem:[%s771 + $0x14] sm:$0xf]
      %v778 = vld [vmem:[%s771 + $0x18] sm:$0xf]
      %v779 = vld [vmem:[%s771 + $0x1c] sm:$0xf]
      %v780 = vld [vmem:[%s771 + $0x20] sm:$0xf]
      %v781 = vld [vmem:[%s771 + $0x24] sm:$0xf]
      %v782 = vld [vmem:[%s771 + $0x28] sm:$0xf]
      %v783 = vld [vmem:[%s771 + $0x2c] sm:$0xf]
      %v784 = vld [vmem:[%s771 + $0x30] sm:$0xf]
      %v785 = vld [vmem:[%s771 + $0x34] sm:$0xf]
      %v786 = vld [vmem:[%s771 + $0x38] sm:$0xf]
      %v787 = vld [vmem:[%s771 + $0x3c] sm:$0xf]
      %v804 = vunpack.c.l.b16 %v772
      %v805 = vunpack.c.l.b16 %v773
      %v806 = vunpack.c.l.b16 %v774
      %v807 = vunpack.c.l.b16 %v775
      %v808 = vunpack.c.l.b16 %v776
      %v809 = vunpack.c.l.b16 %v777
      %v810 = vunpack.c.l.b16 %v778
      %v811 = vunpack.c.l.b16 %v779
      %v812 = vunpack.c.l.b16 %v780
      %v813 = vunpack.c.l.b16 %v781
      %v814 = vunpack.c.l.b16 %v782
      %v815 = vunpack.c.l.b16 %v783
      %v816 = vunpack.c.l.b16 %v784
      %v817 = vunpack.c.l.b16 %v785
      %v818 = vunpack.c.l.b16 %v786
      %v819 = vunpack.c.l.b16 %v787
      %v820 = vpack.c.b16 %v805, %v804
      %v821 = vpack.c.b16 %v807, %v806
      %v822 = vpack.c.b16 %v809, %v808
      %v823 = vpack.c.b16 %v811, %v810
      %v824 = vpack.c.b16 %v813, %v812
      %v825 = vpack.c.b16 %v815, %v814
      %v826 = vpack.c.b16 %v817, %v816
      %v827 = vpack.c.b16 %v819, %v818
      %836 = vmatprep.subr.bf16.mxu0 0
      %837 = vmatpush1.bf16.msra.mxu0 %v827
      %838 = vmatprep.subr.bf16.mxu0 0
      %839 = vmatpush1.bf16.msra.mxu0 %v826
      %840 = vmatprep.subr.bf16.mxu0 0
      %841 = vmatpush1.bf16.msra.mxu0 %v825
      %842 = vmatprep.subr.bf16.mxu0 0
      %843 = vmatpush1.bf16.msra.mxu0 %v824
      %844 = vmatprep.subr.bf16.mxu0 0
      %845 = vmatpush1.bf16.msra.mxu0 %v823
      %846 = vmatprep.subr.bf16.mxu0 0
      %847 = vmatpush1.bf16.msra.mxu0 %v822
      %848 = vmatprep.subr.bf16.mxu0 0
      %849 = vmatpush1.bf16.msra.mxu0 %v821
      %850 = vmatprep.subr.bf16.mxu0 0
      %851 = vmatpush1.bf16.msra.mxu0 %v820
      %852 = vmatprep.subr.bf16.mxu0 0
      %853 = vmatpush2.bf16.msra.mxu0 0
      %854 = vmatprep.subr.bf16.mxu0 0
      %855 = vmatpush2.bf16.msra.mxu0 0
      %856 = vmatprep.subr.bf16.mxu0 0
      %857 = vmatpush2.bf16.msra.mxu0 0
      %858 = vmatprep.subr.bf16.mxu0 0
      %859 = vmatpush2.bf16.msra.mxu0 0
      %860 = vmatprep.subr.bf16.mxu0 0
      %861 = vmatpush2.bf16.msra.mxu0 0
      %862 = vmatprep.subr.bf16.mxu0 0
      %863 = vmatpush2.bf16.msra.mxu0 0
      %864 = vmatprep.subr.bf16.mxu0 0
      %865 = vmatpush2.bf16.msra.mxu0 0
      %866 = vmatprep.subr.bf16.mxu0 0
      %867 = vmatpush2.bf16.msra.mxu0 0
      %868 = vmatprep.mubr.bf16.mxu0 0
      %869 = vmatmul.mubr.bf16.gmra.mxu0 %v751
      %v870 = vpop.f32.mrf.mxu0
      %v871 = vadd.f32 0.0, %v870
      %v872 = vpop.f32.mrf.mxu0
      %v873 = vpop.f32.mrf.mxu0
      %v874 = vadd.f32 0.0, %v873
      %v875 = vpop.f32.mrf.mxu0
      %876 = vmatprep.mubr.bf16.mxu0 0
      %877 = vmatmul.mubr.bf16.gmra.mxu0 %v752
      %v878 = vpop.f32.mrf.mxu0
      %v879 = vadd.f32 0.0, %v878
      %v880 = vpop.f32.mrf.mxu0
      %v881 = vpop.f32.mrf.mxu0
      %v882 = vadd.f32 0.0, %v881
      %v883 = vpop.f32.mrf.mxu0
      %884 = vmatprep.mubr.bf16.mxu0 0
      %885 = vmatmul.mubr.bf16.gmra.mxu0 %v753
      %v886 = vpop.f32.mrf.mxu0
      %v887 = vadd.f32 0.0, %v886
      %v888 = vpop.f32.mrf.mxu0
      %v889 = vpop.f32.mrf.mxu0
      %v890 = vadd.f32 0.0, %v889
      %v891 = vpop.f32.mrf.mxu0
      %892 = vmatprep.mubr.bf16.mxu0 0
      %893 = vmatmul.mubr.bf16.gmra.mxu0 %v754
      %v894 = vpop.f32.mrf.mxu0
      %v895 = vadd.f32 0.0, %v894
      %v896 = vpop.f32.mrf.mxu0
      %v897 = vpop.f32.mrf.mxu0
      %v898 = vadd.f32 0.0, %v897
      %v899 = vpop.f32.mrf.mxu0
      %900 = vmatprep.mubr.bf16.mxu0 0
      %901 = vmatmul.mubr.bf16.gmra.mxu0 %v755
      %v902 = vpop.f32.mrf.mxu0
      %v903 = vadd.f32 0.0, %v902
      %v904 = vpop.f32.mrf.mxu0
      %v905 = vpop.f32.mrf.mxu0
      %v906 = vadd.f32 0.0, %v905
      %v907 = vpop.f32.mrf.mxu0
      %908 = vmatprep.mubr.bf16.mxu0 0
      %909 = vmatmul.mubr.bf16.gmra.mxu0 %v756
      %v910 = vpop.f32.mrf.mxu0
      %v911 = vadd.f32 0.0, %v910
      %v912 = vpop.f32.mrf.mxu0
      %v913 = vpop.f32.mrf.mxu0
      %v914 = vadd.f32 0.0, %v913
      %v915 = vpop.f32.mrf.mxu0
      %916 = vmatprep.mubr.bf16.mxu0 0
      %917 = vmatmul.mubr.bf16.gmra.mxu0 %v757
      %v918 = vpop.f32.mrf.mxu0
      %v919 = vadd.f32 0.0, %v918
      %v920 = vpop.f32.mrf.mxu0
      %v921 = vpop.f32.mrf.mxu0
      %v922 = vadd.f32 0.0, %v921
      %v923 = vpop.f32.mrf.mxu0
      %924 = vmatprep.mubr.bf16.mxu0 0
      %925 = vmatmul.mubr.bf16.gmra.mxu0 %v758
      %v926 = vpop.f32.mrf.mxu0
      %v927 = vadd.f32 0.0, %v926
      %v928 = vpop.f32.mrf.mxu0
      %v929 = vpop.f32.mrf.mxu0
      %v930 = vadd.f32 0.0, %v929
      %v931 = vpop.f32.mrf.mxu0
      %932 = vmatprep.mubr.bf16.mxu0 0
      %933 = vmatmul.mubr.bf16.gmra.mxu0 %v759
      %v934 = vpop.f32.mrf.mxu0
      %v935 = vadd.f32 0.0, %v934
      %v936 = vpop.f32.mrf.mxu0
      %v937 = vpop.f32.mrf.mxu0
      %v938 = vadd.f32 0.0, %v937
      %v939 = vpop.f32.mrf.mxu0
      %940 = vmatprep.mubr.bf16.mxu0 0
      %941 = vmatmul.mubr.bf16.gmra.mxu0 %v760
      %v942 = vpop.f32.mrf.mxu0
      %v943 = vadd.f32 0.0, %v942
      %v944 = vpop.f32.mrf.mxu0
      %v945 = vpop.f32.mrf.mxu0
      %v946 = vadd.f32 0.0, %v945
      %v947 = vpop.f32.mrf.mxu0
      %948 = vmatprep.mubr.bf16.mxu0 0
      %949 = vmatmul.mubr.bf16.gmra.mxu0 %v761
      %v950 = vpop.f32.mrf.mxu0
      %v951 = vadd.f32 0.0, %v950
      %v952 = vpop.f32.mrf.mxu0
      %v953 = vpop.f32.mrf.mxu0
      %v954 = vadd.f32 0.0, %v953
      %v955 = vpop.f32.mrf.mxu0
      %956 = vmatprep.mubr.bf16.mxu0 0
      %957 = vmatmul.mubr.bf16.gmra.mxu0 %v762
      %v958 = vpop.f32.mrf.mxu0
      %v959 = vadd.f32 0.0, %v958
      %v960 = vpop.f32.mrf.mxu0
      %v961 = vpop.f32.mrf.mxu0
      %v962 = vadd.f32 0.0, %v961
      %v963 = vpop.f32.mrf.mxu0
      %964 = vmatprep.mubr.bf16.mxu0 0
      %965 = vmatmul.mubr.bf16.gmra.mxu0 %v763
      %v966 = vpop.f32.mrf.mxu0
      %v967 = vadd.f32 0.0, %v966
      %v968 = vpop.f32.mrf.mxu0
      %v969 = vpop.f32.mrf.mxu0
      %v970 = vadd.f32 0.0, %v969
      %v971 = vpop.f32.mrf.mxu0
      %972 = vmatprep.mubr.bf16.mxu0 0
      %973 = vmatmul.mubr.bf16.gmra.mxu0 %v764
      %v974 = vpop.f32.mrf.mxu0
      %v975 = vadd.f32 0.0, %v974
      %v976 = vpop.f32.mrf.mxu0
      %v977 = vpop.f32.mrf.mxu0
      %v978 = vadd.f32 0.0, %v977
      %v979 = vpop.f32.mrf.mxu0
      %980 = vmatprep.mubr.bf16.mxu0 0
      %981 = vmatmul.mubr.bf16.gmra.mxu0 %v765
      %v982 = vpop.f32.mrf.mxu0
      %v983 = vadd.f32 0.0, %v982
      %v984 = vpop.f32.mrf.mxu0
      %v985 = vpop.f32.mrf.mxu0
      %v986 = vadd.f32 0.0, %v985
      %v987 = vpop.f32.mrf.mxu0
      %988 = vmatprep.mubr.bf16.mxu0 0
      %989 = vmatmul.mubr.bf16.gmra.mxu0 %v766
      %v990 = vpop.f32.mrf.mxu0
      %v991 = vadd.f32 0.0, %v990
      %v992 = vpop.f32.mrf.mxu0
      %v993 = vpop.f32.mrf.mxu0
      %v994 = vadd.f32 0.0, %v993
      %v995 = vpop.f32.mrf.mxu0
      %996 = vmatprep.mubr.bf16.mxu0 0
      %997 = vmatmul.mubr.bf16.gmra.mxu0 %v767
      %v998 = vpop.f32.mrf.mxu0
      %v999 = vadd.f32 0.0, %v998
      %v1000 = vpop.f32.mrf.mxu0
      %v1001 = vpop.f32.mrf.mxu0
      %v1002 = vadd.f32 0.0, %v1001
      %v1003 = vpop.f32.mrf.mxu0
      %1004 = vmatprep.mubr.bf16.mxu0 0
      %1005 = vmatmul.mubr.bf16.gmra.mxu0 %v768
      %v1006 = vpop.f32.mrf.mxu0
      %v1007 = vadd.f32 0.0, %v1006
      %v1008 = vpop.f32.mrf.mxu0
      %v1009 = vpop.f32.mrf.mxu0
      %v1010 = vadd.f32 0.0, %v1009
      %v1011 = vpop.f32.mrf.mxu0
      %1012 = vmatprep.mubr.bf16.mxu0 0
      %1013 = vmatmul.mubr.bf16.gmra.mxu0 %v769
      %v1014 = vpop.f32.mrf.mxu0
      %v1015 = vadd.f32 0.0, %v1014
      %v1016 = vpop.f32.mrf.mxu0
      %v1017 = vpop.f32.mrf.mxu0
      %v1018 = vadd.f32 0.0, %v1017
      %v1019 = vpop.f32.mrf.mxu0
      %1020 = vmatprep.mubr.bf16.mxu0 0
      %1021 = vmatmul.mubr.bf16.gmra.mxu0 %v770
      %v1022 = vpop.f32.mrf.mxu0
      %v1023 = vadd.f32 0.0, %v1022
      %v1024 = vpop.f32.mrf.mxu0
      %v1025 = vpop.f32.mrf.mxu0
      %v1026 = vadd.f32 0.0, %v1025
      %v1027 = vpop.f32.mrf.mxu0
      %1028 = vdwg.mxu0
      %v1029 = vld [vmem:[#allocation2] sm:$0xff]
      %v1030 = vld [vmem:[#allocation2 + $0x8] sm:$0xff]
      %v1031 = vld [vmem:[#allocation2 + $0x10] sm:$0xff]
      %v1032 = vld [vmem:[#allocation2 + $0x18] sm:$0xff]
      %v1033 = vld [vmem:[#allocation2 + $0x20] sm:$0xff]
      %v1034 = vld [vmem:[#allocation2 + $0x28] sm:$0xff]
      %v1035 = vld [vmem:[#allocation2 + $0x30] sm:$0xff]
      %v1036 = vld [vmem:[#allocation2 + $0x38] sm:$0xff]
      %v1037 = vld [vmem:[#allocation2 + $0x40] sm:$0xff]
      %v1038 = vld [vmem:[#allocation2 + $0x48] sm:$0xff]
      %v1039 = vld [vmem:[#allocation2 + $0x50] sm:$0xff]
      %v1040 = vld [vmem:[#allocation2 + $0x58] sm:$0xff]
      %v1041 = vld [vmem:[#allocation2 + $0x60] sm:$0xff]
      %v1042 = vld [vmem:[#allocation2 + $0x68] sm:$0xff]
      %v1043 = vld [vmem:[#allocation2 + $0x70] sm:$0xff]
      %v1044 = vld [vmem:[#allocation2 + $0x78] sm:$0xff]
      %v1045 = vld [vmem:[#allocation2 + $0x80] sm:$0xff]
      %v1046 = vld [vmem:[#allocation2 + $0x88] sm:$0xff]
      %v1047 = vld [vmem:[#allocation2 + $0x90] sm:$0xff]
      %v1048 = vld [vmem:[#allocation2 + $0x98] sm:$0xff]
      %v1049 = vld [vmem:[#allocation2 + $0xa0] sm:$0xff]
      %v1050 = vld [vmem:[#allocation2 + $0xa8] sm:$0xff]
      %v1051 = vld [vmem:[#allocation2 + $0xb0] sm:$0xff]
      %v1052 = vld [vmem:[#allocation2 + $0xb8] sm:$0xff]
      %v1053 = vld [vmem:[#allocation2 + $0xc0] sm:$0xff]
      %v1054 = vld [vmem:[#allocation2 + $0xc8] sm:$0xff]
      %v1055 = vld [vmem:[#allocation2 + $0xd0] sm:$0xff]
      %v1056 = vld [vmem:[#allocation2 + $0xd8] sm:$0xff]
      %v1057 = vld [vmem:[#allocation2 + $0xe0] sm:$0xff]
      %v1058 = vld [vmem:[#allocation2 + $0xe8] sm:$0xff]
      %v1059 = vld [vmem:[#allocation2 + $0xf0] sm:$0xff]
      %v1060 = vld [vmem:[#allocation2 + $0xf8] sm:$0xff]
      %v1061 = vld [vmem:[#allocation2 + $0x100] sm:$0xff]
      %v1062 = vld [vmem:[#allocation2 + $0x108] sm:$0xff]
      %v1063 = vld [vmem:[#allocation2 + $0x110] sm:$0xff]
      %v1064 = vld [vmem:[#allocation2 + $0x118] sm:$0xff]
      %v1065 = vld [vmem:[#allocation2 + $0x120] sm:$0xff]
      %v1066 = vld [vmem:[#allocation2 + $0x128] sm:$0xff]
      %v1067 = vld [vmem:[#allocation2 + $0x130] sm:$0xff]
      %v1068 = vld [vmem:[#allocation2 + $0x138] sm:$0xff]
      %v1069 = vadd.f32 %v1029, %v871
      %v1070 = vadd.f32 %v1030, %v874
      %v1071 = vadd.f32 %v1031, %v879
      %v1072 = vadd.f32 %v1032, %v882
      %v1073 = vadd.f32 %v1033, %v887
      %v1074 = vadd.f32 %v1034, %v890
      %v1075 = vadd.f32 %v1035, %v895
      %v1076 = vadd.f32 %v1036, %v898
      %v1077 = vadd.f32 %v1037, %v903
      %v1078 = vadd.f32 %v1038, %v906
      %v1079 = vadd.f32 %v1039, %v911
      %v1080 = vadd.f32 %v1040, %v914
      %v1081 = vadd.f32 %v1041, %v919
      %v1082 = vadd.f32 %v1042, %v922
      %v1083 = vadd.f32 %v1043, %v927
      %v1084 = vadd.f32 %v1044, %v930
      %v1085 = vadd.f32 %v1045, %v935
      %v1086 = vadd.f32 %v1046, %v938
      %v1087 = vadd.f32 %v1047, %v943
      %v1088 = vadd.f32 %v1048, %v946
      %v1089 = vadd.f32 %v1049, %v951
      %v1090 = vadd.f32 %v1050, %v954
      %v1091 = vadd.f32 %v1051, %v959
      %v1092 = vadd.f32 %v1052, %v962
      %v1093 = vadd.f32 %v1053, %v967
      %v1094 = vadd.f32 %v1054, %v970
      %v1095 = vadd.f32 %v1055, %v975
      %v1096 = vadd.f32 %v1056, %v978
      %v1097 = vadd.f32 %v1057, %v983
      %v1098 = vadd.f32 %v1058, %v986
      %v1099 = vadd.f32 %v1059, %v991
      %v1100 = vadd.f32 %v1060, %v994
      %v1101 = vadd.f32 %v1061, %v999
      %v1102 = vadd.f32 %v1062, %v1002
      %v1103 = vadd.f32 %v1063, %v1007
      %v1104 = vadd.f32 %v1064, %v1010
      %v1105 = vadd.f32 %v1065, %v1015
      %v1106 = vadd.f32 %v1066, %v1018
      %v1107 = vadd.f32 %v1067, %v1023
      %v1108 = vadd.f32 %v1068, %v1026
      %1109 = vst [vmem:[#allocation2] sm:$0xff] %v1069
      %1110 = vst [vmem:[#allocation2 + $0x8] sm:$0xff] %v1070
      %1111 = vst [vmem:[#allocation2 + $0x10] sm:$0xff] %v1071
      %1112 = vst [vmem:[#allocation2 + $0x18] sm:$0xff] %v1072
      %1113 = vst [vmem:[#allocation2 + $0x20] sm:$0xff] %v1073
      %1114 = vst [vmem:[#allocation2 + $0x28] sm:$0xff] %v1074
      %1115 = vst [vmem:[#allocation2 + $0x30] sm:$0xff] %v1075
      %1116 = vst [vmem:[#allocation2 + $0x38] sm:$0xff] %v1076
      %1117 = vst [vmem:[#allocation2 + $0x40] sm:$0xff] %v1077
      %1118 = vst [vmem:[#allocation2 + $0x48] sm:$0xff] %v1078
      %1119 = vst [vmem:[#allocation2 + $0x50] sm:$0xff] %v1079
      %1120 = vst [vmem:[#allocation2 + $0x58] sm:$0xff] %v1080
      %1121 = vst [vmem:[#allocation2 + $0x60] sm:$0xff] %v1081
      %1122 = vst [vmem:[#allocation2 + $0x68] sm:$0xff] %v1082
      %1123 = vst [vmem:[#allocation2 + $0x70] sm:$0xff] %v1083
      %1124 = vst [vmem:[#allocation2 + $0x78] sm:$0xff] %v1084
      %1125 = vst [vmem:[#allocation2 + $0x80] sm:$0xff] %v1085
      %1126 = vst [vmem:[#allocation2 + $0x88] sm:$0xff] %v1086
      %1127 = vst [vmem:[#allocation2 + $0x90] sm:$0xff] %v1087
      %1128 = vst [vmem:[#allocation2 + $0x98] sm:$0xff] %v1088
      %1129 = vst [vmem:[#allocation2 + $0xa0] sm:$0xff] %v1089
      %1130 = vst [vmem:[#allocation2 + $0xa8] sm:$0xff] %v1090
      %1131 = vst [vmem:[#allocation2 + $0xb0] sm:$0xff] %v1091
      %1132 = vst [vmem:[#allocation2 + $0xb8] sm:$0xff] %v1092
      %1133 = vst [vmem:[#allocation2 + $0xc0] sm:$0xff] %v1093
      %1134 = vst [vmem:[#allocation2 + $0xc8] sm:$0xff] %v1094
      %1135 = vst [vmem:[#allocation2 + $0xd0] sm:$0xff] %v1095
      %1136 = vst [vmem:[#allocation2 + $0xd8] sm:$0xff] %v1096
      %1137 = vst [vmem:[#allocation2 + $0xe0] sm:$0xff] %v1097
      %1138 = vst [vmem:[#allocation2 + $0xe8] sm:$0xff] %v1098
      %1139 = vst [vmem:[#allocation2 + $0xf0] sm:$0xff] %v1099
      %1140 = vst [vmem:[#allocation2 + $0xf8] sm:$0xff] %v1100
      %1141 = vst [vmem:[#allocation2 + $0x100] sm:$0xff] %v1101
      %1142 = vst [vmem:[#allocation2 + $0x108] sm:$0xff] %v1102
      %1143 = vst [vmem:[#allocation2 + $0x110] sm:$0xff] %v1103
      %1144 = vst [vmem:[#allocation2 + $0x118] sm:$0xff] %v1104
      %1145 = vst [vmem:[#allocation2 + $0x120] sm:$0xff] %v1105
      %1146 = vst [vmem:[#allocation2 + $0x128] sm:$0xff] %v1106
      %1147 = vst [vmem:[#allocation2 + $0x130] sm:$0xff] %v1107
      %1148 = vst [vmem:[#allocation2 + $0x138] sm:$0xff] %v1108
      %v1149 = vrot.slane %v302, 1
      %v1150 = vrot.slane %v303, 1
      %v1151 = vrot.slane %v304, 1
      %v1152 = vrot.slane %v305, 1
      %v1153 = vrot.slane %v306, 1
      %v1154 = vrot.slane %v307, 1
      %v1155 = vrot.slane %v308, 1
      %v1156 = vrot.slane %v309, 1
      %v1157 = vrot.slane %v310, 1
      %v1158 = vrot.slane %v311, 1
      %v1159 = vrot.slane %v312, 1
      %v1160 = vrot.slane %v313, 1
      %v1161 = vrot.slane %v314, 1
      %v1162 = vrot.slane %v315, 1
      %v1163 = vrot.slane %v316, 1
      %v1164 = vrot.slane %v317, 1
      %v1165 = vrot.slane %v318, 1
      %v1166 = vrot.slane %v319, 1
      %v1167 = vrot.slane %v320, 1
      %v1168 = vrot.slane %v321, 1
      %v1169 = vrot.slane %v322, 1
      %v1170 = vrot.slane %v323, 1
      %v1171 = vrot.slane %v324, 1
      %v1172 = vrot.slane %v325, 1
      %v1173 = vrot.slane %v326, 1
      %v1174 = vrot.slane %v327, 1
      %v1175 = vrot.slane %v328, 1
      %v1176 = vrot.slane %v329, 1
      %v1177 = vrot.slane %v330, 1
      %v1178 = vrot.slane %v331, 1
      %v1179 = vrot.slane %v332, 1
      %v1180 = vrot.slane %v333, 1
      %v1181 = vrot.slane %v334, 1
      %v1182 = vrot.slane %v335, 1
      %v1183 = vrot.slane %v336, 1
      %v1184 = vrot.slane %v337, 1
      %v1185 = vrot.slane %v338, 1
      %v1186 = vrot.slane %v339, 1
      %v1187 = vrot.slane %v340, 1
      %v1188 = vrot.slane %v341, 1
      %v1189 = vrot.slane %v342, 1
      %vm1190 = vcmp.lt.s32.totalorder %v392, 7
      %v1191 = vsel %vm1190, %v1188, %v1189
      %v1192 = vsel %vm1190, %v1187, %v1188
      %v1193 = vsel %vm1190, %v1186, %v1187
      %v1194 = vsel %vm1190, %v1185, %v1186
      %v1195 = vsel %vm1190, %v1184, %v1185
      %v1196 = vsel %vm1190, %v1183, %v1184
      %v1197 = vsel %vm1190, %v1182, %v1183
      %v1198 = vsel %vm1190, %v1181, %v1182
      %v1199 = vsel %vm1190, %v1180, %v1181
      %v1200 = vsel %vm1190, %v1179, %v1180
      %v1201 = vsel %vm1190, %v1178, %v1179
      %v1202 = vsel %vm1190, %v1177, %v1178
      %v1203 = vsel %vm1190, %v1176, %v1177
      %v1204 = vsel %vm1190, %v1175, %v1176
      %v1205 = vsel %vm1190, %v1174, %v1175
      %v1206 = vsel %vm1190, %v1173, %v1174
      %v1207 = vsel %vm1190, %v1172, %v1173
      %v1208 = vsel %vm1190, %v1171, %v1172
      %v1209 = vsel %vm1190, %v1170, %v1171
      %v1210 = vsel %vm1190, %v1169, %v1170
      %v1211 = vsel %vm1190, %v1168, %v1169
      %v1212 = vsel %vm1190, %v1167, %v1168
      %v1213 = vsel %vm1190, %v1166, %v1167
      %v1214 = vsel %vm1190, %v1165, %v1166
      %v1215 = vsel %vm1190, %v1164, %v1165
      %v1216 = vsel %vm1190, %v1163, %v1164
      %v1217 = vsel %vm1190, %v1162, %v1163
      %v1218 = vsel %vm1190, %v1161, %v1162
      %v1219 = vsel %vm1190, %v1160, %v1161
      %v1220 = vsel %vm1190, %v1159, %v1160
      %v1221 = vsel %vm1190, %v1158, %v1159
      %v1222 = vsel %vm1190, %v1157, %v1158
      %v1223 = vsel %vm1190, %v1156, %v1157
      %v1224 = vsel %vm1190, %v1155, %v1156
      %v1225 = vsel %vm1190, %v1154, %v1155
      %v1226 = vsel %vm1190, %v1153, %v1154
      %v1227 = vsel %vm1190, %v1152, %v1153
      %v1228 = vsel %vm1190, %v1151, %v1152
      %v1229 = vsel %vm1190, %v1150, %v1151
      %v1230 = vsel %vm1190, %v1149, %v1150
      %v1231 = vpack.c.bf16 %v1229, %v1230
      %v1232 = vpack.c.bf16 %v1227, %v1228
      %v1233 = vpack.c.bf16 %v1225, %v1226
      %v1234 = vpack.c.bf16 %v1223, %v1224
      %v1235 = vpack.c.bf16 %v1221, %v1222
      %v1236 = vpack.c.bf16 %v1219, %v1220
      %v1237 = vpack.c.bf16 %v1217, %v1218
      %v1238 = vpack.c.bf16 %v1215, %v1216
      %v1239 = vpack.c.bf16 %v1213, %v1214
      %v1240 = vpack.c.bf16 %v1211, %v1212
      %v1241 = vpack.c.bf16 %v1209, %v1210
      %v1242 = vpack.c.bf16 %v1207, %v1208
      %v1243 = vpack.c.bf16 %v1205, %v1206
      %v1244 = vpack.c.bf16 %v1203, %v1204
      %v1245 = vpack.c.bf16 %v1201, %v1202
      %v1246 = vpack.c.bf16 %v1199, %v1200
      %v1247 = vpack.c.bf16 %v1197, %v1198
      %v1248 = vpack.c.bf16 %v1195, %v1196
      %v1249 = vpack.c.bf16 %v1193, %v1194
      %v1250 = vpack.c.bf16 %v1191, %v1192
      %s1251 = scalar_lea.vmem %s1, 128
      %v1252 = vld [vmem:[%s1251] sm:$0xf]
      %v1253 = vld [vmem:[%s1251 + $0x4] sm:$0xf]
      %v1254 = vld [vmem:[%s1251 + $0x8] sm:$0xf]
      %v1255 = vld [vmem:[%s1251 + $0xc] sm:$0xf]
      %v1256 = vld [vmem:[%s1251 + $0x10] sm:$0xf]
      %v1257 = vld [vmem:[%s1251 + $0x14] sm:$0xf]
      %v1258 = vld [vmem:[%s1251 + $0x18] sm:$0xf]
      %v1259 = vld [vmem:[%s1251 + $0x1c] sm:$0xf]
      %v1260 = vld [vmem:[%s1251 + $0x20] sm:$0xf]
      %v1261 = vld [vmem:[%s1251 + $0x24] sm:$0xf]
      %v1262 = vld [vmem:[%s1251 + $0x28] sm:$0xf]
      %v1263 = vld [vmem:[%s1251 + $0x2c] sm:$0xf]
      %v1264 = vld [vmem:[%s1251 + $0x30] sm:$0xf]
      %v1265 = vld [vmem:[%s1251 + $0x34] sm:$0xf]
      %v1266 = vld [vmem:[%s1251 + $0x38] sm:$0xf]
      %v1267 = vld [vmem:[%s1251 + $0x3c] sm:$0xf]
      %v1284 = vunpack.c.l.b16 %v1252
      %v1285 = vunpack.c.l.b16 %v1253
      %v1286 = vunpack.c.l.b16 %v1254
      %v1287 = vunpack.c.l.b16 %v1255
      %v1288 = vunpack.c.l.b16 %v1256
      %v1289 = vunpack.c.l.b16 %v1257
      %v1290 = vunpack.c.l.b16 %v1258
      %v1291 = vunpack.c.l.b16 %v1259
      %v1292 = vunpack.c.l.b16 %v1260
      %v1293 = vunpack.c.l.b16 %v1261
      %v1294 = vunpack.c.l.b16 %v1262
      %v1295 = vunpack.c.l.b16 %v1263
      %v1296 = vunpack.c.l.b16 %v1264
      %v1297 = vunpack.c.l.b16 %v1265
      %v1298 = vunpack.c.l.b16 %v1266
      %v1299 = vunpack.c.l.b16 %v1267
      %v1300 = vpack.c.b16 %v1285, %v1284
      %v1301 = vpack.c.b16 %v1287, %v1286
      %v1302 = vpack.c.b16 %v1289, %v1288
      %v1303 = vpack.c.b16 %v1291, %v1290
      %v1304 = vpack.c.b16 %v1293, %v1292
      %v1305 = vpack.c.b16 %v1295, %v1294
      %v1306 = vpack.c.b16 %v1297, %v1296
      %v1307 = vpack.c.b16 %v1299, %v1298
      %1316 = vmatprep.subr.bf16.mxu0 0
      %1317 = vmatpush1.bf16.msra.mxu0 %v1307
      %1318 = vmatprep.subr.bf16.mxu0 0
      %1319 = vmatpush1.bf16.msra.mxu0 %v1306
      %1320 = vmatprep.subr.bf16.mxu0 0
      %1321 = vmatpush1.bf16.msra.mxu0 %v1305
      %1322 = vmatprep.subr.bf16.mxu0 0
      %1323 = vmatpush1.bf16.msra.mxu0 %v1304
      %1324 = vmatprep.subr.bf16.mxu0 0
      %1325 = vmatpush1.bf16.msra.mxu0 %v1303
      %1326 = vmatprep.subr.bf16.mxu0 0
      %1327 = vmatpush1.bf16.msra.mxu0 %v1302
      %1328 = vmatprep.subr.bf16.mxu0 0
      %1329 = vmatpush1.bf16.msra.mxu0 %v1301
      %1330 = vmatprep.subr.bf16.mxu0 0
      %1331 = vmatpush1.bf16.msra.mxu0 %v1300
      %1332 = vmatprep.subr.bf16.mxu0 0
      %1333 = vmatpush2.bf16.msra.mxu0 0
      %1334 = vmatprep.subr.bf16.mxu0 0
      %1335 = vmatpush2.bf16.msra.mxu0 0
      %1336 = vmatprep.subr.bf16.mxu0 0
      %1337 = vmatpush2.bf16.msra.mxu0 0
      %1338 = vmatprep.subr.bf16.mxu0 0
      %1339 = vmatpush2.bf16.msra.mxu0 0
      %1340 = vmatprep.subr.bf16.mxu0 0
      %1341 = vmatpush2.bf16.msra.mxu0 0
      %1342 = vmatprep.subr.bf16.mxu0 0
      %1343 = vmatpush2.bf16.msra.mxu0 0
      %1344 = vmatprep.subr.bf16.mxu0 0
      %1345 = vmatpush2.bf16.msra.mxu0 0
      %1346 = vmatprep.subr.bf16.mxu0 0
      %1347 = vmatpush2.bf16.msra.mxu0 0
      %1348 = vmatprep.mubr.bf16.mxu0 0
      %1349 = vmatmul.mubr.bf16.gmra.mxu0 %v1231
      %v1350 = vpop.f32.mrf.mxu0
      %v1351 = vadd.f32 0.0, %v1350
      %v1352 = vpop.f32.mrf.mxu0
      %v1353 = vpop.f32.mrf.mxu0
      %v1354 = vadd.f32 0.0, %v1353
      %v1355 = vpop.f32.mrf.mxu0
      %1356 = vmatprep.mubr.bf16.mxu0 0
      %1357 = vmatmul.mubr.bf16.gmra.mxu0 %v1232
      %v1358 = vpop.f32.mrf.mxu0
      %v1359 = vadd.f32 0.0, %v1358
      %v1360 = vpop.f32.mrf.mxu0
      %v1361 = vpop.f32.mrf.mxu0
      %v1362 = vadd.f32 0.0, %v1361
      %v1363 = vpop.f32.mrf.mxu0
      %1364 = vmatprep.mubr.bf16.mxu0 0
      %1365 = vmatmul.mubr.bf16.gmra.mxu0 %v1233
      %v1366 = vpop.f32.mrf.mxu0
      %v1367 = vadd.f32 0.0, %v1366
      %v1368 = vpop.f32.mrf.mxu0
      %v1369 = vpop.f32.mrf.mxu0
      %v1370 = vadd.f32 0.0, %v1369
      %v1371 = vpop.f32.mrf.mxu0
      %1372 = vmatprep.mubr.bf16.mxu0 0
      %1373 = vmatmul.mubr.bf16.gmra.mxu0 %v1234
      %v1374 = vpop.f32.mrf.mxu0
      %v1375 = vadd.f32 0.0, %v1374
      %v1376 = vpop.f32.mrf.mxu0
      %v1377 = vpop.f32.mrf.mxu0
      %v1378 = vadd.f32 0.0, %v1377
      %v1379 = vpop.f32.mrf.mxu0
      %1380 = vmatprep.mubr.bf16.mxu0 0
      %1381 = vmatmul.mubr.bf16.gmra.mxu0 %v1235
      %v1382 = vpop.f32.mrf.mxu0
      %v1383 = vadd.f32 0.0, %v1382
      %v1384 = vpop.f32.mrf.mxu0
      %v1385 = vpop.f32.mrf.mxu0
      %v1386 = vadd.f32 0.0, %v1385
      %v1387 = vpop.f32.mrf.mxu0
      %1388 = vmatprep.mubr.bf16.mxu0 0
      %1389 = vmatmul.mubr.bf16.gmra.mxu0 %v1236
      %v1390 = vpop.f32.mrf.mxu0
      %v1391 = vadd.f32 0.0, %v1390
      %v1392 = vpop.f32.mrf.mxu0
      %v1393 = vpop.f32.mrf.mxu0
      %v1394 = vadd.f32 0.0, %v1393
      %v1395 = vpop.f32.mrf.mxu0
      %1396 = vmatprep.mubr.bf16.mxu0 0
      %1397 = vmatmul.mubr.bf16.gmra.mxu0 %v1237
      %v1398 = vpop.f32.mrf.mxu0
      %v1399 = vadd.f32 0.0, %v1398
      %v1400 = vpop.f32.mrf.mxu0
      %v1401 = vpop.f32.mrf.mxu0
      %v1402 = vadd.f32 0.0, %v1401
      %v1403 = vpop.f32.mrf.mxu0
      %1404 = vmatprep.mubr.bf16.mxu0 0
      %1405 = vmatmul.mubr.bf16.gmra.mxu0 %v1238
      %v1406 = vpop.f32.mrf.mxu0
      %v1407 = vadd.f32 0.0, %v1406
      %v1408 = vpop.f32.mrf.mxu0
      %v1409 = vpop.f32.mrf.mxu0
      %v1410 = vadd.f32 0.0, %v1409
      %v1411 = vpop.f32.mrf.mxu0
      %1412 = vmatprep.mubr.bf16.mxu0 0
      %1413 = vmatmul.mubr.bf16.gmra.mxu0 %v1239
      %v1414 = vpop.f32.mrf.mxu0
      %v1415 = vadd.f32 0.0, %v1414
      %v1416 = vpop.f32.mrf.mxu0
      %v1417 = vpop.f32.mrf.mxu0
      %v1418 = vadd.f32 0.0, %v1417
      %v1419 = vpop.f32.mrf.mxu0
      %1420 = vmatprep.mubr.bf16.mxu0 0
      %1421 = vmatmul.mubr.bf16.gmra.mxu0 %v1240
      %v1422 = vpop.f32.mrf.mxu0
      %v1423 = vadd.f32 0.0, %v1422
      %v1424 = vpop.f32.mrf.mxu0
      %v1425 = vpop.f32.mrf.mxu0
      %v1426 = vadd.f32 0.0, %v1425
      %v1427 = vpop.f32.mrf.mxu0
      %1428 = vmatprep.mubr.bf16.mxu0 0
      %1429 = vmatmul.mubr.bf16.gmra.mxu0 %v1241
      %v1430 = vpop.f32.mrf.mxu0
      %v1431 = vadd.f32 0.0, %v1430
      %v1432 = vpop.f32.mrf.mxu0
      %v1433 = vpop.f32.mrf.mxu0
      %v1434 = vadd.f32 0.0, %v1433
      %v1435 = vpop.f32.mrf.mxu0
      %1436 = vmatprep.mubr.bf16.mxu0 0
      %1437 = vmatmul.mubr.bf16.gmra.mxu0 %v1242
      %v1438 = vpop.f32.mrf.mxu0
      %v1439 = vadd.f32 0.0, %v1438
      %v1440 = vpop.f32.mrf.mxu0
      %v1441 = vpop.f32.mrf.mxu0
      %v1442 = vadd.f32 0.0, %v1441
      %v1443 = vpop.f32.mrf.mxu0
      %1444 = vmatprep.mubr.bf16.mxu0 0
      %1445 = vmatmul.mubr.bf16.gmra.mxu0 %v1243
      %v1446 = vpop.f32.mrf.mxu0
      %v1447 = vadd.f32 0.0, %v1446
      %v1448 = vpop.f32.mrf.mxu0
      %v1449 = vpop.f32.mrf.mxu0
      %v1450 = vadd.f32 0.0, %v1449
      %v1451 = vpop.f32.mrf.mxu0
      %1452 = vmatprep.mubr.bf16.mxu0 0
      %1453 = vmatmul.mubr.bf16.gmra.mxu0 %v1244
      %v1454 = vpop.f32.mrf.mxu0
      %v1455 = vadd.f32 0.0, %v1454
      %v1456 = vpop.f32.mrf.mxu0
      %v1457 = vpop.f32.mrf.mxu0
      %v1458 = vadd.f32 0.0, %v1457
      %v1459 = vpop.f32.mrf.mxu0
      %1460 = vmatprep.mubr.bf16.mxu0 0
      %1461 = vmatmul.mubr.bf16.gmra.mxu0 %v1245
      %v1462 = vpop.f32.mrf.mxu0
      %v1463 = vadd.f32 0.0, %v1462
      %v1464 = vpop.f32.mrf.mxu0
      %v1465 = vpop.f32.mrf.mxu0
      %v1466 = vadd.f32 0.0, %v1465
      %v1467 = vpop.f32.mrf.mxu0
      %1468 = vmatprep.mubr.bf16.mxu0 0
      %1469 = vmatmul.mubr.bf16.gmra.mxu0 %v1246
      %v1470 = vpop.f32.mrf.mxu0
      %v1471 = vadd.f32 0.0, %v1470
      %v1472 = vpop.f32.mrf.mxu0
      %v1473 = vpop.f32.mrf.mxu0
      %v1474 = vadd.f32 0.0, %v1473
      %v1475 = vpop.f32.mrf.mxu0
      %1476 = vmatprep.mubr.bf16.mxu0 0
      %1477 = vmatmul.mubr.bf16.gmra.mxu0 %v1247
      %v1478 = vpop.f32.mrf.mxu0
      %v1479 = vadd.f32 0.0, %v1478
      %v1480 = vpop.f32.mrf.mxu0
      %v1481 = vpop.f32.mrf.mxu0
      %v1482 = vadd.f32 0.0, %v1481
      %v1483 = vpop.f32.mrf.mxu0
      %1484 = vmatprep.mubr.bf16.mxu0 0
      %1485 = vmatmul.mubr.bf16.gmra.mxu0 %v1248
      %v1486 = vpop.f32.mrf.mxu0
      %v1487 = vadd.f32 0.0, %v1486
      %v1488 = vpop.f32.mrf.mxu0
      %v1489 = vpop.f32.mrf.mxu0
      %v1490 = vadd.f32 0.0, %v1489
      %v1491 = vpop.f32.mrf.mxu0
      %1492 = vmatprep.mubr.bf16.mxu0 0
      %1493 = vmatmul.mubr.bf16.gmra.mxu0 %v1249
      %v1494 = vpop.f32.mrf.mxu0
      %v1495 = vadd.f32 0.0, %v1494
      %v1496 = vpop.f32.mrf.mxu0
      %v1497 = vpop.f32.mrf.mxu0
      %v1498 = vadd.f32 0.0, %v1497
      %v1499 = vpop.f32.mrf.mxu0
      %1500 = vmatprep.mubr.bf16.mxu0 0
      %1501 = vmatmul.mubr.bf16.gmra.mxu0 %v1250
      %v1502 = vpop.f32.mrf.mxu0
      %v1503 = vadd.f32 0.0, %v1502
      %v1504 = vpop.f32.mrf.mxu0
      %v1505 = vpop.f32.mrf.mxu0
      %v1506 = vadd.f32 0.0, %v1505
      %v1507 = vpop.f32.mrf.mxu0
      %1508 = vdwg.mxu0
      %v1509 = vld [vmem:[#allocation2] sm:$0xff]
      %v1510 = vld [vmem:[#allocation2 + $0x8] sm:$0xff]
      %v1511 = vld [vmem:[#allocation2 + $0x10] sm:$0xff]
      %v1512 = vld [vmem:[#allocation2 + $0x18] sm:$0xff]
      %v1513 = vld [vmem:[#allocation2 + $0x20] sm:$0xff]
      %v1514 = vld [vmem:[#allocation2 + $0x28] sm:$0xff]
      %v1515 = vld [vmem:[#allocation2 + $0x30] sm:$0xff]
      %v1516 = vld [vmem:[#allocation2 + $0x38] sm:$0xff]
      %v1517 = vld [vmem:[#allocation2 + $0x40] sm:$0xff]
      %v1518 = vld [vmem:[#allocation2 + $0x48] sm:$0xff]
      %v1519 = vld [vmem:[#allocation2 + $0x50] sm:$0xff]
      %v1520 = vld [vmem:[#allocation2 + $0x58] sm:$0xff]
      %v1521 = vld [vmem:[#allocation2 + $0x60] sm:$0xff]
      %v1522 = vld [vmem:[#allocation2 + $0x68] sm:$0xff]
      %v1523 = vld [vmem:[#allocation2 + $0x70] sm:$0xff]
      %v1524 = vld [vmem:[#allocation2 + $0x78] sm:$0xff]
      %v1525 = vld [vmem:[#allocation2 + $0x80] sm:$0xff]
      %v1526 = vld [vmem:[#allocation2 + $0x88] sm:$0xff]
      %v1527 = vld [vmem:[#allocation2 + $0x90] sm:$0xff]
      %v1528 = vld [vmem:[#allocation2 + $0x98] sm:$0xff]
      %v1529 = vld [vmem:[#allocation2 + $0xa0] sm:$0xff]
      %v1530 = vld [vmem:[#allocation2 + $0xa8] sm:$0xff]
      %v1531 = vld [vmem:[#allocation2 + $0xb0] sm:$0xff]
      %v1532 = vld [vmem:[#allocation2 + $0xb8] sm:$0xff]
      %v1533 = vld [vmem:[#allocation2 + $0xc0] sm:$0xff]
      %v1534 = vld [vmem:[#allocation2 + $0xc8] sm:$0xff]
      %v1535 = vld [vmem:[#allocation2 + $0xd0] sm:$0xff]
      %v1536 = vld [vmem:[#allocation2 + $0xd8] sm:$0xff]
      %v1537 = vld [vmem:[#allocation2 + $0xe0] sm:$0xff]
      %v1538 = vld [vmem:[#allocation2 + $0xe8] sm:$0xff]
      %v1539 = vld [vmem:[#allocation2 + $0xf0] sm:$0xff]
      %v1540 = vld [vmem:[#allocation2 + $0xf8] sm:$0xff]
      %v1541 = vld [vmem:[#allocation2 + $0x100] sm:$0xff]
      %v1542 = vld [vmem:[#allocation2 + $0x108] sm:$0xff]
      %v1543 = vld [vmem:[#allocation2 + $0x110] sm:$0xff]
      %v1544 = vld [vmem:[#allocation2 + $0x118] sm:$0xff]
      %v1545 = vld [vmem:[#allocation2 + $0x120] sm:$0xff]
      %v1546 = vld [vmem:[#allocation2 + $0x128] sm:$0xff]
      %v1547 = vld [vmem:[#allocation2 + $0x130] sm:$0xff]
      %v1548 = vld [vmem:[#allocation2 + $0x138] sm:$0xff]
      %v1549 = vadd.f32 %v1509, %v1351
      %v1550 = vadd.f32 %v1510, %v1354
      %v1551 = vadd.f32 %v1511, %v1359
      %v1552 = vadd.f32 %v1512, %v1362
      %v1553 = vadd.f32 %v1513, %v1367
      %v1554 = vadd.f32 %v1514, %v1370
      %v1555 = vadd.f32 %v1515, %v1375
      %v1556 = vadd.f32 %v1516, %v1378
      %v1557 = vadd.f32 %v1517, %v1383
      %v1558 = vadd.f32 %v1518, %v1386
      %v1559 = vadd.f32 %v1519, %v1391
      %v1560 = vadd.f32 %v1520, %v1394
      %v1561 = vadd.f32 %v1521, %v1399
      %v1562 = vadd.f32 %v1522, %v1402
      %v1563 = vadd.f32 %v1523, %v1407
      %v1564 = vadd.f32 %v1524, %v1410
      %v1565 = vadd.f32 %v1525, %v1415
      %v1566 = vadd.f32 %v1526, %v1418
      %v1567 = vadd.f32 %v1527, %v1423
      %v1568 = vadd.f32 %v1528, %v1426
      %v1569 = vadd.f32 %v1529, %v1431
      %v1570 = vadd.f32 %v1530, %v1434
      %v1571 = vadd.f32 %v1531, %v1439
      %v1572 = vadd.f32 %v1532, %v1442
      %v1573 = vadd.f32 %v1533, %v1447
      %v1574 = vadd.f32 %v1534, %v1450
      %v1575 = vadd.f32 %v1535, %v1455
      %v1576 = vadd.f32 %v1536, %v1458
      %v1577 = vadd.f32 %v1537, %v1463
      %v1578 = vadd.f32 %v1538, %v1466
      %v1579 = vadd.f32 %v1539, %v1471
      %v1580 = vadd.f32 %v1540, %v1474
      %v1581 = vadd.f32 %v1541, %v1479
      %v1582 = vadd.f32 %v1542, %v1482
      %v1583 = vadd.f32 %v1543, %v1487
      %v1584 = vadd.f32 %v1544, %v1490
      %v1585 = vadd.f32 %v1545, %v1495
      %v1586 = vadd.f32 %v1546, %v1498
      %v1587 = vadd.f32 %v1547, %v1503
      %v1588 = vadd.f32 %v1548, %v1506
      %1589 = vst [vmem:[#allocation2] sm:$0xff] %v1549
      %1590 = vst [vmem:[#allocation2 + $0x8] sm:$0xff] %v1550
      %1591 = vst [vmem:[#allocation2 + $0x10] sm:$0xff] %v1551
      %1592 = vst [vmem:[#allocation2 + $0x18] sm:$0xff] %v1552
      %1593 = vst [vmem:[#allocation2 + $0x20] sm:$0xff] %v1553
      %1594 = vst [vmem:[#allocation2 + $0x28] sm:$0xff] %v1554
      %1595 = vst [vmem:[#allocation2 + $0x30] sm:$0xff] %v1555
      %1596 = vst [vmem:[#allocation2 + $0x38] sm:$0xff] %v1556
      %1597 = vst [vmem:[#allocation2 + $0x40] sm:$0xff] %v1557
      %1598 = vst [vmem:[#allocation2 + $0x48] sm:$0xff] %v1558
      %1599 = vst [vmem:[#allocation2 + $0x50] sm:$0xff] %v1559
      %1600 = vst [vmem:[#allocation2 + $0x58] sm:$0xff] %v1560
      %1601 = vst [vmem:[#allocation2 + $0x60] sm:$0xff] %v1561
      %1602 = vst [vmem:[#allocation2 + $0x68] sm:$0xff] %v1562
      %1603 = vst [vmem:[#allocation2 + $0x70] sm:$0xff] %v1563
      %1604 = vst [vmem:[#allocation2 + $0x78] sm:$0xff] %v1564
      %1605 = vst [vmem:[#allocation2 + $0x80] sm:$0xff] %v1565
      %1606 = vst [vmem:[#allocation2 + $0x88] sm:$0xff] %v1566
      %1607 = vst [vmem:[#allocation2 + $0x90] sm:$0xff] %v1567
      %1608 = vst [vmem:[#allocation2 + $0x98] sm:$0xff] %v1568
      %1609 = vst [vmem:[#allocation2 + $0xa0] sm:$0xff] %v1569
      %1610 = vst [vmem:[#allocation2 + $0xa8] sm:$0xff] %v1570
      %1611 = vst [vmem:[#allocation2 + $0xb0] sm:$0xff] %v1571
      %1612 = vst [vmem:[#allocation2 + $0xb8] sm:$0xff] %v1572
      %1613 = vst [vmem:[#allocation2 + $0xc0] sm:$0xff] %v1573
      %1614 = vst [vmem:[#allocation2 + $0xc8] sm:$0xff] %v1574
      %1615 = vst [vmem:[#allocation2 + $0xd0] sm:$0xff] %v1575
      %1616 = vst [vmem:[#allocation2 + $0xd8] sm:$0xff] %v1576
      %1617 = vst [vmem:[#allocation2 + $0xe0] sm:$0xff] %v1577
      %1618 = vst [vmem:[#allocation2 + $0xe8] sm:$0xff] %v1578
      %1619 = vst [vmem:[#allocation2 + $0xf0] sm:$0xff] %v1579
      %1620 = vst [vmem:[#allocation2 + $0xf8] sm:$0xff] %v1580
      %1621 = vst [vmem:[#allocation2 + $0x100] sm:$0xff] %v1581
      %1622 = vst [vmem:[#allocation2 + $0x108] sm:$0xff] %v1582
      %1623 = vst [vmem:[#allocation2 + $0x110] sm:$0xff] %v1583
      %1624 = vst [vmem:[#allocation2 + $0x118] sm:$0xff] %v1584
      %1625 = vst [vmem:[#allocation2 + $0x120] sm:$0xff] %v1585
      %1626 = vst [vmem:[#allocation2 + $0x128] sm:$0xff] %v1586
      %1627 = vst [vmem:[#allocation2 + $0x130] sm:$0xff] %v1587
      %1628 = vst [vmem:[#allocation2 + $0x138] sm:$0xff] %v1588
      %v1629 = vrot.slane %v342, 7
      %v1630 = vrot.slane %v343, 7
      %v1631 = vrot.slane %v344, 7
      %v1632 = vrot.slane %v345, 7
      %v1633 = vsel %vm393, %v1631, %v1632
      %v1634 = vsel %vm393, %v1630, %v1631
      %v1635 = vsel %vm393, %v1629, %v1630
      %v1636 = vsel %vm393, %v389, %v1629
      %v1637 = vpack.c.bf16 %v1635, %v1636
      %v1638 = vpack.c.bf16 %v1633, %v1634
      %s1639 = scalar_lea.vmem %s1, 192
      %v1640 = vld [vmem:[%s1639] sm:$0xf]
      %v1641 = vld [vmem:[%s1639 + $0x4] sm:$0xf]
      %v1642 = vld [vmem:[%s1639 + $0x8] sm:$0xf]
      %v1643 = vld [vmem:[%s1639 + $0xc] sm:$0xf]
      %v1644 = vld [vmem:[%s1639 + $0x10] sm:$0xf]
      %v1645 = vld [vmem:[%s1639 + $0x14] sm:$0xf]
      %v1646 = vld [vmem:[%s1639 + $0x18] sm:$0xf]
      %v1647 = vld [vmem:[%s1639 + $0x1c] sm:$0xf]
      %v1648 = vld [vmem:[%s1639 + $0x20] sm:$0xf]
      %v1649 = vld [vmem:[%s1639 + $0x24] sm:$0xf]
      %v1650 = vld [vmem:[%s1639 + $0x28] sm:$0xf]
      %v1651 = vld [vmem:[%s1639 + $0x2c] sm:$0xf]
      %v1652 = vld [vmem:[%s1639 + $0x30] sm:$0xf]
      %v1653 = vld [vmem:[%s1639 + $0x34] sm:$0xf]
      %v1654 = vld [vmem:[%s1639 + $0x38] sm:$0xf]
      %v1655 = vld [vmem:[%s1639 + $0x3c] sm:$0xf]
      %v1672 = vunpack.c.l.b16 %v1640
      %v1673 = vunpack.c.l.b16 %v1641
      %v1674 = vunpack.c.l.b16 %v1642
      %v1675 = vunpack.c.l.b16 %v1643
      %v1676 = vunpack.c.l.b16 %v1644
      %v1677 = vunpack.c.l.b16 %v1645
      %v1678 = vunpack.c.l.b16 %v1646
      %v1679 = vunpack.c.l.b16 %v1647
      %v1680 = vunpack.c.l.b16 %v1648
      %v1681 = vunpack.c.l.b16 %v1649
      %v1682 = vunpack.c.l.b16 %v1650
      %v1683 = vunpack.c.l.b16 %v1651
      %v1684 = vunpack.c.l.b16 %v1652
      %v1685 = vunpack.c.l.b16 %v1653
      %v1686 = vunpack.c.l.b16 %v1654
      %v1687 = vunpack.c.l.b16 %v1655
      %v1688 = vpack.c.b16 %v1673, %v1672
      %v1689 = vpack.c.b16 %v1675, %v1674
      %v1690 = vpack.c.b16 %v1677, %v1676
      %v1691 = vpack.c.b16 %v1679, %v1678
      %v1692 = vpack.c.b16 %v1681, %v1680
      %v1693 = vpack.c.b16 %v1683, %v1682
      %v1694 = vpack.c.b16 %v1685, %v1684
      %v1695 = vpack.c.b16 %v1687, %v1686
      %1704 = vmatprep.subr.bf16.mxu0 0
      %1705 = vmatpush1.bf16.msra.mxu0 %v1695
      %1706 = vmatprep.subr.bf16.mxu0 0
      %1707 = vmatpush1.bf16.msra.mxu0 %v1694
      %1708 = vmatprep.subr.bf16.mxu0 0
      %1709 = vmatpush1.bf16.msra.mxu0 %v1693
      %1710 = vmatprep.subr.bf16.mxu0 0
      %1711 = vmatpush1.bf16.msra.mxu0 %v1692
      %1712 = vmatprep.subr.bf16.mxu0 0
      %1713 = vmatpush1.bf16.msra.mxu0 %v1691
      %1714 = vmatprep.subr.bf16.mxu0 0
      %1715 = vmatpush1.bf16.msra.mxu0 %v1690
      %1716 = vmatprep.subr.bf16.mxu0 0
      %1717 = vmatpush1.bf16.msra.mxu0 %v1689
      %1718 = vmatprep.subr.bf16.mxu0 0
      %1719 = vmatpush1.bf16.msra.mxu0 %v1688
      %1720 = vmatprep.subr.bf16.mxu0 0
      %1721 = vmatpush2.bf16.msra.mxu0 0
      %1722 = vmatprep.subr.bf16.mxu0 0
      %1723 = vmatpush2.bf16.msra.mxu0 0
      %1724 = vmatprep.subr.bf16.mxu0 0
      %1725 = vmatpush2.bf16.msra.mxu0 0
      %1726 = vmatprep.subr.bf16.mxu0 0
      %1727 = vmatpush2.bf16.msra.mxu0 0
      %1728 = vmatprep.subr.bf16.mxu0 0
      %1729 = vmatpush2.bf16.msra.mxu0 0
      %1730 = vmatprep.subr.bf16.mxu0 0
      %1731 = vmatpush2.bf16.msra.mxu0 0
      %1732 = vmatprep.subr.bf16.mxu0 0
      %1733 = vmatpush2.bf16.msra.mxu0 0
      %1734 = vmatprep.subr.bf16.mxu0 0
      %1735 = vmatpush2.bf16.msra.mxu0 0
      %1736 = vmatprep.mubr.bf16.mxu0 0
      %1737 = vmatmul.mubr.bf16.gmra.mxu0 %v436
      %v1738 = vpop.f32.mrf.mxu0
      %v1739 = vadd.f32 0.0, %v1738
      %v1740 = vpop.f32.mrf.mxu0
      %v1741 = vpop.f32.mrf.mxu0
      %v1742 = vadd.f32 0.0, %v1741
      %v1743 = vpop.f32.mrf.mxu0
      %1744 = vmatprep.mubr.bf16.mxu0 0
      %1745 = vmatmul.mubr.bf16.gmra.mxu0 %v437
      %v1746 = vpop.f32.mrf.mxu0
      %v1747 = vadd.f32 0.0, %v1746
      %v1748 = vpop.f32.mrf.mxu0
      %v1749 = vpop.f32.mrf.mxu0
      %v1750 = vadd.f32 0.0, %v1749
      %v1751 = vpop.f32.mrf.mxu0
      %1752 = vmatprep.mubr.bf16.mxu0 0
      %1753 = vmatmul.mubr.bf16.gmra.mxu0 %v438
      %v1754 = vpop.f32.mrf.mxu0
      %v1755 = vadd.f32 0.0, %v1754
      %v1756 = vpop.f32.mrf.mxu0
      %v1757 = vpop.f32.mrf.mxu0
      %v1758 = vadd.f32 0.0, %v1757
      %v1759 = vpop.f32.mrf.mxu0
      %1760 = vmatprep.mubr.bf16.mxu0 0
      %1761 = vmatmul.mubr.bf16.gmra.mxu0 %v439
      %v1762 = vpop.f32.mrf.mxu0
      %v1763 = vadd.f32 0.0, %v1762
      %v1764 = vpop.f32.mrf.mxu0
      %v1765 = vpop.f32.mrf.mxu0
      %v1766 = vadd.f32 0.0, %v1765
      %v1767 = vpop.f32.mrf.mxu0
      %1768 = vmatprep.mubr.bf16.mxu0 0
      %1769 = vmatmul.mubr.bf16.gmra.mxu0 %v440
      %v1770 = vpop.f32.mrf.mxu0
      %v1771 = vadd.f32 0.0, %v1770
      %v1772 = vpop.f32.mrf.mxu0
      %v1773 = vpop.f32.mrf.mxu0
      %v1774 = vadd.f32 0.0, %v1773
      %v1775 = vpop.f32.mrf.mxu0
      %1776 = vmatprep.mubr.bf16.mxu0 0
      %1777 = vmatmul.mubr.bf16.gmra.mxu0 %v441
      %v1778 = vpop.f32.mrf.mxu0
      %v1779 = vadd.f32 0.0, %v1778
      %v1780 = vpop.f32.mrf.mxu0
      %v1781 = vpop.f32.mrf.mxu0
      %v1782 = vadd.f32 0.0, %v1781
      %v1783 = vpop.f32.mrf.mxu0
      %1784 = vmatprep.mubr.bf16.mxu0 0
      %1785 = vmatmul.mubr.bf16.gmra.mxu0 %v442
      %v1786 = vpop.f32.mrf.mxu0
      %v1787 = vadd.f32 0.0, %v1786
      %v1788 = vpop.f32.mrf.mxu0
      %v1789 = vpop.f32.mrf.mxu0
      %v1790 = vadd.f32 0.0, %v1789
      %v1791 = vpop.f32.mrf.mxu0
      %1792 = vmatprep.mubr.bf16.mxu0 0
      %1793 = vmatmul.mubr.bf16.gmra.mxu0 %v443
      %v1794 = vpop.f32.mrf.mxu0
      %v1795 = vadd.f32 0.0, %v1794
      %v1796 = vpop.f32.mrf.mxu0
      %v1797 = vpop.f32.mrf.mxu0
      %v1798 = vadd.f32 0.0, %v1797
      %v1799 = vpop.f32.mrf.mxu0
      %1800 = vmatprep.mubr.bf16.mxu0 0
      %1801 = vmatmul.mubr.bf16.gmra.mxu0 %v444
      %v1802 = vpop.f32.mrf.mxu0
      %v1803 = vadd.f32 0.0, %v1802
      %v1804 = vpop.f32.mrf.mxu0
      %v1805 = vpop.f32.mrf.mxu0
      %v1806 = vadd.f32 0.0, %v1805
      %v1807 = vpop.f32.mrf.mxu0
      %1808 = vmatprep.mubr.bf16.mxu0 0
      %1809 = vmatmul.mubr.bf16.gmra.mxu0 %v445
      %v1810 = vpop.f32.mrf.mxu0
      %v1811 = vadd.f32 0.0, %v1810
      %v1812 = vpop.f32.mrf.mxu0
      %v1813 = vpop.f32.mrf.mxu0
      %v1814 = vadd.f32 0.0, %v1813
      %v1815 = vpop.f32.mrf.mxu0
      %1816 = vmatprep.mubr.bf16.mxu0 0
      %1817 = vmatmul.mubr.bf16.gmra.mxu0 %v446
      %v1818 = vpop.f32.mrf.mxu0
      %v1819 = vadd.f32 0.0, %v1818
      %v1820 = vpop.f32.mrf.mxu0
      %v1821 = vpop.f32.mrf.mxu0
      %v1822 = vadd.f32 0.0, %v1821
      %v1823 = vpop.f32.mrf.mxu0
      %1824 = vmatprep.mubr.bf16.mxu0 0
      %1825 = vmatmul.mubr.bf16.gmra.mxu0 %v447
      %v1826 = vpop.f32.mrf.mxu0
      %v1827 = vadd.f32 0.0, %v1826
      %v1828 = vpop.f32.mrf.mxu0
      %v1829 = vpop.f32.mrf.mxu0
      %v1830 = vadd.f32 0.0, %v1829
      %v1831 = vpop.f32.mrf.mxu0
      %1832 = vmatprep.mubr.bf16.mxu0 0
      %1833 = vmatmul.mubr.bf16.gmra.mxu0 %v448
      %v1834 = vpop.f32.mrf.mxu0
      %v1835 = vadd.f32 0.0, %v1834
      %v1836 = vpop.f32.mrf.mxu0
      %v1837 = vpop.f32.mrf.mxu0
      %v1838 = vadd.f32 0.0, %v1837
      %v1839 = vpop.f32.mrf.mxu0
      %1840 = vmatprep.mubr.bf16.mxu0 0
      %1841 = vmatmul.mubr.bf16.gmra.mxu0 %v449
      %v1842 = vpop.f32.mrf.mxu0
      %v1843 = vadd.f32 0.0, %v1842
      %v1844 = vpop.f32.mrf.mxu0
      %v1845 = vpop.f32.mrf.mxu0
      %v1846 = vadd.f32 0.0, %v1845
      %v1847 = vpop.f32.mrf.mxu0
      %1848 = vmatprep.mubr.bf16.mxu0 0
      %1849 = vmatmul.mubr.bf16.gmra.mxu0 %v450
      %v1850 = vpop.f32.mrf.mxu0
      %v1851 = vadd.f32 0.0, %v1850
      %v1852 = vpop.f32.mrf.mxu0
      %v1853 = vpop.f32.mrf.mxu0
      %v1854 = vadd.f32 0.0, %v1853
      %v1855 = vpop.f32.mrf.mxu0
      %1856 = vmatprep.mubr.bf16.mxu0 0
      %1857 = vmatmul.mubr.bf16.gmra.mxu0 %v451
      %v1858 = vpop.f32.mrf.mxu0
      %v1859 = vadd.f32 0.0, %v1858
      %v1860 = vpop.f32.mrf.mxu0
      %v1861 = vpop.f32.mrf.mxu0
      %v1862 = vadd.f32 0.0, %v1861
      %v1863 = vpop.f32.mrf.mxu0
      %1864 = vmatprep.mubr.bf16.mxu0 0
      %1865 = vmatmul.mubr.bf16.gmra.mxu0 %v452
      %v1866 = vpop.f32.mrf.mxu0
      %v1867 = vadd.f32 0.0, %v1866
      %v1868 = vpop.f32.mrf.mxu0
      %v1869 = vpop.f32.mrf.mxu0
      %v1870 = vadd.f32 0.0, %v1869
      %v1871 = vpop.f32.mrf.mxu0
      %1872 = vmatprep.mubr.bf16.mxu0 0
      %1873 = vmatmul.mubr.bf16.gmra.mxu0 %v453
      %v1874 = vpop.f32.mrf.mxu0
      %v1875 = vadd.f32 0.0, %v1874
      %v1876 = vpop.f32.mrf.mxu0
      %v1877 = vpop.f32.mrf.mxu0
      %v1878 = vadd.f32 0.0, %v1877
      %v1879 = vpop.f32.mrf.mxu0
      %1880 = vmatprep.mubr.bf16.mxu0 0
      %1881 = vmatmul.mubr.bf16.gmra.mxu0 %v1637
      %v1882 = vpop.f32.mrf.mxu0
      %v1883 = vadd.f32 0.0, %v1882
      %v1884 = vpop.f32.mrf.mxu0
      %v1885 = vpop.f32.mrf.mxu0
      %v1886 = vadd.f32 0.0, %v1885
      %v1887 = vpop.f32.mrf.mxu0
      %1888 = vmatprep.mubr.bf16.mxu0 0
      %1889 = vmatmul.mubr.bf16.gmra.mxu0 %v1638
      %v1890 = vpop.f32.mrf.mxu0
      %v1891 = vadd.f32 0.0, %v1890
      %v1892 = vpop.f32.mrf.mxu0
      %v1893 = vpop.f32.mrf.mxu0
      %v1894 = vadd.f32 0.0, %v1893
      %v1895 = vpop.f32.mrf.mxu0
      %1896 = vdwg.mxu0
      %v1897 = vld [vmem:[#allocation2] sm:$0xff]
      %v1898 = vld [vmem:[#allocation2 + $0x8] sm:$0xff]
      %v1899 = vld [vmem:[#allocation2 + $0x10] sm:$0xff]
      %v1900 = vld [vmem:[#allocation2 + $0x18] sm:$0xff]
      %v1901 = vld [vmem:[#allocation2 + $0x20] sm:$0xff]
      %v1902 = vld [vmem:[#allocation2 + $0x28] sm:$0xff]
      %v1903 = vld [vmem:[#allocation2 + $0x30] sm:$0xff]
      %v1904 = vld [vmem:[#allocation2 + $0x38] sm:$0xff]
      %v1905 = vld [vmem:[#allocation2 + $0x40] sm:$0xff]
      %v1906 = vld [vmem:[#allocation2 + $0x48] sm:$0xff]
      %v1907 = vld [vmem:[#allocation2 + $0x50] sm:$0xff]
      %v1908 = vld [vmem:[#allocation2 + $0x58] sm:$0xff]
      %v1909 = vld [vmem:[#allocation2 + $0x60] sm:$0xff]
      %v1910 = vld [vmem:[#allocation2 + $0x68] sm:$0xff]
      %v1911 = vld [vmem:[#allocation2 + $0x70] sm:$0xff]
      %v1912 = vld [vmem:[#allocation2 + $0x78] sm:$0xff]
      %v1913 = vld [vmem:[#allocation2 + $0x80] sm:$0xff]
      %v1914 = vld [vmem:[#allocation2 + $0x88] sm:$0xff]
      %v1915 = vld [vmem:[#allocation2 + $0x90] sm:$0xff]
      %v1916 = vld [vmem:[#allocation2 + $0x98] sm:$0xff]
      %v1917 = vld [vmem:[#allocation2 + $0xa0] sm:$0xff]
      %v1918 = vld [vmem:[#allocation2 + $0xa8] sm:$0xff]
      %v1919 = vld [vmem:[#allocation2 + $0xb0] sm:$0xff]
      %v1920 = vld [vmem:[#allocation2 + $0xb8] sm:$0xff]
      %v1921 = vld [vmem:[#allocation2 + $0xc0] sm:$0xff]
      %v1922 = vld [vmem:[#allocation2 + $0xc8] sm:$0xff]
      %v1923 = vld [vmem:[#allocation2 + $0xd0] sm:$0xff]
      %v1924 = vld [vmem:[#allocation2 + $0xd8] sm:$0xff]
      %v1925 = vld [vmem:[#allocation2 + $0xe0] sm:$0xff]
      %v1926 = vld [vmem:[#allocation2 + $0xe8] sm:$0xff]
      %v1927 = vld [vmem:[#allocation2 + $0xf0] sm:$0xff]
      %v1928 = vld [vmem:[#allocation2 + $0xf8] sm:$0xff]
      %v1929 = vld [vmem:[#allocation2 + $0x100] sm:$0xff]
      %v1930 = vld [vmem:[#allocation2 + $0x108] sm:$0xff]
      %v1931 = vld [vmem:[#allocation2 + $0x110] sm:$0xff]
      %v1932 = vld [vmem:[#allocation2 + $0x118] sm:$0xff]
      %v1933 = vld [vmem:[#allocation2 + $0x120] sm:$0xff]
      %v1934 = vld [vmem:[#allocation2 + $0x128] sm:$0xff]
      %v1935 = vld [vmem:[#allocation2 + $0x130] sm:$0xff]
      %v1936 = vld [vmem:[#allocation2 + $0x138] sm:$0xff]
      %v1937 = vadd.f32 %v1897, %v1739
      %v1938 = vadd.f32 %v1898, %v1742
      %v1939 = vadd.f32 %v1899, %v1747
      %v1940 = vadd.f32 %v1900, %v1750
      %v1941 = vadd.f32 %v1901, %v1755
      %v1942 = vadd.f32 %v1902, %v1758
      %v1943 = vadd.f32 %v1903, %v1763
      %v1944 = vadd.f32 %v1904, %v1766
      %v1945 = vadd.f32 %v1905, %v1771
      %v1946 = vadd.f32 %v1906, %v1774
      %v1947 = vadd.f32 %v1907, %v1779
      %v1948 = vadd.f32 %v1908, %v1782
      %v1949 = vadd.f32 %v1909, %v1787
      %v1950 = vadd.f32 %v1910, %v1790
      %v1951 = vadd.f32 %v1911, %v1795
      %v1952 = vadd.f32 %v1912, %v1798
      %v1953 = vadd.f32 %v1913, %v1803
      %v1954 = vadd.f32 %v1914, %v1806
      %v1955 = vadd.f32 %v1915, %v1811
      %v1956 = vadd.f32 %v1916, %v1814
      %v1957 = vadd.f32 %v1917, %v1819
      %v1958 = vadd.f32 %v1918, %v1822
      %v1959 = vadd.f32 %v1919, %v1827
      %v1960 = vadd.f32 %v1920, %v1830
      %v1961 = vadd.f32 %v1921, %v1835
      %v1962 = vadd.f32 %v1922, %v1838
      %v1963 = vadd.f32 %v1923, %v1843
      %v1964 = vadd.f32 %v1924, %v1846
      %v1965 = vadd.f32 %v1925, %v1851
      %v1966 = vadd.f32 %v1926, %v1854
      %v1967 = vadd.f32 %v1927, %v1859
      %v1968 = vadd.f32 %v1928, %v1862
      %v1969 = vadd.f32 %v1929, %v1867
      %v1970 = vadd.f32 %v1930, %v1870
      %v1971 = vadd.f32 %v1931, %v1875
      %v1972 = vadd.f32 %v1932, %v1878
      %v1973 = vadd.f32 %v1933, %v1883
      %v1974 = vadd.f32 %v1934, %v1886
      %v1975 = vadd.f32 %v1935, %v1891
      %v1976 = vadd.f32 %v1936, %v1894
      %1977 = vst [vmem:[#allocation2] sm:$0xff] %v1937
      %1978 = vst [vmem:[#allocation2 + $0x8] sm:$0xff] %v1938
      %1979 = vst [vmem:[#allocation2 + $0x10] sm:$0xff] %v1939
      %1980 = vst [vmem:[#allocation2 + $0x18] sm:$0xff] %v1940
      %1981 = vst [vmem:[#allocation2 + $0x20] sm:$0xff] %v1941
      %1982 = vst [vmem:[#allocation2 + $0x28] sm:$0xff] %v1942
      %1983 = vst [vmem:[#allocation2 + $0x30] sm:$0xff] %v1943
      %1984 = vst [vmem:[#allocation2 + $0x38] sm:$0xff] %v1944
      %1985 = vst [vmem:[#allocation2 + $0x40] sm:$0xff] %v1945
      %1986 = vst [vmem:[#allocation2 + $0x48] sm:$0xff] %v1946
      %1987 = vst [vmem:[#allocation2 + $0x50] sm:$0xff] %v1947
      %1988 = vst [vmem:[#allocation2 + $0x58] sm:$0xff] %v1948
      %1989 = vst [vmem:[#allocation2 + $0x60] sm:$0xff] %v1949
      %1990 = vst [vmem:[#allocation2 + $0x68] sm:$0xff] %v1950
      %1991 = vst [vmem:[#allocation2 + $0x70] sm:$0xff] %v1951
      %1992 = vst [vmem:[#allocation2 + $0x78] sm:$0xff] %v1952
      %1993 = vst [vmem:[#allocation2 + $0x80] sm:$0xff] %v1953
      %1994 = vst [vmem:[#allocation2 + $0x88] sm:$0xff] %v1954
      %1995 = vst [vmem:[#allocation2 + $0x90] sm:$0xff] %v1955
      %1996 = vst [vmem:[#allocation2 + $0x98] sm:$0xff] %v1956
      %1997 = vst [vmem:[#allocation2 + $0xa0] sm:$0xff] %v1957
      %1998 = vst [vmem:[#allocation2 + $0xa8] sm:$0xff] %v1958
      %1999 = vst [vmem:[#allocation2 + $0xb0] sm:$0xff] %v1959
      %2000 = vst [vmem:[#allocation2 + $0xb8] sm:$0xff] %v1960
      %2001 = vst [vmem:[#allocation2 + $0xc0] sm:$0xff] %v1961
      %2002 = vst [vmem:[#allocation2 + $0xc8] sm:$0xff] %v1962
      %2003 = vst [vmem:[#allocation2 + $0xd0] sm:$0xff] %v1963
      %2004 = vst [vmem:[#allocation2 + $0xd8] sm:$0xff] %v1964
      %2005 = vst [vmem:[#allocation2 + $0xe0] sm:$0xff] %v1965
      %2006 = vst [vmem:[#allocation2 + $0xe8] sm:$0xff] %v1966
      %2007 = vst [vmem:[#allocation2 + $0xf0] sm:$0xff] %v1967
      %2008 = vst [vmem:[#allocation2 + $0xf8] sm:$0xff] %v1968
      %2009 = vst [vmem:[#allocation2 + $0x100] sm:$0xff] %v1969
      %2010 = vst [vmem:[#allocation2 + $0x108] sm:$0xff] %v1970
      %2011 = vst [vmem:[#allocation2 + $0x110] sm:$0xff] %v1971
      %2012 = vst [vmem:[#allocation2 + $0x118] sm:$0xff] %v1972
      %2013 = vst [vmem:[#allocation2 + $0x120] sm:$0xff] %v1973
      %2014 = vst [vmem:[#allocation2 + $0x128] sm:$0xff] %v1974
      %2015 = vst [vmem:[#allocation2 + $0x130] sm:$0xff] %v1975
      %2016 = vst [vmem:[#allocation2 + $0x138] sm:$0xff] %v1976
      %v2017 = vpack.c.bf16 %v343, %v342
      %v2018 = vpack.c.bf16 %v345, %v344
      %s2019 = scalar_lea.vmem %s1, 256
      %v2020 = vld [vmem:[%s2019] sm:$0xf]
      %v2021 = vld [vmem:[%s2019 + $0x4] sm:$0xf]
      %v2022 = vld [vmem:[%s2019 + $0x8] sm:$0xf]
      %v2023 = vld [vmem:[%s2019 + $0xc] sm:$0xf]
      %v2024 = vld [vmem:[%s2019 + $0x10] sm:$0xf]
      %v2025 = vld [vmem:[%s2019 + $0x14] sm:$0xf]
      %v2026 = vld [vmem:[%s2019 + $0x18] sm:$0xf]
      %v2027 = vld [vmem:[%s2019 + $0x1c] sm:$0xf]
      %v2028 = vld [vmem:[%s2019 + $0x20] sm:$0xf]
      %v2029 = vld [vmem:[%s2019 + $0x24] sm:$0xf]
      %v2030 = vld [vmem:[%s2019 + $0x28] sm:$0xf]
      %v2031 = vld [vmem:[%s2019 + $0x2c] sm:$0xf]
      %v2032 = vld [vmem:[%s2019 + $0x30] sm:$0xf]
      %v2033 = vld [vmem:[%s2019 + $0x34] sm:$0xf]
      %v2034 = vld [vmem:[%s2019 + $0x38] sm:$0xf]
      %v2035 = vld [vmem:[%s2019 + $0x3c] sm:$0xf]
      %v2052 = vunpack.c.l.b16 %v2020
      %v2053 = vunpack.c.l.b16 %v2021
      %v2054 = vunpack.c.l.b16 %v2022
      %v2055 = vunpack.c.l.b16 %v2023
      %v2056 = vunpack.c.l.b16 %v2024
      %v2057 = vunpack.c.l.b16 %v2025
      %v2058 = vunpack.c.l.b16 %v2026
      %v2059 = vunpack.c.l.b16 %v2027
      %v2060 = vunpack.c.l.b16 %v2028
      %v2061 = vunpack.c.l.b16 %v2029
      %v2062 = vunpack.c.l.b16 %v2030
      %v2063 = vunpack.c.l.b16 %v2031
      %v2064 = vunpack.c.l.b16 %v2032
      %v2065 = vunpack.c.l.b16 %v2033
      %v2066 = vunpack.c.l.b16 %v2034
      %v2067 = vunpack.c.l.b16 %v2035
      %v2068 = vpack.c.b16 %v2053, %v2052
      %v2069 = vpack.c.b16 %v2055, %v2054
      %v2070 = vpack.c.b16 %v2057, %v2056
      %v2071 = vpack.c.b16 %v2059, %v2058
      %v2072 = vpack.c.b16 %v2061, %v2060
      %v2073 = vpack.c.b16 %v2063, %v2062
      %v2074 = vpack.c.b16 %v2065, %v2064
      %v2075 = vpack.c.b16 %v2067, %v2066
      %2084 = vmatprep.subr.bf16.mxu0 0
      %2085 = vmatpush1.bf16.msra.mxu0 %v2075
      %2086 = vmatprep.subr.bf16.mxu0 0
      %2087 = vmatpush1.bf16.msra.mxu0 %v2074
      %2088 = vmatprep.subr.bf16.mxu0 0
      %2089 = vmatpush1.bf16.msra.mxu0 %v2073
      %2090 = vmatprep.subr.bf16.mxu0 0
      %2091 = vmatpush1.bf16.msra.mxu0 %v2072
      %2092 = vmatprep.subr.bf16.mxu0 0
      %2093 = vmatpush1.bf16.msra.mxu0 %v2071
      %2094 = vmatprep.subr.bf16.mxu0 0
      %2095 = vmatpush1.bf16.msra.mxu0 %v2070
      %2096 = vmatprep.subr.bf16.mxu0 0
      %2097 = vmatpush1.bf16.msra.mxu0 %v2069
      %2098 = vmatprep.subr.bf16.mxu0 0
      %2099 = vmatpush1.bf16.msra.mxu0 %v2068
      %2100 = vmatprep.subr.bf16.mxu0 0
      %2101 = vmatpush2.bf16.msra.mxu0 0
      %2102 = vmatprep.subr.bf16.mxu0 0
      %2103 = vmatpush2.bf16.msra.mxu0 0
      %2104 = vmatprep.subr.bf16.mxu0 0
      %2105 = vmatpush2.bf16.msra.mxu0 0
      %2106 = vmatprep.subr.bf16.mxu0 0
      %2107 = vmatpush2.bf16.msra.mxu0 0
      %2108 = vmatprep.subr.bf16.mxu0 0
      %2109 = vmatpush2.bf16.msra.mxu0 0
      %2110 = vmatprep.subr.bf16.mxu0 0
      %2111 = vmatpush2.bf16.msra.mxu0 0
      %2112 = vmatprep.subr.bf16.mxu0 0
      %2113 = vmatpush2.bf16.msra.mxu0 0
      %2114 = vmatprep.subr.bf16.mxu0 0
      %2115 = vmatpush2.bf16.msra.mxu0 0
      %2116 = vmatprep.mubr.bf16.mxu0 0
      %2117 = vmatmul.mubr.bf16.gmra.mxu0 %v753
      %v2118 = vpop.f32.mrf.mxu0
      %v2119 = vadd.f32 0.0, %v2118
      %v2120 = vpop.f32.mrf.mxu0
      %v2121 = vpop.f32.mrf.mxu0
      %v2122 = vadd.f32 0.0, %v2121
      %v2123 = vpop.f32.mrf.mxu0
      %2124 = vmatprep.mubr.bf16.mxu0 0
      %2125 = vmatmul.mubr.bf16.gmra.mxu0 %v754
      %v2126 = vpop.f32.mrf.mxu0
      %v2127 = vadd.f32 0.0, %v2126
      %v2128 = vpop.f32.mrf.mxu0
      %v2129 = vpop.f32.mrf.mxu0
      %v2130 = vadd.f32 0.0, %v2129
      %v2131 = vpop.f32.mrf.mxu0
      %2132 = vmatprep.mubr.bf16.mxu0 0
      %2133 = vmatmul.mubr.bf16.gmra.mxu0 %v755
      %v2134 = vpop.f32.mrf.mxu0
      %v2135 = vadd.f32 0.0, %v2134
      %v2136 = vpop.f32.mrf.mxu0
      %v2137 = vpop.f32.mrf.mxu0
      %v2138 = vadd.f32 0.0, %v2137
      %v2139 = vpop.f32.mrf.mxu0
      %2140 = vmatprep.mubr.bf16.mxu0 0
      %2141 = vmatmul.mubr.bf16.gmra.mxu0 %v756
      %v2142 = vpop.f32.mrf.mxu0
      %v2143 = vadd.f32 0.0, %v2142
      %v2144 = vpop.f32.mrf.mxu0
      %v2145 = vpop.f32.mrf.mxu0
      %v2146 = vadd.f32 0.0, %v2145
      %v2147 = vpop.f32.mrf.mxu0
      %2148 = vmatprep.mubr.bf16.mxu0 0
      %2149 = vmatmul.mubr.bf16.gmra.mxu0 %v757
      %v2150 = vpop.f32.mrf.mxu0
      %v2151 = vadd.f32 0.0, %v2150
      %v2152 = vpop.f32.mrf.mxu0
      %v2153 = vpop.f32.mrf.mxu0
      %v2154 = vadd.f32 0.0, %v2153
      %v2155 = vpop.f32.mrf.mxu0
      %2156 = vmatprep.mubr.bf16.mxu0 0
      %2157 = vmatmul.mubr.bf16.gmra.mxu0 %v758
      %v2158 = vpop.f32.mrf.mxu0
      %v2159 = vadd.f32 0.0, %v2158
      %v2160 = vpop.f32.mrf.mxu0
      %v2161 = vpop.f32.mrf.mxu0
      %v2162 = vadd.f32 0.0, %v2161
      %v2163 = vpop.f32.mrf.mxu0
      %2164 = vmatprep.mubr.bf16.mxu0 0
      %2165 = vmatmul.mubr.bf16.gmra.mxu0 %v759
      %v2166 = vpop.f32.mrf.mxu0
      %v2167 = vadd.f32 0.0, %v2166
      %v2168 = vpop.f32.mrf.mxu0
      %v2169 = vpop.f32.mrf.mxu0
      %v2170 = vadd.f32 0.0, %v2169
      %v2171 = vpop.f32.mrf.mxu0
      %2172 = vmatprep.mubr.bf16.mxu0 0
      %2173 = vmatmul.mubr.bf16.gmra.mxu0 %v760
      %v2174 = vpop.f32.mrf.mxu0
      %v2175 = vadd.f32 0.0, %v2174
      %v2176 = vpop.f32.mrf.mxu0
      %v2177 = vpop.f32.mrf.mxu0
      %v2178 = vadd.f32 0.0, %v2177
      %v2179 = vpop.f32.mrf.mxu0
      %2180 = vmatprep.mubr.bf16.mxu0 0
      %2181 = vmatmul.mubr.bf16.gmra.mxu0 %v761
      %v2182 = vpop.f32.mrf.mxu0
      %v2183 = vadd.f32 0.0, %v2182
      %v2184 = vpop.f32.mrf.mxu0
      %v2185 = vpop.f32.mrf.mxu0
      %v2186 = vadd.f32 0.0, %v2185
      %v2187 = vpop.f32.mrf.mxu0
      %2188 = vmatprep.mubr.bf16.mxu0 0
      %2189 = vmatmul.mubr.bf16.gmra.mxu0 %v762
      %v2190 = vpop.f32.mrf.mxu0
      %v2191 = vadd.f32 0.0, %v2190
      %v2192 = vpop.f32.mrf.mxu0
      %v2193 = vpop.f32.mrf.mxu0
      %v2194 = vadd.f32 0.0, %v2193
      %v2195 = vpop.f32.mrf.mxu0
      %2196 = vmatprep.mubr.bf16.mxu0 0
      %2197 = vmatmul.mubr.bf16.gmra.mxu0 %v763
      %v2198 = vpop.f32.mrf.mxu0
      %v2199 = vadd.f32 0.0, %v2198
      %v2200 = vpop.f32.mrf.mxu0
      %v2201 = vpop.f32.mrf.mxu0
      %v2202 = vadd.f32 0.0, %v2201
      %v2203 = vpop.f32.mrf.mxu0
      %2204 = vmatprep.mubr.bf16.mxu0 0
      %2205 = vmatmul.mubr.bf16.gmra.mxu0 %v764
      %v2206 = vpop.f32.mrf.mxu0
      %v2207 = vadd.f32 0.0, %v2206
      %v2208 = vpop.f32.mrf.mxu0
      %v2209 = vpop.f32.mrf.mxu0
      %v2210 = vadd.f32 0.0, %v2209
      %v2211 = vpop.f32.mrf.mxu0
      %2212 = vmatprep.mubr.bf16.mxu0 0
      %2213 = vmatmul.mubr.bf16.gmra.mxu0 %v765
      %v2214 = vpop.f32.mrf.mxu0
      %v2215 = vadd.f32 0.0, %v2214
      %v2216 = vpop.f32.mrf.mxu0
      %v2217 = vpop.f32.mrf.mxu0
      %v2218 = vadd.f32 0.0, %v2217
      %v2219 = vpop.f32.mrf.mxu0
      %2220 = vmatprep.mubr.bf16.mxu0 0
      %2221 = vmatmul.mubr.bf16.gmra.mxu0 %v766
      %v2222 = vpop.f32.mrf.mxu0
      %v2223 = vadd.f32 0.0, %v2222
      %v2224 = vpop.f32.mrf.mxu0
      %v2225 = vpop.f32.mrf.mxu0
      %v2226 = vadd.f32 0.0, %v2225
      %v2227 = vpop.f32.mrf.mxu0
      %2228 = vmatprep.mubr.bf16.mxu0 0
      %2229 = vmatmul.mubr.bf16.gmra.mxu0 %v767
      %v2230 = vpop.f32.mrf.mxu0
      %v2231 = vadd.f32 0.0, %v2230
      %v2232 = vpop.f32.mrf.mxu0
      %v2233 = vpop.f32.mrf.mxu0
      %v2234 = vadd.f32 0.0, %v2233
      %v2235 = vpop.f32.mrf.mxu0
      %2236 = vmatprep.mubr.bf16.mxu0 0
      %2237 = vmatmul.mubr.bf16.gmra.mxu0 %v768
      %v2238 = vpop.f32.mrf.mxu0
      %v2239 = vadd.f32 0.0, %v2238
      %v2240 = vpop.f32.mrf.mxu0
      %v2241 = vpop.f32.mrf.mxu0
      %v2242 = vadd.f32 0.0, %v2241
      %v2243 = vpop.f32.mrf.mxu0
      %2244 = vmatprep.mubr.bf16.mxu0 0
      %2245 = vmatmul.mubr.bf16.gmra.mxu0 %v769
      %v2246 = vpop.f32.mrf.mxu0
      %v2247 = vadd.f32 0.0, %v2246
      %v2248 = vpop.f32.mrf.mxu0
      %v2249 = vpop.f32.mrf.mxu0
      %v2250 = vadd.f32 0.0, %v2249
      %v2251 = vpop.f32.mrf.mxu0
      %2252 = vmatprep.mubr.bf16.mxu0 0
      %2253 = vmatmul.mubr.bf16.gmra.mxu0 %v770
      %v2254 = vpop.f32.mrf.mxu0
      %v2255 = vadd.f32 0.0, %v2254
      %v2256 = vpop.f32.mrf.mxu0
      %v2257 = vpop.f32.mrf.mxu0
      %v2258 = vadd.f32 0.0, %v2257
      %v2259 = vpop.f32.mrf.mxu0
      %2260 = vmatprep.mubr.bf16.mxu0 0
      %2261 = vmatmul.mubr.bf16.gmra.mxu0 %v2017
      %v2262 = vpop.f32.mrf.mxu0
      %v2263 = vadd.f32 0.0, %v2262
      %v2264 = vpop.f32.mrf.mxu0
      %v2265 = vpop.f32.mrf.mxu0
      %v2266 = vadd.f32 0.0, %v2265
      %v2267 = vpop.f32.mrf.mxu0
      %2268 = vmatprep.mubr.bf16.mxu0 0
      %2269 = vmatmul.mubr.bf16.gmra.mxu0 %v2018
      %v2270 = vpop.f32.mrf.mxu0
      %v2271 = vadd.f32 0.0, %v2270
      %v2272 = vpop.f32.mrf.mxu0
      %v2273 = vpop.f32.mrf.mxu0
      %v2274 = vadd.f32 0.0, %v2273
      %v2275 = vpop.f32.mrf.mxu0
      %2276 = vdwg.mxu0
      %v2277 = vld [vmem:[#allocation2] sm:$0xff]
      %v2278 = vld [vmem:[#allocation2 + $0x8] sm:$0xff]
      %v2279 = vld [vmem:[#allocation2 + $0x10] sm:$0xff]
      %v2280 = vld [vmem:[#allocation2 + $0x18] sm:$0xff]
      %v2281 = vld [vmem:[#allocation2 + $0x20] sm:$0xff]
      %v2282 = vld [vmem:[#allocation2 + $0x28] sm:$0xff]
      %v2283 = vld [vmem:[#allocation2 + $0x30] sm:$0xff]
      %v2284 = vld [vmem:[#allocation2 + $0x38] sm:$0xff]
      %v2285 = vld [vmem:[#allocation2 + $0x40] sm:$0xff]
      %v2286 = vld [vmem:[#allocation2 + $0x48] sm:$0xff]
      %v2287 = vld [vmem:[#allocation2 + $0x50] sm:$0xff]
      %v2288 = vld [vmem:[#allocation2 + $0x58] sm:$0xff]
      %v2289 = vld [vmem:[#allocation2 + $0x60] sm:$0xff]
      %v2290 = vld [vmem:[#allocation2 + $0x68] sm:$0xff]
      %v2291 = vld [vmem:[#allocation2 + $0x70] sm:$0xff]
      %v2292 = vld [vmem:[#allocation2 + $0x78] sm:$0xff]
      %v2293 = vld [vmem:[#allocation2 + $0x80] sm:$0xff]
      %v2294 = vld [vmem:[#allocation2 + $0x88] sm:$0xff]
      %v2295 = vld [vmem:[#allocation2 + $0x90] sm:$0xff]
      %v2296 = vld [vmem:[#allocation2 + $0x98] sm:$0xff]
      %v2297 = vld [vmem:[#allocation2 + $0xa0] sm:$0xff]
      %v2298 = vld [vmem:[#allocation2 + $0xa8] sm:$0xff]
      %v2299 = vld [vmem:[#allocation2 + $0xb0] sm:$0xff]
      %v2300 = vld [vmem:[#allocation2 + $0xb8] sm:$0xff]
      %v2301 = vld [vmem:[#allocation2 + $0xc0] sm:$0xff]
      %v2302 = vld [vmem:[#allocation2 + $0xc8] sm:$0xff]
      %v2303 = vld [vmem:[#allocation2 + $0xd0] sm:$0xff]
      %v2304 = vld [vmem:[#allocation2 + $0xd8] sm:$0xff]
      %v2305 = vld [vmem:[#allocation2 + $0xe0] sm:$0xff]
      %v2306 = vld [vmem:[#allocation2 + $0xe8] sm:$0xff]
      %v2307 = vld [vmem:[#allocation2 + $0xf0] sm:$0xff]
      %v2308 = vld [vmem:[#allocation2 + $0xf8] sm:$0xff]
      %v2309 = vld [vmem:[#allocation2 + $0x100] sm:$0xff]
      %v2310 = vld [vmem:[#allocation2 + $0x108] sm:$0xff]
      %v2311 = vld [vmem:[#allocation2 + $0x110] sm:$0xff]
      %v2312 = vld [vmem:[#allocation2 + $0x118] sm:$0xff]
      %v2313 = vld [vmem:[#allocation2 + $0x120] sm:$0xff]
      %v2314 = vld [vmem:[#allocation2 + $0x128] sm:$0xff]
      %v2315 = vld [vmem:[#allocation2 + $0x130] sm:$0xff]
      %v2316 = vld [vmem:[#allocation2 + $0x138] sm:$0xff]
      %v2317 = vadd.f32 %v2277, %v2119
      %v2318 = vadd.f32 %v2278, %v2122
      %v2319 = vadd.f32 %v2279, %v2127
      %v2320 = vadd.f32 %v2280, %v2130
      %v2321 = vadd.f32 %v2281, %v2135
      %v2322 = vadd.f32 %v2282, %v2138
      %v2323 = vadd.f32 %v2283, %v2143
      %v2324 = vadd.f32 %v2284, %v2146
      %v2325 = vadd.f32 %v2285, %v2151
      %v2326 = vadd.f32 %v2286, %v2154
      %v2327 = vadd.f32 %v2287, %v2159
      %v2328 = vadd.f32 %v2288, %v2162
      %v2329 = vadd.f32 %v2289, %v2167
      %v2330 = vadd.f32 %v2290, %v2170
      %v2331 = vadd.f32 %v2291, %v2175
      %v2332 = vadd.f32 %v2292, %v2178
      %v2333 = vadd.f32 %v2293, %v2183
      %v2334 = vadd.f32 %v2294, %v2186
      %v2335 = vadd.f32 %v2295, %v2191
      %v2336 = vadd.f32 %v2296, %v2194
      %v2337 = vadd.f32 %v2297, %v2199
      %v2338 = vadd.f32 %v2298, %v2202
      %v2339 = vadd.f32 %v2299, %v2207
      %v2340 = vadd.f32 %v2300, %v2210
      %v2341 = vadd.f32 %v2301, %v2215
      %v2342 = vadd.f32 %v2302, %v2218
      %v2343 = vadd.f32 %v2303, %v2223
      %v2344 = vadd.f32 %v2304, %v2226
      %v2345 = vadd.f32 %v2305, %v2231
      %v2346 = vadd.f32 %v2306, %v2234
      %v2347 = vadd.f32 %v2307, %v2239
      %v2348 = vadd.f32 %v2308, %v2242
      %v2349 = vadd.f32 %v2309, %v2247
      %v2350 = vadd.f32 %v2310, %v2250
      %v2351 = vadd.f32 %v2311, %v2255
      %v2352 = vadd.f32 %v2312, %v2258
      %v2353 = vadd.f32 %v2313, %v2263
      %v2354 = vadd.f32 %v2314, %v2266
      %v2355 = vadd.f32 %v2315, %v2271
      %v2356 = vadd.f32 %v2316, %v2274
      %2357 = vst [vmem:[#allocation2] sm:$0xff] %v2317
      %2358 = vst [vmem:[#allocation2 + $0x8] sm:$0xff] %v2318
      %2359 = vst [vmem:[#allocation2 + $0x10] sm:$0xff] %v2319
      %2360 = vst [vmem:[#allocation2 + $0x18] sm:$0xff] %v2320
      %2361 = vst [vmem:[#allocation2 + $0x20] sm:$0xff] %v2321
      %2362 = vst [vmem:[#allocation2 + $0x28] sm:$0xff] %v2322
      %2363 = vst [vmem:[#allocation2 + $0x30] sm:$0xff] %v2323
      %2364 = vst [vmem:[#allocation2 + $0x38] sm:$0xff] %v2324
      %2365 = vst [vmem:[#allocation2 + $0x40] sm:$0xff] %v2325
      %2366 = vst [vmem:[#allocation2 + $0x48] sm:$0xff] %v2326
      %2367 = vst [vmem:[#allocation2 + $0x50] sm:$0xff] %v2327
      %2368 = vst [vmem:[#allocation2 + $0x58] sm:$0xff] %v2328
      %2369 = vst [vmem:[#allocation2 + $0x60] sm:$0xff] %v2329
      %2370 = vst [vmem:[#allocation2 + $0x68] sm:$0xff] %v2330
      %2371 = vst [vmem:[#allocation2 + $0x70] sm:$0xff] %v2331
      %2372 = vst [vmem:[#allocation2 + $0x78] sm:$0xff] %v2332
      %2373 = vst [vmem:[#allocation2 + $0x80] sm:$0xff] %v2333
      %2374 = vst [vmem:[#allocation2 + $0x88] sm:$0xff] %v2334
      %2375 = vst [vmem:[#allocation2 + $0x90] sm:$0xff] %v2335
      %2376 = vst [vmem:[#allocation2 + $0x98] sm:$0xff] %v2336
      %2377 = vst [vmem:[#allocation2 + $0xa0] sm:$0xff] %v2337
      %2378 = vst [vmem:[#allocation2 + $0xa8] sm:$0xff] %v2338
      %2379 = vst [vmem:[#allocation2 + $0xb0] sm:$0xff] %v2339
      %2380 = vst [vmem:[#allocation2 + $0xb8] sm:$0xff] %v2340
      %2381 = vst [vmem:[#allocation2 + $0xc0] sm:$0xff] %v2341
      %2382 = vst [vmem:[#allocation2 + $0xc8] sm:$0xff] %v2342
      %2383 = vst [vmem:[#allocation2 + $0xd0] sm:$0xff] %v2343
      %2384 = vst [vmem:[#allocation2 + $0xd8] sm:$0xff] %v2344
      %2385 = vst [vmem:[#allocation2 + $0xe0] sm:$0xff] %v2345
      %2386 = vst [vmem:[#allocation2 + $0xe8] sm:$0xff] %v2346
      %2387 = vst [vmem:[#allocation2 + $0xf0] sm:$0xff] %v2347
      %2388 = vst [vmem:[#allocation2 + $0xf8] sm:$0xff] %v2348
      %2389 = vst [vmem:[#allocation2 + $0x100] sm:$0xff] %v2349
      %2390 = vst [vmem:[#allocation2 + $0x108] sm:$0xff] %v2350
      %2391 = vst [vmem:[#allocation2 + $0x110] sm:$0xff] %v2351
      %2392 = vst [vmem:[#allocation2 + $0x118] sm:$0xff] %v2352
      %2393 = vst [vmem:[#allocation2 + $0x120] sm:$0xff] %v2353
      %2394 = vst [vmem:[#allocation2 + $0x128] sm:$0xff] %v2354
      %2395 = vst [vmem:[#allocation2 + $0x130] sm:$0xff] %v2355
      %2396 = vst [vmem:[#allocation2 + $0x138] sm:$0xff] %v2356
      %v2397 = vrot.slane %v343, 1
      %v2398 = vrot.slane %v344, 1
      %v2399 = vrot.slane %v345, 1
      %v2400 = vrot.slane %v346, 1
      %v2401 = vsel %vm1190, %v2399, %v2400
      %v2402 = vsel %vm1190, %v2398, %v2399
      %v2403 = vsel %vm1190, %v2397, %v2398
      %v2404 = vsel %vm1190, %v1189, %v2397
      %v2405 = vpack.c.bf16 %v2403, %v2404
      %v2406 = vpack.c.bf16 %v2401, %v2402
      %s2407 = scalar_lea.vmem %s1, 320
      %v2408 = vld [vmem:[%s2407] sm:$0xf]
      %v2409 = vld [vmem:[%s2407 + $0x4] sm:$0xf]
      %v2410 = vld [vmem:[%s2407 + $0x8] sm:$0xf]
      %v2411 = vld [vmem:[%s2407 + $0xc] sm:$0xf]
      %v2412 = vld [vmem:[%s2407 + $0x10] sm:$0xf]
      %v2413 = vld [vmem:[%s2407 + $0x14] sm:$0xf]
      %v2414 = vld [vmem:[%s2407 + $0x18] sm:$0xf]
      %v2415 = vld [vmem:[%s2407 + $0x1c] sm:$0xf]
      %v2416 = vld [vmem:[%s2407 + $0x20] sm:$0xf]
      %v2417 = vld [vmem:[%s2407 + $0x24] sm:$0xf]
      %v2418 = vld [vmem:[%s2407 + $0x28] sm:$0xf]
      %v2419 = vld [vmem:[%s2407 + $0x2c] sm:$0xf]
      %v2420 = vld [vmem:[%s2407 + $0x30] sm:$0xf]
      %v2421 = vld [vmem:[%s2407 + $0x34] sm:$0xf]
      %v2422 = vld [vmem:[%s2407 + $0x38] sm:$0xf]
      %v2423 = vld [vmem:[%s2407 + $0x3c] sm:$0xf]
      %v2440 = vunpack.c.l.b16 %v2408
      %v2441 = vunpack.c.l.b16 %v2409
      %v2442 = vunpack.c.l.b16 %v2410
      %v2443 = vunpack.c.l.b16 %v2411
      %v2444 = vunpack.c.l.b16 %v2412
      %v2445 = vunpack.c.l.b16 %v2413
      %v2446 = vunpack.c.l.b16 %v2414
      %v2447 = vunpack.c.l.b16 %v2415
      %v2448 = vunpack.c.l.b16 %v2416
      %v2449 = vunpack.c.l.b16 %v2417
      %v2450 = vunpack.c.l.b16 %v2418
      %v2451 = vunpack.c.l.b16 %v2419
      %v2452 = vunpack.c.l.b16 %v2420
      %v2453 = vunpack.c.l.b16 %v2421
      %v2454 = vunpack.c.l.b16 %v2422
      %v2455 = vunpack.c.l.b16 %v2423
      %v2456 = vpack.c.b16 %v2441, %v2440
      %v2457 = vpack.c.b16 %v2443, %v2442
      %v2458 = vpack.c.b16 %v2445, %v2444
      %v2459 = vpack.c.b16 %v2447, %v2446
      %v2460 = vpack.c.b16 %v2449, %v2448
      %v2461 = vpack.c.b16 %v2451, %v2450
      %v2462 = vpack.c.b16 %v2453, %v2452
      %v2463 = vpack.c.b16 %v2455, %v2454
      %2472 = vmatprep.subr.bf16.mxu0 0
      %2473 = vmatpush1.bf16.msra.mxu0 %v2463
      %2474 = vmatprep.subr.bf16.mxu0 0
      %2475 = vmatpush1.bf16.msra.mxu0 %v2462
      %2476 = vmatprep.subr.bf16.mxu0 0
      %2477 = vmatpush1.bf16.msra.mxu0 %v2461
      %2478 = vmatprep.subr.bf16.mxu0 0
      %2479 = vmatpush1.bf16.msra.mxu0 %v2460
      %2480 = vmatprep.subr.bf16.mxu0 0
      %2481 = vmatpush1.bf16.msra.mxu0 %v2459
      %2482 = vmatprep.subr.bf16.mxu0 0
      %2483 = vmatpush1.bf16.msra.mxu0 %v2458
      %2484 = vmatprep.subr.bf16.mxu0 0
      %2485 = vmatpush1.bf16.msra.mxu0 %v2457
      %2486 = vmatprep.subr.bf16.mxu0 0
      %2487 = vmatpush1.bf16.msra.mxu0 %v2456
      %2488 = vmatprep.subr.bf16.mxu0 0
      %2489 = vmatpush2.bf16.msra.mxu0 0
      %2490 = vmatprep.subr.bf16.mxu0 0
      %2491 = vmatpush2.bf16.msra.mxu0 0
      %2492 = vmatprep.subr.bf16.mxu0 0
      %2493 = vmatpush2.bf16.msra.mxu0 0
      %2494 = vmatprep.subr.bf16.mxu0 0
      %2495 = vmatpush2.bf16.msra.mxu0 0
      %2496 = vmatprep.subr.bf16.mxu0 0
      %2497 = vmatpush2.bf16.msra.mxu0 0
      %2498 = vmatprep.subr.bf16.mxu0 0
      %2499 = vmatpush2.bf16.msra.mxu0 0
      %2500 = vmatprep.subr.bf16.mxu0 0
      %2501 = vmatpush2.bf16.msra.mxu0 0
      %2502 = vmatprep.subr.bf16.mxu0 0
      %2503 = vmatpush2.bf16.msra.mxu0 0
      %2504 = vmatprep.mubr.bf16.mxu0 0
      %2505 = vmatmul.mubr.bf16.gmra.mxu0 %v1233
      %v2506 = vpop.f32.mrf.mxu0
      %v2507 = vadd.f32 0.0, %v2506
      %v2508 = vpop.f32.mrf.mxu0
      %v2509 = vpop.f32.mrf.mxu0
      %v2510 = vadd.f32 0.0, %v2509
      %v2511 = vpop.f32.mrf.mxu0
      %2512 = vmatprep.mubr.bf16.mxu0 0
      %2513 = vmatmul.mubr.bf16.gmra.mxu0 %v1234
      %v2514 = vpop.f32.mrf.mxu0
      %v2515 = vadd.f32 0.0, %v2514
      %v2516 = vpop.f32.mrf.mxu0
      %v2517 = vpop.f32.mrf.mxu0
      %v2518 = vadd.f32 0.0, %v2517
      %v2519 = vpop.f32.mrf.mxu0
      %2520 = vmatprep.mubr.bf16.mxu0 0
      %2521 = vmatmul.mubr.bf16.gmra.mxu0 %v1235
      %v2522 = vpop.f32.mrf.mxu0
      %v2523 = vadd.f32 0.0, %v2522
      %v2524 = vpop.f32.mrf.mxu0
      %v2525 = vpop.f32.mrf.mxu0
      %v2526 = vadd.f32 0.0, %v2525
      %v2527 = vpop.f32.mrf.mxu0
      %2528 = vmatprep.mubr.bf16.mxu0 0
      %2529 = vmatmul.mubr.bf16.gmra.mxu0 %v1236
      %v2530 = vpop.f32.mrf.mxu0
      %v2531 = vadd.f32 0.0, %v2530
      %v2532 = vpop.f32.mrf.mxu0
      %v2533 = vpop.f32.mrf.mxu0
      %v2534 = vadd.f32 0.0, %v2533
      %v2535 = vpop.f32.mrf.mxu0
      %2536 = vmatprep.mubr.bf16.mxu0 0
      %2537 = vmatmul.mubr.bf16.gmra.mxu0 %v1237
      %v2538 = vpop.f32.mrf.mxu0
      %v2539 = vadd.f32 0.0, %v2538
      %v2540 = vpop.f32.mrf.mxu0
      %v2541 = vpop.f32.mrf.mxu0
      %v2542 = vadd.f32 0.0, %v2541
      %v2543 = vpop.f32.mrf.mxu0
      %2544 = vmatprep.mubr.bf16.mxu0 0
      %2545 = vmatmul.mubr.bf16.gmra.mxu0 %v1238
      %v2546 = vpop.f32.mrf.mxu0
      %v2547 = vadd.f32 0.0, %v2546
      %v2548 = vpop.f32.mrf.mxu0
      %v2549 = vpop.f32.mrf.mxu0
      %v2550 = vadd.f32 0.0, %v2549
      %v2551 = vpop.f32.mrf.mxu0
      %2552 = vmatprep.mubr.bf16.mxu0 0
      %2553 = vmatmul.mubr.bf16.gmra.mxu0 %v1239
      %v2554 = vpop.f32.mrf.mxu0
      %v2555 = vadd.f32 0.0, %v2554
      %v2556 = vpop.f32.mrf.mxu0
      %v2557 = vpop.f32.mrf.mxu0
      %v2558 = vadd.f32 0.0, %v2557
      %v2559 = vpop.f32.mrf.mxu0
      %2560 = vmatprep.mubr.bf16.mxu0 0
      %2561 = vmatmul.mubr.bf16.gmra.mxu0 %v1240
      %v2562 = vpop.f32.mrf.mxu0
      %v2563 = vadd.f32 0.0, %v2562
      %v2564 = vpop.f32.mrf.mxu0
      %v2565 = vpop.f32.mrf.mxu0
      %v2566 = vadd.f32 0.0, %v2565
      %v2567 = vpop.f32.mrf.mxu0
      %2568 = vmatprep.mubr.bf16.mxu0 0
      %2569 = vmatmul.mubr.bf16.gmra.mxu0 %v1241
      %v2570 = vpop.f32.mrf.mxu0
      %v2571 = vadd.f32 0.0, %v2570
      %v2572 = vpop.f32.mrf.mxu0
      %v2573 = vpop.f32.mrf.mxu0
      %v2574 = vadd.f32 0.0, %v2573
      %v2575 = vpop.f32.mrf.mxu0
      %2576 = vmatprep.mubr.bf16.mxu0 0
      %2577 = vmatmul.mubr.bf16.gmra.mxu0 %v1242
      %v2578 = vpop.f32.mrf.mxu0
      %v2579 = vadd.f32 0.0, %v2578
      %v2580 = vpop.f32.mrf.mxu0
      %v2581 = vpop.f32.mrf.mxu0
      %v2582 = vadd.f32 0.0, %v2581
      %v2583 = vpop.f32.mrf.mxu0
      %2584 = vmatprep.mubr.bf16.mxu0 0
      %2585 = vmatmul.mubr.bf16.gmra.mxu0 %v1243
      %v2586 = vpop.f32.mrf.mxu0
      %v2587 = vadd.f32 0.0, %v2586
      %v2588 = vpop.f32.mrf.mxu0
      %v2589 = vpop.f32.mrf.mxu0
      %v2590 = vadd.f32 0.0, %v2589
      %v2591 = vpop.f32.mrf.mxu0
      %2592 = vmatprep.mubr.bf16.mxu0 0
      %2593 = vmatmul.mubr.bf16.gmra.mxu0 %v1244
      %v2594 = vpop.f32.mrf.mxu0
      %v2595 = vadd.f32 0.0, %v2594
      %v2596 = vpop.f32.mrf.mxu0
      %v2597 = vpop.f32.mrf.mxu0
      %v2598 = vadd.f32 0.0, %v2597
      %v2599 = vpop.f32.mrf.mxu0
      %2600 = vmatprep.mubr.bf16.mxu0 0
      %2601 = vmatmul.mubr.bf16.gmra.mxu0 %v1245
      %v2602 = vpop.f32.mrf.mxu0
      %v2603 = vadd.f32 0.0, %v2602
      %v2604 = vpop.f32.mrf.mxu0
      %v2605 = vpop.f32.mrf.mxu0
      %v2606 = vadd.f32 0.0, %v2605
      %v2607 = vpop.f32.mrf.mxu0
      %2608 = vmatprep.mubr.bf16.mxu0 0
      %2609 = vmatmul.mubr.bf16.gmra.mxu0 %v1246
      %v2610 = vpop.f32.mrf.mxu0
      %v2611 = vadd.f32 0.0, %v2610
      %v2612 = vpop.f32.mrf.mxu0
      %v2613 = vpop.f32.mrf.mxu0
      %v2614 = vadd.f32 0.0, %v2613
      %v2615 = vpop.f32.mrf.mxu0
      %2616 = vmatprep.mubr.bf16.mxu0 0
      %2617 = vmatmul.mubr.bf16.gmra.mxu0 %v1247
      %v2618 = vpop.f32.mrf.mxu0
      %v2619 = vadd.f32 0.0, %v2618
      %v2620 = vpop.f32.mrf.mxu0
      %v2621 = vpop.f32.mrf.mxu0
      %v2622 = vadd.f32 0.0, %v2621
      %v2623 = vpop.f32.mrf.mxu0
      %2624 = vmatprep.mubr.bf16.mxu0 0
      %2625 = vmatmul.mubr.bf16.gmra.mxu0 %v1248
      %v2626 = vpop.f32.mrf.mxu0
      %v2627 = vadd.f32 0.0, %v2626
      %v2628 = vpop.f32.mrf.mxu0
      %v2629 = vpop.f32.mrf.mxu0
      %v2630 = vadd.f32 0.0, %v2629
      %v2631 = vpop.f32.mrf.mxu0
      %2632 = vmatprep.mubr.bf16.mxu0 0
      %2633 = vmatmul.mubr.bf16.gmra.mxu0 %v1249
      %v2634 = vpop.f32.mrf.mxu0
      %v2635 = vadd.f32 0.0, %v2634
      %v2636 = vpop.f32.mrf.mxu0
      %v2637 = vpop.f32.mrf.mxu0
      %v2638 = vadd.f32 0.0, %v2637
      %v2639 = vpop.f32.mrf.mxu0
      %2640 = vmatprep.mubr.bf16.mxu0 0
      %2641 = vmatmul.mubr.bf16.gmra.mxu0 %v1250
      %v2642 = vpop.f32.mrf.mxu0
      %v2643 = vadd.f32 0.0, %v2642
      %v2644 = vpop.f32.mrf.mxu0
      %v2645 = vpop.f32.mrf.mxu0
      %v2646 = vadd.f32 0.0, %v2645
      %v2647 = vpop.f32.mrf.mxu0
      %2648 = vmatprep.mubr.bf16.mxu0 0
      %2649 = vmatmul.mubr.bf16.gmra.mxu0 %v2405
      %v2650 = vpop.f32.mrf.mxu0
      %v2651 = vadd.f32 0.0, %v2650
      %v2652 = vpop.f32.mrf.mxu0
      %v2653 = vpop.f32.mrf.mxu0
      %v2654 = vadd.f32 0.0, %v2653
      %v2655 = vpop.f32.mrf.mxu0
      %2656 = vmatprep.mubr.bf16.mxu0 0
      %2657 = vmatmul.mubr.bf16.gmra.mxu0 %v2406
      %v2658 = vpop.f32.mrf.mxu0
      %v2659 = vadd.f32 0.0, %v2658
      %v2660 = vpop.f32.mrf.mxu0
      %v2661 = vpop.f32.mrf.mxu0
      %v2662 = vadd.f32 0.0, %v2661
      %v2663 = vpop.f32.mrf.mxu0
      %2664 = vdwg.mxu0
      %v2665 = vld [vmem:[#allocation2] sm:$0xff]
      %v2666 = vld [vmem:[#allocation2 + $0x8] sm:$0xff]
      %v2667 = vld [vmem:[#allocation2 + $0x10] sm:$0xff]
      %v2668 = vld [vmem:[#allocation2 + $0x18] sm:$0xff]
      %v2669 = vld [vmem:[#allocation2 + $0x20] sm:$0xff]
      %v2670 = vld [vmem:[#allocation2 + $0x28] sm:$0xff]
      %v2671 = vld [vmem:[#allocation2 + $0x30] sm:$0xff]
      %v2672 = vld [vmem:[#allocation2 + $0x38] sm:$0xff]
      %v2673 = vld [vmem:[#allocation2 + $0x40] sm:$0xff]
      %v2674 = vld [vmem:[#allocation2 + $0x48] sm:$0xff]
      %v2675 = vld [vmem:[#allocation2 + $0x50] sm:$0xff]
      %v2676 = vld [vmem:[#allocation2 + $0x58] sm:$0xff]
      %v2677 = vld [vmem:[#allocation2 + $0x60] sm:$0xff]
      %v2678 = vld [vmem:[#allocation2 + $0x68] sm:$0xff]
      %v2679 = vld [vmem:[#allocation2 + $0x70] sm:$0xff]
      %v2680 = vld [vmem:[#allocation2 + $0x78] sm:$0xff]
      %v2681 = vld [vmem:[#allocation2 + $0x80] sm:$0xff]
      %v2682 = vld [vmem:[#allocation2 + $0x88] sm:$0xff]
      %v2683 = vld [vmem:[#allocation2 + $0x90] sm:$0xff]
      %v2684 = vld [vmem:[#allocation2 + $0x98] sm:$0xff]
      %v2685 = vld [vmem:[#allocation2 + $0xa0] sm:$0xff]
      %v2686 = vld [vmem:[#allocation2 + $0xa8] sm:$0xff]
      %v2687 = vld [vmem:[#allocation2 + $0xb0] sm:$0xff]
      %v2688 = vld [vmem:[#allocation2 + $0xb8] sm:$0xff]
      %v2689 = vld [vmem:[#allocation2 + $0xc0] sm:$0xff]
      %v2690 = vld [vmem:[#allocation2 + $0xc8] sm:$0xff]
      %v2691 = vld [vmem:[#allocation2 + $0xd0] sm:$0xff]
      %v2692 = vld [vmem:[#allocation2 + $0xd8] sm:$0xff]
      %v2693 = vld [vmem:[#allocation2 + $0xe0] sm:$0xff]
      %v2694 = vld [vmem:[#allocation2 + $0xe8] sm:$0xff]
      %v2695 = vld [vmem:[#allocation2 + $0xf0] sm:$0xff]
      %v2696 = vld [vmem:[#allocation2 + $0xf8] sm:$0xff]
      %v2697 = vld [vmem:[#allocation2 + $0x100] sm:$0xff]
      %v2698 = vld [vmem:[#allocation2 + $0x108] sm:$0xff]
      %v2699 = vld [vmem:[#allocation2 + $0x110] sm:$0xff]
      %v2700 = vld [vmem:[#allocation2 + $0x118] sm:$0xff]
      %v2701 = vld [vmem:[#allocation2 + $0x120] sm:$0xff]
      %v2702 = vld [vmem:[#allocation2 + $0x128] sm:$0xff]
      %v2703 = vld [vmem:[#allocation2 + $0x130] sm:$0xff]
      %v2704 = vld [vmem:[#allocation2 + $0x138] sm:$0xff]
      %v2705 = vadd.f32 %v2665, %v2507
      %v2706 = vadd.f32 %v2666, %v2510
      %v2707 = vadd.f32 %v2667, %v2515
      %v2708 = vadd.f32 %v2668, %v2518
      %v2709 = vadd.f32 %v2669, %v2523
      %v2710 = vadd.f32 %v2670, %v2526
      %v2711 = vadd.f32 %v2671, %v2531
      %v2712 = vadd.f32 %v2672, %v2534
      %v2713 = vadd.f32 %v2673, %v2539
      %v2714 = vadd.f32 %v2674, %v2542
      %v2715 = vadd.f32 %v2675, %v2547
      %v2716 = vadd.f32 %v2676, %v2550
      %v2717 = vadd.f32 %v2677, %v2555
      %v2718 = vadd.f32 %v2678, %v2558
      %v2719 = vadd.f32 %v2679, %v2563
      %v2720 = vadd.f32 %v2680, %v2566
      %v2721 = vadd.f32 %v2681, %v2571
      %v2722 = vadd.f32 %v2682, %v2574
      %v2723 = vadd.f32 %v2683, %v2579
      %v2724 = vadd.f32 %v2684, %v2582
      %v2725 = vadd.f32 %v2685, %v2587
      %v2726 = vadd.f32 %v2686, %v2590
      %v2727 = vadd.f32 %v2687, %v2595
      %v2728 = vadd.f32 %v2688, %v2598
      %v2729 = vadd.f32 %v2689, %v2603
      %v2730 = vadd.f32 %v2690, %v2606
      %v2731 = vadd.f32 %v2691, %v2611
      %v2732 = vadd.f32 %v2692, %v2614
      %v2733 = vadd.f32 %v2693, %v2619
      %v2734 = vadd.f32 %v2694, %v2622
      %v2735 = vadd.f32 %v2695, %v2627
      %v2736 = vadd.f32 %v2696, %v2630
      %v2737 = vadd.f32 %v2697, %v2635
      %v2738 = vadd.f32 %v2698, %v2638
      %v2739 = vadd.f32 %v2699, %v2643
      %v2740 = vadd.f32 %v2700, %v2646
      %v2741 = vadd.f32 %v2701, %v2651
      %v2742 = vadd.f32 %v2702, %v2654
      %v2743 = vadd.f32 %v2703, %v2659
      %v2744 = vadd.f32 %v2704, %v2662
      %2745 = vst [vmem:[#allocation2] sm:$0xff] %v2705
      %2746 = vst [vmem:[#allocation2 + $0x8] sm:$0xff] %v2706
      %2747 = vst [vmem:[#allocation2 + $0x10] sm:$0xff] %v2707
      %2748 = vst [vmem:[#allocation2 + $0x18] sm:$0xff] %v2708
      %2749 = vst [vmem:[#allocation2 + $0x20] sm:$0xff] %v2709
      %2750 = vst [vmem:[#allocation2 + $0x28] sm:$0xff] %v2710
      %2751 = vst [vmem:[#allocation2 + $0x30] sm:$0xff] %v2711
      %2752 = vst [vmem:[#allocation2 + $0x38] sm:$0xff] %v2712
      %2753 = vst [vmem:[#allocation2 + $0x40] sm:$0xff] %v2713
      %2754 = vst [vmem:[#allocation2 + $0x48] sm:$0xff] %v2714
      %2755 = vst [vmem:[#allocation2 + $0x50] sm:$0xff] %v2715
      %2756 = vst [vmem:[#allocation2 + $0x58] sm:$0xff] %v2716
      %2757 = vst [vmem:[#allocation2 + $0x60] sm:$0xff] %v2717
      %2758 = vst [vmem:[#allocation2 + $0x68] sm:$0xff] %v2718
      %2759 = vst [vmem:[#allocation2 + $0x70] sm:$0xff] %v2719
      %2760 = vst [vmem:[#allocation2 + $0x78] sm:$0xff] %v2720
      %2761 = vst [vmem:[#allocation2 + $0x80] sm:$0xff] %v2721
      %2762 = vst [vmem:[#allocation2 + $0x88] sm:$0xff] %v2722
      %2763 = vst [vmem:[#allocation2 + $0x90] sm:$0xff] %v2723
      %2764 = vst [vmem:[#allocation2 + $0x98] sm:$0xff] %v2724
      %2765 = vst [vmem:[#allocation2 + $0xa0] sm:$0xff] %v2725
      %2766 = vst [vmem:[#allocation2 + $0xa8] sm:$0xff] %v2726
      %2767 = vst [vmem:[#allocation2 + $0xb0] sm:$0xff] %v2727
      %2768 = vst [vmem:[#allocation2 + $0xb8] sm:$0xff] %v2728
      %2769 = vst [vmem:[#allocation2 + $0xc0] sm:$0xff] %v2729
      %2770 = vst [vmem:[#allocation2 + $0xc8] sm:$0xff] %v2730
      %2771 = vst [vmem:[#allocation2 + $0xd0] sm:$0xff] %v2731
      %2772 = vst [vmem:[#allocation2 + $0xd8] sm:$0xff] %v2732
      %2773 = vst [vmem:[#allocation2 + $0xe0] sm:$0xff] %v2733
      %2774 = vst [vmem:[#allocation2 + $0xe8] sm:$0xff] %v2734
      %2775 = vst [vmem:[#allocation2 + $0xf0] sm:$0xff] %v2735
      %2776 = vst [vmem:[#allocation2 + $0xf8] sm:$0xff] %v2736
      %2777 = vst [vmem:[#allocation2 + $0x100] sm:$0xff] %v2737
      %2778 = vst [vmem:[#allocation2 + $0x108] sm:$0xff] %v2738
      %2779 = vst [vmem:[#allocation2 + $0x110] sm:$0xff] %v2739
      %2780 = vst [vmem:[#allocation2 + $0x118] sm:$0xff] %v2740
      %2781 = vst [vmem:[#allocation2 + $0x120] sm:$0xff] %v2741
      %2782 = vst [vmem:[#allocation2 + $0x128] sm:$0xff] %v2742
      %2783 = vst [vmem:[#allocation2 + $0x130] sm:$0xff] %v2743
      %2784 = vst [vmem:[#allocation2 + $0x138] sm:$0xff] %v2744
      %v2785 = vrot.slane %v346, 7
      %v2786 = vrot.slane %v347, 7
      %v2787 = vrot.slane %v348, 7
      %v2788 = vsel %vm393, %v2787, %v390
      %v2789 = vsel %vm393, %v2786, %v2787
      %v2790 = vsel %vm393, %v2785, %v2786
      %v2791 = vsel %vm393, %v1632, %v2785
      %v2792 = vpack.c.bf16 %v2790, %v2791
      %v2793 = vpack.c.bf16 %v2788, %v2789
      %s2794 = scalar_lea.vmem %s1, 384
      %v2795 = vld [vmem:[%s2794] sm:$0xf]
      %v2796 = vld [vmem:[%s2794 + $0x4] sm:$0xf]
      %v2797 = vld [vmem:[%s2794 + $0x8] sm:$0xf]
      %v2798 = vld [vmem:[%s2794 + $0xc] sm:$0xf]
      %v2799 = vld [vmem:[%s2794 + $0x10] sm:$0xf]
      %v2800 = vld [vmem:[%s2794 + $0x14] sm:$0xf]
      %v2801 = vld [vmem:[%s2794 + $0x18] sm:$0xf]
      %v2802 = vld [vmem:[%s2794 + $0x1c] sm:$0xf]
      %v2803 = vld [vmem:[%s2794 + $0x20] sm:$0xf]
      %v2804 = vld [vmem:[%s2794 + $0x24] sm:$0xf]
      %v2805 = vld [vmem:[%s2794 + $0x28] sm:$0xf]
      %v2806 = vld [vmem:[%s2794 + $0x2c] sm:$0xf]
      %v2807 = vld [vmem:[%s2794 + $0x30] sm:$0xf]
      %v2808 = vld [vmem:[%s2794 + $0x34] sm:$0xf]
      %v2809 = vld [vmem:[%s2794 + $0x38] sm:$0xf]
      %v2810 = vld [vmem:[%s2794 + $0x3c] sm:$0xf]
      %v2827 = vunpack.c.l.b16 %v2795
      %v2828 = vunpack.c.l.b16 %v2796
      %v2829 = vunpack.c.l.b16 %v2797
      %v2830 = vunpack.c.l.b16 %v2798
      %v2831 = vunpack.c.l.b16 %v2799
      %v2832 = vunpack.c.l.b16 %v2800
      %v2833 = vunpack.c.l.b16 %v2801
      %v2834 = vunpack.c.l.b16 %v2802
      %v2835 = vunpack.c.l.b16 %v2803
      %v2836 = vunpack.c.l.b16 %v2804
      %v2837 = vunpack.c.l.b16 %v2805
      %v2838 = vunpack.c.l.b16 %v2806
      %v2839 = vunpack.c.l.b16 %v2807
      %v2840 = vunpack.c.l.b16 %v2808
      %v2841 = vunpack.c.l.b16 %v2809
      %v2842 = vunpack.c.l.b16 %v2810
      %v2843 = vpack.c.b16 %v2828, %v2827
      %v2844 = vpack.c.b16 %v2830, %v2829
      %v2845 = vpack.c.b16 %v2832, %v2831
      %v2846 = vpack.c.b16 %v2834, %v2833
      %v2847 = vpack.c.b16 %v2836, %v2835
      %v2848 = vpack.c.b16 %v2838, %v2837
      %v2849 = vpack.c.b16 %v2840, %v2839
      %v2850 = vpack.c.b16 %v2842, %v2841
      %2859 = vmatprep.subr.bf16.mxu0 0
      %2860 = vmatpush1.bf16.msra.mxu0 %v2850
      %2861 = vmatprep.subr.bf16.mxu0 0
      %2862 = vmatpush1.bf16.msra.mxu0 %v2849
      %2863 = vmatprep.subr.bf16.mxu0 0
      %2864 = vmatpush1.bf16.msra.mxu0 %v2848
      %2865 = vmatprep.subr.bf16.mxu0 0
      %2866 = vmatpush1.bf16.msra.mxu0 %v2847
      %2867 = vmatprep.subr.bf16.mxu0 0
      %2868 = vmatpush1.bf16.msra.mxu0 %v2846
      %2869 = vmatprep.subr.bf16.mxu0 0
      %2870 = vmatpush1.bf16.msra.mxu0 %v2845
      %2871 = vmatprep.subr.bf16.mxu0 0
      %2872 = vmatpush1.bf16.msra.mxu0 %v2844
      %2873 = vmatprep.subr.bf16.mxu0 0
      %2874 = vmatpush1.bf16.msra.mxu0 %v2843
      %2875 = vmatprep.subr.bf16.mxu0 0
      %2876 = vmatpush2.bf16.msra.mxu0 0
      %2877 = vmatprep.subr.bf16.mxu0 0
      %2878 = vmatpush2.bf16.msra.mxu0 0
      %2879 = vmatprep.subr.bf16.mxu0 0
      %2880 = vmatpush2.bf16.msra.mxu0 0
      %2881 = vmatprep.subr.bf16.mxu0 0
      %2882 = vmatpush2.bf16.msra.mxu0 0
      %2883 = vmatprep.subr.bf16.mxu0 0
      %2884 = vmatpush2.bf16.msra.mxu0 0
      %2885 = vmatprep.subr.bf16.mxu0 0
      %2886 = vmatpush2.bf16.msra.mxu0 0
      %2887 = vmatprep.subr.bf16.mxu0 0
      %2888 = vmatpush2.bf16.msra.mxu0 0
      %2889 = vmatprep.subr.bf16.mxu0 0
      %2890 = vmatpush2.bf16.msra.mxu0 0
      %2891 = vmatprep.mubr.bf16.mxu0 0
      %2892 = vmatmul.mubr.bf16.gmra.mxu0 %v438
      %v2893 = vpop.f32.mrf.mxu0
      %v2894 = vadd.f32 0.0, %v2893
      %v2895 = vpop.f32.mrf.mxu0
      %v2896 = vpop.f32.mrf.mxu0
      %v2897 = vadd.f32 0.0, %v2896
      %v2898 = vpop.f32.mrf.mxu0
      %2899 = vmatprep.mubr.bf16.mxu0 0
      %2900 = vmatmul.mubr.bf16.gmra.mxu0 %v439
      %v2901 = vpop.f32.mrf.mxu0
      %v2902 = vadd.f32 0.0, %v2901
      %v2903 = vpop.f32.mrf.mxu0
      %v2904 = vpop.f32.mrf.mxu0
      %v2905 = vadd.f32 0.0, %v2904
      %v2906 = vpop.f32.mrf.mxu0
      %2907 = vmatprep.mubr.bf16.mxu0 0
      %2908 = vmatmul.mubr.bf16.gmra.mxu0 %v440
      %v2909 = vpop.f32.mrf.mxu0
      %v2910 = vadd.f32 0.0, %v2909
      %v2911 = vpop.f32.mrf.mxu0
      %v2912 = vpop.f32.mrf.mxu0
      %v2913 = vadd.f32 0.0, %v2912
      %v2914 = vpop.f32.mrf.mxu0
      %2915 = vmatprep.mubr.bf16.mxu0 0
      %2916 = vmatmul.mubr.bf16.gmra.mxu0 %v441
      %v2917 = vpop.f32.mrf.mxu0
      %v2918 = vadd.f32 0.0, %v2917
      %v2919 = vpop.f32.mrf.mxu0
      %v2920 = vpop.f32.mrf.mxu0
      %v2921 = vadd.f32 0.0, %v2920
      %v2922 = vpop.f32.mrf.mxu0
      %2923 = vmatprep.mubr.bf16.mxu0 0
      %2924 = vmatmul.mubr.bf16.gmra.mxu0 %v442
      %v2925 = vpop.f32.mrf.mxu0
      %v2926 = vadd.f32 0.0, %v2925
      %v2927 = vpop.f32.mrf.mxu0
      %v2928 = vpop.f32.mrf.mxu0
      %v2929 = vadd.f32 0.0, %v2928
      %v2930 = vpop.f32.mrf.mxu0
      %2931 = vmatprep.mubr.bf16.mxu0 0
      %2932 = vmatmul.mubr.bf16.gmra.mxu0 %v443
      %v2933 = vpop.f32.mrf.mxu0
      %v2934 = vadd.f32 0.0, %v2933
      %v2935 = vpop.f32.mrf.mxu0
      %v2936 = vpop.f32.mrf.mxu0
      %v2937 = vadd.f32 0.0, %v2936
      %v2938 = vpop.f32.mrf.mxu0
      %2939 = vmatprep.mubr.bf16.mxu0 0
      %2940 = vmatmul.mubr.bf16.gmra.mxu0 %v444
      %v2941 = vpop.f32.mrf.mxu0
      %v2942 = vadd.f32 0.0, %v2941
      %v2943 = vpop.f32.mrf.mxu0
      %v2944 = vpop.f32.mrf.mxu0
      %v2945 = vadd.f32 0.0, %v2944
      %v2946 = vpop.f32.mrf.mxu0
      %2947 = vmatprep.mubr.bf16.mxu0 0
      %2948 = vmatmul.mubr.bf16.gmra.mxu0 %v445
      %v2949 = vpop.f32.mrf.mxu0
      %v2950 = vadd.f32 0.0, %v2949
      %v2951 = vpop.f32.mrf.mxu0
      %v2952 = vpop.f32.mrf.mxu0
      %v2953 = vadd.f32 0.0, %v2952
      %v2954 = vpop.f32.mrf.mxu0
      %2955 = vmatprep.mubr.bf16.mxu0 0
      %2956 = vmatmul.mubr.bf16.gmra.mxu0 %v446
      %v2957 = vpop.f32.mrf.mxu0
      %v2958 = vadd.f32 0.0, %v2957
      %v2959 = vpop.f32.mrf.mxu0
      %v2960 = vpop.f32.mrf.mxu0
      %v2961 = vadd.f32 0.0, %v2960
      %v2962 = vpop.f32.mrf.mxu0
      %2963 = vmatprep.mubr.bf16.mxu0 0
      %2964 = vmatmul.mubr.bf16.gmra.mxu0 %v447
      %v2965 = vpop.f32.mrf.mxu0
      %v2966 = vadd.f32 0.0, %v2965
      %v2967 = vpop.f32.mrf.mxu0
      %v2968 = vpop.f32.mrf.mxu0
      %v2969 = vadd.f32 0.0, %v2968
      %v2970 = vpop.f32.mrf.mxu0
      %2971 = vmatprep.mubr.bf16.mxu0 0
      %2972 = vmatmul.mubr.bf16.gmra.mxu0 %v448
      %v2973 = vpop.f32.mrf.mxu0
      %v2974 = vadd.f32 0.0, %v2973
      %v2975 = vpop.f32.mrf.mxu0
      %v2976 = vpop.f32.mrf.mxu0
      %v2977 = vadd.f32 0.0, %v2976
      %v2978 = vpop.f32.mrf.mxu0
      %2979 = vmatprep.mubr.bf16.mxu0 0
      %2980 = vmatmul.mubr.bf16.gmra.mxu0 %v449
      %v2981 = vpop.f32.mrf.mxu0
      %v2982 = vadd.f32 0.0, %v2981
      %v2983 = vpop.f32.mrf.mxu0
      %v2984 = vpop.f32.mrf.mxu0
      %v2985 = vadd.f32 0.0, %v2984
      %v2986 = vpop.f32.mrf.mxu0
      %2987 = vmatprep.mubr.bf16.mxu0 0
      %2988 = vmatmul.mubr.bf16.gmra.mxu0 %v450
      %v2989 = vpop.f32.mrf.mxu0
      %v2990 = vadd.f32 0.0, %v2989
      %v2991 = vpop.f32.mrf.mxu0
      %v2992 = vpop.f32.mrf.mxu0
      %v2993 = vadd.f32 0.0, %v2992
      %v2994 = vpop.f32.mrf.mxu0
      %2995 = vmatprep.mubr.bf16.mxu0 0
      %2996 = vmatmul.mubr.bf16.gmra.mxu0 %v451
      %v2997 = vpop.f32.mrf.mxu0
      %v2998 = vadd.f32 0.0, %v2997
      %v2999 = vpop.f32.mrf.mxu0
      %v3000 = vpop.f32.mrf.mxu0
      %v3001 = vadd.f32 0.0, %v3000
      %v3002 = vpop.f32.mrf.mxu0
      %3003 = vmatprep.mubr.bf16.mxu0 0
      %3004 = vmatmul.mubr.bf16.gmra.mxu0 %v452
      %v3005 = vpop.f32.mrf.mxu0
      %v3006 = vadd.f32 0.0, %v3005
      %v3007 = vpop.f32.mrf.mxu0
      %v3008 = vpop.f32.mrf.mxu0
      %v3009 = vadd.f32 0.0, %v3008
      %v3010 = vpop.f32.mrf.mxu0
      %3011 = vmatprep.mubr.bf16.mxu0 0
      %3012 = vmatmul.mubr.bf16.gmra.mxu0 %v453
      %v3013 = vpop.f32.mrf.mxu0
      %v3014 = vadd.f32 0.0, %v3013
      %v3015 = vpop.f32.mrf.mxu0
      %v3016 = vpop.f32.mrf.mxu0
      %v3017 = vadd.f32 0.0, %v3016
      %v3018 = vpop.f32.mrf.mxu0
      %3019 = vmatprep.mubr.bf16.mxu0 0
      %3020 = vmatmul.mubr.bf16.gmra.mxu0 %v1637
      %v3021 = vpop.f32.mrf.mxu0
      %v3022 = vadd.f32 0.0, %v3021
      %v3023 = vpop.f32.mrf.mxu0
      %v3024 = vpop.f32.mrf.mxu0
      %v3025 = vadd.f32 0.0, %v3024
      %v3026 = vpop.f32.mrf.mxu0
      %3027 = vmatprep.mubr.bf16.mxu0 0
      %3028 = vmatmul.mubr.bf16.gmra.mxu0 %v1638
      %v3029 = vpop.f32.mrf.mxu0
      %v3030 = vadd.f32 0.0, %v3029
      %v3031 = vpop.f32.mrf.mxu0
      %v3032 = vpop.f32.mrf.mxu0
      %v3033 = vadd.f32 0.0, %v3032
      %v3034 = vpop.f32.mrf.mxu0
      %3035 = vmatprep.mubr.bf16.mxu0 0
      %3036 = vmatmul.mubr.bf16.gmra.mxu0 %v2792
      %v3037 = vpop.f32.mrf.mxu0
      %v3038 = vadd.f32 0.0, %v3037
      %v3039 = vpop.f32.mrf.mxu0
      %v3040 = vpop.f32.mrf.mxu0
      %v3041 = vadd.f32 0.0, %v3040
      %v3042 = vpop.f32.mrf.mxu0
      %3043 = vmatprep.mubr.bf16.mxu0 0
      %3044 = vmatmul.mubr.bf16.gmra.mxu0 %v2793
      %v3045 = vpop.f32.mrf.mxu0
      %v3046 = vadd.f32 0.0, %v3045
      %v3047 = vpop.f32.mrf.mxu0
      %v3048 = vpop.f32.mrf.mxu0
      %v3049 = vadd.f32 0.0, %v3048
      %v3050 = vpop.f32.mrf.mxu0
      %3051 = vdwg.mxu0
      %v3052 = vld [vmem:[#allocation2] sm:$0xff]
      %v3053 = vld [vmem:[#allocation2 + $0x8] sm:$0xff]
      %v3054 = vld [vmem:[#allocation2 + $0x10] sm:$0xff]
      %v3055 = vld [vmem:[#allocation2 + $0x18] sm:$0xff]
      %v3056 = vld [vmem:[#allocation2 + $0x20] sm:$0xff]
      %v3057 = vld [vmem:[#allocation2 + $0x28] sm:$0xff]
      %v3058 = vld [vmem:[#allocation2 + $0x30] sm:$0xff]
      %v3059 = vld [vmem:[#allocation2 + $0x38] sm:$0xff]
      %v3060 = vld [vmem:[#allocation2 + $0x40] sm:$0xff]
      %v3061 = vld [vmem:[#allocation2 + $0x48] sm:$0xff]
      %v3062 = vld [vmem:[#allocation2 + $0x50] sm:$0xff]
      %v3063 = vld [vmem:[#allocation2 + $0x58] sm:$0xff]
      %v3064 = vld [vmem:[#allocation2 + $0x60] sm:$0xff]
      %v3065 = vld [vmem:[#allocation2 + $0x68] sm:$0xff]
      %v3066 = vld [vmem:[#allocation2 + $0x70] sm:$0xff]
      %v3067 = vld [vmem:[#allocation2 + $0x78] sm:$0xff]
      %v3068 = vld [vmem:[#allocation2 + $0x80] sm:$0xff]
      %v3069 = vld [vmem:[#allocation2 + $0x88] sm:$0xff]
      %v3070 = vld [vmem:[#allocation2 + $0x90] sm:$0xff]
      %v3071 = vld [vmem:[#allocation2 + $0x98] sm:$0xff]
      %v3072 = vld [vmem:[#allocation2 + $0xa0] sm:$0xff]
      %v3073 = vld [vmem:[#allocation2 + $0xa8] sm:$0xff]
      %v3074 = vld [vmem:[#allocation2 + $0xb0] sm:$0xff]
      %v3075 = vld [vmem:[#allocation2 + $0xb8] sm:$0xff]
      %v3076 = vld [vmem:[#allocation2 + $0xc0] sm:$0xff]
      %v3077 = vld [vmem:[#allocation2 + $0xc8] sm:$0xff]
      %v3078 = vld [vmem:[#allocation2 + $0xd0] sm:$0xff]
      %v3079 = vld [vmem:[#allocation2 + $0xd8] sm:$0xff]
      %v3080 = vld [vmem:[#allocation2 + $0xe0] sm:$0xff]
      %v3081 = vld [vmem:[#allocation2 + $0xe8] sm:$0xff]
      %v3082 = vld [vmem:[#allocation2 + $0xf0] sm:$0xff]
      %v3083 = vld [vmem:[#allocation2 + $0xf8] sm:$0xff]
      %v3084 = vld [vmem:[#allocation2 + $0x100] sm:$0xff]
      %v3085 = vld [vmem:[#allocation2 + $0x108] sm:$0xff]
      %v3086 = vld [vmem:[#allocation2 + $0x110] sm:$0xff]
      %v3087 = vld [vmem:[#allocation2 + $0x118] sm:$0xff]
      %v3088 = vld [vmem:[#allocation2 + $0x120] sm:$0xff]
      %v3089 = vld [vmem:[#allocation2 + $0x128] sm:$0xff]
      %v3090 = vld [vmem:[#allocation2 + $0x130] sm:$0xff]
      %v3091 = vld [vmem:[#allocation2 + $0x138] sm:$0xff]
      %v3092 = vadd.f32 %v3052, %v2894
      %v3093 = vadd.f32 %v3053, %v2897
      %v3094 = vadd.f32 %v3054, %v2902
      %v3095 = vadd.f32 %v3055, %v2905
      %v3096 = vadd.f32 %v3056, %v2910
      %v3097 = vadd.f32 %v3057, %v2913
      %v3098 = vadd.f32 %v3058, %v2918
      %v3099 = vadd.f32 %v3059, %v2921
      %v3100 = vadd.f32 %v3060, %v2926
      %v3101 = vadd.f32 %v3061, %v2929
      %v3102 = vadd.f32 %v3062, %v2934
      %v3103 = vadd.f32 %v3063, %v2937
      %v3104 = vadd.f32 %v3064, %v2942
      %v3105 = vadd.f32 %v3065, %v2945
      %v3106 = vadd.f32 %v3066, %v2950
      %v3107 = vadd.f32 %v3067, %v2953
      %v3108 = vadd.f32 %v3068, %v2958
      %v3109 = vadd.f32 %v3069, %v2961
      %v3110 = vadd.f32 %v3070, %v2966
      %v3111 = vadd.f32 %v3071, %v2969
      %v3112 = vadd.f32 %v3072, %v2974
      %v3113 = vadd.f32 %v3073, %v2977
      %v3114 = vadd.f32 %v3074, %v2982
      %v3115 = vadd.f32 %v3075, %v2985
      %v3116 = vadd.f32 %v3076, %v2990
      %v3117 = vadd.f32 %v3077, %v2993
      %v3118 = vadd.f32 %v3078, %v2998
      %v3119 = vadd.f32 %v3079, %v3001
      %v3120 = vadd.f32 %v3080, %v3006
      %v3121 = vadd.f32 %v3081, %v3009
      %v3122 = vadd.f32 %v3082, %v3014
      %v3123 = vadd.f32 %v3083, %v3017
      %v3124 = vadd.f32 %v3084, %v3022
      %v3125 = vadd.f32 %v3085, %v3025
      %v3126 = vadd.f32 %v3086, %v3030
      %v3127 = vadd.f32 %v3087, %v3033
      %v3128 = vadd.f32 %v3088, %v3038
      %v3129 = vadd.f32 %v3089, %v3041
      %v3130 = vadd.f32 %v3090, %v3046
      %v3131 = vadd.f32 %v3091, %v3049
      %3132 = vst [vmem:[#allocation2] sm:$0xff] %v3092
      %3133 = vst [vmem:[#allocation2 + $0x8] sm:$0xff] %v3093
      %3134 = vst [vmem:[#allocation2 + $0x10] sm:$0xff] %v3094
      %3135 = vst [vmem:[#allocation2 + $0x18] sm:$0xff] %v3095
      %3136 = vst [vmem:[#allocation2 + $0x20] sm:$0xff] %v3096
      %3137 = vst [vmem:[#allocation2 + $0x28] sm:$0xff] %v3097
      %3138 = vst [vmem:[#allocation2 + $0x30] sm:$0xff] %v3098
      %3139 = vst [vmem:[#allocation2 + $0x38] sm:$0xff] %v3099
      %3140 = vst [vmem:[#allocation2 + $0x40] sm:$0xff] %v3100
      %3141 = vst [vmem:[#allocation2 + $0x48] sm:$0xff] %v3101
      %3142 = vst [vmem:[#allocation2 + $0x50] sm:$0xff] %v3102
      %3143 = vst [vmem:[#allocation2 + $0x58] sm:$0xff] %v3103
      %3144 = vst [vmem:[#allocation2 + $0x60] sm:$0xff] %v3104
      %3145 = vst [vmem:[#allocation2 + $0x68] sm:$0xff] %v3105
      %3146 = vst [vmem:[#allocation2 + $0x70] sm:$0xff] %v3106
      %3147 = vst [vmem:[#allocation2 + $0x78] sm:$0xff] %v3107
      %3148 = vst [vmem:[#allocation2 + $0x80] sm:$0xff] %v3108
      %3149 = vst [vmem:[#allocation2 + $0x88] sm:$0xff] %v3109
      %3150 = vst [vmem:[#allocation2 + $0x90] sm:$0xff] %v3110
      %3151 = vst [vmem:[#allocation2 + $0x98] sm:$0xff] %v3111
      %3152 = vst [vmem:[#allocation2 + $0xa0] sm:$0xff] %v3112
      %3153 = vst [vmem:[#allocation2 + $0xa8] sm:$0xff] %v3113
      %3154 = vst [vmem:[#allocation2 + $0xb0] sm:$0xff] %v3114
      %3155 = vst [vmem:[#allocation2 + $0xb8] sm:$0xff] %v3115
      %3156 = vst [vmem:[#allocation2 + $0xc0] sm:$0xff] %v3116
      %3157 = vst [vmem:[#allocation2 + $0xc8] sm:$0xff] %v3117
      %3158 = vst [vmem:[#allocation2 + $0xd0] sm:$0xff] %v3118
      %3159 = vst [vmem:[#allocation2 + $0xd8] sm:$0xff] %v3119
      %3160 = vst [vmem:[#allocation2 + $0xe0] sm:$0xff] %v3120
      %3161 = vst [vmem:[#allocation2 + $0xe8] sm:$0xff] %v3121
      %3162 = vst [vmem:[#allocation2 + $0xf0] sm:$0xff] %v3122
      %3163 = vst [vmem:[#allocation2 + $0xf8] sm:$0xff] %v3123
      %3164 = vst [vmem:[#allocation2 + $0x100] sm:$0xff] %v3124
      %3165 = vst [vmem:[#allocation2 + $0x108] sm:$0xff] %v3125
      %3166 = vst [vmem:[#allocation2 + $0x110] sm:$0xff] %v3126
      %3167 = vst [vmem:[#allocation2 + $0x118] sm:$0xff] %v3127
      %3168 = vst [vmem:[#allocation2 + $0x120] sm:$0xff] %v3128
      %3169 = vst [vmem:[#allocation2 + $0x128] sm:$0xff] %v3129
      %3170 = vst [vmem:[#allocation2 + $0x130] sm:$0xff] %v3130
      %3171 = vst [vmem:[#allocation2 + $0x138] sm:$0xff] %v3131
      %v3172 = vpack.c.bf16 %v347, %v346
      %v3173 = vpack.c.bf16 %v349, %v348
      %s3174 = scalar_lea.vmem %s1, 448
      %v3175 = vld [vmem:[%s3174] sm:$0xf]
      %v3176 = vld [vmem:[%s3174 + $0x4] sm:$0xf]
      %v3177 = vld [vmem:[%s3174 + $0x8] sm:$0xf]
      %v3178 = vld [vmem:[%s3174 + $0xc] sm:$0xf]
      %v3179 = vld [vmem:[%s3174 + $0x10] sm:$0xf]
      %v3180 = vld [vmem:[%s3174 + $0x14] sm:$0xf]
      %v3181 = vld [vmem:[%s3174 + $0x18] sm:$0xf]
      %v3182 = vld [vmem:[%s3174 + $0x1c] sm:$0xf]
      %v3183 = vld [vmem:[%s3174 + $0x20] sm:$0xf]
      %v3184 = vld [vmem:[%s3174 + $0x24] sm:$0xf]
      %v3185 = vld [vmem:[%s3174 + $0x28] sm:$0xf]
      %v3186 = vld [vmem:[%s3174 + $0x2c] sm:$0xf]
      %v3187 = vld [vmem:[%s3174 + $0x30] sm:$0xf]
      %v3188 = vld [vmem:[%s3174 + $0x34] sm:$0xf]
      %v3189 = vld [vmem:[%s3174 + $0x38] sm:$0xf]
      %v3190 = vld [vmem:[%s3174 + $0x3c] sm:$0xf]
      %v3207 = vunpack.c.l.b16 %v3175
      %v3208 = vunpack.c.l.b16 %v3176
      %v3209 = vunpack.c.l.b16 %v3177
      %v3210 = vunpack.c.l.b16 %v3178
      %v3211 = vunpack.c.l.b16 %v3179
      %v3212 = vunpack.c.l.b16 %v3180
      %v3213 = vunpack.c.l.b16 %v3181
      %v3214 = vunpack.c.l.b16 %v3182
      %v3215 = vunpack.c.l.b16 %v3183
      %v3216 = vunpack.c.l.b16 %v3184
      %v3217 = vunpack.c.l.b16 %v3185
      %v3218 = vunpack.c.l.b16 %v3186
      %v3219 = vunpack.c.l.b16 %v3187
      %v3220 = vunpack.c.l.b16 %v3188
      %v3221 = vunpack.c.l.b16 %v3189
      %v3222 = vunpack.c.l.b16 %v3190
      %v3223 = vpack.c.b16 %v3208, %v3207
      %v3224 = vpack.c.b16 %v3210, %v3209
      %v3225 = vpack.c.b16 %v3212, %v3211
      %v3226 = vpack.c.b16 %v3214, %v3213
      %v3227 = vpack.c.b16 %v3216, %v3215
      %v3228 = vpack.c.b16 %v3218, %v3217
      %v3229 = vpack.c.b16 %v3220, %v3219
      %v3230 = vpack.c.b16 %v3222, %v3221
      %3239 = vmatprep.subr.bf16.mxu0 0
      %3240 = vmatpush1.bf16.msra.mxu0 %v3230
      %3241 = vmatprep.subr.bf16.mxu0 0
      %3242 = vmatpush1.bf16.msra.mxu0 %v3229
      %3243 = vmatprep.subr.bf16.mxu0 0
      %3244 = vmatpush1.bf16.msra.mxu0 %v3228
      %3245 = vmatprep.subr.bf16.mxu0 0
      %3246 = vmatpush1.bf16.msra.mxu0 %v3227
      %3247 = vmatprep.subr.bf16.mxu0 0
      %3248 = vmatpush1.bf16.msra.mxu0 %v3226
      %3249 = vmatprep.subr.bf16.mxu0 0
      %3250 = vmatpush1.bf16.msra.mxu0 %v3225
      %3251 = vmatprep.subr.bf16.mxu0 0
      %3252 = vmatpush1.bf16.msra.mxu0 %v3224
      %3253 = vmatprep.subr.bf16.mxu0 0
      %3254 = vmatpush1.bf16.msra.mxu0 %v3223
      %3255 = vmatprep.subr.bf16.mxu0 0
      %3256 = vmatpush2.bf16.msra.mxu0 0
      %3257 = vmatprep.subr.bf16.mxu0 0
      %3258 = vmatpush2.bf16.msra.mxu0 0
      %3259 = vmatprep.subr.bf16.mxu0 0
      %3260 = vmatpush2.bf16.msra.mxu0 0
      %3261 = vmatprep.subr.bf16.mxu0 0
      %3262 = vmatpush2.bf16.msra.mxu0 0
      %3263 = vmatprep.subr.bf16.mxu0 0
      %3264 = vmatpush2.bf16.msra.mxu0 0
      %3265 = vmatprep.subr.bf16.mxu0 0
      %3266 = vmatpush2.bf16.msra.mxu0 0
      %3267 = vmatprep.subr.bf16.mxu0 0
      %3268 = vmatpush2.bf16.msra.mxu0 0
      %3269 = vmatprep.subr.bf16.mxu0 0
      %3270 = vmatpush2.bf16.msra.mxu0 0
      %3271 = vmatprep.mubr.bf16.mxu0 0
      %3272 = vmatmul.mubr.bf16.gmra.mxu0 %v755
      %v3273 = vpop.f32.mrf.mxu0
      %v3274 = vadd.f32 0.0, %v3273
      %v3275 = vpop.f32.mrf.mxu0
      %v3276 = vpop.f32.mrf.mxu0
      %v3277 = vadd.f32 0.0, %v3276
      %v3278 = vpop.f32.mrf.mxu0
      %3279 = vmatprep.mubr.bf16.mxu0 0
      %3280 = vmatmul.mubr.bf16.gmra.mxu0 %v756
      %v3281 = vpop.f32.mrf.mxu0
      %v3282 = vadd.f32 0.0, %v3281
      %v3283 = vpop.f32.mrf.mxu0
      %v3284 = vpop.f32.mrf.mxu0
      %v3285 = vadd.f32 0.0, %v3284
      %v3286 = vpop.f32.mrf.mxu0
      %3287 = vmatprep.mubr.bf16.mxu0 0
      %3288 = vmatmul.mubr.bf16.gmra.mxu0 %v757
      %v3289 = vpop.f32.mrf.mxu0
      %v3290 = vadd.f32 0.0, %v3289
      %v3291 = vpop.f32.mrf.mxu0
      %v3292 = vpop.f32.mrf.mxu0
      %v3293 = vadd.f32 0.0, %v3292
      %v3294 = vpop.f32.mrf.mxu0
      %3295 = vmatprep.mubr.bf16.mxu0 0
      %3296 = vmatmul.mubr.bf16.gmra.mxu0 %v758
      %v3297 = vpop.f32.mrf.mxu0
      %v3298 = vadd.f32 0.0, %v3297
      %v3299 = vpop.f32.mrf.mxu0
      %v3300 = vpop.f32.mrf.mxu0
      %v3301 = vadd.f32 0.0, %v3300
      %v3302 = vpop.f32.mrf.mxu0
      %3303 = vmatprep.mubr.bf16.mxu0 0
      %3304 = vmatmul.mubr.bf16.gmra.mxu0 %v759
      %v3305 = vpop.f32.mrf.mxu0
      %v3306 = vadd.f32 0.0, %v3305
      %v3307 = vpop.f32.mrf.mxu0
      %v3308 = vpop.f32.mrf.mxu0
      %v3309 = vadd.f32 0.0, %v3308
      %v3310 = vpop.f32.mrf.mxu0
      %3311 = vmatprep.mubr.bf16.mxu0 0
      %3312 = vmatmul.mubr.bf16.gmra.mxu0 %v760
      %v3313 = vpop.f32.mrf.mxu0
      %v3314 = vadd.f32 0.0, %v3313
      %v3315 = vpop.f32.mrf.mxu0
      %v3316 = vpop.f32.mrf.mxu0
      %v3317 = vadd.f32 0.0, %v3316
      %v3318 = vpop.f32.mrf.mxu0
      %3319 = vmatprep.mubr.bf16.mxu0 0
      %3320 = vmatmul.mubr.bf16.gmra.mxu0 %v761
      %v3321 = vpop.f32.mrf.mxu0
      %v3322 = vadd.f32 0.0, %v3321
      %v3323 = vpop.f32.mrf.mxu0
      %v3324 = vpop.f32.mrf.mxu0
      %v3325 = vadd.f32 0.0, %v3324
      %v3326 = vpop.f32.mrf.mxu0
      %3327 = vmatprep.mubr.bf16.mxu0 0
      %3328 = vmatmul.mubr.bf16.gmra.mxu0 %v762
      %v3329 = vpop.f32.mrf.mxu0
      %v3330 = vadd.f32 0.0, %v3329
      %v3331 = vpop.f32.mrf.mxu0
      %v3332 = vpop.f32.mrf.mxu0
      %v3333 = vadd.f32 0.0, %v3332
      %v3334 = vpop.f32.mrf.mxu0
      %3335 = vmatprep.mubr.bf16.mxu0 0
      %3336 = vmatmul.mubr.bf16.gmra.mxu0 %v763
      %v3337 = vpop.f32.mrf.mxu0
      %v3338 = vadd.f32 0.0, %v3337
      %v3339 = vpop.f32.mrf.mxu0
      %v3340 = vpop.f32.mrf.mxu0
      %v3341 = vadd.f32 0.0, %v3340
      %v3342 = vpop.f32.mrf.mxu0
      %3343 = vmatprep.mubr.bf16.mxu0 0
      %3344 = vmatmul.mubr.bf16.gmra.mxu0 %v764
      %v3345 = vpop.f32.mrf.mxu0
      %v3346 = vadd.f32 0.0, %v3345
      %v3347 = vpop.f32.mrf.mxu0
      %v3348 = vpop.f32.mrf.mxu0
      %v3349 = vadd.f32 0.0, %v3348
      %v3350 = vpop.f32.mrf.mxu0
      %3351 = vmatprep.mubr.bf16.mxu0 0
      %3352 = vmatmul.mubr.bf16.gmra.mxu0 %v765
      %v3353 = vpop.f32.mrf.mxu0
      %v3354 = vadd.f32 0.0, %v3353
      %v3355 = vpop.f32.mrf.mxu0
      %v3356 = vpop.f32.mrf.mxu0
      %v3357 = vadd.f32 0.0, %v3356
      %v3358 = vpop.f32.mrf.mxu0
      %3359 = vmatprep.mubr.bf16.mxu0 0
      %3360 = vmatmul.mubr.bf16.gmra.mxu0 %v766
      %v3361 = vpop.f32.mrf.mxu0
      %v3362 = vadd.f32 0.0, %v3361
      %v3363 = vpop.f32.mrf.mxu0
      %v3364 = vpop.f32.mrf.mxu0
      %v3365 = vadd.f32 0.0, %v3364
      %v3366 = vpop.f32.mrf.mxu0
      %3367 = vmatprep.mubr.bf16.mxu0 0
      %3368 = vmatmul.mubr.bf16.gmra.mxu0 %v767
      %v3369 = vpop.f32.mrf.mxu0
      %v3370 = vadd.f32 0.0, %v3369
      %v3371 = vpop.f32.mrf.mxu0
      %v3372 = vpop.f32.mrf.mxu0
      %v3373 = vadd.f32 0.0, %v3372
      %v3374 = vpop.f32.mrf.mxu0
      %3375 = vmatprep.mubr.bf16.mxu0 0
      %3376 = vmatmul.mubr.bf16.gmra.mxu0 %v768
      %v3377 = vpop.f32.mrf.mxu0
      %v3378 = vadd.f32 0.0, %v3377
      %v3379 = vpop.f32.mrf.mxu0
      %v3380 = vpop.f32.mrf.mxu0
      %v3381 = vadd.f32 0.0, %v3380
      %v3382 = vpop.f32.mrf.mxu0
      %3383 = vmatprep.mubr.bf16.mxu0 0
      %3384 = vmatmul.mubr.bf16.gmra.mxu0 %v769
      %v3385 = vpop.f32.mrf.mxu0
      %v3386 = vadd.f32 0.0, %v3385
      %v3387 = vpop.f32.mrf.mxu0
      %v3388 = vpop.f32.mrf.mxu0
      %v3389 = vadd.f32 0.0, %v3388
      %v3390 = vpop.f32.mrf.mxu0
      %3391 = vmatprep.mubr.bf16.mxu0 0
      %3392 = vmatmul.mubr.bf16.gmra.mxu0 %v770
      %v3393 = vpop.f32.mrf.mxu0
      %v3394 = vadd.f32 0.0, %v3393
      %v3395 = vpop.f32.mrf.mxu0
      %v3396 = vpop.f32.mrf.mxu0
      %v3397 = vadd.f32 0.0, %v3396
      %v3398 = vpop.f32.mrf.mxu0
      %3399 = vmatprep.mubr.bf16.mxu0 0
      %3400 = vmatmul.mubr.bf16.gmra.mxu0 %v2017
      %v3401 = vpop.f32.mrf.mxu0
      %v3402 = vadd.f32 0.0, %v3401
      %v3403 = vpop.f32.mrf.mxu0
      %v3404 = vpop.f32.mrf.mxu0
      %v3405 = vadd.f32 0.0, %v3404
      %v3406 = vpop.f32.mrf.mxu0
      %3407 = vmatprep.mubr.bf16.mxu0 0
      %3408 = vmatmul.mubr.bf16.gmra.mxu0 %v2018
      %v3409 = vpop.f32.mrf.mxu0
      %v3410 = vadd.f32 0.0, %v3409
      %v3411 = vpop.f32.mrf.mxu0
      %v3412 = vpop.f32.mrf.mxu0
      %v3413 = vadd.f32 0.0, %v3412
      %v3414 = vpop.f32.mrf.mxu0
      %3415 = vmatprep.mubr.bf16.mxu0 0
      %3416 = vmatmul.mubr.bf16.gmra.mxu0 %v3172
      %v3417 = vpop.f32.mrf.mxu0
      %v3418 = vadd.f32 0.0, %v3417
      %v3419 = vpop.f32.mrf.mxu0
      %v3420 = vpop.f32.mrf.mxu0
      %v3421 = vadd.f32 0.0, %v3420
      %v3422 = vpop.f32.mrf.mxu0
      %3423 = vmatprep.mubr.bf16.mxu0 0
      %3424 = vmatmul.mubr.bf16.gmra.mxu0 %v3173
      %v3425 = vpop.f32.mrf.mxu0
      %v3426 = vadd.f32 0.0, %v3425
      %v3427 = vpop.f32.mrf.mxu0
      %v3428 = vpop.f32.mrf.mxu0
      %v3429 = vadd.f32 0.0, %v3428
      %v3430 = vpop.f32.mrf.mxu0
      %3431 = vdwg.mxu0
      %v3432 = vld [vmem:[#allocation2] sm:$0xff]
      %v3433 = vld [vmem:[#allocation2 + $0x8] sm:$0xff]
      %v3434 = vld [vmem:[#allocation2 + $0x10] sm:$0xff]
      %v3435 = vld [vmem:[#allocation2 + $0x18] sm:$0xff]
      %v3436 = vld [vmem:[#allocation2 + $0x20] sm:$0xff]
      %v3437 = vld [vmem:[#allocation2 + $0x28] sm:$0xff]
      %v3438 = vld [vmem:[#allocation2 + $0x30] sm:$0xff]
      %v3439 = vld [vmem:[#allocation2 + $0x38] sm:$0xff]
      %v3440 = vld [vmem:[#allocation2 + $0x40] sm:$0xff]
      %v3441 = vld [vmem:[#allocation2 + $0x48] sm:$0xff]
      %v3442 = vld [vmem:[#allocation2 + $0x50] sm:$0xff]
      %v3443 = vld [vmem:[#allocation2 + $0x58] sm:$0xff]
      %v3444 = vld [vmem:[#allocation2 + $0x60] sm:$0xff]
      %v3445 = vld [vmem:[#allocation2 + $0x68] sm:$0xff]
      %v3446 = vld [vmem:[#allocation2 + $0x70] sm:$0xff]
      %v3447 = vld [vmem:[#allocation2 + $0x78] sm:$0xff]
      %v3448 = vld [vmem:[#allocation2 + $0x80] sm:$0xff]
      %v3449 = vld [vmem:[#allocation2 + $0x88] sm:$0xff]
      %v3450 = vld [vmem:[#allocation2 + $0x90] sm:$0xff]
      %v3451 = vld [vmem:[#allocation2 + $0x98] sm:$0xff]
      %v3452 = vld [vmem:[#allocation2 + $0xa0] sm:$0xff]
      %v3453 = vld [vmem:[#allocation2 + $0xa8] sm:$0xff]
      %v3454 = vld [vmem:[#allocation2 + $0xb0] sm:$0xff]
      %v3455 = vld [vmem:[#allocation2 + $0xb8] sm:$0xff]
      %v3456 = vld [vmem:[#allocation2 + $0xc0] sm:$0xff]
      %v3457 = vld [vmem:[#allocation2 + $0xc8] sm:$0xff]
      %v3458 = vld [vmem:[#allocation2 + $0xd0] sm:$0xff]
      %v3459 = vld [vmem:[#allocation2 + $0xd8] sm:$0xff]
      %v3460 = vld [vmem:[#allocation2 + $0xe0] sm:$0xff]
      %v3461 = vld [vmem:[#allocation2 + $0xe8] sm:$0xff]
      %v3462 = vld [vmem:[#allocation2 + $0xf0] sm:$0xff]
      %v3463 = vld [vmem:[#allocation2 + $0xf8] sm:$0xff]
      %v3464 = vld [vmem:[#allocation2 + $0x100] sm:$0xff]
      %v3465 = vld [vmem:[#allocation2 + $0x108] sm:$0xff]
      %v3466 = vld [vmem:[#allocation2 + $0x110] sm:$0xff]
      %v3467 = vld [vmem:[#allocation2 + $0x118] sm:$0xff]
      %v3468 = vld [vmem:[#allocation2 + $0x120] sm:$0xff]
      %v3469 = vld [vmem:[#allocation2 + $0x128] sm:$0xff]
      %v3470 = vld [vmem:[#allocation2 + $0x130] sm:$0xff]
      %v3471 = vld [vmem:[#allocation2 + $0x138] sm:$0xff]
      %v3472 = vadd.f32 %v3432, %v3274
      %v3473 = vadd.f32 %v3433, %v3277
      %v3474 = vadd.f32 %v3434, %v3282
      %v3475 = vadd.f32 %v3435, %v3285
      %v3476 = vadd.f32 %v3436, %v3290
      %v3477 = vadd.f32 %v3437, %v3293
      %v3478 = vadd.f32 %v3438, %v3298
      %v3479 = vadd.f32 %v3439, %v3301
      %v3480 = vadd.f32 %v3440, %v3306
      %v3481 = vadd.f32 %v3441, %v3309
      %v3482 = vadd.f32 %v3442, %v3314
      %v3483 = vadd.f32 %v3443, %v3317
      %v3484 = vadd.f32 %v3444, %v3322
      %v3485 = vadd.f32 %v3445, %v3325
      %v3486 = vadd.f32 %v3446, %v3330
      %v3487 = vadd.f32 %v3447, %v3333
      %v3488 = vadd.f32 %v3448, %v3338
      %v3489 = vadd.f32 %v3449, %v3341
      %v3490 = vadd.f32 %v3450, %v3346
      %v3491 = vadd.f32 %v3451, %v3349
      %v3492 = vadd.f32 %v3452, %v3354
      %v3493 = vadd.f32 %v3453, %v3357
      %v3494 = vadd.f32 %v3454, %v3362
      %v3495 = vadd.f32 %v3455, %v3365
      %v3496 = vadd.f32 %v3456, %v3370
      %v3497 = vadd.f32 %v3457, %v3373
      %v3498 = vadd.f32 %v3458, %v3378
      %v3499 = vadd.f32 %v3459, %v3381
      %v3500 = vadd.f32 %v3460, %v3386
      %v3501 = vadd.f32 %v3461, %v3389
      %v3502 = vadd.f32 %v3462, %v3394
      %v3503 = vadd.f32 %v3463, %v3397
      %v3504 = vadd.f32 %v3464, %v3402
      %v3505 = vadd.f32 %v3465, %v3405
      %v3506 = vadd.f32 %v3466, %v3410
      %v3507 = vadd.f32 %v3467, %v3413
      %v3508 = vadd.f32 %v3468, %v3418
      %v3509 = vadd.f32 %v3469, %v3421
      %v3510 = vadd.f32 %v3470, %v3426
      %v3511 = vadd.f32 %v3471, %v3429
      %3512 = vst [vmem:[#allocation2] sm:$0xff] %v3472
      %3513 = vst [vmem:[#allocation2 + $0x8] sm:$0xff] %v3473
      %3514 = vst [vmem:[#allocation2 + $0x10] sm:$0xff] %v3474
      %3515 = vst [vmem:[#allocation2 + $0x18] sm:$0xff] %v3475
      %3516 = vst [vmem:[#allocation2 + $0x20] sm:$0xff] %v3476
      %3517 = vst [vmem:[#allocation2 + $0x28] sm:$0xff] %v3477
      %3518 = vst [vmem:[#allocation2 + $0x30] sm:$0xff] %v3478
      %3519 = vst [vmem:[#allocation2 + $0x38] sm:$0xff] %v3479
      %3520 = vst [vmem:[#allocation2 + $0x40] sm:$0xff] %v3480
      %3521 = vst [vmem:[#allocation2 + $0x48] sm:$0xff] %v3481
      %3522 = vst [vmem:[#allocation2 + $0x50] sm:$0xff] %v3482
      %3523 = vst [vmem:[#allocation2 + $0x58] sm:$0xff] %v3483
      %3524 = vst [vmem:[#allocation2 + $0x60] sm:$0xff] %v3484
      %3525 = vst [vmem:[#allocation2 + $0x68] sm:$0xff] %v3485
      %3526 = vst [vmem:[#allocation2 + $0x70] sm:$0xff] %v3486
      %3527 = vst [vmem:[#allocation2 + $0x78] sm:$0xff] %v3487
      %3528 = vst [vmem:[#allocation2 + $0x80] sm:$0xff] %v3488
      %3529 = vst [vmem:[#allocation2 + $0x88] sm:$0xff] %v3489
      %3530 = vst [vmem:[#allocation2 + $0x90] sm:$0xff] %v3490
      %3531 = vst [vmem:[#allocation2 + $0x98] sm:$0xff] %v3491
      %3532 = vst [vmem:[#allocation2 + $0xa0] sm:$0xff] %v3492
      %3533 = vst [vmem:[#allocation2 + $0xa8] sm:$0xff] %v3493
      %3534 = vst [vmem:[#allocation2 + $0xb0] sm:$0xff] %v3494
      %3535 = vst [vmem:[#allocation2 + $0xb8] sm:$0xff] %v3495
      %3536 = vst [vmem:[#allocation2 + $0xc0] sm:$0xff] %v3496
      %3537 = vst [vmem:[#allocation2 + $0xc8] sm:$0xff] %v3497
      %3538 = vst [vmem:[#allocation2 + $0xd0] sm:$0xff] %v3498
      %3539 = vst [vmem:[#allocation2 + $0xd8] sm:$0xff] %v3499
      %3540 = vst [vmem:[#allocation2 + $0xe0] sm:$0xff] %v3500
      %3541 = vst [vmem:[#allocation2 + $0xe8] sm:$0xff] %v3501
      %3542 = vst [vmem:[#allocation2 + $0xf0] sm:$0xff] %v3502
      %3543 = vst [vmem:[#allocation2 + $0xf8] sm:$0xff] %v3503
      %3544 = vst [vmem:[#allocation2 + $0x100] sm:$0xff] %v3504
      %3545 = vst [vmem:[#allocation2 + $0x108] sm:$0xff] %v3505
      %3546 = vst [vmem:[#allocation2 + $0x110] sm:$0xff] %v3506
      %3547 = vst [vmem:[#allocation2 + $0x118] sm:$0xff] %v3507
      %3548 = vst [vmem:[#allocation2 + $0x120] sm:$0xff] %v3508
      %3549 = vst [vmem:[#allocation2 + $0x128] sm:$0xff] %v3509
      %3550 = vst [vmem:[#allocation2 + $0x130] sm:$0xff] %v3510
      %3551 = vst [vmem:[#allocation2 + $0x138] sm:$0xff] %v3511
      %v3552 = vrot.slane %v347, 1
      %v3553 = vrot.slane %v348, 1
      %v3554 = vrot.slane %v349, 1
      %v3555 = vsel %vm1190, %v3553, %v3554
      %v3556 = vsel %vm1190, %v3552, %v3553
      %v3557 = vsel %vm1190, %v2400, %v3552
      %v3558 = vsel %vm1190, %v3554, %v1149
      %v3559 = vpack.c.bf16 %v3556, %v3557
      %v3560 = vpack.c.bf16 %v3558, %v3555
      %s3561 = scalar_lea.vmem %s1, 512
      %v3562 = vld [vmem:[%s3561] sm:$0xf]
      %v3563 = vld [vmem:[%s3561 + $0x4] sm:$0xf]
      %v3564 = vld [vmem:[%s3561 + $0x8] sm:$0xf]
      %v3565 = vld [vmem:[%s3561 + $0xc] sm:$0xf]
      %v3566 = vld [vmem:[%s3561 + $0x10] sm:$0xf]
      %v3567 = vld [vmem:[%s3561 + $0x14] sm:$0xf]
      %v3568 = vld [vmem:[%s3561 + $0x18] sm:$0xf]
      %v3569 = vld [vmem:[%s3561 + $0x1c] sm:$0xf]
      %v3570 = vld [vmem:[%s3561 + $0x20] sm:$0xf]
      %v3571 = vld [vmem:[%s3561 + $0x24] sm:$0xf]
      %v3572 = vld [vmem:[%s3561 + $0x28] sm:$0xf]
      %v3573 = vld [vmem:[%s3561 + $0x2c] sm:$0xf]
      %v3574 = vld [vmem:[%s3561 + $0x30] sm:$0xf]
      %v3575 = vld [vmem:[%s3561 + $0x34] sm:$0xf]
      %v3576 = vld [vmem:[%s3561 + $0x38] sm:$0xf]
      %v3577 = vld [vmem:[%s3561 + $0x3c] sm:$0xf]
      %v3594 = vunpack.c.l.b16 %v3562
      %v3595 = vunpack.c.l.b16 %v3563
      %v3596 = vunpack.c.l.b16 %v3564
      %v3597 = vunpack.c.l.b16 %v3565
      %v3598 = vunpack.c.l.b16 %v3566
      %v3599 = vunpack.c.l.b16 %v3567
      %v3600 = vunpack.c.l.b16 %v3568
      %v3601 = vunpack.c.l.b16 %v3569
      %v3602 = vunpack.c.l.b16 %v3570
      %v3603 = vunpack.c.l.b16 %v3571
      %v3604 = vunpack.c.l.b16 %v3572
      %v3605 = vunpack.c.l.b16 %v3573
      %v3606 = vunpack.c.l.b16 %v3574
      %v3607 = vunpack.c.l.b16 %v3575
      %v3608 = vunpack.c.l.b16 %v3576
      %v3609 = vunpack.c.l.b16 %v3577
      %v3610 = vpack.c.b16 %v3595, %v3594
      %v3611 = vpack.c.b16 %v3597, %v3596
      %v3612 = vpack.c.b16 %v3599, %v3598
      %v3613 = vpack.c.b16 %v3601, %v3600
      %v3614 = vpack.c.b16 %v3603, %v3602
      %v3615 = vpack.c.b16 %v3605, %v3604
      %v3616 = vpack.c.b16 %v3607, %v3606
      %v3617 = vpack.c.b16 %v3609, %v3608
      %3626 = vmatprep.subr.bf16.mxu0 0
      %3627 = vmatpush1.bf16.msra.mxu0 %v3617
      %3628 = vmatprep.subr.bf16.mxu0 0
      %3629 = vmatpush1.bf16.msra.mxu0 %v3616
      %3630 = vmatprep.subr.bf16.mxu0 0
      %3631 = vmatpush1.bf16.msra.mxu0 %v3615
      %3632 = vmatprep.subr.bf16.mxu0 0
      %3633 = vmatpush1.bf16.msra.mxu0 %v3614
      %3634 = vmatprep.subr.bf16.mxu0 0
      %3635 = vmatpush1.bf16.msra.mxu0 %v3613
      %3636 = vmatprep.subr.bf16.mxu0 0
      %3637 = vmatpush1.bf16.msra.mxu0 %v3612
      %3638 = vmatprep.subr.bf16.mxu0 0
      %3639 = vmatpush1.bf16.msra.mxu0 %v3611
      %3640 = vmatprep.subr.bf16.mxu0 0
      %3641 = vmatpush1.bf16.msra.mxu0 %v3610
      %3642 = vmatprep.subr.bf16.mxu0 0
      %3643 = vmatpush2.bf16.msra.mxu0 0
      %3644 = vmatprep.subr.bf16.mxu0 0
      %3645 = vmatpush2.bf16.msra.mxu0 0
      %3646 = vmatprep.subr.bf16.mxu0 0
      %3647 = vmatpush2.bf16.msra.mxu0 0
      %3648 = vmatprep.subr.bf16.mxu0 0
      %3649 = vmatpush2.bf16.msra.mxu0 0
      %3650 = vmatprep.subr.bf16.mxu0 0
      %3651 = vmatpush2.bf16.msra.mxu0 0
      %3652 = vmatprep.subr.bf16.mxu0 0
      %3653 = vmatpush2.bf16.msra.mxu0 0
      %3654 = vmatprep.subr.bf16.mxu0 0
      %3655 = vmatpush2.bf16.msra.mxu0 0
      %3656 = vmatprep.subr.bf16.mxu0 0
      %3657 = vmatpush2.bf16.msra.mxu0 0
      %3658 = vmatprep.mubr.bf16.mxu0 0
      %3659 = vmatmul.mubr.bf16.gmra.mxu0 %v1235
      %v3660 = vpop.f32.mrf.mxu0
      %v3661 = vadd.f32 0.0, %v3660
      %v3662 = vpop.f32.mrf.mxu0
      %v3663 = vpop.f32.mrf.mxu0
      %v3664 = vadd.f32 0.0, %v3663
      %v3665 = vpop.f32.mrf.mxu0
      %3666 = vmatprep.mubr.bf16.mxu0 0
      %3667 = vmatmul.mubr.bf16.gmra.mxu0 %v1236
      %v3668 = vpop.f32.mrf.mxu0
      %v3669 = vadd.f32 0.0, %v3668
      %v3670 = vpop.f32.mrf.mxu0
      %v3671 = vpop.f32.mrf.mxu0
      %v3672 = vadd.f32 0.0, %v3671
      %v3673 = vpop.f32.mrf.mxu0
      %3674 = vmatprep.mubr.bf16.mxu0 0
      %3675 = vmatmul.mubr.bf16.gmra.mxu0 %v1237
      %v3676 = vpop.f32.mrf.mxu0
      %v3677 = vadd.f32 0.0, %v3676
      %v3678 = vpop.f32.mrf.mxu0
      %v3679 = vpop.f32.mrf.mxu0
      %v3680 = vadd.f32 0.0, %v3679
      %v3681 = vpop.f32.mrf.mxu0
      %3682 = vmatprep.mubr.bf16.mxu0 0
      %3683 = vmatmul.mubr.bf16.gmra.mxu0 %v1238
      %v3684 = vpop.f32.mrf.mxu0
      %v3685 = vadd.f32 0.0, %v3684
      %v3686 = vpop.f32.mrf.mxu0
      %v3687 = vpop.f32.mrf.mxu0
      %v3688 = vadd.f32 0.0, %v3687
      %v3689 = vpop.f32.mrf.mxu0
      %3690 = vmatprep.mubr.bf16.mxu0 0
      %3691 = vmatmul.mubr.bf16.gmra.mxu0 %v1239
      %v3692 = vpop.f32.mrf.mxu0
      %v3693 = vadd.f32 0.0, %v3692
      %v3694 = vpop.f32.mrf.mxu0
      %v3695 = vpop.f32.mrf.mxu0
      %v3696 = vadd.f32 0.0, %v3695
      %v3697 = vpop.f32.mrf.mxu0
      %3698 = vmatprep.mubr.bf16.mxu0 0
      %3699 = vmatmul.mubr.bf16.gmra.mxu0 %v1240
      %v3700 = vpop.f32.mrf.mxu0
      %v3701 = vadd.f32 0.0, %v3700
      %v3702 = vpop.f32.mrf.mxu0
      %v3703 = vpop.f32.mrf.mxu0
      %v3704 = vadd.f32 0.0, %v3703
      %v3705 = vpop.f32.mrf.mxu0
      %3706 = vmatprep.mubr.bf16.mxu0 0
      %3707 = vmatmul.mubr.bf16.gmra.mxu0 %v1241
      %v3708 = vpop.f32.mrf.mxu0
      %v3709 = vadd.f32 0.0, %v3708
      %v3710 = vpop.f32.mrf.mxu0
      %v3711 = vpop.f32.mrf.mxu0
      %v3712 = vadd.f32 0.0, %v3711
      %v3713 = vpop.f32.mrf.mxu0
      %3714 = vmatprep.mubr.bf16.mxu0 0
      %3715 = vmatmul.mubr.bf16.gmra.mxu0 %v1242
      %v3716 = vpop.f32.mrf.mxu0
      %v3717 = vadd.f32 0.0, %v3716
      %v3718 = vpop.f32.mrf.mxu0
      %v3719 = vpop.f32.mrf.mxu0
      %v3720 = vadd.f32 0.0, %v3719
      %v3721 = vpop.f32.mrf.mxu0
      %3722 = vmatprep.mubr.bf16.mxu0 0
      %3723 = vmatmul.mubr.bf16.gmra.mxu0 %v1243
      %v3724 = vpop.f32.mrf.mxu0
      %v3725 = vadd.f32 0.0, %v3724
      %v3726 = vpop.f32.mrf.mxu0
      %v3727 = vpop.f32.mrf.mxu0
      %v3728 = vadd.f32 0.0, %v3727
      %v3729 = vpop.f32.mrf.mxu0
      %3730 = vmatprep.mubr.bf16.mxu0 0
      %3731 = vmatmul.mubr.bf16.gmra.mxu0 %v1244
      %v3732 = vpop.f32.mrf.mxu0
      %v3733 = vadd.f32 0.0, %v3732
      %v3734 = vpop.f32.mrf.mxu0
      %v3735 = vpop.f32.mrf.mxu0
      %v3736 = vadd.f32 0.0, %v3735
      %v3737 = vpop.f32.mrf.mxu0
      %3738 = vmatprep.mubr.bf16.mxu0 0
      %3739 = vmatmul.mubr.bf16.gmra.mxu0 %v1245
      %v3740 = vpop.f32.mrf.mxu0
      %v3741 = vadd.f32 0.0, %v3740
      %v3742 = vpop.f32.mrf.mxu0
      %v3743 = vpop.f32.mrf.mxu0
      %v3744 = vadd.f32 0.0, %v3743
      %v3745 = vpop.f32.mrf.mxu0
      %3746 = vmatprep.mubr.bf16.mxu0 0
      %3747 = vmatmul.mubr.bf16.gmra.mxu0 %v1246
      %v3748 = vpop.f32.mrf.mxu0
      %v3749 = vadd.f32 0.0, %v3748
      %v3750 = vpop.f32.mrf.mxu0
      %v3751 = vpop.f32.mrf.mxu0
      %v3752 = vadd.f32 0.0, %v3751
      %v3753 = vpop.f32.mrf.mxu0
      %3754 = vmatprep.mubr.bf16.mxu0 0
      %3755 = vmatmul.mubr.bf16.gmra.mxu0 %v1247
      %v3756 = vpop.f32.mrf.mxu0
      %v3757 = vadd.f32 0.0, %v3756
      %v3758 = vpop.f32.mrf.mxu0
      %v3759 = vpop.f32.mrf.mxu0
      %v3760 = vadd.f32 0.0, %v3759
      %v3761 = vpop.f32.mrf.mxu0
      %3762 = vmatprep.mubr.bf16.mxu0 0
      %3763 = vmatmul.mubr.bf16.gmra.mxu0 %v1248
      %v3764 = vpop.f32.mrf.mxu0
      %v3765 = vadd.f32 0.0, %v3764
      %v3766 = vpop.f32.mrf.mxu0
      %v3767 = vpop.f32.mrf.mxu0
      %v3768 = vadd.f32 0.0, %v3767
      %v3769 = vpop.f32.mrf.mxu0
      %3770 = vmatprep.mubr.bf16.mxu0 0
      %3771 = vmatmul.mubr.bf16.gmra.mxu0 %v1249
      %v3772 = vpop.f32.mrf.mxu0
      %v3773 = vadd.f32 0.0, %v3772
      %v3774 = vpop.f32.mrf.mxu0
      %v3775 = vpop.f32.mrf.mxu0
      %v3776 = vadd.f32 0.0, %v3775
      %v3777 = vpop.f32.mrf.mxu0
      %3778 = vmatprep.mubr.bf16.mxu0 0
      %3779 = vmatmul.mubr.bf16.gmra.mxu0 %v1250
      %v3780 = vpop.f32.mrf.mxu0
      %v3781 = vadd.f32 0.0, %v3780
      %v3782 = vpop.f32.mrf.mxu0
      %v3783 = vpop.f32.mrf.mxu0
      %v3784 = vadd.f32 0.0, %v3783
      %v3785 = vpop.f32.mrf.mxu0
      %3786 = vmatprep.mubr.bf16.mxu0 0
      %3787 = vmatmul.mubr.bf16.gmra.mxu0 %v2405
      %v3788 = vpop.f32.mrf.mxu0
      %v3789 = vadd.f32 0.0, %v3788
      %v3790 = vpop.f32.mrf.mxu0
      %v3791 = vpop.f32.mrf.mxu0
      %v3792 = vadd.f32 0.0, %v3791
      %v3793 = vpop.f32.mrf.mxu0
      %3794 = vmatprep.mubr.bf16.mxu0 0
      %3795 = vmatmul.mubr.bf16.gmra.mxu0 %v2406
      %v3796 = vpop.f32.mrf.mxu0
      %v3797 = vadd.f32 0.0, %v3796
      %v3798 = vpop.f32.mrf.mxu0
      %v3799 = vpop.f32.mrf.mxu0
      %v3800 = vadd.f32 0.0, %v3799
      %v3801 = vpop.f32.mrf.mxu0
      %3802 = vmatprep.mubr.bf16.mxu0 0
      %3803 = vmatmul.mubr.bf16.gmra.mxu0 %v3559
      %v3804 = vpop.f32.mrf.mxu0
      %v3805 = vadd.f32 0.0, %v3804
      %v3806 = vpop.f32.mrf.mxu0
      %v3807 = vpop.f32.mrf.mxu0
      %v3808 = vadd.f32 0.0, %v3807
      %v3809 = vpop.f32.mrf.mxu0
      %3810 = vmatprep.mubr.bf16.mxu0 0
      %3811 = vmatmul.mubr.bf16.gmra.mxu0 %v3560
      %v3812 = vpop.f32.mrf.mxu0
      %v3813 = vadd.f32 0.0, %v3812
      %v3814 = vpop.f32.mrf.mxu0
      %v3815 = vpop.f32.mrf.mxu0
      %v3816 = vadd.f32 0.0, %v3815
      %v3817 = vpop.f32.mrf.mxu0
      %3818 = vdwg.mxu0
      %v3819 = vld [vmem:[#allocation2] sm:$0xff]
      %v3820 = vld [vmem:[#allocation2 + $0x8] sm:$0xff]
      %v3821 = vld [vmem:[#allocation2 + $0x10] sm:$0xff]
      %v3822 = vld [vmem:[#allocation2 + $0x18] sm:$0xff]
      %v3823 = vld [vmem:[#allocation2 + $0x20] sm:$0xff]
      %v3824 = vld [vmem:[#allocation2 + $0x28] sm:$0xff]
      %v3825 = vld [vmem:[#allocation2 + $0x30] sm:$0xff]
      %v3826 = vld [vmem:[#allocation2 + $0x38] sm:$0xff]
      %v3827 = vld [vmem:[#allocation2 + $0x40] sm:$0xff]
      %v3828 = vld [vmem:[#allocation2 + $0x48] sm:$0xff]
      %v3829 = vld [vmem:[#allocation2 + $0x50] sm:$0xff]
      %v3830 = vld [vmem:[#allocation2 + $0x58] sm:$0xff]
      %v3831 = vld [vmem:[#allocation2 + $0x60] sm:$0xff]
      %v3832 = vld [vmem:[#allocation2 + $0x68] sm:$0xff]
      %v3833 = vld [vmem:[#allocation2 + $0x70] sm:$0xff]
      %v3834 = vld [vmem:[#allocation2 + $0x78] sm:$0xff]
      %v3835 = vld [vmem:[#allocation2 + $0x80] sm:$0xff]
      %v3836 = vld [vmem:[#allocation2 + $0x88] sm:$0xff]
      %v3837 = vld [vmem:[#allocation2 + $0x90] sm:$0xff]
      %v3838 = vld [vmem:[#allocation2 + $0x98] sm:$0xff]
      %v3839 = vld [vmem:[#allocation2 + $0xa0] sm:$0xff]
      %v3840 = vld [vmem:[#allocation2 + $0xa8] sm:$0xff]
      %v3841 = vld [vmem:[#allocation2 + $0xb0] sm:$0xff]
      %v3842 = vld [vmem:[#allocation2 + $0xb8] sm:$0xff]
      %v3843 = vld [vmem:[#allocation2 + $0xc0] sm:$0xff]
      %v3844 = vld [vmem:[#allocation2 + $0xc8] sm:$0xff]
      %v3845 = vld [vmem:[#allocation2 + $0xd0] sm:$0xff]
      %v3846 = vld [vmem:[#allocation2 + $0xd8] sm:$0xff]
      %v3847 = vld [vmem:[#allocation2 + $0xe0] sm:$0xff]
      %v3848 = vld [vmem:[#allocation2 + $0xe8] sm:$0xff]
      %v3849 = vld [vmem:[#allocation2 + $0xf0] sm:$0xff]
      %v3850 = vld [vmem:[#allocation2 + $0xf8] sm:$0xff]
      %v3851 = vld [vmem:[#allocation2 + $0x100] sm:$0xff]
      %v3852 = vld [vmem:[#allocation2 + $0x108] sm:$0xff]
      %v3853 = vld [vmem:[#allocation2 + $0x110] sm:$0xff]
      %v3854 = vld [vmem:[#allocation2 + $0x118] sm:$0xff]
      %v3855 = vld [vmem:[#allocation2 + $0x120] sm:$0xff]
      %v3856 = vld [vmem:[#allocation2 + $0x128] sm:$0xff]
      %v3857 = vld [vmem:[#allocation2 + $0x130] sm:$0xff]
      %v3858 = vld [vmem:[#allocation2 + $0x138] sm:$0xff]
      %v3859 = vadd.f32 %v3819, %v3661
      %v3860 = vadd.f32 %v3820, %v3664
      %v3861 = vadd.f32 %v3821, %v3669
      %v3862 = vadd.f32 %v3822, %v3672
      %v3863 = vadd.f32 %v3823, %v3677
      %v3864 = vadd.f32 %v3824, %v3680
      %v3865 = vadd.f32 %v3825, %v3685
      %v3866 = vadd.f32 %v3826, %v3688
      %v3867 = vadd.f32 %v3827, %v3693
      %v3868 = vadd.f32 %v3828, %v3696
      %v3869 = vadd.f32 %v3829, %v3701
      %v3870 = vadd.f32 %v3830, %v3704
      %v3871 = vadd.f32 %v3831, %v3709
      %v3872 = vadd.f32 %v3832, %v3712
      %v3873 = vadd.f32 %v3833, %v3717
      %v3874 = vadd.f32 %v3834, %v3720
      %v3875 = vadd.f32 %v3835, %v3725
      %v3876 = vadd.f32 %v3836, %v3728
      %v3877 = vadd.f32 %v3837, %v3733
      %v3878 = vadd.f32 %v3838, %v3736
      %v3879 = vadd.f32 %v3839, %v3741
      %v3880 = vadd.f32 %v3840, %v3744
      %v3881 = vadd.f32 %v3841, %v3749
      %v3882 = vadd.f32 %v3842, %v3752
      %v3883 = vadd.f32 %v3843, %v3757
      %v3884 = vadd.f32 %v3844, %v3760
      %v3885 = vadd.f32 %v3845, %v3765
      %v3886 = vadd.f32 %v3846, %v3768
      %v3887 = vadd.f32 %v3847, %v3773
      %v3888 = vadd.f32 %v3848, %v3776
      %v3889 = vadd.f32 %v3849, %v3781
      %v3890 = vadd.f32 %v3850, %v3784
      %v3891 = vadd.f32 %v3851, %v3789
      %v3892 = vadd.f32 %v3852, %v3792
      %v3893 = vadd.f32 %v3853, %v3797
      %v3894 = vadd.f32 %v3854, %v3800
      %v3895 = vadd.f32 %v3855, %v3805
      %v3896 = vadd.f32 %v3856, %v3808
      %v3897 = vadd.f32 %v3857, %v3813
      %v3898 = vadd.f32 %v3858, %v3816
      %3899 = vst [vmem:[#allocation2] sm:$0xff] %v3859
      %3900 = vst [vmem:[#allocation2 + $0x8] sm:$0xff] %v3860
      %3901 = vst [vmem:[#allocation2 + $0x10] sm:$0xff] %v3861
      %3902 = vst [vmem:[#allocation2 + $0x18] sm:$0xff] %v3862
      %3903 = vst [vmem:[#allocation2 + $0x20] sm:$0xff] %v3863
      %3904 = vst [vmem:[#allocation2 + $0x28] sm:$0xff] %v3864
      %3905 = vst [vmem:[#allocation2 + $0x30] sm:$0xff] %v3865
      %3906 = vst [vmem:[#allocation2 + $0x38] sm:$0xff] %v3866
      %3907 = vst [vmem:[#allocation2 + $0x40] sm:$0xff] %v3867
      %3908 = vst [vmem:[#allocation2 + $0x48] sm:$0xff] %v3868
      %3909 = vst [vmem:[#allocation2 + $0x50] sm:$0xff] %v3869
      %3910 = vst [vmem:[#allocation2 + $0x58] sm:$0xff] %v3870
      %3911 = vst [vmem:[#allocation2 + $0x60] sm:$0xff] %v3871
      %3912 = vst [vmem:[#allocation2 + $0x68] sm:$0xff] %v3872
      %3913 = vst [vmem:[#allocation2 + $0x70] sm:$0xff] %v3873
      %3914 = vst [vmem:[#allocation2 + $0x78] sm:$0xff] %v3874
      %3915 = vst [vmem:[#allocation2 + $0x80] sm:$0xff] %v3875
      %3916 = vst [vmem:[#allocation2 + $0x88] sm:$0xff] %v3876
      %3917 = vst [vmem:[#allocation2 + $0x90] sm:$0xff] %v3877
      %3918 = vst [vmem:[#allocation2 + $0x98] sm:$0xff] %v3878
      %3919 = vst [vmem:[#allocation2 + $0xa0] sm:$0xff] %v3879
      %3920 = vst [vmem:[#allocation2 + $0xa8] sm:$0xff] %v3880
      %3921 = vst [vmem:[#allocation2 + $0xb0] sm:$0xff] %v3881
      %3922 = vst [vmem:[#allocation2 + $0xb8] sm:$0xff] %v3882
      %3923 = vst [vmem:[#allocation2 + $0xc0] sm:$0xff] %v3883
      %3924 = vst [vmem:[#allocation2 + $0xc8] sm:$0xff] %v3884
      %3925 = vst [vmem:[#allocation2 + $0xd0] sm:$0xff] %v3885
      %3926 = vst [vmem:[#allocation2 + $0xd8] sm:$0xff] %v3886
      %3927 = vst [vmem:[#allocation2 + $0xe0] sm:$0xff] %v3887
      %3928 = vst [vmem:[#allocation2 + $0xe8] sm:$0xff] %v3888
      %3929 = vst [vmem:[#allocation2 + $0xf0] sm:$0xff] %v3889
      %3930 = vst [vmem:[#allocation2 + $0xf8] sm:$0xff] %v3890
      %3931 = vst [vmem:[#allocation2 + $0x100] sm:$0xff] %v3891
      %3932 = vst [vmem:[#allocation2 + $0x108] sm:$0xff] %v3892
      %3933 = vst [vmem:[#allocation2 + $0x110] sm:$0xff] %v3893
      %3934 = vst [vmem:[#allocation2 + $0x118] sm:$0xff] %v3894
      %3935 = vst [vmem:[#allocation2 + $0x120] sm:$0xff] %v3895
      %3936 = vst [vmem:[#allocation2 + $0x128] sm:$0xff] %v3896
      %3937 = vst [vmem:[#allocation2 + $0x130] sm:$0xff] %v3897
      %3938 = vst [vmem:[#allocation2 + $0x138] sm:$0xff] %v3898
      %v3939 = vadd.s32 %v392, 8
      %v3940 = vadd.s32 %v392, 16
      %v3941 = vadd.s32 %v392, 24
      %v3942 = vadd.s32 %v392, 32
      %v3943 = vadd.s32 %v392, 40
      %v3944 = vadd.s32 %v392, 48
      %v3945 = vadd.s32 %v392, 56
      %v3946 = vadd.s32 %v392, 64
      %v3947 = vadd.s32 %v392, 72
      %v3948 = vadd.s32 %v392, 80
      %v3949 = vadd.s32 %v392, 88
      %v3950 = vadd.s32 %v392, 96
      %v3951 = vadd.s32 %v392, 104
      %v3952 = vadd.s32 %v392, 112
      %v3953 = vadd.s32 %v392, 120
      %v3954 = vadd.s32 %v392, 128
      %v3955 = vadd.s32 %v392, 136
      %v3956 = vadd.s32 %v392, 144
      %v3957 = vadd.s32 %v392, 152
      %v3958 = vadd.s32 %v392, 160
      %v3959 = vadd.s32 %v392, 168
      %v3960 = vadd.s32 %v392, 176
      %v3961 = vadd.s32 %v392, 184
      %v3962 = vadd.s32 %v392, 192
      %v3963 = vadd.s32 %v392, 200
      %v3964 = vadd.s32 %v392, 208
      %v3965 = vadd.s32 %v392, 216
      %v3966 = vadd.s32 %v392, 224
      %v3967 = vadd.s32 %v392, 232
      %v3968 = vadd.s32 %v392, 240
      %v3969 = vadd.s32 %v392, 248
      %v3970 = vadd.s32 %v392, 256
      %v3971 = vadd.s32 %v392, 264
      %v3972 = vadd.s32 %v392, 272
      %v3973 = vadd.s32 %v392, 280
      %v3974 = vadd.s32 %v392, 288
      %v3975 = vadd.s32 %v392, 296
      %v3976 = vadd.s32 %v392, 304
      %v3977 = vadd.s32 %v392, 312
      %v3978 = vcvt.s32.f32 %v392
      %v3979 = vcvt.s32.f32 %v3939
      %v3980 = vcvt.s32.f32 %v3940
      %v3981 = vcvt.s32.f32 %v3941
      %v3982 = vcvt.s32.f32 %v3942
      %v3983 = vcvt.s32.f32 %v3943
      %v3984 = vcvt.s32.f32 %v3944
      %v3985 = vcvt.s32.f32 %v3945
      %v3986 = vcvt.s32.f32 %v3946
      %v3987 = vcvt.s32.f32 %v3947
      %v3988 = vcvt.s32.f32 %v3948
      %v3989 = vcvt.s32.f32 %v3949
      %v3990 = vcvt.s32.f32 %v3950
      %v3991 = vcvt.s32.f32 %v3951
      %v3992 = vcvt.s32.f32 %v3952
      %v3993 = vcvt.s32.f32 %v3953
      %v3994 = vcvt.s32.f32 %v3954
      %v3995 = vcvt.s32.f32 %v3955
      %v3996 = vcvt.s32.f32 %v3956
      %v3997 = vcvt.s32.f32 %v3957
      %v3998 = vcvt.s32.f32 %v3958
      %v3999 = vcvt.s32.f32 %v3959
      %v4000 = vcvt.s32.f32 %v3960
      %v4001 = vcvt.s32.f32 %v3961
      %v4002 = vcvt.s32.f32 %v3962
      %v4003 = vcvt.s32.f32 %v3963
      %v4004 = vcvt.s32.f32 %v3964
      %v4005 = vcvt.s32.f32 %v3965
      %v4006 = vcvt.s32.f32 %v3966
      %v4007 = vcvt.s32.f32 %v3967
      %v4008 = vcvt.s32.f32 %v3968
      %v4009 = vcvt.s32.f32 %v3969
      %v4010 = vcvt.s32.f32 %v3970
      %v4011 = vcvt.s32.f32 %v3971
      %v4012 = vcvt.s32.f32 %v3972
      %v4013 = vcvt.s32.f32 %v3973
      %v4014 = vcvt.s32.f32 %v3974
      %v4015 = vcvt.s32.f32 %v3975
      %v4016 = vcvt.s32.f32 %v3976
      %v4017 = vcvt.s32.f32 %v3977
      %v4018 = vadd.f32 %v3978, 0.5
      %v4019 = vadd.f32 %v3979, 0.5
      %v4020 = vadd.f32 %v3980, 0.5
      %v4021 = vadd.f32 %v3981, 0.5
      %v4022 = vadd.f32 %v3982, 0.5
      %v4023 = vadd.f32 %v3983, 0.5
      %v4024 = vadd.f32 %v3984, 0.5
      %v4025 = vadd.f32 %v3985, 0.5
      %v4026 = vadd.f32 %v3986, 0.5
      %v4027 = vadd.f32 %v3987, 0.5
      %v4028 = vadd.f32 %v3988, 0.5
      %v4029 = vadd.f32 %v3989, 0.5
      %v4030 = vadd.f32 %v3990, 0.5
      %v4031 = vadd.f32 %v3991, 0.5
      %v4032 = vadd.f32 %v3992, 0.5
      %v4033 = vadd.f32 %v3993, 0.5
      %v4034 = vadd.f32 %v3994, 0.5
      %v4035 = vadd.f32 %v3995, 0.5
      %v4036 = vadd.f32 %v3996, 0.5
      %v4037 = vadd.f32 %v3997, 0.5
      %v4038 = vadd.f32 %v3998, 0.5
      %v4039 = vadd.f32 %v3999, 0.5
      %v4040 = vadd.f32 %v4000, 0.5
      %v4041 = vadd.f32 %v4001, 0.5
      %v4042 = vadd.f32 %v4002, 0.5
      %v4043 = vadd.f32 %v4003, 0.5
      %v4044 = vadd.f32 %v4004, 0.5
      %v4045 = vadd.f32 %v4005, 0.5
      %v4046 = vadd.f32 %v4006, 0.5
      %v4047 = vadd.f32 %v4007, 0.5
      %v4048 = vadd.f32 %v4008, 0.5
      %v4049 = vadd.f32 %v4009, 0.5
      %v4050 = vadd.f32 %v4010, 0.5
      %v4051 = vadd.f32 %v4011, 0.5
      %v4052 = vadd.f32 %v4012, 0.5
      %v4053 = vadd.f32 %v4013, 0.5
      %v4054 = vadd.f32 %v4014, 0.5
      %v4055 = vadd.f32 %v4015, 0.5
      %v4056 = vadd.f32 %v4016, 0.5
      %v4057 = vadd.f32 %v4017, 0.5
      %v4058 = vmul.f32 %v4018, 0.03125
      %v4059 = vmul.f32 %v4019, 0.03125
      %v4060 = vmul.f32 %v4020, 0.03125
      %v4061 = vmul.f32 %v4021, 0.03125
      %v4062 = vmul.f32 %v4022, 0.03125
      %v4063 = vmul.f32 %v4023, 0.03125
      %v4064 = vmul.f32 %v4024, 0.03125
      %v4065 = vmul.f32 %v4025, 0.03125
      %v4066 = vmul.f32 %v4026, 0.03125
      %v4067 = vmul.f32 %v4027, 0.03125
      %v4068 = vmul.f32 %v4028, 0.03125
      %v4069 = vmul.f32 %v4029, 0.03125
      %v4070 = vmul.f32 %v4030, 0.03125
      %v4071 = vmul.f32 %v4031, 0.03125
      %v4072 = vmul.f32 %v4032, 0.03125
      %v4073 = vmul.f32 %v4033, 0.03125
      %v4074 = vmul.f32 %v4034, 0.03125
      %v4075 = vmul.f32 %v4035, 0.03125
      %v4076 = vmul.f32 %v4036, 0.03125
      %v4077 = vmul.f32 %v4037, 0.03125
      %v4078 = vmul.f32 %v4038, 0.03125
      %v4079 = vmul.f32 %v4039, 0.03125
      %v4080 = vmul.f32 %v4040, 0.03125
      %v4081 = vmul.f32 %v4041, 0.03125
      %v4082 = vmul.f32 %v4042, 0.03125
      %v4083 = vmul.f32 %v4043, 0.03125
      %v4084 = vmul.f32 %v4044, 0.03125
      %v4085 = vmul.f32 %v4045, 0.03125
      %v4086 = vmul.f32 %v4046, 0.03125
      %v4087 = vmul.f32 %v4047, 0.03125
      %v4088 = vmul.f32 %v4048, 0.03125
      %v4089 = vmul.f32 %v4049, 0.03125
      %v4090 = vmul.f32 %v4050, 0.03125
      %v4091 = vmul.f32 %v4051, 0.03125
      %v4092 = vmul.f32 %v4052, 0.03125
      %v4093 = vmul.f32 %v4053, 0.03125
      %v4094 = vmul.f32 %v4054, 0.03125
      %v4095 = vmul.f32 %v4055, 0.03125
      %v4096 = vmul.f32 %v4056, 0.03125
      %v4097 = vmul.f32 %v4057, 0.03125
      %v4098 = vfloor.f32 %v4058
      %v4099 = vfloor.f32 %v4059
      %v4100 = vfloor.f32 %v4060
      %v4101 = vfloor.f32 %v4061
      %v4102 = vfloor.f32 %v4062
      %v4103 = vfloor.f32 %v4063
      %v4104 = vfloor.f32 %v4064
      %v4105 = vfloor.f32 %v4065
      %v4106 = vfloor.f32 %v4066
      %v4107 = vfloor.f32 %v4067
      %v4108 = vfloor.f32 %v4068
      %v4109 = vfloor.f32 %v4069
      %v4110 = vfloor.f32 %v4070
      %v4111 = vfloor.f32 %v4071
      %v4112 = vfloor.f32 %v4072
      %v4113 = vfloor.f32 %v4073
      %v4114 = vfloor.f32 %v4074
      %v4115 = vfloor.f32 %v4075
      %v4116 = vfloor.f32 %v4076
      %v4117 = vfloor.f32 %v4077
      %v4118 = vfloor.f32 %v4078
      %v4119 = vfloor.f32 %v4079
      %v4120 = vfloor.f32 %v4080
      %v4121 = vfloor.f32 %v4081
      %v4122 = vfloor.f32 %v4082
      %v4123 = vfloor.f32 %v4083
      %v4124 = vfloor.f32 %v4084
      %v4125 = vfloor.f32 %v4085
      %v4126 = vfloor.f32 %v4086
      %v4127 = vfloor.f32 %v4087
      %v4128 = vfloor.f32 %v4088
      %v4129 = vfloor.f32 %v4089
      %v4130 = vfloor.f32 %v4090
      %v4131 = vfloor.f32 %v4091
      %v4132 = vfloor.f32 %v4092
      %v4133 = vfloor.f32 %v4093
      %v4134 = vfloor.f32 %v4094
      %v4135 = vfloor.f32 %v4095
      %v4136 = vfloor.f32 %v4096
      %v4137 = vfloor.f32 %v4097
      %v4138 = vcvt.f32.s32.to.zero.pseudo %v4098
      %v4139 = vcvt.f32.s32.to.zero.pseudo %v4099
      %v4140 = vcvt.f32.s32.to.zero.pseudo %v4100
      %v4141 = vcvt.f32.s32.to.zero.pseudo %v4101
      %v4142 = vcvt.f32.s32.to.zero.pseudo %v4102
      %v4143 = vcvt.f32.s32.to.zero.pseudo %v4103
      %v4144 = vcvt.f32.s32.to.zero.pseudo %v4104
      %v4145 = vcvt.f32.s32.to.zero.pseudo %v4105
      %v4146 = vcvt.f32.s32.to.zero.pseudo %v4106
      %v4147 = vcvt.f32.s32.to.zero.pseudo %v4107
      %v4148 = vcvt.f32.s32.to.zero.pseudo %v4108
      %v4149 = vcvt.f32.s32.to.zero.pseudo %v4109
      %v4150 = vcvt.f32.s32.to.zero.pseudo %v4110
      %v4151 = vcvt.f32.s32.to.zero.pseudo %v4111
      %v4152 = vcvt.f32.s32.to.zero.pseudo %v4112
      %v4153 = vcvt.f32.s32.to.zero.pseudo %v4113
      %v4154 = vcvt.f32.s32.to.zero.pseudo %v4114
      %v4155 = vcvt.f32.s32.to.zero.pseudo %v4115
      %v4156 = vcvt.f32.s32.to.zero.pseudo %v4116
      %v4157 = vcvt.f32.s32.to.zero.pseudo %v4117
      %v4158 = vcvt.f32.s32.to.zero.pseudo %v4118
      %v4159 = vcvt.f32.s32.to.zero.pseudo %v4119
      %v4160 = vcvt.f32.s32.to.zero.pseudo %v4120
      %v4161 = vcvt.f32.s32.to.zero.pseudo %v4121
      %v4162 = vcvt.f32.s32.to.zero.pseudo %v4122
      %v4163 = vcvt.f32.s32.to.zero.pseudo %v4123
      %v4164 = vcvt.f32.s32.to.zero.pseudo %v4124
      %v4165 = vcvt.f32.s32.to.zero.pseudo %v4125
      %v4166 = vcvt.f32.s32.to.zero.pseudo %v4126
      %v4167 = vcvt.f32.s32.to.zero.pseudo %v4127
      %v4168 = vcvt.f32.s32.to.zero.pseudo %v4128
      %v4169 = vcvt.f32.s32.to.zero.pseudo %v4129
      %v4170 = vcvt.f32.s32.to.zero.pseudo %v4130
      %v4171 = vcvt.f32.s32.to.zero.pseudo %v4131
      %v4172 = vcvt.f32.s32.to.zero.pseudo %v4132
      %v4173 = vcvt.f32.s32.to.zero.pseudo %v4133
      %v4174 = vcvt.f32.s32.to.zero.pseudo %v4134
      %v4175 = vcvt.f32.s32.to.zero.pseudo %v4135
      %v4176 = vcvt.f32.s32.to.zero.pseudo %v4136
      %v4177 = vcvt.f32.s32.to.zero.pseudo %v4137
      %v4178 = vmul.u32 %v4138, 32
      %v4179 = vmul.u32 %v4139, 32
      %v4180 = vmul.u32 %v4140, 32
      %v4181 = vmul.u32 %v4141, 32
      %v4182 = vmul.u32 %v4142, 32
      %v4183 = vmul.u32 %v4143, 32
      %v4184 = vmul.u32 %v4144, 32
      %v4185 = vmul.u32 %v4145, 32
      %v4186 = vmul.u32 %v4146, 32
      %v4187 = vmul.u32 %v4147, 32
      %v4188 = vmul.u32 %v4148, 32
      %v4189 = vmul.u32 %v4149, 32
      %v4190 = vmul.u32 %v4150, 32
      %v4191 = vmul.u32 %v4151, 32
      %v4192 = vmul.u32 %v4152, 32
      %v4193 = vmul.u32 %v4153, 32
      %v4194 = vmul.u32 %v4154, 32
      %v4195 = vmul.u32 %v4155, 32
      %v4196 = vmul.u32 %v4156, 32
      %v4197 = vmul.u32 %v4157, 32
      %v4198 = vmul.u32 %v4158, 32
      %v4199 = vmul.u32 %v4159, 32
      %v4200 = vmul.u32 %v4160, 32
      %v4201 = vmul.u32 %v4161, 32
      %v4202 = vmul.u32 %v4162, 32
      %v4203 = vmul.u32 %v4163, 32
      %v4204 = vmul.u32 %v4164, 32
      %v4205 = vmul.u32 %v4165, 32
      %v4206 = vmul.u32 %v4166, 32
      %v4207 = vmul.u32 %v4167, 32
      %v4208 = vmul.u32 %v4168, 32
      %v4209 = vmul.u32 %v4169, 32
      %v4210 = vmul.u32 %v4170, 32
      %v4211 = vmul.u32 %v4171, 32
      %v4212 = vmul.u32 %v4172, 32
      %v4213 = vmul.u32 %v4173, 32
      %v4214 = vmul.u32 %v4174, 32
      %v4215 = vmul.u32 %v4175, 32
      %v4216 = vmul.u32 %v4176, 32
      %v4217 = vmul.u32 %v4177, 32
      %v4218 = vsub.s32 %v392, %v4178
      %v4219 = vsub.s32 %v3939, %v4179
      %v4220 = vsub.s32 %v3940, %v4180
      %v4221 = vsub.s32 %v3941, %v4181
      %v4222 = vsub.s32 %v3942, %v4182
      %v4223 = vsub.s32 %v3943, %v4183
      %v4224 = vsub.s32 %v3944, %v4184
      %v4225 = vsub.s32 %v3945, %v4185
      %v4226 = vsub.s32 %v3946, %v4186
      %v4227 = vsub.s32 %v3947, %v4187
      %v4228 = vsub.s32 %v3948, %v4188
      %v4229 = vsub.s32 %v3949, %v4189
      %v4230 = vsub.s32 %v3950, %v4190
      %v4231 = vsub.s32 %v3951, %v4191
      %v4232 = vsub.s32 %v3952, %v4192
      %v4233 = vsub.s32 %v3953, %v4193
      %v4234 = vsub.s32 %v3954, %v4194
      %v4235 = vsub.s32 %v3955, %v4195
      %v4236 = vsub.s32 %v3956, %v4196
      %v4237 = vsub.s32 %v3957, %v4197
      %v4238 = vsub.s32 %v3958, %v4198
      %v4239 = vsub.s32 %v3959, %v4199
      %v4240 = vsub.s32 %v3960, %v4200
      %v4241 = vsub.s32 %v3961, %v4201
      %v4242 = vsub.s32 %v3962, %v4202
      %v4243 = vsub.s32 %v3963, %v4203
      %v4244 = vsub.s32 %v3964, %v4204
      %v4245 = vsub.s32 %v3965, %v4205
      %v4246 = vsub.s32 %v3966, %v4206
      %v4247 = vsub.s32 %v3967, %v4207
      %v4248 = vsub.s32 %v3968, %v4208
      %v4249 = vsub.s32 %v3969, %v4209
      %v4250 = vsub.s32 %v3970, %v4210
      %v4251 = vsub.s32 %v3971, %v4211
      %v4252 = vsub.s32 %v3972, %v4212
      %v4253 = vsub.s32 %v3973, %v4213
      %v4254 = vsub.s32 %v3974, %v4214
      %v4255 = vsub.s32 %v3975, %v4215
      %v4256 = vsub.s32 %v3976, %v4216
      %v4257 = vsub.s32 %v3977, %v4217
      %s4258 = smul.u32 %s21, 8
      %s4259 = sadd.s32 %s4258, 1
      %v4260 = vstv %s4259
      %v4261 = vadd.s32 %v4138, %v4260
      %v4262 = vadd.s32 %v4139, %v4260
      %v4263 = vadd.s32 %v4140, %v4260
      %v4264 = vadd.s32 %v4141, %v4260
      %v4265 = vadd.s32 %v4142, %v4260
      %v4266 = vadd.s32 %v4143, %v4260
      %v4267 = vadd.s32 %v4144, %v4260
      %v4268 = vadd.s32 %v4145, %v4260
      %v4269 = vadd.s32 %v4146, %v4260
      %v4270 = vadd.s32 %v4147, %v4260
      %v4271 = vadd.s32 %v4148, %v4260
      %v4272 = vadd.s32 %v4149, %v4260
      %v4273 = vadd.s32 %v4150, %v4260
      %v4274 = vadd.s32 %v4151, %v4260
      %v4275 = vadd.s32 %v4152, %v4260
      %v4276 = vadd.s32 %v4153, %v4260
      %v4277 = vadd.s32 %v4154, %v4260
      %v4278 = vadd.s32 %v4155, %v4260
      %v4279 = vadd.s32 %v4156, %v4260
      %v4280 = vadd.s32 %v4157, %v4260
      %v4281 = vadd.s32 %v4158, %v4260
      %v4282 = vadd.s32 %v4159, %v4260
      %v4283 = vadd.s32 %v4160, %v4260
      %v4284 = vadd.s32 %v4161, %v4260
      %v4285 = vadd.s32 %v4162, %v4260
      %v4286 = vadd.s32 %v4163, %v4260
      %v4287 = vadd.s32 %v4164, %v4260
      %v4288 = vadd.s32 %v4165, %v4260
      %v4289 = vadd.s32 %v4166, %v4260
      %v4290 = vadd.s32 %v4167, %v4260
      %v4291 = vadd.s32 %v4168, %v4260
      %v4292 = vadd.s32 %v4169, %v4260
      %v4293 = vadd.s32 %v4170, %v4260
      %v4294 = vadd.s32 %v4171, %v4260
      %v4295 = vadd.s32 %v4172, %v4260
      %v4296 = vadd.s32 %v4173, %v4260
      %v4297 = vadd.s32 %v4174, %v4260
      %v4298 = vadd.s32 %v4175, %v4260
      %v4299 = vadd.s32 %v4176, %v4260
      %v4300 = vadd.s32 %v4177, %v4260
      %vm4301 = vcmp.ge.s32.totalorder %v4261, 2
      %vm4302 = vcmp.ge.s32.totalorder %v4262, 2
      %vm4303 = vcmp.ge.s32.totalorder %v4263, 2
      %vm4304 = vcmp.ge.s32.totalorder %v4264, 2
      %vm4305 = vcmp.ge.s32.totalorder %v4265, 2
      %vm4306 = vcmp.ge.s32.totalorder %v4266, 2
      %vm4307 = vcmp.ge.s32.totalorder %v4267, 2
      %vm4308 = vcmp.ge.s32.totalorder %v4268, 2
      %vm4309 = vcmp.ge.s32.totalorder %v4269, 2
      %vm4310 = vcmp.ge.s32.totalorder %v4270, 2
      %vm4311 = vcmp.ge.s32.totalorder %v4271, 2
      %vm4312 = vcmp.ge.s32.totalorder %v4272, 2
      %vm4313 = vcmp.ge.s32.totalorder %v4273, 2
      %vm4314 = vcmp.ge.s32.totalorder %v4274, 2
      %vm4315 = vcmp.ge.s32.totalorder %v4275, 2
      %vm4316 = vcmp.ge.s32.totalorder %v4276, 2
      %vm4317 = vcmp.ge.s32.totalorder %v4277, 2
      %vm4318 = vcmp.ge.s32.totalorder %v4278, 2
      %vm4319 = vcmp.ge.s32.totalorder %v4279, 2
      %vm4320 = vcmp.ge.s32.totalorder %v4280, 2
      %vm4321 = vcmp.ge.s32.totalorder %v4281, 2
      %vm4322 = vcmp.ge.s32.totalorder %v4282, 2
      %vm4323 = vcmp.ge.s32.totalorder %v4283, 2
      %vm4324 = vcmp.ge.s32.totalorder %v4284, 2
      %vm4325 = vcmp.ge.s32.totalorder %v4285, 2
      %vm4326 = vcmp.ge.s32.totalorder %v4286, 2
      %vm4327 = vcmp.ge.s32.totalorder %v4287, 2
      %vm4328 = vcmp.ge.s32.totalorder %v4288, 2
      %vm4329 = vcmp.ge.s32.totalorder %v4289, 2
      %vm4330 = vcmp.ge.s32.totalorder %v4290, 2
      %vm4331 = vcmp.ge.s32.totalorder %v4291, 2
      %vm4332 = vcmp.ge.s32.totalorder %v4292, 2
      %vm4333 = vcmp.ge.s32.totalorder %v4293, 2
      %vm4334 = vcmp.ge.s32.totalorder %v4294, 2
      %vm4335 = vcmp.ge.s32.totalorder %v4295, 2
      %vm4336 = vcmp.ge.s32.totalorder %v4296, 2
      %vm4337 = vcmp.ge.s32.totalorder %v4297, 2
      %vm4338 = vcmp.ge.s32.totalorder %v4298, 2
      %vm4339 = vcmp.ge.s32.totalorder %v4299, 2
      %vm4340 = vcmp.ge.s32.totalorder %v4300, 2
      %vm4341 = vcmp.le.s32.totalorder %v4261, 17
      %vm4342 = vcmp.le.s32.totalorder %v4262, 17
      %vm4343 = vcmp.le.s32.totalorder %v4263, 17
      %vm4344 = vcmp.le.s32.totalorder %v4264, 17
      %vm4345 = vcmp.le.s32.totalorder %v4265, 17
      %vm4346 = vcmp.le.s32.totalorder %v4266, 17
      %vm4347 = vcmp.le.s32.totalorder %v4267, 17
      %vm4348 = vcmp.le.s32.totalorder %v4268, 17
      %vm4349 = vcmp.le.s32.totalorder %v4269, 17
      %vm4350 = vcmp.le.s32.totalorder %v4270, 17
      %vm4351 = vcmp.le.s32.totalorder %v4271, 17
      %vm4352 = vcmp.le.s32.totalorder %v4272, 17
      %vm4353 = vcmp.le.s32.totalorder %v4273, 17
      %vm4354 = vcmp.le.s32.totalorder %v4274, 17
      %vm4355 = vcmp.le.s32.totalorder %v4275, 17
      %vm4356 = vcmp.le.s32.totalorder %v4276, 17
      %vm4357 = vcmp.le.s32.totalorder %v4277, 17
      %vm4358 = vcmp.le.s32.totalorder %v4278, 17
      %vm4359 = vcmp.le.s32.totalorder %v4279, 17
      %vm4360 = vcmp.le.s32.totalorder %v4280, 17
      %vm4361 = vcmp.le.s32.totalorder %v4281, 17
      %vm4362 = vcmp.le.s32.totalorder %v4282, 17
      %vm4363 = vcmp.le.s32.totalorder %v4283, 17
      %vm4364 = vcmp.le.s32.totalorder %v4284, 17
      %vm4365 = vcmp.le.s32.totalorder %v4285, 17
      %vm4366 = vcmp.le.s32.totalorder %v4286, 17
      %vm4367 = vcmp.le.s32.totalorder %v4287, 17
      %vm4368 = vcmp.le.s32.totalorder %v4288, 17
      %vm4369 = vcmp.le.s32.totalorder %v4289, 17
      %vm4370 = vcmp.le.s32.totalorder %v4290, 17
      %vm4371 = vcmp.le.s32.totalorder %v4291, 17
      %vm4372 = vcmp.le.s32.totalorder %v4292, 17
      %vm4373 = vcmp.le.s32.totalorder %v4293, 17
      %vm4374 = vcmp.le.s32.totalorder %v4294, 17
      %vm4375 = vcmp.le.s32.totalorder %v4295, 17
      %vm4376 = vcmp.le.s32.totalorder %v4296, 17
      %vm4377 = vcmp.le.s32.totalorder %v4297, 17
      %vm4378 = vcmp.le.s32.totalorder %v4298, 17
      %vm4379 = vcmp.le.s32.totalorder %v4299, 17
      %vm4380 = vcmp.le.s32.totalorder %v4300, 17
      %vm4381 = vmand %vm4301, %vm4341
      %vm4382 = vmand %vm4302, %vm4342
      %vm4383 = vmand %vm4303, %vm4343
      %vm4384 = vmand %vm4304, %vm4344
      %vm4385 = vmand %vm4305, %vm4345
      %vm4386 = vmand %vm4306, %vm4346
      %vm4387 = vmand %vm4307, %vm4347
      %vm4388 = vmand %vm4308, %vm4348
      %vm4389 = vmand %vm4309, %vm4349
      %vm4390 = vmand %vm4310, %vm4350
      %vm4391 = vmand %vm4311, %vm4351
      %vm4392 = vmand %vm4312, %vm4352
      %vm4393 = vmand %vm4313, %vm4353
      %vm4394 = vmand %vm4314, %vm4354
      %vm4395 = vmand %vm4315, %vm4355
      %vm4396 = vmand %vm4316, %vm4356
      %vm4397 = vmand %vm4317, %vm4357
      %vm4398 = vmand %vm4318, %vm4358
      %vm4399 = vmand %vm4319, %vm4359
      %vm4400 = vmand %vm4320, %vm4360
      %vm4401 = vmand %vm4321, %vm4361
      %vm4402 = vmand %vm4322, %vm4362
      %vm4403 = vmand %vm4323, %vm4363
      %vm4404 = vmand %vm4324, %vm4364
      %vm4405 = vmand %vm4325, %vm4365
      %vm4406 = vmand %vm4326, %vm4366
      %vm4407 = vmand %vm4327, %vm4367
      %vm4408 = vmand %vm4328, %vm4368
      %vm4409 = vmand %vm4329, %vm4369
      %vm4410 = vmand %vm4330, %vm4370
      %vm4411 = vmand %vm4331, %vm4371
      %vm4412 = vmand %vm4332, %vm4372
      %vm4413 = vmand %vm4333, %vm4373
      %vm4414 = vmand %vm4334, %vm4374
      %vm4415 = vmand %vm4335, %vm4375
      %vm4416 = vmand %vm4336, %vm4376
      %vm4417 = vmand %vm4337, %vm4377
      %vm4418 = vmand %vm4338, %vm4378
      %vm4419 = vmand %vm4339, %vm4379
      %vm4420 = vmand %vm4340, %vm4380
      %vm4421 = vcmp.ge.s32.totalorder %v4218, 1
      %vm4422 = vcmp.ge.s32.totalorder %v4219, 1
      %vm4423 = vcmp.ge.s32.totalorder %v4220, 1
      %vm4424 = vcmp.ge.s32.totalorder %v4221, 1
      %vm4425 = vcmp.ge.s32.totalorder %v4222, 1
      %vm4426 = vcmp.ge.s32.totalorder %v4223, 1
      %vm4427 = vcmp.ge.s32.totalorder %v4224, 1
      %vm4428 = vcmp.ge.s32.totalorder %v4225, 1
      %vm4429 = vcmp.ge.s32.totalorder %v4226, 1
      %vm4430 = vcmp.ge.s32.totalorder %v4227, 1
      %vm4431 = vcmp.ge.s32.totalorder %v4228, 1
      %vm4432 = vcmp.ge.s32.totalorder %v4229, 1
      %vm4433 = vcmp.ge.s32.totalorder %v4230, 1
      %vm4434 = vcmp.ge.s32.totalorder %v4231, 1
      %vm4435 = vcmp.ge.s32.totalorder %v4232, 1
      %vm4436 = vcmp.ge.s32.totalorder %v4233, 1
      %vm4437 = vcmp.ge.s32.totalorder %v4234, 1
      %vm4438 = vcmp.ge.s32.totalorder %v4235, 1
      %vm4439 = vcmp.ge.s32.totalorder %v4236, 1
      %vm4440 = vcmp.ge.s32.totalorder %v4237, 1
      %vm4441 = vcmp.ge.s32.totalorder %v4238, 1
      %vm4442 = vcmp.ge.s32.totalorder %v4239, 1
      %vm4443 = vcmp.ge.s32.totalorder %v4240, 1
      %vm4444 = vcmp.ge.s32.totalorder %v4241, 1
      %vm4445 = vcmp.ge.s32.totalorder %v4242, 1
      %vm4446 = vcmp.ge.s32.totalorder %v4243, 1
      %vm4447 = vcmp.ge.s32.totalorder %v4244, 1
      %vm4448 = vcmp.ge.s32.totalorder %v4245, 1
      %vm4449 = vcmp.ge.s32.totalorder %v4246, 1
      %vm4450 = vcmp.ge.s32.totalorder %v4247, 1
      %vm4451 = vcmp.ge.s32.totalorder %v4248, 1
      %vm4452 = vcmp.ge.s32.totalorder %v4249, 1
      %vm4453 = vcmp.ge.s32.totalorder %v4250, 1
      %vm4454 = vcmp.ge.s32.totalorder %v4251, 1
      %vm4455 = vcmp.ge.s32.totalorder %v4252, 1
      %vm4456 = vcmp.ge.s32.totalorder %v4253, 1
      %vm4457 = vcmp.ge.s32.totalorder %v4254, 1
      %vm4458 = vcmp.ge.s32.totalorder %v4255, 1
      %vm4459 = vcmp.ge.s32.totalorder %v4256, 1
      %vm4460 = vcmp.ge.s32.totalorder %v4257, 1
      %vm4461 = vmand %vm4381, %vm4421
      %vm4462 = vmand %vm4382, %vm4422
      %vm4463 = vmand %vm4383, %vm4423
      %vm4464 = vmand %vm4384, %vm4424
      %vm4465 = vmand %vm4385, %vm4425
      %vm4466 = vmand %vm4386, %vm4426
      %vm4467 = vmand %vm4387, %vm4427
      %vm4468 = vmand %vm4388, %vm4428
      %vm4469 = vmand %vm4389, %vm4429
      %vm4470 = vmand %vm4390, %vm4430
      %vm4471 = vmand %vm4391, %vm4431
      %vm4472 = vmand %vm4392, %vm4432
      %vm4473 = vmand %vm4393, %vm4433
      %vm4474 = vmand %vm4394, %vm4434
      %vm4475 = vmand %vm4395, %vm4435
      %vm4476 = vmand %vm4396, %vm4436
      %vm4477 = vmand %vm4397, %vm4437
      %vm4478 = vmand %vm4398, %vm4438
      %vm4479 = vmand %vm4399, %vm4439
      %vm4480 = vmand %vm4400, %vm4440
      %vm4481 = vmand %vm4401, %vm4441
      %vm4482 = vmand %vm4402, %vm4442
      %vm4483 = vmand %vm4403, %vm4443
      %vm4484 = vmand %vm4404, %vm4444
      %vm4485 = vmand %vm4405, %vm4445
      %vm4486 = vmand %vm4406, %vm4446
      %vm4487 = vmand %vm4407, %vm4447
      %vm4488 = vmand %vm4408, %vm4448
      %vm4489 = vmand %vm4409, %vm4449
      %vm4490 = vmand %vm4410, %vm4450
      %vm4491 = vmand %vm4411, %vm4451
      %vm4492 = vmand %vm4412, %vm4452
      %vm4493 = vmand %vm4413, %vm4453
      %vm4494 = vmand %vm4414, %vm4454
      %vm4495 = vmand %vm4415, %vm4455
      %vm4496 = vmand %vm4416, %vm4456
      %vm4497 = vmand %vm4417, %vm4457
      %vm4498 = vmand %vm4418, %vm4458
      %vm4499 = vmand %vm4419, %vm4459
      %vm4500 = vmand %vm4420, %vm4460
      %vm4501 = vcmp.le.s32.totalorder %v4218, 16
      %vm4502 = vcmp.le.s32.totalorder %v4219, 16
      %vm4503 = vcmp.le.s32.totalorder %v4220, 16
      %vm4504 = vcmp.le.s32.totalorder %v4221, 16
      %vm4505 = vcmp.le.s32.totalorder %v4222, 16
      %vm4506 = vcmp.le.s32.totalorder %v4223, 16
      %vm4507 = vcmp.le.s32.totalorder %v4224, 16
      %vm4508 = vcmp.le.s32.totalorder %v4225, 16
      %vm4509 = vcmp.le.s32.totalorder %v4226, 16
      %vm4510 = vcmp.le.s32.totalorder %v4227, 16
      %vm4511 = vcmp.le.s32.totalorder %v4228, 16
      %vm4512 = vcmp.le.s32.totalorder %v4229, 16
      %vm4513 = vcmp.le.s32.totalorder %v4230, 16
      %vm4514 = vcmp.le.s32.totalorder %v4231, 16
      %vm4515 = vcmp.le.s32.totalorder %v4232, 16
      %vm4516 = vcmp.le.s32.totalorder %v4233, 16
      %vm4517 = vcmp.le.s32.totalorder %v4234, 16
      %vm4518 = vcmp.le.s32.totalorder %v4235, 16
      %vm4519 = vcmp.le.s32.totalorder %v4236, 16
      %vm4520 = vcmp.le.s32.totalorder %v4237, 16
      %vm4521 = vcmp.le.s32.totalorder %v4238, 16
      %vm4522 = vcmp.le.s32.totalorder %v4239, 16
      %vm4523 = vcmp.le.s32.totalorder %v4240, 16
      %vm4524 = vcmp.le.s32.totalorder %v4241, 16
      %vm4525 = vcmp.le.s32.totalorder %v4242, 16
      %vm4526 = vcmp.le.s32.totalorder %v4243, 16
      %vm4527 = vcmp.le.s32.totalorder %v4244, 16
      %vm4528 = vcmp.le.s32.totalorder %v4245, 16
      %vm4529 = vcmp.le.s32.totalorder %v4246, 16
      %vm4530 = vcmp.le.s32.totalorder %v4247, 16
      %vm4531 = vcmp.le.s32.totalorder %v4248, 16
      %vm4532 = vcmp.le.s32.totalorder %v4249, 16
      %vm4533 = vcmp.le.s32.totalorder %v4250, 16
      %vm4534 = vcmp.le.s32.totalorder %v4251, 16
      %vm4535 = vcmp.le.s32.totalorder %v4252, 16
      %vm4536 = vcmp.le.s32.totalorder %v4253, 16
      %vm4537 = vcmp.le.s32.totalorder %v4254, 16
      %vm4538 = vcmp.le.s32.totalorder %v4255, 16
      %vm4539 = vcmp.le.s32.totalorder %v4256, 16
      %vm4540 = vcmp.le.s32.totalorder %v4257, 16
      %vm4541 = vmand %vm4461, %vm4501
      %vm4542 = vmand %vm4462, %vm4502
      %vm4543 = vmand %vm4463, %vm4503
      %vm4544 = vmand %vm4464, %vm4504
      %vm4545 = vmand %vm4465, %vm4505
      %vm4546 = vmand %vm4466, %vm4506
      %vm4547 = vmand %vm4467, %vm4507
      %vm4548 = vmand %vm4468, %vm4508
      %vm4549 = vmand %vm4469, %vm4509
      %vm4550 = vmand %vm4470, %vm4510
      %vm4551 = vmand %vm4471, %vm4511
      %vm4552 = vmand %vm4472, %vm4512
      %vm4553 = vmand %vm4473, %vm4513
      %vm4554 = vmand %vm4474, %vm4514
      %vm4555 = vmand %vm4475, %vm4515
      %vm4556 = vmand %vm4476, %vm4516
      %vm4557 = vmand %vm4477, %vm4517
      %vm4558 = vmand %vm4478, %vm4518
      %vm4559 = vmand %vm4479, %vm4519
      %vm4560 = vmand %vm4480, %vm4520
      %vm4561 = vmand %vm4481, %vm4521
      %vm4562 = vmand %vm4482, %vm4522
      %vm4563 = vmand %vm4483, %vm4523
      %vm4564 = vmand %vm4484, %vm4524
      %vm4565 = vmand %vm4485, %vm4525
      %vm4566 = vmand %vm4486, %vm4526
      %vm4567 = vmand %vm4487, %vm4527
      %vm4568 = vmand %vm4488, %vm4528
      %vm4569 = vmand %vm4489, %vm4529
      %vm4570 = vmand %vm4490, %vm4530
      %vm4571 = vmand %vm4491, %vm4531
      %vm4572 = vmand %vm4492, %vm4532
      %vm4573 = vmand %vm4493, %vm4533
      %vm4574 = vmand %vm4494, %vm4534
      %vm4575 = vmand %vm4495, %vm4535
      %vm4576 = vmand %vm4496, %vm4536
      %vm4577 = vmand %vm4497, %vm4537
      %vm4578 = vmand %vm4498, %vm4538
      %vm4579 = vmand %vm4499, %vm4539
      %vm4580 = vmand %vm4500, %vm4540
      %v4581 = vsel %vm4541, 1, 0
      %v4582 = vsel %vm4542, 1, 0
      %v4583 = vsel %vm4543, 1, 0
      %v4584 = vsel %vm4544, 1, 0
      %v4585 = vsel %vm4545, 1, 0
      %v4586 = vsel %vm4546, 1, 0
      %v4587 = vsel %vm4547, 1, 0
      %v4588 = vsel %vm4548, 1, 0
      %v4589 = vsel %vm4549, 1, 0
      %v4590 = vsel %vm4550, 1, 0
      %v4591 = vsel %vm4551, 1, 0
      %v4592 = vsel %vm4552, 1, 0
      %v4593 = vsel %vm4553, 1, 0
      %v4594 = vsel %vm4554, 1, 0
      %v4595 = vsel %vm4555, 1, 0
      %v4596 = vsel %vm4556, 1, 0
      %v4597 = vsel %vm4557, 1, 0
      %v4598 = vsel %vm4558, 1, 0
      %v4599 = vsel %vm4559, 1, 0
      %v4600 = vsel %vm4560, 1, 0
      %v4601 = vsel %vm4561, 1, 0
      %v4602 = vsel %vm4562, 1, 0
      %v4603 = vsel %vm4563, 1, 0
      %v4604 = vsel %vm4564, 1, 0
      %v4605 = vsel %vm4565, 1, 0
      %v4606 = vsel %vm4566, 1, 0
      %v4607 = vsel %vm4567, 1, 0
      %v4608 = vsel %vm4568, 1, 0
      %v4609 = vsel %vm4569, 1, 0
      %v4610 = vsel %vm4570, 1, 0
      %v4611 = vsel %vm4571, 1, 0
      %v4612 = vsel %vm4572, 1, 0
      %v4613 = vsel %vm4573, 1, 0
      %v4614 = vsel %vm4574, 1, 0
      %v4615 = vsel %vm4575, 1, 0
      %v4616 = vsel %vm4576, 1, 0
      %v4617 = vsel %vm4577, 1, 0
      %v4618 = vsel %vm4578, 1, 0
      %v4619 = vsel %vm4579, 1, 0
      %v4620 = vsel %vm4580, 1, 0
      %v4621 = vcvt.s32.f32 %v4581
      %v4622 = vcvt.s32.f32 %v4582
      %v4623 = vcvt.s32.f32 %v4583
      %v4624 = vcvt.s32.f32 %v4584
      %v4625 = vcvt.s32.f32 %v4585
      %v4626 = vcvt.s32.f32 %v4586
      %v4627 = vcvt.s32.f32 %v4587
      %v4628 = vcvt.s32.f32 %v4588
      %v4629 = vcvt.s32.f32 %v4589
      %v4630 = vcvt.s32.f32 %v4590
      %v4631 = vcvt.s32.f32 %v4591
      %v4632 = vcvt.s32.f32 %v4592
      %v4633 = vcvt.s32.f32 %v4593
      %v4634 = vcvt.s32.f32 %v4594
      %v4635 = vcvt.s32.f32 %v4595
      %v4636 = vcvt.s32.f32 %v4596
      %v4637 = vcvt.s32.f32 %v4597
      %v4638 = vcvt.s32.f32 %v4598
      %v4639 = vcvt.s32.f32 %v4599
      %v4640 = vcvt.s32.f32 %v4600
      %v4641 = vcvt.s32.f32 %v4601
      %v4642 = vcvt.s32.f32 %v4602
      %v4643 = vcvt.s32.f32 %v4603
      %v4644 = vcvt.s32.f32 %v4604
      %v4645 = vcvt.s32.f32 %v4605
      %v4646 = vcvt.s32.f32 %v4606
      %v4647 = vcvt.s32.f32 %v4607
      %v4648 = vcvt.s32.f32 %v4608
      %v4649 = vcvt.s32.f32 %v4609
      %v4650 = vcvt.s32.f32 %v4610
      %v4651 = vcvt.s32.f32 %v4611
      %v4652 = vcvt.s32.f32 %v4612
      %v4653 = vcvt.s32.f32 %v4613
      %v4654 = vcvt.s32.f32 %v4614
      %v4655 = vcvt.s32.f32 %v4615
      %v4656 = vcvt.s32.f32 %v4616
      %v4657 = vcvt.s32.f32 %v4617
      %v4658 = vcvt.s32.f32 %v4618
      %v4659 = vcvt.s32.f32 %v4619
      %v4660 = vcvt.s32.f32 %v4620
      %v4661 = vld [vmem:[#allocation2] sm:$0xff]
      %v4662 = vld [vmem:[#allocation2 + $0x8] sm:$0xff]
      %v4663 = vld [vmem:[#allocation2 + $0x10] sm:$0xff]
      %v4664 = vld [vmem:[#allocation2 + $0x18] sm:$0xff]
      %v4665 = vld [vmem:[#allocation2 + $0x20] sm:$0xff]
      %v4666 = vld [vmem:[#allocation2 + $0x28] sm:$0xff]
      %v4667 = vld [vmem:[#allocation2 + $0x30] sm:$0xff]
      %v4668 = vld [vmem:[#allocation2 + $0x38] sm:$0xff]
      %v4669 = vld [vmem:[#allocation2 + $0x40] sm:$0xff]
      %v4670 = vld [vmem:[#allocation2 + $0x48] sm:$0xff]
      %v4671 = vld [vmem:[#allocation2 + $0x50] sm:$0xff]
      %v4672 = vld [vmem:[#allocation2 + $0x58] sm:$0xff]
      %v4673 = vld [vmem:[#allocation2 + $0x60] sm:$0xff]
      %v4674 = vld [vmem:[#allocation2 + $0x68] sm:$0xff]
      %v4675 = vld [vmem:[#allocation2 + $0x70] sm:$0xff]
      %v4676 = vld [vmem:[#allocation2 + $0x78] sm:$0xff]
      %v4677 = vld [vmem:[#allocation2 + $0x80] sm:$0xff]
      %v4678 = vld [vmem:[#allocation2 + $0x88] sm:$0xff]
      %v4679 = vld [vmem:[#allocation2 + $0x90] sm:$0xff]
      %v4680 = vld [vmem:[#allocation2 + $0x98] sm:$0xff]
      %v4681 = vld [vmem:[#allocation2 + $0xa0] sm:$0xff]
      %v4682 = vld [vmem:[#allocation2 + $0xa8] sm:$0xff]
      %v4683 = vld [vmem:[#allocation2 + $0xb0] sm:$0xff]
      %v4684 = vld [vmem:[#allocation2 + $0xb8] sm:$0xff]
      %v4685 = vld [vmem:[#allocation2 + $0xc0] sm:$0xff]
      %v4686 = vld [vmem:[#allocation2 + $0xc8] sm:$0xff]
      %v4687 = vld [vmem:[#allocation2 + $0xd0] sm:$0xff]
      %v4688 = vld [vmem:[#allocation2 + $0xd8] sm:$0xff]
      %v4689 = vld [vmem:[#allocation2 + $0xe0] sm:$0xff]
      %v4690 = vld [vmem:[#allocation2 + $0xe8] sm:$0xff]
      %v4691 = vld [vmem:[#allocation2 + $0xf0] sm:$0xff]
      %v4692 = vld [vmem:[#allocation2 + $0xf8] sm:$0xff]
      %v4693 = vld [vmem:[#allocation2 + $0x100] sm:$0xff]
      %v4694 = vld [vmem:[#allocation2 + $0x108] sm:$0xff]
      %v4695 = vld [vmem:[#allocation2 + $0x110] sm:$0xff]
      %v4696 = vld [vmem:[#allocation2 + $0x118] sm:$0xff]
      %v4697 = vld [vmem:[#allocation2 + $0x120] sm:$0xff]
      %v4698 = vld [vmem:[#allocation2 + $0x128] sm:$0xff]
      %v4699 = vld [vmem:[#allocation2 + $0x130] sm:$0xff]
      %v4700 = vld [vmem:[#allocation2 + $0x138] sm:$0xff]
      %v4701 = vld [vmem:[%s2] sm:$0x1]
      %v4703 = vlaneseq
      %v4704 = vshrl.u32 %v4703, 7
      %v4705 = vsub.s32 0, %v4704
      %v4706 = vrot.slane %v4701, %v4705
      %v4708 = vadd.f32 %v4661, %v4706
      %v4709 = vadd.f32 %v4662, %v4706
      %v4710 = vadd.f32 %v4663, %v4706
      %v4711 = vadd.f32 %v4664, %v4706
      %v4712 = vadd.f32 %v4665, %v4706
      %v4713 = vadd.f32 %v4666, %v4706
      %v4714 = vadd.f32 %v4667, %v4706
      %v4715 = vadd.f32 %v4668, %v4706
      %v4716 = vadd.f32 %v4669, %v4706
      %v4717 = vadd.f32 %v4670, %v4706
      %v4718 = vadd.f32 %v4671, %v4706
      %v4719 = vadd.f32 %v4672, %v4706
      %v4720 = vadd.f32 %v4673, %v4706
      %v4721 = vadd.f32 %v4674, %v4706
      %v4722 = vadd.f32 %v4675, %v4706
      %v4723 = vadd.f32 %v4676, %v4706
      %v4724 = vadd.f32 %v4677, %v4706
      %v4725 = vadd.f32 %v4678, %v4706
      %v4726 = vadd.f32 %v4679, %v4706
      %v4727 = vadd.f32 %v4680, %v4706
      %v4728 = vadd.f32 %v4681, %v4706
      %v4729 = vadd.f32 %v4682, %v4706
      %v4730 = vadd.f32 %v4683, %v4706
      %v4731 = vadd.f32 %v4684, %v4706
      %v4732 = vadd.f32 %v4685, %v4706
      %v4733 = vadd.f32 %v4686, %v4706
      %v4734 = vadd.f32 %v4687, %v4706
      %v4735 = vadd.f32 %v4688, %v4706
      %v4736 = vadd.f32 %v4689, %v4706
      %v4737 = vadd.f32 %v4690, %v4706
      %v4738 = vadd.f32 %v4691, %v4706
      %v4739 = vadd.f32 %v4692, %v4706
      %v4740 = vadd.f32 %v4693, %v4706
      %v4741 = vadd.f32 %v4694, %v4706
      %v4742 = vadd.f32 %v4695, %v4706
      %v4743 = vadd.f32 %v4696, %v4706
      %v4744 = vadd.f32 %v4697, %v4706
      %v4745 = vadd.f32 %v4698, %v4706
      %v4746 = vadd.f32 %v4699, %v4706
      %v4747 = vadd.f32 %v4700, %v4706
      %v4748 = vmax.f32 %v4708, 0.0
      %v4749 = vmax.f32 %v4709, 0.0
      %v4750 = vmax.f32 %v4710, 0.0
      %v4751 = vmax.f32 %v4711, 0.0
      %v4752 = vmax.f32 %v4712, 0.0
      %v4753 = vmax.f32 %v4713, 0.0
      %v4754 = vmax.f32 %v4714, 0.0
      %v4755 = vmax.f32 %v4715, 0.0
      %v4756 = vmax.f32 %v4716, 0.0
      %v4757 = vmax.f32 %v4717, 0.0
      %v4758 = vmax.f32 %v4718, 0.0
      %v4759 = vmax.f32 %v4719, 0.0
      %v4760 = vmax.f32 %v4720, 0.0
      %v4761 = vmax.f32 %v4721, 0.0
      %v4762 = vmax.f32 %v4722, 0.0
      %v4763 = vmax.f32 %v4723, 0.0
      %v4764 = vmax.f32 %v4724, 0.0
      %v4765 = vmax.f32 %v4725, 0.0
      %v4766 = vmax.f32 %v4726, 0.0
      %v4767 = vmax.f32 %v4727, 0.0
      %v4768 = vmax.f32 %v4728, 0.0
      %v4769 = vmax.f32 %v4729, 0.0
      %v4770 = vmax.f32 %v4730, 0.0
      %v4771 = vmax.f32 %v4731, 0.0
      %v4772 = vmax.f32 %v4732, 0.0
      %v4773 = vmax.f32 %v4733, 0.0
      %v4774 = vmax.f32 %v4734, 0.0
      %v4775 = vmax.f32 %v4735, 0.0
      %v4776 = vmax.f32 %v4736, 0.0
      %v4777 = vmax.f32 %v4737, 0.0
      %v4778 = vmax.f32 %v4738, 0.0
      %v4779 = vmax.f32 %v4739, 0.0
      %v4780 = vmax.f32 %v4740, 0.0
      %v4781 = vmax.f32 %v4741, 0.0
      %v4782 = vmax.f32 %v4742, 0.0
      %v4783 = vmax.f32 %v4743, 0.0
      %v4784 = vmax.f32 %v4744, 0.0
      %v4785 = vmax.f32 %v4745, 0.0
      %v4786 = vmax.f32 %v4746, 0.0
      %v4787 = vmax.f32 %v4747, 0.0
      %v4788 = vmul.f32 %v4621, %v4748
      %v4789 = vmul.f32 %v4622, %v4749
      %v4790 = vmul.f32 %v4623, %v4750
      %v4791 = vmul.f32 %v4624, %v4751
      %v4792 = vmul.f32 %v4625, %v4752
      %v4793 = vmul.f32 %v4626, %v4753
      %v4794 = vmul.f32 %v4627, %v4754
      %v4795 = vmul.f32 %v4628, %v4755
      %v4796 = vmul.f32 %v4629, %v4756
      %v4797 = vmul.f32 %v4630, %v4757
      %v4798 = vmul.f32 %v4631, %v4758
      %v4799 = vmul.f32 %v4632, %v4759
      %v4800 = vmul.f32 %v4633, %v4760
      %v4801 = vmul.f32 %v4634, %v4761
      %v4802 = vmul.f32 %v4635, %v4762
      %v4803 = vmul.f32 %v4636, %v4763
      %v4804 = vmul.f32 %v4637, %v4764
      %v4805 = vmul.f32 %v4638, %v4765
      %v4806 = vmul.f32 %v4639, %v4766
      %v4807 = vmul.f32 %v4640, %v4767
      %v4808 = vmul.f32 %v4641, %v4768
      %v4809 = vmul.f32 %v4642, %v4769
      %v4810 = vmul.f32 %v4643, %v4770
      %v4811 = vmul.f32 %v4644, %v4771
      %v4812 = vmul.f32 %v4645, %v4772
      %v4813 = vmul.f32 %v4646, %v4773
      %v4814 = vmul.f32 %v4647, %v4774
      %v4815 = vmul.f32 %v4648, %v4775
      %v4816 = vmul.f32 %v4649, %v4776
      %v4817 = vmul.f32 %v4650, %v4777
      %v4818 = vmul.f32 %v4651, %v4778
      %v4819 = vmul.f32 %v4652, %v4779
      %v4820 = vmul.f32 %v4653, %v4780
      %v4821 = vmul.f32 %v4654, %v4781
      %v4822 = vmul.f32 %v4655, %v4782
      %v4823 = vmul.f32 %v4656, %v4783
      %v4824 = vmul.f32 %v4657, %v4784
      %v4825 = vmul.f32 %v4658, %v4785
      %v4826 = vmul.f32 %v4659, %v4786
      %v4827 = vmul.f32 %v4660, %v4787
      %4828 = vst [vmem:[#allocation3] sm:$0xff] %v4788
      %4829 = vst [vmem:[#allocation3 + $0x8] sm:$0xff] %v4789
      %4830 = vst [vmem:[#allocation3 + $0x10] sm:$0xff] %v4790
      %4831 = vst [vmem:[#allocation3 + $0x18] sm:$0xff] %v4791
      %4832 = vst [vmem:[#allocation3 + $0x20] sm:$0xff] %v4792
      %4833 = vst [vmem:[#allocation3 + $0x28] sm:$0xff] %v4793
      %4834 = vst [vmem:[#allocation3 + $0x30] sm:$0xff] %v4794
      %4835 = vst [vmem:[#allocation3 + $0x38] sm:$0xff] %v4795
      %4836 = vst [vmem:[#allocation3 + $0x40] sm:$0xff] %v4796
      %4837 = vst [vmem:[#allocation3 + $0x48] sm:$0xff] %v4797
      %4838 = vst [vmem:[#allocation3 + $0x50] sm:$0xff] %v4798
      %4839 = vst [vmem:[#allocation3 + $0x58] sm:$0xff] %v4799
      %4840 = vst [vmem:[#allocation3 + $0x60] sm:$0xff] %v4800
      %4841 = vst [vmem:[#allocation3 + $0x68] sm:$0xff] %v4801
      %4842 = vst [vmem:[#allocation3 + $0x70] sm:$0xff] %v4802
      %4843 = vst [vmem:[#allocation3 + $0x78] sm:$0xff] %v4803
      %4844 = vst [vmem:[#allocation3 + $0x80] sm:$0xff] %v4804
      %4845 = vst [vmem:[#allocation3 + $0x88] sm:$0xff] %v4805
      %4846 = vst [vmem:[#allocation3 + $0x90] sm:$0xff] %v4806
      %4847 = vst [vmem:[#allocation3 + $0x98] sm:$0xff] %v4807
      %4848 = vst [vmem:[#allocation3 + $0xa0] sm:$0xff] %v4808
      %4849 = vst [vmem:[#allocation3 + $0xa8] sm:$0xff] %v4809
      %4850 = vst [vmem:[#allocation3 + $0xb0] sm:$0xff] %v4810
      %4851 = vst [vmem:[#allocation3 + $0xb8] sm:$0xff] %v4811
      %4852 = vst [vmem:[#allocation3 + $0xc0] sm:$0xff] %v4812
      %4853 = vst [vmem:[#allocation3 + $0xc8] sm:$0xff] %v4813
      %4854 = vst [vmem:[#allocation3 + $0xd0] sm:$0xff] %v4814
      %4855 = vst [vmem:[#allocation3 + $0xd8] sm:$0xff] %v4815
      %4856 = vst [vmem:[#allocation3 + $0xe0] sm:$0xff] %v4816
      %4857 = vst [vmem:[#allocation3 + $0xe8] sm:$0xff] %v4817
      %4858 = vst [vmem:[#allocation3 + $0xf0] sm:$0xff] %v4818
      %4859 = vst [vmem:[#allocation3 + $0xf8] sm:$0xff] %v4819
      %4860 = vst [vmem:[#allocation3 + $0x100] sm:$0xff] %v4820
      %4861 = vst [vmem:[#allocation3 + $0x108] sm:$0xff] %v4821
      %4862 = vst [vmem:[#allocation3 + $0x110] sm:$0xff] %v4822
      %4863 = vst [vmem:[#allocation3 + $0x118] sm:$0xff] %v4823
      %4864 = vst [vmem:[#allocation3 + $0x120] sm:$0xff] %v4824
      %4865 = vst [vmem:[#allocation3 + $0x128] sm:$0xff] %v4825
      %4866 = vst [vmem:[#allocation3 + $0x130] sm:$0xff] %v4826
      %4867 = vst [vmem:[#allocation3 + $0x138] sm:$0xff] %v4827
      %v4868 = vld [vmem:[#allocation3] sm:$0xff]
      %v4869 = vld [vmem:[#allocation3 + $0x8] sm:$0xff]
      %v4870 = vld [vmem:[#allocation3 + $0x10] sm:$0xff]
      %v4871 = vld [vmem:[#allocation3 + $0x18] sm:$0xff]
      %v4872 = vld [vmem:[#allocation3 + $0x20] sm:$0xff]
      %v4873 = vld [vmem:[#allocation3 + $0x28] sm:$0xff]
      %v4874 = vld [vmem:[#allocation3 + $0x30] sm:$0xff]
      %v4875 = vld [vmem:[#allocation3 + $0x38] sm:$0xff]
      %v4876 = vld [vmem:[#allocation3 + $0x40] sm:$0xff]
      %v4877 = vld [vmem:[#allocation3 + $0x48] sm:$0xff]
      %v4878 = vld [vmem:[#allocation3 + $0x50] sm:$0xff]
      %v4879 = vld [vmem:[#allocation3 + $0x58] sm:$0xff]
      %v4880 = vld [vmem:[#allocation3 + $0x60] sm:$0xff]
      %v4881 = vld [vmem:[#allocation3 + $0x68] sm:$0xff]
      %v4882 = vld [vmem:[#allocation3 + $0x70] sm:$0xff]
      %v4883 = vld [vmem:[#allocation3 + $0x78] sm:$0xff]
      %v4884 = vld [vmem:[#allocation3 + $0x80] sm:$0xff]
      %v4885 = vld [vmem:[#allocation3 + $0x88] sm:$0xff]
      %v4886 = vld [vmem:[#allocation3 + $0x90] sm:$0xff]
      %v4887 = vld [vmem:[#allocation3 + $0x98] sm:$0xff]
      %v4888 = vld [vmem:[#allocation3 + $0xa0] sm:$0xff]
      %v4889 = vld [vmem:[#allocation3 + $0xa8] sm:$0xff]
      %v4890 = vld [vmem:[#allocation3 + $0xb0] sm:$0xff]
      %v4891 = vld [vmem:[#allocation3 + $0xb8] sm:$0xff]
      %v4892 = vld [vmem:[#allocation3 + $0xc0] sm:$0xff]
      %v4893 = vld [vmem:[#allocation3 + $0xc8] sm:$0xff]
      %v4894 = vld [vmem:[#allocation3 + $0xd0] sm:$0xff]
      %v4895 = vld [vmem:[#allocation3 + $0xd8] sm:$0xff]
      %v4896 = vld [vmem:[#allocation3 + $0xe0] sm:$0xff]
      %v4897 = vld [vmem:[#allocation3 + $0xe8] sm:$0xff]
      %v4898 = vld [vmem:[#allocation3 + $0xf0] sm:$0xff]
      %v4899 = vld [vmem:[#allocation3 + $0xf8] sm:$0xff]
      %v4900 = vld [vmem:[#allocation3 + $0x100] sm:$0xff]
      %v4901 = vld [vmem:[#allocation3 + $0x108] sm:$0xff]
      %v4902 = vld [vmem:[#allocation3 + $0x110] sm:$0xff]
      %v4903 = vld [vmem:[#allocation3 + $0x118] sm:$0xff]
      %v4904 = vld [vmem:[#allocation3 + $0x120] sm:$0xff]
      %v4905 = vld [vmem:[#allocation3 + $0x128] sm:$0xff]
      %v4906 = vld [vmem:[#allocation3 + $0x130] sm:$0xff]
      %v4907 = vld [vmem:[#allocation3 + $0x138] sm:$0xff]
      %v4908 = vrot.slane %v4868, 7
      %v4909 = vrot.slane %v4869, 7
      %v4910 = vrot.slane %v4870, 7
      %v4911 = vrot.slane %v4871, 7
      %v4912 = vrot.slane %v4872, 7
      %v4913 = vrot.slane %v4873, 7
      %v4914 = vrot.slane %v4874, 7
      %v4915 = vrot.slane %v4875, 7
      %v4916 = vrot.slane %v4876, 7
      %v4917 = vrot.slane %v4877, 7
      %v4918 = vrot.slane %v4878, 7
      %v4919 = vrot.slane %v4879, 7
      %v4920 = vrot.slane %v4880, 7
      %v4921 = vrot.slane %v4881, 7
      %v4922 = vrot.slane %v4882, 7
      %v4923 = vrot.slane %v4883, 7
      %v4924 = vrot.slane %v4884, 7
      %v4925 = vrot.slane %v4885, 7
      %v4926 = vrot.slane %v4886, 7
      %v4927 = vrot.slane %v4887, 7
      %v4928 = vrot.slane %v4888, 7
      %v4929 = vrot.slane %v4889, 7
      %v4930 = vrot.slane %v4890, 7
      %v4931 = vrot.slane %v4891, 7
      %v4932 = vrot.slane %v4892, 7
      %v4933 = vrot.slane %v4893, 7
      %v4934 = vrot.slane %v4894, 7
      %v4935 = vrot.slane %v4895, 7
      %v4936 = vrot.slane %v4896, 7
      %v4937 = vrot.slane %v4897, 7
      %v4938 = vrot.slane %v4898, 7
      %v4939 = vrot.slane %v4899, 7
      %v4940 = vrot.slane %v4907, 7
      %v4941 = vsel %vm393, %v4938, %v4939
      %v4942 = vsel %vm393, %v4937, %v4938
      %v4943 = vsel %vm393, %v4936, %v4937
      %v4944 = vsel %vm393, %v4935, %v4936
      %v4945 = vsel %vm393, %v4934, %v4935
      %v4946 = vsel %vm393, %v4933, %v4934
      %v4947 = vsel %vm393, %v4932, %v4933
      %v4948 = vsel %vm393, %v4931, %v4932
      %v4949 = vsel %vm393, %v4930, %v4931
      %v4950 = vsel %vm393, %v4929, %v4930
      %v4951 = vsel %vm393, %v4928, %v4929
      %v4952 = vsel %vm393, %v4927, %v4928
      %v4953 = vsel %vm393, %v4926, %v4927
      %v4954 = vsel %vm393, %v4925, %v4926
      %v4955 = vsel %vm393, %v4924, %v4925
      %v4956 = vsel %vm393, %v4923, %v4924
      %v4957 = vsel %vm393, %v4922, %v4923
      %v4958 = vsel %vm393, %v4921, %v4922
      %v4959 = vsel %vm393, %v4920, %v4921
      %v4960 = vsel %vm393, %v4919, %v4920
      %v4961 = vsel %vm393, %v4918, %v4919
      %v4962 = vsel %vm393, %v4917, %v4918
      %v4963 = vsel %vm393, %v4916, %v4917
      %v4964 = vsel %vm393, %v4915, %v4916
      %v4965 = vsel %vm393, %v4914, %v4915
      %v4966 = vsel %vm393, %v4913, %v4914
      %v4967 = vsel %vm393, %v4912, %v4913
      %v4968 = vsel %vm393, %v4911, %v4912
      %v4969 = vsel %vm393, %v4910, %v4911
      %v4970 = vsel %vm393, %v4909, %v4910
      %v4971 = vsel %vm393, %v4908, %v4909
      %v4972 = vsel %vm393, %v4940, %v4908
      %v4973 = vpack.c.bf16 %v4971, %v4972
      %v4974 = vpack.c.bf16 %v4969, %v4970
      %v4975 = vpack.c.bf16 %v4967, %v4968
      %v4976 = vpack.c.bf16 %v4965, %v4966
      %v4977 = vpack.c.bf16 %v4963, %v4964
      %v4978 = vpack.c.bf16 %v4961, %v4962
      %v4979 = vpack.c.bf16 %v4959, %v4960
      %v4980 = vpack.c.bf16 %v4957, %v4958
      %v4981 = vpack.c.bf16 %v4955, %v4956
      %v4982 = vpack.c.bf16 %v4953, %v4954
      %v4983 = vpack.c.bf16 %v4951, %v4952
      %v4984 = vpack.c.bf16 %v4949, %v4950
      %v4985 = vpack.c.bf16 %v4947, %v4948
      %v4986 = vpack.c.bf16 %v4945, %v4946
      %v4987 = vpack.c.bf16 %v4943, %v4944
      %v4988 = vpack.c.bf16 %v4941, %v4942
      %v4989 = vld [vmem:[%s3] sm:$0xf]
      %v4990 = vld [vmem:[%s3 + $0x4] sm:$0xf]
      %v4991 = vld [vmem:[%s3 + $0x8] sm:$0xf]
      %v4992 = vld [vmem:[%s3 + $0xc] sm:$0xf]
      %v4993 = vld [vmem:[%s3 + $0x10] sm:$0xf]
      %v4994 = vld [vmem:[%s3 + $0x14] sm:$0xf]
      %v4995 = vld [vmem:[%s3 + $0x18] sm:$0xf]
      %v4996 = vld [vmem:[%s3 + $0x1c] sm:$0xf]
      %v4997 = vld [vmem:[%s3 + $0x20] sm:$0xf]
      %v4998 = vld [vmem:[%s3 + $0x24] sm:$0xf]
      %v4999 = vld [vmem:[%s3 + $0x28] sm:$0xf]
      %v5000 = vld [vmem:[%s3 + $0x2c] sm:$0xf]
      %v5001 = vld [vmem:[%s3 + $0x30] sm:$0xf]
      %v5002 = vld [vmem:[%s3 + $0x34] sm:$0xf]
      %v5003 = vld [vmem:[%s3 + $0x38] sm:$0xf]
      %v5004 = vld [vmem:[%s3 + $0x3c] sm:$0xf]
      %v5021 = vunpack.c.l.b16 %v4989
      %v5022 = vunpack.c.l.b16 %v4990
      %v5023 = vunpack.c.l.b16 %v4991
      %v5024 = vunpack.c.l.b16 %v4992
      %v5025 = vunpack.c.l.b16 %v4993
      %v5026 = vunpack.c.l.b16 %v4994
      %v5027 = vunpack.c.l.b16 %v4995
      %v5028 = vunpack.c.l.b16 %v4996
      %v5029 = vunpack.c.l.b16 %v4997
      %v5030 = vunpack.c.l.b16 %v4998
      %v5031 = vunpack.c.l.b16 %v4999
      %v5032 = vunpack.c.l.b16 %v5000
      %v5033 = vunpack.c.l.b16 %v5001
      %v5034 = vunpack.c.l.b16 %v5002
      %v5035 = vunpack.c.l.b16 %v5003
      %v5036 = vunpack.c.l.b16 %v5004
      %v5037 = vpack.c.b16 %v5022, %v5021
      %v5038 = vpack.c.b16 %v5024, %v5023
      %v5039 = vpack.c.b16 %v5026, %v5025
      %v5040 = vpack.c.b16 %v5028, %v5027
      %v5041 = vpack.c.b16 %v5030, %v5029
      %v5042 = vpack.c.b16 %v5032, %v5031
      %v5043 = vpack.c.b16 %v5034, %v5033
      %v5044 = vpack.c.b16 %v5036, %v5035
      %5053 = vmatprep.subr.bf16.mxu0 0
      %5054 = vmatpush1.bf16.msra.mxu0 %v5044
      %5055 = vmatprep.subr.bf16.mxu0 0
      %5056 = vmatpush1.bf16.msra.mxu0 %v5043
      %5057 = vmatprep.subr.bf16.mxu0 0
      %5058 = vmatpush1.bf16.msra.mxu0 %v5042
      %5059 = vmatprep.subr.bf16.mxu0 0
      %5060 = vmatpush1.bf16.msra.mxu0 %v5041
      %5061 = vmatprep.subr.bf16.mxu0 0
      %5062 = vmatpush1.bf16.msra.mxu0 %v5040
      %5063 = vmatprep.subr.bf16.mxu0 0
      %5064 = vmatpush1.bf16.msra.mxu0 %v5039
      %5065 = vmatprep.subr.bf16.mxu0 0
      %5066 = vmatpush1.bf16.msra.mxu0 %v5038
      %5067 = vmatprep.subr.bf16.mxu0 0
      %5068 = vmatpush1.bf16.msra.mxu0 %v5037
      %5069 = vmatprep.subr.bf16.mxu0 0
      %5070 = vmatpush2.bf16.msra.mxu0 0
      %5071 = vmatprep.subr.bf16.mxu0 0
      %5072 = vmatpush2.bf16.msra.mxu0 0
      %5073 = vmatprep.subr.bf16.mxu0 0
      %5074 = vmatpush2.bf16.msra.mxu0 0
      %5075 = vmatprep.subr.bf16.mxu0 0
      %5076 = vmatpush2.bf16.msra.mxu0 0
      %5077 = vmatprep.subr.bf16.mxu0 0
      %5078 = vmatpush2.bf16.msra.mxu0 0
      %5079 = vmatprep.subr.bf16.mxu0 0
      %5080 = vmatpush2.bf16.msra.mxu0 0
      %5081 = vmatprep.subr.bf16.mxu0 0
      %5082 = vmatpush2.bf16.msra.mxu0 0
      %5083 = vmatprep.subr.bf16.mxu0 0
      %5084 = vmatpush2.bf16.msra.mxu0 0
      %5085 = vmatprep.mubr.bf16.mxu0 0
      %5086 = vmatmul.mubr.bf16.gmra.mxu0 %v4973
      %v5087 = vpop.f32.mrf.mxu0
      %v5088 = vadd.f32 0.0, %v5087
      %v5089 = vpop.f32.mrf.mxu0
      %v5090 = vpop.f32.mrf.mxu0
      %v5091 = vadd.f32 0.0, %v5090
      %v5092 = vpop.f32.mrf.mxu0
      %5093 = vmatprep.mubr.bf16.mxu0 0
      %5094 = vmatmul.mubr.bf16.gmra.mxu0 %v4974
      %v5095 = vpop.f32.mrf.mxu0
      %v5096 = vadd.f32 0.0, %v5095
      %v5097 = vpop.f32.mrf.mxu0
      %v5098 = vpop.f32.mrf.mxu0
      %v5099 = vadd.f32 0.0, %v5098
      %v5100 = vpop.f32.mrf.mxu0
      %5101 = vmatprep.mubr.bf16.mxu0 0
      %5102 = vmatmul.mubr.bf16.gmra.mxu0 %v4975
      %v5103 = vpop.f32.mrf.mxu0
      %v5104 = vadd.f32 0.0, %v5103
      %v5105 = vpop.f32.mrf.mxu0
      %v5106 = vpop.f32.mrf.mxu0
      %v5107 = vadd.f32 0.0, %v5106
      %v5108 = vpop.f32.mrf.mxu0
      %5109 = vmatprep.mubr.bf16.mxu0 0
      %5110 = vmatmul.mubr.bf16.gmra.mxu0 %v4976
      %v5111 = vpop.f32.mrf.mxu0
      %v5112 = vadd.f32 0.0, %v5111
      %v5113 = vpop.f32.mrf.mxu0
      %v5114 = vpop.f32.mrf.mxu0
      %v5115 = vadd.f32 0.0, %v5114
      %v5116 = vpop.f32.mrf.mxu0
      %5117 = vmatprep.mubr.bf16.mxu0 0
      %5118 = vmatmul.mubr.bf16.gmra.mxu0 %v4977
      %v5119 = vpop.f32.mrf.mxu0
      %v5120 = vadd.f32 0.0, %v5119
      %v5121 = vpop.f32.mrf.mxu0
      %v5122 = vpop.f32.mrf.mxu0
      %v5123 = vadd.f32 0.0, %v5122
      %v5124 = vpop.f32.mrf.mxu0
      %5125 = vmatprep.mubr.bf16.mxu0 0
      %5126 = vmatmul.mubr.bf16.gmra.mxu0 %v4978
      %v5127 = vpop.f32.mrf.mxu0
      %v5128 = vadd.f32 0.0, %v5127
      %v5129 = vpop.f32.mrf.mxu0
      %v5130 = vpop.f32.mrf.mxu0
      %v5131 = vadd.f32 0.0, %v5130
      %v5132 = vpop.f32.mrf.mxu0
      %5133 = vmatprep.mubr.bf16.mxu0 0
      %5134 = vmatmul.mubr.bf16.gmra.mxu0 %v4979
      %v5135 = vpop.f32.mrf.mxu0
      %v5136 = vadd.f32 0.0, %v5135
      %v5137 = vpop.f32.mrf.mxu0
      %v5138 = vpop.f32.mrf.mxu0
      %v5139 = vadd.f32 0.0, %v5138
      %v5140 = vpop.f32.mrf.mxu0
      %5141 = vmatprep.mubr.bf16.mxu0 0
      %5142 = vmatmul.mubr.bf16.gmra.mxu0 %v4980
      %v5143 = vpop.f32.mrf.mxu0
      %v5144 = vadd.f32 0.0, %v5143
      %v5145 = vpop.f32.mrf.mxu0
      %v5146 = vpop.f32.mrf.mxu0
      %v5147 = vadd.f32 0.0, %v5146
      %v5148 = vpop.f32.mrf.mxu0
      %5149 = vmatprep.mubr.bf16.mxu0 0
      %5150 = vmatmul.mubr.bf16.gmra.mxu0 %v4981
      %v5151 = vpop.f32.mrf.mxu0
      %v5152 = vadd.f32 0.0, %v5151
      %v5153 = vpop.f32.mrf.mxu0
      %v5154 = vpop.f32.mrf.mxu0
      %v5155 = vadd.f32 0.0, %v5154
      %v5156 = vpop.f32.mrf.mxu0
      %5157 = vmatprep.mubr.bf16.mxu0 0
      %5158 = vmatmul.mubr.bf16.gmra.mxu0 %v4982
      %v5159 = vpop.f32.mrf.mxu0
      %v5160 = vadd.f32 0.0, %v5159
      %v5161 = vpop.f32.mrf.mxu0
      %v5162 = vpop.f32.mrf.mxu0
      %v5163 = vadd.f32 0.0, %v5162
      %v5164 = vpop.f32.mrf.mxu0
      %5165 = vmatprep.mubr.bf16.mxu0 0
      %5166 = vmatmul.mubr.bf16.gmra.mxu0 %v4983
      %v5167 = vpop.f32.mrf.mxu0
      %v5168 = vadd.f32 0.0, %v5167
      %v5169 = vpop.f32.mrf.mxu0
      %v5170 = vpop.f32.mrf.mxu0
      %v5171 = vadd.f32 0.0, %v5170
      %v5172 = vpop.f32.mrf.mxu0
      %5173 = vmatprep.mubr.bf16.mxu0 0
      %5174 = vmatmul.mubr.bf16.gmra.mxu0 %v4984
      %v5175 = vpop.f32.mrf.mxu0
      %v5176 = vadd.f32 0.0, %v5175
      %v5177 = vpop.f32.mrf.mxu0
      %v5178 = vpop.f32.mrf.mxu0
      %v5179 = vadd.f32 0.0, %v5178
      %v5180 = vpop.f32.mrf.mxu0
      %5181 = vmatprep.mubr.bf16.mxu0 0
      %5182 = vmatmul.mubr.bf16.gmra.mxu0 %v4985
      %v5183 = vpop.f32.mrf.mxu0
      %v5184 = vadd.f32 0.0, %v5183
      %v5185 = vpop.f32.mrf.mxu0
      %v5186 = vpop.f32.mrf.mxu0
      %v5187 = vadd.f32 0.0, %v5186
      %v5188 = vpop.f32.mrf.mxu0
      %5189 = vmatprep.mubr.bf16.mxu0 0
      %5190 = vmatmul.mubr.bf16.gmra.mxu0 %v4986
      %v5191 = vpop.f32.mrf.mxu0
      %v5192 = vadd.f32 0.0, %v5191
      %v5193 = vpop.f32.mrf.mxu0
      %v5194 = vpop.f32.mrf.mxu0
      %v5195 = vadd.f32 0.0, %v5194
      %v5196 = vpop.f32.mrf.mxu0
      %5197 = vmatprep.mubr.bf16.mxu0 0
      %5198 = vmatmul.mubr.bf16.gmra.mxu0 %v4987
      %v5199 = vpop.f32.mrf.mxu0
      %v5200 = vadd.f32 0.0, %v5199
      %v5201 = vpop.f32.mrf.mxu0
      %v5202 = vpop.f32.mrf.mxu0
      %v5203 = vadd.f32 0.0, %v5202
      %v5204 = vpop.f32.mrf.mxu0
      %5205 = vmatprep.mubr.bf16.mxu0 0
      %5206 = vmatmul.mubr.bf16.gmra.mxu0 %v4988
      %v5207 = vpop.f32.mrf.mxu0
      %v5208 = vadd.f32 0.0, %v5207
      %v5209 = vpop.f32.mrf.mxu0
      %v5210 = vpop.f32.mrf.mxu0
      %v5211 = vadd.f32 0.0, %v5210
      %v5212 = vpop.f32.mrf.mxu0
      %5213 = vdwg.mxu0
      %5214 = vst [vmem:[#allocation2] sm:$0xff] %v5088
      %5215 = vst [vmem:[#allocation2 + $0x8] sm:$0xff] %v5091
      %5216 = vst [vmem:[#allocation2 + $0x10] sm:$0xff] %v5096
      %5217 = vst [vmem:[#allocation2 + $0x18] sm:$0xff] %v5099
      %5218 = vst [vmem:[#allocation2 + $0x20] sm:$0xff] %v5104
      %5219 = vst [vmem:[#allocation2 + $0x28] sm:$0xff] %v5107
      %5220 = vst [vmem:[#allocation2 + $0x30] sm:$0xff] %v5112
      %5221 = vst [vmem:[#allocation2 + $0x38] sm:$0xff] %v5115
      %5222 = vst [vmem:[#allocation2 + $0x40] sm:$0xff] %v5120
      %5223 = vst [vmem:[#allocation2 + $0x48] sm:$0xff] %v5123
      %5224 = vst [vmem:[#allocation2 + $0x50] sm:$0xff] %v5128
      %5225 = vst [vmem:[#allocation2 + $0x58] sm:$0xff] %v5131
      %5226 = vst [vmem:[#allocation2 + $0x60] sm:$0xff] %v5136
      %5227 = vst [vmem:[#allocation2 + $0x68] sm:$0xff] %v5139
      %5228 = vst [vmem:[#allocation2 + $0x70] sm:$0xff] %v5144
      %5229 = vst [vmem:[#allocation2 + $0x78] sm:$0xff] %v5147
      %5230 = vst [vmem:[#allocation2 + $0x80] sm:$0xff] %v5152
      %5231 = vst [vmem:[#allocation2 + $0x88] sm:$0xff] %v5155
      %5232 = vst [vmem:[#allocation2 + $0x90] sm:$0xff] %v5160
      %5233 = vst [vmem:[#allocation2 + $0x98] sm:$0xff] %v5163
      %5234 = vst [vmem:[#allocation2 + $0xa0] sm:$0xff] %v5168
      %5235 = vst [vmem:[#allocation2 + $0xa8] sm:$0xff] %v5171
      %5236 = vst [vmem:[#allocation2 + $0xb0] sm:$0xff] %v5176
      %5237 = vst [vmem:[#allocation2 + $0xb8] sm:$0xff] %v5179
      %5238 = vst [vmem:[#allocation2 + $0xc0] sm:$0xff] %v5184
      %5239 = vst [vmem:[#allocation2 + $0xc8] sm:$0xff] %v5187
      %5240 = vst [vmem:[#allocation2 + $0xd0] sm:$0xff] %v5192
      %5241 = vst [vmem:[#allocation2 + $0xd8] sm:$0xff] %v5195
      %5242 = vst [vmem:[#allocation2 + $0xe0] sm:$0xff] %v5200
      %5243 = vst [vmem:[#allocation2 + $0xe8] sm:$0xff] %v5203
      %5244 = vst [vmem:[#allocation2 + $0xf0] sm:$0xff] %v5208
      %5245 = vst [vmem:[#allocation2 + $0xf8] sm:$0xff] %v5211
      %v5246 = vpack.c.bf16 %v4869, %v4868
      %v5247 = vpack.c.bf16 %v4871, %v4870
      %v5248 = vpack.c.bf16 %v4873, %v4872
      %v5249 = vpack.c.bf16 %v4875, %v4874
      %v5250 = vpack.c.bf16 %v4877, %v4876
      %v5251 = vpack.c.bf16 %v4879, %v4878
      %v5252 = vpack.c.bf16 %v4881, %v4880
      %v5253 = vpack.c.bf16 %v4883, %v4882
      %v5254 = vpack.c.bf16 %v4885, %v4884
      %v5255 = vpack.c.bf16 %v4887, %v4886
      %v5256 = vpack.c.bf16 %v4889, %v4888
      %v5257 = vpack.c.bf16 %v4891, %v4890
      %v5258 = vpack.c.bf16 %v4893, %v4892
      %v5259 = vpack.c.bf16 %v4895, %v4894
      %v5260 = vpack.c.bf16 %v4897, %v4896
      %v5261 = vpack.c.bf16 %v4899, %v4898
      %s5262 = scalar_lea.vmem %s3, 64
      %v5263 = vld [vmem:[%s5262] sm:$0xf]
      %v5264 = vld [vmem:[%s5262 + $0x4] sm:$0xf]
      %v5265 = vld [vmem:[%s5262 + $0x8] sm:$0xf]
      %v5266 = vld [vmem:[%s5262 + $0xc] sm:$0xf]
      %v5267 = vld [vmem:[%s5262 + $0x10] sm:$0xf]
      %v5268 = vld [vmem:[%s5262 + $0x14] sm:$0xf]
      %v5269 = vld [vmem:[%s5262 + $0x18] sm:$0xf]
      %v5270 = vld [vmem:[%s5262 + $0x1c] sm:$0xf]
      %v5271 = vld [vmem:[%s5262 + $0x20] sm:$0xf]
      %v5272 = vld [vmem:[%s5262 + $0x24] sm:$0xf]
      %v5273 = vld [vmem:[%s5262 + $0x28] sm:$0xf]
      %v5274 = vld [vmem:[%s5262 + $0x2c] sm:$0xf]
      %v5275 = vld [vmem:[%s5262 + $0x30] sm:$0xf]
      %v5276 = vld [vmem:[%s5262 + $0x34] sm:$0xf]
      %v5277 = vld [vmem:[%s5262 + $0x38] sm:$0xf]
      %v5278 = vld [vmem:[%s5262 + $0x3c] sm:$0xf]
      %v5295 = vunpack.c.l.b16 %v5263
      %v5296 = vunpack.c.l.b16 %v5264
      %v5297 = vunpack.c.l.b16 %v5265
      %v5298 = vunpack.c.l.b16 %v5266
      %v5299 = vunpack.c.l.b16 %v5267
      %v5300 = vunpack.c.l.b16 %v5268
      %v5301 = vunpack.c.l.b16 %v5269
      %v5302 = vunpack.c.l.b16 %v5270
      %v5303 = vunpack.c.l.b16 %v5271
      %v5304 = vunpack.c.l.b16 %v5272
      %v5305 = vunpack.c.l.b16 %v5273
      %v5306 = vunpack.c.l.b16 %v5274
      %v5307 = vunpack.c.l.b16 %v5275
      %v5308 = vunpack.c.l.b16 %v5276
      %v5309 = vunpack.c.l.b16 %v5277
      %v5310 = vunpack.c.l.b16 %v5278
      %v5311 = vpack.c.b16 %v5296, %v5295
      %v5312 = vpack.c.b16 %v5298, %v5297
      %v5313 = vpack.c.b16 %v5300, %v5299
      %v5314 = vpack.c.b16 %v5302, %v5301
      %v5315 = vpack.c.b16 %v5304, %v5303
      %v5316 = vpack.c.b16 %v5306, %v5305
      %v5317 = vpack.c.b16 %v5308, %v5307
      %v5318 = vpack.c.b16 %v5310, %v5309
      %5327 = vmatprep.subr.bf16.mxu0 0
      %5328 = vmatpush1.bf16.msra.mxu0 %v5318
      %5329 = vmatprep.subr.bf16.mxu0 0
      %5330 = vmatpush1.bf16.msra.mxu0 %v5317
      %5331 = vmatprep.subr.bf16.mxu0 0
      %5332 = vmatpush1.bf16.msra.mxu0 %v5316
      %5333 = vmatprep.subr.bf16.mxu0 0
      %5334 = vmatpush1.bf16.msra.mxu0 %v5315
      %5335 = vmatprep.subr.bf16.mxu0 0
      %5336 = vmatpush1.bf16.msra.mxu0 %v5314
      %5337 = vmatprep.subr.bf16.mxu0 0
      %5338 = vmatpush1.bf16.msra.mxu0 %v5313
      %5339 = vmatprep.subr.bf16.mxu0 0
      %5340 = vmatpush1.bf16.msra.mxu0 %v5312
      %5341 = vmatprep.subr.bf16.mxu0 0
      %5342 = vmatpush1.bf16.msra.mxu0 %v5311
      %5343 = vmatprep.subr.bf16.mxu0 0
      %5344 = vmatpush2.bf16.msra.mxu0 0
      %5345 = vmatprep.subr.bf16.mxu0 0
      %5346 = vmatpush2.bf16.msra.mxu0 0
      %5347 = vmatprep.subr.bf16.mxu0 0
      %5348 = vmatpush2.bf16.msra.mxu0 0
      %5349 = vmatprep.subr.bf16.mxu0 0
      %5350 = vmatpush2.bf16.msra.mxu0 0
      %5351 = vmatprep.subr.bf16.mxu0 0
      %5352 = vmatpush2.bf16.msra.mxu0 0
      %5353 = vmatprep.subr.bf16.mxu0 0
      %5354 = vmatpush2.bf16.msra.mxu0 0
      %5355 = vmatprep.subr.bf16.mxu0 0
      %5356 = vmatpush2.bf16.msra.mxu0 0
      %5357 = vmatprep.subr.bf16.mxu0 0
      %5358 = vmatpush2.bf16.msra.mxu0 0
      %5359 = vmatprep.mubr.bf16.mxu0 0
      %5360 = vmatmul.mubr.bf16.gmra.mxu0 %v5246
      %v5361 = vpop.f32.mrf.mxu0
      %v5362 = vadd.f32 0.0, %v5361
      %v5363 = vpop.f32.mrf.mxu0
      %v5364 = vpop.f32.mrf.mxu0
      %v5365 = vadd.f32 0.0, %v5364
      %v5366 = vpop.f32.mrf.mxu0
      %5367 = vmatprep.mubr.bf16.mxu0 0
      %5368 = vmatmul.mubr.bf16.gmra.mxu0 %v5247
      %v5369 = vpop.f32.mrf.mxu0
      %v5370 = vadd.f32 0.0, %v5369
      %v5371 = vpop.f32.mrf.mxu0
      %v5372 = vpop.f32.mrf.mxu0
      %v5373 = vadd.f32 0.0, %v5372
      %v5374 = vpop.f32.mrf.mxu0
      %5375 = vmatprep.mubr.bf16.mxu0 0
      %5376 = vmatmul.mubr.bf16.gmra.mxu0 %v5248
      %v5377 = vpop.f32.mrf.mxu0
      %v5378 = vadd.f32 0.0, %v5377
      %v5379 = vpop.f32.mrf.mxu0
      %v5380 = vpop.f32.mrf.mxu0
      %v5381 = vadd.f32 0.0, %v5380
      %v5382 = vpop.f32.mrf.mxu0
      %5383 = vmatprep.mubr.bf16.mxu0 0
      %5384 = vmatmul.mubr.bf16.gmra.mxu0 %v5249
      %v5385 = vpop.f32.mrf.mxu0
      %v5386 = vadd.f32 0.0, %v5385
      %v5387 = vpop.f32.mrf.mxu0
      %v5388 = vpop.f32.mrf.mxu0
      %v5389 = vadd.f32 0.0, %v5388
      %v5390 = vpop.f32.mrf.mxu0
      %5391 = vmatprep.mubr.bf16.mxu0 0
      %5392 = vmatmul.mubr.bf16.gmra.mxu0 %v5250
      %v5393 = vpop.f32.mrf.mxu0
      %v5394 = vadd.f32 0.0, %v5393
      %v5395 = vpop.f32.mrf.mxu0
      %v5396 = vpop.f32.mrf.mxu0
      %v5397 = vadd.f32 0.0, %v5396
      %v5398 = vpop.f32.mrf.mxu0
      %5399 = vmatprep.mubr.bf16.mxu0 0
      %5400 = vmatmul.mubr.bf16.gmra.mxu0 %v5251
      %v5401 = vpop.f32.mrf.mxu0
      %v5402 = vadd.f32 0.0, %v5401
      %v5403 = vpop.f32.mrf.mxu0
      %v5404 = vpop.f32.mrf.mxu0
      %v5405 = vadd.f32 0.0, %v5404
      %v5406 = vpop.f32.mrf.mxu0
      %5407 = vmatprep.mubr.bf16.mxu0 0
      %5408 = vmatmul.mubr.bf16.gmra.mxu0 %v5252
      %v5409 = vpop.f32.mrf.mxu0
      %v5410 = vadd.f32 0.0, %v5409
      %v5411 = vpop.f32.mrf.mxu0
      %v5412 = vpop.f32.mrf.mxu0
      %v5413 = vadd.f32 0.0, %v5412
      %v5414 = vpop.f32.mrf.mxu0
      %5415 = vmatprep.mubr.bf16.mxu0 0
      %5416 = vmatmul.mubr.bf16.gmra.mxu0 %v5253
      %v5417 = vpop.f32.mrf.mxu0
      %v5418 = vadd.f32 0.0, %v5417
      %v5419 = vpop.f32.mrf.mxu0
      %v5420 = vpop.f32.mrf.mxu0
      %v5421 = vadd.f32 0.0, %v5420
      %v5422 = vpop.f32.mrf.mxu0
      %5423 = vmatprep.mubr.bf16.mxu0 0
      %5424 = vmatmul.mubr.bf16.gmra.mxu0 %v5254
      %v5425 = vpop.f32.mrf.mxu0
      %v5426 = vadd.f32 0.0, %v5425
      %v5427 = vpop.f32.mrf.mxu0
      %v5428 = vpop.f32.mrf.mxu0
      %v5429 = vadd.f32 0.0, %v5428
      %v5430 = vpop.f32.mrf.mxu0
      %5431 = vmatprep.mubr.bf16.mxu0 0
      %5432 = vmatmul.mubr.bf16.gmra.mxu0 %v5255
      %v5433 = vpop.f32.mrf.mxu0
      %v5434 = vadd.f32 0.0, %v5433
      %v5435 = vpop.f32.mrf.mxu0
      %v5436 = vpop.f32.mrf.mxu0
      %v5437 = vadd.f32 0.0, %v5436
      %v5438 = vpop.f32.mrf.mxu0
      %5439 = vmatprep.mubr.bf16.mxu0 0
      %5440 = vmatmul.mubr.bf16.gmra.mxu0 %v5256
      %v5441 = vpop.f32.mrf.mxu0
      %v5442 = vadd.f32 0.0, %v5441
      %v5443 = vpop.f32.mrf.mxu0
      %v5444 = vpop.f32.mrf.mxu0
      %v5445 = vadd.f32 0.0, %v5444
      %v5446 = vpop.f32.mrf.mxu0
      %5447 = vmatprep.mubr.bf16.mxu0 0
      %5448 = vmatmul.mubr.bf16.gmra.mxu0 %v5257
      %v5449 = vpop.f32.mrf.mxu0
      %v5450 = vadd.f32 0.0, %v5449
      %v5451 = vpop.f32.mrf.mxu0
      %v5452 = vpop.f32.mrf.mxu0
      %v5453 = vadd.f32 0.0, %v5452
      %v5454 = vpop.f32.mrf.mxu0
      %5455 = vmatprep.mubr.bf16.mxu0 0
      %5456 = vmatmul.mubr.bf16.gmra.mxu0 %v5258
      %v5457 = vpop.f32.mrf.mxu0
      %v5458 = vadd.f32 0.0, %v5457
      %v5459 = vpop.f32.mrf.mxu0
      %v5460 = vpop.f32.mrf.mxu0
      %v5461 = vadd.f32 0.0, %v5460
      %v5462 = vpop.f32.mrf.mxu0
      %5463 = vmatprep.mubr.bf16.mxu0 0
      %5464 = vmatmul.mubr.bf16.gmra.mxu0 %v5259
      %v5465 = vpop.f32.mrf.mxu0
      %v5466 = vadd.f32 0.0, %v5465
      %v5467 = vpop.f32.mrf.mxu0
      %v5468 = vpop.f32.mrf.mxu0
      %v5469 = vadd.f32 0.0, %v5468
      %v5470 = vpop.f32.mrf.mxu0
      %5471 = vmatprep.mubr.bf16.mxu0 0
      %5472 = vmatmul.mubr.bf16.gmra.mxu0 %v5260
      %v5473 = vpop.f32.mrf.mxu0
      %v5474 = vadd.f32 0.0, %v5473
      %v5475 = vpop.f32.mrf.mxu0
      %v5476 = vpop.f32.mrf.mxu0
      %v5477 = vadd.f32 0.0, %v5476
      %v5478 = vpop.f32.mrf.mxu0
      %5479 = vmatprep.mubr.bf16.mxu0 0
      %5480 = vmatmul.mubr.bf16.gmra.mxu0 %v5261
      %v5481 = vpop.f32.mrf.mxu0
      %v5482 = vadd.f32 0.0, %v5481
      %v5483 = vpop.f32.mrf.mxu0
      %v5484 = vpop.f32.mrf.mxu0
      %v5485 = vadd.f32 0.0, %v5484
      %v5486 = vpop.f32.mrf.mxu0
      %5487 = vdwg.mxu0
      %v5488 = vld [vmem:[#allocation2] sm:$0xff]
      %v5489 = vld [vmem:[#allocation2 + $0x8] sm:$0xff]
      %v5490 = vld [vmem:[#allocation2 + $0x10] sm:$0xff]
      %v5491 = vld [vmem:[#allocation2 + $0x18] sm:$0xff]
      %v5492 = vld [vmem:[#allocation2 + $0x20] sm:$0xff]
      %v5493 = vld [vmem:[#allocation2 + $0x28] sm:$0xff]
      %v5494 = vld [vmem:[#allocation2 + $0x30] sm:$0xff]
      %v5495 = vld [vmem:[#allocation2 + $0x38] sm:$0xff]
      %v5496 = vld [vmem:[#allocation2 + $0x40] sm:$0xff]
      %v5497 = vld [vmem:[#allocation2 + $0x48] sm:$0xff]
      %v5498 = vld [vmem:[#allocation2 + $0x50] sm:$0xff]
      %v5499 = vld [vmem:[#allocation2 + $0x58] sm:$0xff]
      %v5500 = vld [vmem:[#allocation2 + $0x60] sm:$0xff]
      %v5501 = vld [vmem:[#allocation2 + $0x68] sm:$0xff]
      %v5502 = vld [vmem:[#allocation2 + $0x70] sm:$0xff]
      %v5503 = vld [vmem:[#allocation2 + $0x78] sm:$0xff]
      %v5504 = vld [vmem:[#allocation2 + $0x80] sm:$0xff]
      %v5505 = vld [vmem:[#allocation2 + $0x88] sm:$0xff]
      %v5506 = vld [vmem:[#allocation2 + $0x90] sm:$0xff]
      %v5507 = vld [vmem:[#allocation2 + $0x98] sm:$0xff]
      %v5508 = vld [vmem:[#allocation2 + $0xa0] sm:$0xff]
      %v5509 = vld [vmem:[#allocation2 + $0xa8] sm:$0xff]
      %v5510 = vld [vmem:[#allocation2 + $0xb0] sm:$0xff]
      %v5511 = vld [vmem:[#allocation2 + $0xb8] sm:$0xff]
      %v5512 = vld [vmem:[#allocation2 + $0xc0] sm:$0xff]
      %v5513 = vld [vmem:[#allocation2 + $0xc8] sm:$0xff]
      %v5514 = vld [vmem:[#allocation2 + $0xd0] sm:$0xff]
      %v5515 = vld [vmem:[#allocation2 + $0xd8] sm:$0xff]
      %v5516 = vld [vmem:[#allocation2 + $0xe0] sm:$0xff]
      %v5517 = vld [vmem:[#allocation2 + $0xe8] sm:$0xff]
      %v5518 = vld [vmem:[#allocation2 + $0xf0] sm:$0xff]
      %v5519 = vld [vmem:[#allocation2 + $0xf8] sm:$0xff]
      %v5520 = vadd.f32 %v5488, %v5362
      %v5521 = vadd.f32 %v5489, %v5365
      %v5522 = vadd.f32 %v5490, %v5370
      %v5523 = vadd.f32 %v5491, %v5373
      %v5524 = vadd.f32 %v5492, %v5378
      %v5525 = vadd.f32 %v5493, %v5381
      %v5526 = vadd.f32 %v5494, %v5386
      %v5527 = vadd.f32 %v5495, %v5389
      %v5528 = vadd.f32 %v5496, %v5394
      %v5529 = vadd.f32 %v5497, %v5397
      %v5530 = vadd.f32 %v5498, %v5402
      %v5531 = vadd.f32 %v5499, %v5405
      %v5532 = vadd.f32 %v5500, %v5410
      %v5533 = vadd.f32 %v5501, %v5413
      %v5534 = vadd.f32 %v5502, %v5418
      %v5535 = vadd.f32 %v5503, %v5421
      %v5536 = vadd.f32 %v5504, %v5426
      %v5537 = vadd.f32 %v5505, %v5429
      %v5538 = vadd.f32 %v5506, %v5434
      %v5539 = vadd.f32 %v5507, %v5437
      %v5540 = vadd.f32 %v5508, %v5442
      %v5541 = vadd.f32 %v5509, %v5445
      %v5542 = vadd.f32 %v5510, %v5450
      %v5543 = vadd.f32 %v5511, %v5453
      %v5544 = vadd.f32 %v5512, %v5458
      %v5545 = vadd.f32 %v5513, %v5461
      %v5546 = vadd.f32 %v5514, %v5466
      %v5547 = vadd.f32 %v5515, %v5469
      %v5548 = vadd.f32 %v5516, %v5474
      %v5549 = vadd.f32 %v5517, %v5477
      %v5550 = vadd.f32 %v5518, %v5482
      %v5551 = vadd.f32 %v5519, %v5485
      %5552 = vst [vmem:[#allocation2] sm:$0xff] %v5520
      %5553 = vst [vmem:[#allocation2 + $0x8] sm:$0xff] %v5521
      %5554 = vst [vmem:[#allocation2 + $0x10] sm:$0xff] %v5522
      %5555 = vst [vmem:[#allocation2 + $0x18] sm:$0xff] %v5523
      %5556 = vst [vmem:[#allocation2 + $0x20] sm:$0xff] %v5524
      %5557 = vst [vmem:[#allocation2 + $0x28] sm:$0xff] %v5525
      %5558 = vst [vmem:[#allocation2 + $0x30] sm:$0xff] %v5526
      %5559 = vst [vmem:[#allocation2 + $0x38] sm:$0xff] %v5527
      %5560 = vst [vmem:[#allocation2 + $0x40] sm:$0xff] %v5528
      %5561 = vst [vmem:[#allocation2 + $0x48] sm:$0xff] %v5529
      %5562 = vst [vmem:[#allocation2 + $0x50] sm:$0xff] %v5530
      %5563 = vst [vmem:[#allocation2 + $0x58] sm:$0xff] %v5531
      %5564 = vst [vmem:[#allocation2 + $0x60] sm:$0xff] %v5532
      %5565 = vst [vmem:[#allocation2 + $0x68] sm:$0xff] %v5533
      %5566 = vst [vmem:[#allocation2 + $0x70] sm:$0xff] %v5534
      %5567 = vst [vmem:[#allocation2 + $0x78] sm:$0xff] %v5535
      %5568 = vst [vmem:[#allocation2 + $0x80] sm:$0xff] %v5536
      %5569 = vst [vmem:[#allocation2 + $0x88] sm:$0xff] %v5537
      %5570 = vst [vmem:[#allocation2 + $0x90] sm:$0xff] %v5538
      %5571 = vst [vmem:[#allocation2 + $0x98] sm:$0xff] %v5539
      %5572 = vst [vmem:[#allocation2 + $0xa0] sm:$0xff] %v5540
      %5573 = vst [vmem:[#allocation2 + $0xa8] sm:$0xff] %v5541
      %5574 = vst [vmem:[#allocation2 + $0xb0] sm:$0xff] %v5542
      %5575 = vst [vmem:[#allocation2 + $0xb8] sm:$0xff] %v5543
      %5576 = vst [vmem:[#allocation2 + $0xc0] sm:$0xff] %v5544
      %5577 = vst [vmem:[#allocation2 + $0xc8] sm:$0xff] %v5545
      %5578 = vst [vmem:[#allocation2 + $0xd0] sm:$0xff] %v5546
      %5579 = vst [vmem:[#allocation2 + $0xd8] sm:$0xff] %v5547
      %5580 = vst [vmem:[#allocation2 + $0xe0] sm:$0xff] %v5548
      %5581 = vst [vmem:[#allocation2 + $0xe8] sm:$0xff] %v5549
      %5582 = vst [vmem:[#allocation2 + $0xf0] sm:$0xff] %v5550
      %5583 = vst [vmem:[#allocation2 + $0xf8] sm:$0xff] %v5551
      %v5584 = vrot.slane %v4868, 1
      %v5585 = vrot.slane %v4869, 1
      %v5586 = vrot.slane %v4870, 1
      %v5587 = vrot.slane %v4871, 1
      %v5588 = vrot.slane %v4872, 1
      %v5589 = vrot.slane %v4873, 1
      %v5590 = vrot.slane %v4874, 1
      %v5591 = vrot.slane %v4875, 1
      %v5592 = vrot.slane %v4876, 1
      %v5593 = vrot.slane %v4877, 1
      %v5594 = vrot.slane %v4878, 1
      %v5595 = vrot.slane %v4879, 1
      %v5596 = vrot.slane %v4880, 1
      %v5597 = vrot.slane %v4881, 1
      %v5598 = vrot.slane %v4882, 1
      %v5599 = vrot.slane %v4883, 1
      %v5600 = vrot.slane %v4884, 1
      %v5601 = vrot.slane %v4885, 1
      %v5602 = vrot.slane %v4886, 1
      %v5603 = vrot.slane %v4887, 1
      %v5604 = vrot.slane %v4888, 1
      %v5605 = vrot.slane %v4889, 1
      %v5606 = vrot.slane %v4890, 1
      %v5607 = vrot.slane %v4891, 1
      %v5608 = vrot.slane %v4892, 1
      %v5609 = vrot.slane %v4893, 1
      %v5610 = vrot.slane %v4894, 1
      %v5611 = vrot.slane %v4895, 1
      %v5612 = vrot.slane %v4896, 1
      %v5613 = vrot.slane %v4897, 1
      %v5614 = vrot.slane %v4898, 1
      %v5615 = vrot.slane %v4899, 1
      %v5616 = vrot.slane %v4900, 1
      %v5617 = vsel %vm1190, %v5615, %v5616
      %v5618 = vsel %vm1190, %v5614, %v5615
      %v5619 = vsel %vm1190, %v5613, %v5614
      %v5620 = vsel %vm1190, %v5612, %v5613
      %v5621 = vsel %vm1190, %v5611, %v5612
      %v5622 = vsel %vm1190, %v5610, %v5611
      %v5623 = vsel %vm1190, %v5609, %v5610
      %v5624 = vsel %vm1190, %v5608, %v5609
      %v5625 = vsel %vm1190, %v5607, %v5608
      %v5626 = vsel %vm1190, %v5606, %v5607
      %v5627 = vsel %vm1190, %v5605, %v5606
      %v5628 = vsel %vm1190, %v5604, %v5605
      %v5629 = vsel %vm1190, %v5603, %v5604
      %v5630 = vsel %vm1190, %v5602, %v5603
      %v5631 = vsel %vm1190, %v5601, %v5602
      %v5632 = vsel %vm1190, %v5600, %v5601
      %v5633 = vsel %vm1190, %v5599, %v5600
      %v5634 = vsel %vm1190, %v5598, %v5599
      %v5635 = vsel %vm1190, %v5597, %v5598
      %v5636 = vsel %vm1190, %v5596, %v5597
      %v5637 = vsel %vm1190, %v5595, %v5596
      %v5638 = vsel %vm1190, %v5594, %v5595
      %v5639 = vsel %vm1190, %v5593, %v5594
      %v5640 = vsel %vm1190, %v5592, %v5593
      %v5641 = vsel %vm1190, %v5591, %v5592
      %v5642 = vsel %vm1190, %v5590, %v5591
      %v5643 = vsel %vm1190, %v5589, %v5590
      %v5644 = vsel %vm1190, %v5588, %v5589
      %v5645 = vsel %vm1190, %v5587, %v5588
      %v5646 = vsel %vm1190, %v5586, %v5587
      %v5647 = vsel %vm1190, %v5585, %v5586
      %v5648 = vsel %vm1190, %v5584, %v5585
      %v5649 = vpack.c.bf16 %v5647, %v5648
      %v5650 = vpack.c.bf16 %v5645, %v5646
      %v5651 = vpack.c.bf16 %v5643, %v5644
      %v5652 = vpack.c.bf16 %v5641, %v5642
      %v5653 = vpack.c.bf16 %v5639, %v5640
      %v5654 = vpack.c.bf16 %v5637, %v5638
      %v5655 = vpack.c.bf16 %v5635, %v5636
      %v5656 = vpack.c.bf16 %v5633, %v5634
      %v5657 = vpack.c.bf16 %v5631, %v5632
      %v5658 = vpack.c.bf16 %v5629, %v5630
      %v5659 = vpack.c.bf16 %v5627, %v5628
      %v5660 = vpack.c.bf16 %v5625, %v5626
      %v5661 = vpack.c.bf16 %v5623, %v5624
      %v5662 = vpack.c.bf16 %v5621, %v5622
      %v5663 = vpack.c.bf16 %v5619, %v5620
      %v5664 = vpack.c.bf16 %v5617, %v5618
      %s5665 = scalar_lea.vmem %s3, 128
      %v5666 = vld [vmem:[%s5665] sm:$0xf]
      %v5667 = vld [vmem:[%s5665 + $0x4] sm:$0xf]
      %v5668 = vld [vmem:[%s5665 + $0x8] sm:$0xf]
      %v5669 = vld [vmem:[%s5665 + $0xc] sm:$0xf]
      %v5670 = vld [vmem:[%s5665 + $0x10] sm:$0xf]
      %v5671 = vld [vmem:[%s5665 + $0x14] sm:$0xf]
      %v5672 = vld [vmem:[%s5665 + $0x18] sm:$0xf]
      %v5673 = vld [vmem:[%s5665 + $0x1c] sm:$0xf]
      %v5674 = vld [vmem:[%s5665 + $0x20] sm:$0xf]
      %v5675 = vld [vmem:[%s5665 + $0x24] sm:$0xf]
      %v5676 = vld [vmem:[%s5665 + $0x28] sm:$0xf]
      %v5677 = vld [vmem:[%s5665 + $0x2c] sm:$0xf]
      %v5678 = vld [vmem:[%s5665 + $0x30] sm:$0xf]
      %v5679 = vld [vmem:[%s5665 + $0x34] sm:$0xf]
      %v5680 = vld [vmem:[%s5665 + $0x38] sm:$0xf]
      %v5681 = vld [vmem:[%s5665 + $0x3c] sm:$0xf]
      %v5698 = vunpack.c.l.b16 %v5666
      %v5699 = vunpack.c.l.b16 %v5667
      %v5700 = vunpack.c.l.b16 %v5668
      %v5701 = vunpack.c.l.b16 %v5669
      %v5702 = vunpack.c.l.b16 %v5670
      %v5703 = vunpack.c.l.b16 %v5671
      %v5704 = vunpack.c.l.b16 %v5672
      %v5705 = vunpack.c.l.b16 %v5673
      %v5706 = vunpack.c.l.b16 %v5674
      %v5707 = vunpack.c.l.b16 %v5675
      %v5708 = vunpack.c.l.b16 %v5676
      %v5709 = vunpack.c.l.b16 %v5677
      %v5710 = vunpack.c.l.b16 %v5678
      %v5711 = vunpack.c.l.b16 %v5679
      %v5712 = vunpack.c.l.b16 %v5680
      %v5713 = vunpack.c.l.b16 %v5681
      %v5714 = vpack.c.b16 %v5699, %v5698
      %v5715 = vpack.c.b16 %v5701, %v5700
      %v5716 = vpack.c.b16 %v5703, %v5702
      %v5717 = vpack.c.b16 %v5705, %v5704
      %v5718 = vpack.c.b16 %v5707, %v5706
      %v5719 = vpack.c.b16 %v5709, %v5708
      %v5720 = vpack.c.b16 %v5711, %v5710
      %v5721 = vpack.c.b16 %v5713, %v5712
      %5730 = vmatprep.subr.bf16.mxu0 0
      %5731 = vmatpush1.bf16.msra.mxu0 %v5721
      %5732 = vmatprep.subr.bf16.mxu0 0
      %5733 = vmatpush1.bf16.msra.mxu0 %v5720
      %5734 = vmatprep.subr.bf16.mxu0 0
      %5735 = vmatpush1.bf16.msra.mxu0 %v5719
      %5736 = vmatprep.subr.bf16.mxu0 0
      %5737 = vmatpush1.bf16.msra.mxu0 %v5718
      %5738 = vmatprep.subr.bf16.mxu0 0
      %5739 = vmatpush1.bf16.msra.mxu0 %v5717
      %5740 = vmatprep.subr.bf16.mxu0 0
      %5741 = vmatpush1.bf16.msra.mxu0 %v5716
      %5742 = vmatprep.subr.bf16.mxu0 0
      %5743 = vmatpush1.bf16.msra.mxu0 %v5715
      %5744 = vmatprep.subr.bf16.mxu0 0
      %5745 = vmatpush1.bf16.msra.mxu0 %v5714
      %5746 = vmatprep.subr.bf16.mxu0 0
      %5747 = vmatpush2.bf16.msra.mxu0 0
      %5748 = vmatprep.subr.bf16.mxu0 0
      %5749 = vmatpush2.bf16.msra.mxu0 0
      %5750 = vmatprep.subr.bf16.mxu0 0
      %5751 = vmatpush2.bf16.msra.mxu0 0
      %5752 = vmatprep.subr.bf16.mxu0 0
      %5753 = vmatpush2.bf16.msra.mxu0 0
      %5754 = vmatprep.subr.bf16.mxu0 0
      %5755 = vmatpush2.bf16.msra.mxu0 0
      %5756 = vmatprep.subr.bf16.mxu0 0
      %5757 = vmatpush2.bf16.msra.mxu0 0
      %5758 = vmatprep.subr.bf16.mxu0 0
      %5759 = vmatpush2.bf16.msra.mxu0 0
      %5760 = vmatprep.subr.bf16.mxu0 0
      %5761 = vmatpush2.bf16.msra.mxu0 0
      %5762 = vmatprep.mubr.bf16.mxu0 0
      %5763 = vmatmul.mubr.bf16.gmra.mxu0 %v5649
      %v5764 = vpop.f32.mrf.mxu0
      %v5765 = vadd.f32 0.0, %v5764
      %v5766 = vpop.f32.mrf.mxu0
      %v5767 = vpop.f32.mrf.mxu0
      %v5768 = vadd.f32 0.0, %v5767
      %v5769 = vpop.f32.mrf.mxu0
      %5770 = vmatprep.mubr.bf16.mxu0 0
      %5771 = vmatmul.mubr.bf16.gmra.mxu0 %v5650
      %v5772 = vpop.f32.mrf.mxu0
      %v5773 = vadd.f32 0.0, %v5772
      %v5774 = vpop.f32.mrf.mxu0
      %v5775 = vpop.f32.mrf.mxu0
      %v5776 = vadd.f32 0.0, %v5775
      %v5777 = vpop.f32.mrf.mxu0
      %5778 = vmatprep.mubr.bf16.mxu0 0
      %5779 = vmatmul.mubr.bf16.gmra.mxu0 %v5651
      %v5780 = vpop.f32.mrf.mxu0
      %v5781 = vadd.f32 0.0, %v5780
      %v5782 = vpop.f32.mrf.mxu0
      %v5783 = vpop.f32.mrf.mxu0
      %v5784 = vadd.f32 0.0, %v5783
      %v5785 = vpop.f32.mrf.mxu0
      %5786 = vmatprep.mubr.bf16.mxu0 0
      %5787 = vmatmul.mubr.bf16.gmra.mxu0 %v5652
      %v5788 = vpop.f32.mrf.mxu0
      %v5789 = vadd.f32 0.0, %v5788
      %v5790 = vpop.f32.mrf.mxu0
      %v5791 = vpop.f32.mrf.mxu0
      %v5792 = vadd.f32 0.0, %v5791
      %v5793 = vpop.f32.mrf.mxu0
      %5794 = vmatprep.mubr.bf16.mxu0 0
      %5795 = vmatmul.mubr.bf16.gmra.mxu0 %v5653
      %v5796 = vpop.f32.mrf.mxu0
      %v5797 = vadd.f32 0.0, %v5796
      %v5798 = vpop.f32.mrf.mxu0
      %v5799 = vpop.f32.mrf.mxu0
      %v5800 = vadd.f32 0.0, %v5799
      %v5801 = vpop.f32.mrf.mxu0
      %5802 = vmatprep.mubr.bf16.mxu0 0
      %5803 = vmatmul.mubr.bf16.gmra.mxu0 %v5654
      %v5804 = vpop.f32.mrf.mxu0
      %v5805 = vadd.f32 0.0, %v5804
      %v5806 = vpop.f32.mrf.mxu0
      %v5807 = vpop.f32.mrf.mxu0
      %v5808 = vadd.f32 0.0, %v5807
      %v5809 = vpop.f32.mrf.mxu0
      %5810 = vmatprep.mubr.bf16.mxu0 0
      %5811 = vmatmul.mubr.bf16.gmra.mxu0 %v5655
      %v5812 = vpop.f32.mrf.mxu0
      %v5813 = vadd.f32 0.0, %v5812
      %v5814 = vpop.f32.mrf.mxu0
      %v5815 = vpop.f32.mrf.mxu0
      %v5816 = vadd.f32 0.0, %v5815
      %v5817 = vpop.f32.mrf.mxu0
      %5818 = vmatprep.mubr.bf16.mxu0 0
      %5819 = vmatmul.mubr.bf16.gmra.mxu0 %v5656
      %v5820 = vpop.f32.mrf.mxu0
      %v5821 = vadd.f32 0.0, %v5820
      %v5822 = vpop.f32.mrf.mxu0
      %v5823 = vpop.f32.mrf.mxu0
      %v5824 = vadd.f32 0.0, %v5823
      %v5825 = vpop.f32.mrf.mxu0
      %5826 = vmatprep.mubr.bf16.mxu0 0
      %5827 = vmatmul.mubr.bf16.gmra.mxu0 %v5657
      %v5828 = vpop.f32.mrf.mxu0
      %v5829 = vadd.f32 0.0, %v5828
      %v5830 = vpop.f32.mrf.mxu0
      %v5831 = vpop.f32.mrf.mxu0
      %v5832 = vadd.f32 0.0, %v5831
      %v5833 = vpop.f32.mrf.mxu0
      %5834 = vmatprep.mubr.bf16.mxu0 0
      %5835 = vmatmul.mubr.bf16.gmra.mxu0 %v5658
      %v5836 = vpop.f32.mrf.mxu0
      %v5837 = vadd.f32 0.0, %v5836
      %v5838 = vpop.f32.mrf.mxu0
      %v5839 = vpop.f32.mrf.mxu0
      %v5840 = vadd.f32 0.0, %v5839
      %v5841 = vpop.f32.mrf.mxu0
      %5842 = vmatprep.mubr.bf16.mxu0 0
      %5843 = vmatmul.mubr.bf16.gmra.mxu0 %v5659
      %v5844 = vpop.f32.mrf.mxu0
      %v5845 = vadd.f32 0.0, %v5844
      %v5846 = vpop.f32.mrf.mxu0
      %v5847 = vpop.f32.mrf.mxu0
      %v5848 = vadd.f32 0.0, %v5847
      %v5849 = vpop.f32.mrf.mxu0
      %5850 = vmatprep.mubr.bf16.mxu0 0
      %5851 = vmatmul.mubr.bf16.gmra.mxu0 %v5660
      %v5852 = vpop.f32.mrf.mxu0
      %v5853 = vadd.f32 0.0, %v5852
      %v5854 = vpop.f32.mrf.mxu0
      %v5855 = vpop.f32.mrf.mxu0
      %v5856 = vadd.f32 0.0, %v5855
      %v5857 = vpop.f32.mrf.mxu0
      %5858 = vmatprep.mubr.bf16.mxu0 0
      %5859 = vmatmul.mubr.bf16.gmra.mxu0 %v5661
      %v5860 = vpop.f32.mrf.mxu0
      %v5861 = vadd.f32 0.0, %v5860
      %v5862 = vpop.f32.mrf.mxu0
      %v5863 = vpop.f32.mrf.mxu0
      %v5864 = vadd.f32 0.0, %v5863
      %v5865 = vpop.f32.mrf.mxu0
      %5866 = vmatprep.mubr.bf16.mxu0 0
      %5867 = vmatmul.mubr.bf16.gmra.mxu0 %v5662
      %v5868 = vpop.f32.mrf.mxu0
      %v5869 = vadd.f32 0.0, %v5868
      %v5870 = vpop.f32.mrf.mxu0
      %v5871 = vpop.f32.mrf.mxu0
      %v5872 = vadd.f32 0.0, %v5871
      %v5873 = vpop.f32.mrf.mxu0
      %5874 = vmatprep.mubr.bf16.mxu0 0
      %5875 = vmatmul.mubr.bf16.gmra.mxu0 %v5663
      %v5876 = vpop.f32.mrf.mxu0
      %v5877 = vadd.f32 0.0, %v5876
      %v5878 = vpop.f32.mrf.mxu0
      %v5879 = vpop.f32.mrf.mxu0
      %v5880 = vadd.f32 0.0, %v5879
      %v5881 = vpop.f32.mrf.mxu0
      %5882 = vmatprep.mubr.bf16.mxu0 0
      %5883 = vmatmul.mubr.bf16.gmra.mxu0 %v5664
      %v5884 = vpop.f32.mrf.mxu0
      %v5885 = vadd.f32 0.0, %v5884
      %v5886 = vpop.f32.mrf.mxu0
      %v5887 = vpop.f32.mrf.mxu0
      %v5888 = vadd.f32 0.0, %v5887
      %v5889 = vpop.f32.mrf.mxu0
      %5890 = vdwg.mxu0
      %v5891 = vld [vmem:[#allocation2] sm:$0xff]
      %v5892 = vld [vmem:[#allocation2 + $0x8] sm:$0xff]
      %v5893 = vld [vmem:[#allocation2 + $0x10] sm:$0xff]
      %v5894 = vld [vmem:[#allocation2 + $0x18] sm:$0xff]
      %v5895 = vld [vmem:[#allocation2 + $0x20] sm:$0xff]
      %v5896 = vld [vmem:[#allocation2 + $0x28] sm:$0xff]
      %v5897 = vld [vmem:[#allocation2 + $0x30] sm:$0xff]
      %v5898 = vld [vmem:[#allocation2 + $0x38] sm:$0xff]
      %v5899 = vld [vmem:[#allocation2 + $0x40] sm:$0xff]
      %v5900 = vld [vmem:[#allocation2 + $0x48] sm:$0xff]
      %v5901 = vld [vmem:[#allocation2 + $0x50] sm:$0xff]
      %v5902 = vld [vmem:[#allocation2 + $0x58] sm:$0xff]
      %v5903 = vld [vmem:[#allocation2 + $0x60] sm:$0xff]
      %v5904 = vld [vmem:[#allocation2 + $0x68] sm:$0xff]
      %v5905 = vld [vmem:[#allocation2 + $0x70] sm:$0xff]
      %v5906 = vld [vmem:[#allocation2 + $0x78] sm:$0xff]
      %v5907 = vld [vmem:[#allocation2 + $0x80] sm:$0xff]
      %v5908 = vld [vmem:[#allocation2 + $0x88] sm:$0xff]
      %v5909 = vld [vmem:[#allocation2 + $0x90] sm:$0xff]
      %v5910 = vld [vmem:[#allocation2 + $0x98] sm:$0xff]
      %v5911 = vld [vmem:[#allocation2 + $0xa0] sm:$0xff]
      %v5912 = vld [vmem:[#allocation2 + $0xa8] sm:$0xff]
      %v5913 = vld [vmem:[#allocation2 + $0xb0] sm:$0xff]
      %v5914 = vld [vmem:[#allocation2 + $0xb8] sm:$0xff]
      %v5915 = vld [vmem:[#allocation2 + $0xc0] sm:$0xff]
      %v5916 = vld [vmem:[#allocation2 + $0xc8] sm:$0xff]
      %v5917 = vld [vmem:[#allocation2 + $0xd0] sm:$0xff]
      %v5918 = vld [vmem:[#allocation2 + $0xd8] sm:$0xff]
      %v5919 = vld [vmem:[#allocation2 + $0xe0] sm:$0xff]
      %v5920 = vld [vmem:[#allocation2 + $0xe8] sm:$0xff]
      %v5921 = vld [vmem:[#allocation2 + $0xf0] sm:$0xff]
      %v5922 = vld [vmem:[#allocation2 + $0xf8] sm:$0xff]
      %v5923 = vadd.f32 %v5891, %v5765
      %v5924 = vadd.f32 %v5892, %v5768
      %v5925 = vadd.f32 %v5893, %v5773
      %v5926 = vadd.f32 %v5894, %v5776
      %v5927 = vadd.f32 %v5895, %v5781
      %v5928 = vadd.f32 %v5896, %v5784
      %v5929 = vadd.f32 %v5897, %v5789
      %v5930 = vadd.f32 %v5898, %v5792
      %v5931 = vadd.f32 %v5899, %v5797
      %v5932 = vadd.f32 %v5900, %v5800
      %v5933 = vadd.f32 %v5901, %v5805
      %v5934 = vadd.f32 %v5902, %v5808
      %v5935 = vadd.f32 %v5903, %v5813
      %v5936 = vadd.f32 %v5904, %v5816
      %v5937 = vadd.f32 %v5905, %v5821
      %v5938 = vadd.f32 %v5906, %v5824
      %v5939 = vadd.f32 %v5907, %v5829
      %v5940 = vadd.f32 %v5908, %v5832
      %v5941 = vadd.f32 %v5909, %v5837
      %v5942 = vadd.f32 %v5910, %v5840
      %v5943 = vadd.f32 %v5911, %v5845
      %v5944 = vadd.f32 %v5912, %v5848
      %v5945 = vadd.f32 %v5913, %v5853
      %v5946 = vadd.f32 %v5914, %v5856
      %v5947 = vadd.f32 %v5915, %v5861
      %v5948 = vadd.f32 %v5916, %v5864
      %v5949 = vadd.f32 %v5917, %v5869
      %v5950 = vadd.f32 %v5918, %v5872
      %v5951 = vadd.f32 %v5919, %v5877
      %v5952 = vadd.f32 %v5920, %v5880
      %v5953 = vadd.f32 %v5921, %v5885
      %v5954 = vadd.f32 %v5922, %v5888
      %5955 = vst [vmem:[#allocation2] sm:$0xff] %v5923
      %5956 = vst [vmem:[#allocation2 + $0x8] sm:$0xff] %v5924
      %5957 = vst [vmem:[#allocation2 + $0x10] sm:$0xff] %v5925
      %5958 = vst [vmem:[#allocation2 + $0x18] sm:$0xff] %v5926
      %5959 = vst [vmem:[#allocation2 + $0x20] sm:$0xff] %v5927
      %5960 = vst [vmem:[#allocation2 + $0x28] sm:$0xff] %v5928
      %5961 = vst [vmem:[#allocation2 + $0x30] sm:$0xff] %v5929
      %5962 = vst [vmem:[#allocation2 + $0x38] sm:$0xff] %v5930
      %5963 = vst [vmem:[#allocation2 + $0x40] sm:$0xff] %v5931
      %5964 = vst [vmem:[#allocation2 + $0x48] sm:$0xff] %v5932
      %5965 = vst [vmem:[#allocation2 + $0x50] sm:$0xff] %v5933
      %5966 = vst [vmem:[#allocation2 + $0x58] sm:$0xff] %v5934
      %5967 = vst [vmem:[#allocation2 + $0x60] sm:$0xff] %v5935
      %5968 = vst [vmem:[#allocation2 + $0x68] sm:$0xff] %v5936
      %5969 = vst [vmem:[#allocation2 + $0x70] sm:$0xff] %v5937
      %5970 = vst [vmem:[#allocation2 + $0x78] sm:$0xff] %v5938
      %5971 = vst [vmem:[#allocation2 + $0x80] sm:$0xff] %v5939
      %5972 = vst [vmem:[#allocation2 + $0x88] sm:$0xff] %v5940
      %5973 = vst [vmem:[#allocation2 + $0x90] sm:$0xff] %v5941
      %5974 = vst [vmem:[#allocation2 + $0x98] sm:$0xff] %v5942
      %5975 = vst [vmem:[#allocation2 + $0xa0] sm:$0xff] %v5943
      %5976 = vst [vmem:[#allocation2 + $0xa8] sm:$0xff] %v5944
      %5977 = vst [vmem:[#allocation2 + $0xb0] sm:$0xff] %v5945
      %5978 = vst [vmem:[#allocation2 + $0xb8] sm:$0xff] %v5946
      %5979 = vst [vmem:[#allocation2 + $0xc0] sm:$0xff] %v5947
      %5980 = vst [vmem:[#allocation2 + $0xc8] sm:$0xff] %v5948
      %5981 = vst [vmem:[#allocation2 + $0xd0] sm:$0xff] %v5949
      %5982 = vst [vmem:[#allocation2 + $0xd8] sm:$0xff] %v5950
      %5983 = vst [vmem:[#allocation2 + $0xe0] sm:$0xff] %v5951
      %5984 = vst [vmem:[#allocation2 + $0xe8] sm:$0xff] %v5952
      %5985 = vst [vmem:[#allocation2 + $0xf0] sm:$0xff] %v5953
      %5986 = vst [vmem:[#allocation2 + $0xf8] sm:$0xff] %v5954
      %v5987 = vrot.slane %v4900, 7
      %v5988 = vrot.slane %v4901, 7
      %v5989 = vrot.slane %v4902, 7
      %v5990 = vrot.slane %v4903, 7
      %v5991 = vsel %vm393, %v5989, %v5990
      %v5992 = vsel %vm393, %v5988, %v5989
      %v5993 = vsel %vm393, %v5987, %v5988
      %v5994 = vsel %vm393, %v4939, %v5987
      %v5995 = vpack.c.bf16 %v5993, %v5994
      %v5996 = vpack.c.bf16 %v5991, %v5992
      %s5997 = scalar_lea.vmem %s3, 192
      %v5998 = vld [vmem:[%s5997] sm:$0xf]
      %v5999 = vld [vmem:[%s5997 + $0x4] sm:$0xf]
      %v6000 = vld [vmem:[%s5997 + $0x8] sm:$0xf]
      %v6001 = vld [vmem:[%s5997 + $0xc] sm:$0xf]
      %v6002 = vld [vmem:[%s5997 + $0x10] sm:$0xf]
      %v6003 = vld [vmem:[%s5997 + $0x14] sm:$0xf]
      %v6004 = vld [vmem:[%s5997 + $0x18] sm:$0xf]
      %v6005 = vld [vmem:[%s5997 + $0x1c] sm:$0xf]
      %v6006 = vld [vmem:[%s5997 + $0x20] sm:$0xf]
      %v6007 = vld [vmem:[%s5997 + $0x24] sm:$0xf]
      %v6008 = vld [vmem:[%s5997 + $0x28] sm:$0xf]
      %v6009 = vld [vmem:[%s5997 + $0x2c] sm:$0xf]
      %v6010 = vld [vmem:[%s5997 + $0x30] sm:$0xf]
      %v6011 = vld [vmem:[%s5997 + $0x34] sm:$0xf]
      %v6012 = vld [vmem:[%s5997 + $0x38] sm:$0xf]
      %v6013 = vld [vmem:[%s5997 + $0x3c] sm:$0xf]
      %v6030 = vunpack.c.l.b16 %v5998
      %v6031 = vunpack.c.l.b16 %v5999
      %v6032 = vunpack.c.l.b16 %v6000
      %v6033 = vunpack.c.l.b16 %v6001
      %v6034 = vunpack.c.l.b16 %v6002
      %v6035 = vunpack.c.l.b16 %v6003
      %v6036 = vunpack.c.l.b16 %v6004
      %v6037 = vunpack.c.l.b16 %v6005
      %v6038 = vunpack.c.l.b16 %v6006
      %v6039 = vunpack.c.l.b16 %v6007
      %v6040 = vunpack.c.l.b16 %v6008
      %v6041 = vunpack.c.l.b16 %v6009
      %v6042 = vunpack.c.l.b16 %v6010
      %v6043 = vunpack.c.l.b16 %v6011
      %v6044 = vunpack.c.l.b16 %v6012
      %v6045 = vunpack.c.l.b16 %v6013
      %v6046 = vpack.c.b16 %v6031, %v6030
      %v6047 = vpack.c.b16 %v6033, %v6032
      %v6048 = vpack.c.b16 %v6035, %v6034
      %v6049 = vpack.c.b16 %v6037, %v6036
      %v6050 = vpack.c.b16 %v6039, %v6038
      %v6051 = vpack.c.b16 %v6041, %v6040
      %v6052 = vpack.c.b16 %v6043, %v6042
      %v6053 = vpack.c.b16 %v6045, %v6044
      %6062 = vmatprep.subr.bf16.mxu0 0
      %6063 = vmatpush1.bf16.msra.mxu0 %v6053
      %6064 = vmatprep.subr.bf16.mxu0 0
      %6065 = vmatpush1.bf16.msra.mxu0 %v6052
      %6066 = vmatprep.subr.bf16.mxu0 0
      %6067 = vmatpush1.bf16.msra.mxu0 %v6051
      %6068 = vmatprep.subr.bf16.mxu0 0
      %6069 = vmatpush1.bf16.msra.mxu0 %v6050
      %6070 = vmatprep.subr.bf16.mxu0 0
      %6071 = vmatpush1.bf16.msra.mxu0 %v6049
      %6072 = vmatprep.subr.bf16.mxu0 0
      %6073 = vmatpush1.bf16.msra.mxu0 %v6048
      %6074 = vmatprep.subr.bf16.mxu0 0
      %6075 = vmatpush1.bf16.msra.mxu0 %v6047
      %6076 = vmatprep.subr.bf16.mxu0 0
      %6077 = vmatpush1.bf16.msra.mxu0 %v6046
      %6078 = vmatprep.subr.bf16.mxu0 0
      %6079 = vmatpush2.bf16.msra.mxu0 0
      %6080 = vmatprep.subr.bf16.mxu0 0
      %6081 = vmatpush2.bf16.msra.mxu0 0
      %6082 = vmatprep.subr.bf16.mxu0 0
      %6083 = vmatpush2.bf16.msra.mxu0 0
      %6084 = vmatprep.subr.bf16.mxu0 0
      %6085 = vmatpush2.bf16.msra.mxu0 0
      %6086 = vmatprep.subr.bf16.mxu0 0
      %6087 = vmatpush2.bf16.msra.mxu0 0
      %6088 = vmatprep.subr.bf16.mxu0 0
      %6089 = vmatpush2.bf16.msra.mxu0 0
      %6090 = vmatprep.subr.bf16.mxu0 0
      %6091 = vmatpush2.bf16.msra.mxu0 0
      %6092 = vmatprep.subr.bf16.mxu0 0
      %6093 = vmatpush2.bf16.msra.mxu0 0
      %6094 = vmatprep.mubr.bf16.mxu0 0
      %6095 = vmatmul.mubr.bf16.gmra.mxu0 %v4975
      %v6096 = vpop.f32.mrf.mxu0
      %v6097 = vadd.f32 0.0, %v6096
      %v6098 = vpop.f32.mrf.mxu0
      %v6099 = vpop.f32.mrf.mxu0
      %v6100 = vadd.f32 0.0, %v6099
      %v6101 = vpop.f32.mrf.mxu0
      %6102 = vmatprep.mubr.bf16.mxu0 0
      %6103 = vmatmul.mubr.bf16.gmra.mxu0 %v4976
      %v6104 = vpop.f32.mrf.mxu0
      %v6105 = vadd.f32 0.0, %v6104
      %v6106 = vpop.f32.mrf.mxu0
      %v6107 = vpop.f32.mrf.mxu0
      %v6108 = vadd.f32 0.0, %v6107
      %v6109 = vpop.f32.mrf.mxu0
      %6110 = vmatprep.mubr.bf16.mxu0 0
      %6111 = vmatmul.mubr.bf16.gmra.mxu0 %v4977
      %v6112 = vpop.f32.mrf.mxu0
      %v6113 = vadd.f32 0.0, %v6112
      %v6114 = vpop.f32.mrf.mxu0
      %v6115 = vpop.f32.mrf.mxu0
      %v6116 = vadd.f32 0.0, %v6115
      %v6117 = vpop.f32.mrf.mxu0
      %6118 = vmatprep.mubr.bf16.mxu0 0
      %6119 = vmatmul.mubr.bf16.gmra.mxu0 %v4978
      %v6120 = vpop.f32.mrf.mxu0
      %v6121 = vadd.f32 0.0, %v6120
      %v6122 = vpop.f32.mrf.mxu0
      %v6123 = vpop.f32.mrf.mxu0
      %v6124 = vadd.f32 0.0, %v6123
      %v6125 = vpop.f32.mrf.mxu0
      %6126 = vmatprep.mubr.bf16.mxu0 0
      %6127 = vmatmul.mubr.bf16.gmra.mxu0 %v4979
      %v6128 = vpop.f32.mrf.mxu0
      %v6129 = vadd.f32 0.0, %v6128
      %v6130 = vpop.f32.mrf.mxu0
      %v6131 = vpop.f32.mrf.mxu0
      %v6132 = vadd.f32 0.0, %v6131
      %v6133 = vpop.f32.mrf.mxu0
      %6134 = vmatprep.mubr.bf16.mxu0 0
      %6135 = vmatmul.mubr.bf16.gmra.mxu0 %v4980
      %v6136 = vpop.f32.mrf.mxu0
      %v6137 = vadd.f32 0.0, %v6136
      %v6138 = vpop.f32.mrf.mxu0
      %v6139 = vpop.f32.mrf.mxu0
      %v6140 = vadd.f32 0.0, %v6139
      %v6141 = vpop.f32.mrf.mxu0
      %6142 = vmatprep.mubr.bf16.mxu0 0
      %6143 = vmatmul.mubr.bf16.gmra.mxu0 %v4981
      %v6144 = vpop.f32.mrf.mxu0
      %v6145 = vadd.f32 0.0, %v6144
      %v6146 = vpop.f32.mrf.mxu0
      %v6147 = vpop.f32.mrf.mxu0
      %v6148 = vadd.f32 0.0, %v6147
      %v6149 = vpop.f32.mrf.mxu0
      %6150 = vmatprep.mubr.bf16.mxu0 0
      %6151 = vmatmul.mubr.bf16.gmra.mxu0 %v4982
      %v6152 = vpop.f32.mrf.mxu0
      %v6153 = vadd.f32 0.0, %v6152
      %v6154 = vpop.f32.mrf.mxu0
      %v6155 = vpop.f32.mrf.mxu0
      %v6156 = vadd.f32 0.0, %v6155
      %v6157 = vpop.f32.mrf.mxu0
      %6158 = vmatprep.mubr.bf16.mxu0 0
      %6159 = vmatmul.mubr.bf16.gmra.mxu0 %v4983
      %v6160 = vpop.f32.mrf.mxu0
      %v6161 = vadd.f32 0.0, %v6160
      %v6162 = vpop.f32.mrf.mxu0
      %v6163 = vpop.f32.mrf.mxu0
      %v6164 = vadd.f32 0.0, %v6163
      %v6165 = vpop.f32.mrf.mxu0
      %6166 = vmatprep.mubr.bf16.mxu0 0
      %6167 = vmatmul.mubr.bf16.gmra.mxu0 %v4984
      %v6168 = vpop.f32.mrf.mxu0
      %v6169 = vadd.f32 0.0, %v6168
      %v6170 = vpop.f32.mrf.mxu0
      %v6171 = vpop.f32.mrf.mxu0
      %v6172 = vadd.f32 0.0, %v6171
      %v6173 = vpop.f32.mrf.mxu0
      %6174 = vmatprep.mubr.bf16.mxu0 0
      %6175 = vmatmul.mubr.bf16.gmra.mxu0 %v4985
      %v6176 = vpop.f32.mrf.mxu0
      %v6177 = vadd.f32 0.0, %v6176
      %v6178 = vpop.f32.mrf.mxu0
      %v6179 = vpop.f32.mrf.mxu0
      %v6180 = vadd.f32 0.0, %v6179
      %v6181 = vpop.f32.mrf.mxu0
      %6182 = vmatprep.mubr.bf16.mxu0 0
      %6183 = vmatmul.mubr.bf16.gmra.mxu0 %v4986
      %v6184 = vpop.f32.mrf.mxu0
      %v6185 = vadd.f32 0.0, %v6184
      %v6186 = vpop.f32.mrf.mxu0
      %v6187 = vpop.f32.mrf.mxu0
      %v6188 = vadd.f32 0.0, %v6187
      %v6189 = vpop.f32.mrf.mxu0
      %6190 = vmatprep.mubr.bf16.mxu0 0
      %6191 = vmatmul.mubr.bf16.gmra.mxu0 %v4987
      %v6192 = vpop.f32.mrf.mxu0
      %v6193 = vadd.f32 0.0, %v6192
      %v6194 = vpop.f32.mrf.mxu0
      %v6195 = vpop.f32.mrf.mxu0
      %v6196 = vadd.f32 0.0, %v6195
      %v6197 = vpop.f32.mrf.mxu0
      %6198 = vmatprep.mubr.bf16.mxu0 0
      %6199 = vmatmul.mubr.bf16.gmra.mxu0 %v4988
      %v6200 = vpop.f32.mrf.mxu0
      %v6201 = vadd.f32 0.0, %v6200
      %v6202 = vpop.f32.mrf.mxu0
      %v6203 = vpop.f32.mrf.mxu0
      %v6204 = vadd.f32 0.0, %v6203
      %v6205 = vpop.f32.mrf.mxu0
      %6206 = vmatprep.mubr.bf16.mxu0 0
      %6207 = vmatmul.mubr.bf16.gmra.mxu0 %v5995
      %v6208 = vpop.f32.mrf.mxu0
      %v6209 = vadd.f32 0.0, %v6208
      %v6210 = vpop.f32.mrf.mxu0
      %v6211 = vpop.f32.mrf.mxu0
      %v6212 = vadd.f32 0.0, %v6211
      %v6213 = vpop.f32.mrf.mxu0
      %6214 = vmatprep.mubr.bf16.mxu0 0
      %6215 = vmatmul.mubr.bf16.gmra.mxu0 %v5996
      %v6216 = vpop.f32.mrf.mxu0
      %v6217 = vadd.f32 0.0, %v6216
      %v6218 = vpop.f32.mrf.mxu0
      %v6219 = vpop.f32.mrf.mxu0
      %v6220 = vadd.f32 0.0, %v6219
      %v6221 = vpop.f32.mrf.mxu0
      %6222 = vdwg.mxu0
      %v6223 = vld [vmem:[#allocation2] sm:$0xff]
      %v6224 = vld [vmem:[#allocation2 + $0x8] sm:$0xff]
      %v6225 = vld [vmem:[#allocation2 + $0x10] sm:$0xff]
      %v6226 = vld [vmem:[#allocation2 + $0x18] sm:$0xff]
      %v6227 = vld [vmem:[#allocation2 + $0x20] sm:$0xff]
      %v6228 = vld [vmem:[#allocation2 + $0x28] sm:$0xff]
      %v6229 = vld [vmem:[#allocation2 + $0x30] sm:$0xff]
      %v6230 = vld [vmem:[#allocation2 + $0x38] sm:$0xff]
      %v6231 = vld [vmem:[#allocation2 + $0x40] sm:$0xff]
      %v6232 = vld [vmem:[#allocation2 + $0x48] sm:$0xff]
      %v6233 = vld [vmem:[#allocation2 + $0x50] sm:$0xff]
      %v6234 = vld [vmem:[#allocation2 + $0x58] sm:$0xff]
      %v6235 = vld [vmem:[#allocation2 + $0x60] sm:$0xff]
      %v6236 = vld [vmem:[#allocation2 + $0x68] sm:$0xff]
      %v6237 = vld [vmem:[#allocation2 + $0x70] sm:$0xff]
      %v6238 = vld [vmem:[#allocation2 + $0x78] sm:$0xff]
      %v6239 = vld [vmem:[#allocation2 + $0x80] sm:$0xff]
      %v6240 = vld [vmem:[#allocation2 + $0x88] sm:$0xff]
      %v6241 = vld [vmem:[#allocation2 + $0x90] sm:$0xff]
      %v6242 = vld [vmem:[#allocation2 + $0x98] sm:$0xff]
      %v6243 = vld [vmem:[#allocation2 + $0xa0] sm:$0xff]
      %v6244 = vld [vmem:[#allocation2 + $0xa8] sm:$0xff]
      %v6245 = vld [vmem:[#allocation2 + $0xb0] sm:$0xff]
      %v6246 = vld [vmem:[#allocation2 + $0xb8] sm:$0xff]
      %v6247 = vld [vmem:[#allocation2 + $0xc0] sm:$0xff]
      %v6248 = vld [vmem:[#allocation2 + $0xc8] sm:$0xff]
      %v6249 = vld [vmem:[#allocation2 + $0xd0] sm:$0xff]
      %v6250 = vld [vmem:[#allocation2 + $0xd8] sm:$0xff]
      %v6251 = vld [vmem:[#allocation2 + $0xe0] sm:$0xff]
      %v6252 = vld [vmem:[#allocation2 + $0xe8] sm:$0xff]
      %v6253 = vld [vmem:[#allocation2 + $0xf0] sm:$0xff]
      %v6254 = vld [vmem:[#allocation2 + $0xf8] sm:$0xff]
      %v6255 = vadd.f32 %v6223, %v6097
      %v6256 = vadd.f32 %v6224, %v6100
      %v6257 = vadd.f32 %v6225, %v6105
      %v6258 = vadd.f32 %v6226, %v6108
      %v6259 = vadd.f32 %v6227, %v6113
      %v6260 = vadd.f32 %v6228, %v6116
      %v6261 = vadd.f32 %v6229, %v6121
      %v6262 = vadd.f32 %v6230, %v6124
      %v6263 = vadd.f32 %v6231, %v6129
      %v6264 = vadd.f32 %v6232, %v6132
      %v6265 = vadd.f32 %v6233, %v6137
      %v6266 = vadd.f32 %v6234, %v6140
      %v6267 = vadd.f32 %v6235, %v6145
      %v6268 = vadd.f32 %v6236, %v6148
      %v6269 = vadd.f32 %v6237, %v6153
      %v6270 = vadd.f32 %v6238, %v6156
      %v6271 = vadd.f32 %v6239, %v6161
      %v6272 = vadd.f32 %v6240, %v6164
      %v6273 = vadd.f32 %v6241, %v6169
      %v6274 = vadd.f32 %v6242, %v6172
      %v6275 = vadd.f32 %v6243, %v6177
      %v6276 = vadd.f32 %v6244, %v6180
      %v6277 = vadd.f32 %v6245, %v6185
      %v6278 = vadd.f32 %v6246, %v6188
      %v6279 = vadd.f32 %v6247, %v6193
      %v6280 = vadd.f32 %v6248, %v6196
      %v6281 = vadd.f32 %v6249, %v6201
      %v6282 = vadd.f32 %v6250, %v6204
      %v6283 = vadd.f32 %v6251, %v6209
      %v6284 = vadd.f32 %v6252, %v6212
      %v6285 = vadd.f32 %v6253, %v6217
      %v6286 = vadd.f32 %v6254, %v6220
      %6287 = vst [vmem:[#allocation2] sm:$0xff] %v6255
      %6288 = vst [vmem:[#allocation2 + $0x8] sm:$0xff] %v6256
      %6289 = vst [vmem:[#allocation2 + $0x10] sm:$0xff] %v6257
      %6290 = vst [vmem:[#allocation2 + $0x18] sm:$0xff] %v6258
      %6291 = vst [vmem:[#allocation2 + $0x20] sm:$0xff] %v6259
      %6292 = vst [vmem:[#allocation2 + $0x28] sm:$0xff] %v6260
      %6293 = vst [vmem:[#allocation2 + $0x30] sm:$0xff] %v6261
      %6294 = vst [vmem:[#allocation2 + $0x38] sm:$0xff] %v6262
      %6295 = vst [vmem:[#allocation2 + $0x40] sm:$0xff] %v6263
      %6296 = vst [vmem:[#allocation2 + $0x48] sm:$0xff] %v6264
      %6297 = vst [vmem:[#allocation2 + $0x50] sm:$0xff] %v6265
      %6298 = vst [vmem:[#allocation2 + $0x58] sm:$0xff] %v6266
      %6299 = vst [vmem:[#allocation2 + $0x60] sm:$0xff] %v6267
      %6300 = vst [vmem:[#allocation2 + $0x68] sm:$0xff] %v6268
      %6301 = vst [vmem:[#allocation2 + $0x70] sm:$0xff] %v6269
      %6302 = vst [vmem:[#allocation2 + $0x78] sm:$0xff] %v6270
      %6303 = vst [vmem:[#allocation2 + $0x80] sm:$0xff] %v6271
      %6304 = vst [vmem:[#allocation2 + $0x88] sm:$0xff] %v6272
      %6305 = vst [vmem:[#allocation2 + $0x90] sm:$0xff] %v6273
      %6306 = vst [vmem:[#allocation2 + $0x98] sm:$0xff] %v6274
      %6307 = vst [vmem:[#allocation2 + $0xa0] sm:$0xff] %v6275
      %6308 = vst [vmem:[#allocation2 + $0xa8] sm:$0xff] %v6276
      %6309 = vst [vmem:[#allocation2 + $0xb0] sm:$0xff] %v6277
      %6310 = vst [vmem:[#allocation2 + $0xb8] sm:$0xff] %v6278
      %6311 = vst [vmem:[#allocation2 + $0xc0] sm:$0xff] %v6279
      %6312 = vst [vmem:[#allocation2 + $0xc8] sm:$0xff] %v6280
      %6313 = vst [vmem:[#allocation2 + $0xd0] sm:$0xff] %v6281
      %6314 = vst [vmem:[#allocation2 + $0xd8] sm:$0xff] %v6282
      %6315 = vst [vmem:[#allocation2 + $0xe0] sm:$0xff] %v6283
      %6316 = vst [vmem:[#allocation2 + $0xe8] sm:$0xff] %v6284
      %6317 = vst [vmem:[#allocation2 + $0xf0] sm:$0xff] %v6285
      %6318 = vst [vmem:[#allocation2 + $0xf8] sm:$0xff] %v6286
      %v6319 = vpack.c.bf16 %v4901, %v4900
      %v6320 = vpack.c.bf16 %v4903, %v4902
      %s6321 = scalar_lea.vmem %s3, 256
      %v6322 = vld [vmem:[%s6321] sm:$0xf]
      %v6323 = vld [vmem:[%s6321 + $0x4] sm:$0xf]
      %v6324 = vld [vmem:[%s6321 + $0x8] sm:$0xf]
      %v6325 = vld [vmem:[%s6321 + $0xc] sm:$0xf]
      %v6326 = vld [vmem:[%s6321 + $0x10] sm:$0xf]
      %v6327 = vld [vmem:[%s6321 + $0x14] sm:$0xf]
      %v6328 = vld [vmem:[%s6321 + $0x18] sm:$0xf]
      %v6329 = vld [vmem:[%s6321 + $0x1c] sm:$0xf]
      %v6330 = vld [vmem:[%s6321 + $0x20] sm:$0xf]
      %v6331 = vld [vmem:[%s6321 + $0x24] sm:$0xf]
      %v6332 = vld [vmem:[%s6321 + $0x28] sm:$0xf]
      %v6333 = vld [vmem:[%s6321 + $0x2c] sm:$0xf]
      %v6334 = vld [vmem:[%s6321 + $0x30] sm:$0xf]
      %v6335 = vld [vmem:[%s6321 + $0x34] sm:$0xf]
      %v6336 = vld [vmem:[%s6321 + $0x38] sm:$0xf]
      %v6337 = vld [vmem:[%s6321 + $0x3c] sm:$0xf]
      %v6354 = vunpack.c.l.b16 %v6322
      %v6355 = vunpack.c.l.b16 %v6323
      %v6356 = vunpack.c.l.b16 %v6324
      %v6357 = vunpack.c.l.b16 %v6325
      %v6358 = vunpack.c.l.b16 %v6326
      %v6359 = vunpack.c.l.b16 %v6327
      %v6360 = vunpack.c.l.b16 %v6328
      %v6361 = vunpack.c.l.b16 %v6329
      %v6362 = vunpack.c.l.b16 %v6330
      %v6363 = vunpack.c.l.b16 %v6331
      %v6364 = vunpack.c.l.b16 %v6332
      %v6365 = vunpack.c.l.b16 %v6333
      %v6366 = vunpack.c.l.b16 %v6334
      %v6367 = vunpack.c.l.b16 %v6335
      %v6368 = vunpack.c.l.b16 %v6336
      %v6369 = vunpack.c.l.b16 %v6337
      %v6370 = vpack.c.b16 %v6355, %v6354
      %v6371 = vpack.c.b16 %v6357, %v6356
      %v6372 = vpack.c.b16 %v6359, %v6358
      %v6373 = vpack.c.b16 %v6361, %v6360
      %v6374 = vpack.c.b16 %v6363, %v6362
      %v6375 = vpack.c.b16 %v6365, %v6364
      %v6376 = vpack.c.b16 %v6367, %v6366
      %v6377 = vpack.c.b16 %v6369, %v6368
      %6386 = vmatprep.subr.bf16.mxu0 0
      %6387 = vmatpush1.bf16.msra.mxu0 %v6377
      %6388 = vmatprep.subr.bf16.mxu0 0
      %6389 = vmatpush1.bf16.msra.mxu0 %v6376
      %6390 = vmatprep.subr.bf16.mxu0 0
      %6391 = vmatpush1.bf16.msra.mxu0 %v6375
      %6392 = vmatprep.subr.bf16.mxu0 0
      %6393 = vmatpush1.bf16.msra.mxu0 %v6374
      %6394 = vmatprep.subr.bf16.mxu0 0
      %6395 = vmatpush1.bf16.msra.mxu0 %v6373
      %6396 = vmatprep.subr.bf16.mxu0 0
      %6397 = vmatpush1.bf16.msra.mxu0 %v6372
      %6398 = vmatprep.subr.bf16.mxu0 0
      %6399 = vmatpush1.bf16.msra.mxu0 %v6371
      %6400 = vmatprep.subr.bf16.mxu0 0
      %6401 = vmatpush1.bf16.msra.mxu0 %v6370
      %6402 = vmatprep.subr.bf16.mxu0 0
      %6403 = vmatpush2.bf16.msra.mxu0 0
      %6404 = vmatprep.subr.bf16.mxu0 0
      %6405 = vmatpush2.bf16.msra.mxu0 0
      %6406 = vmatprep.subr.bf16.mxu0 0
      %6407 = vmatpush2.bf16.msra.mxu0 0
      %6408 = vmatprep.subr.bf16.mxu0 0
      %6409 = vmatpush2.bf16.msra.mxu0 0
      %6410 = vmatprep.subr.bf16.mxu0 0
      %6411 = vmatpush2.bf16.msra.mxu0 0
      %6412 = vmatprep.subr.bf16.mxu0 0
      %6413 = vmatpush2.bf16.msra.mxu0 0
      %6414 = vmatprep.subr.bf16.mxu0 0
      %6415 = vmatpush2.bf16.msra.mxu0 0
      %6416 = vmatprep.subr.bf16.mxu0 0
      %6417 = vmatpush2.bf16.msra.mxu0 0
      %6418 = vmatprep.mubr.bf16.mxu0 0
      %6419 = vmatmul.mubr.bf16.gmra.mxu0 %v5248
      %v6420 = vpop.f32.mrf.mxu0
      %v6421 = vadd.f32 0.0, %v6420
      %v6422 = vpop.f32.mrf.mxu0
      %v6423 = vpop.f32.mrf.mxu0
      %v6424 = vadd.f32 0.0, %v6423
      %v6425 = vpop.f32.mrf.mxu0
      %6426 = vmatprep.mubr.bf16.mxu0 0
      %6427 = vmatmul.mubr.bf16.gmra.mxu0 %v5249
      %v6428 = vpop.f32.mrf.mxu0
      %v6429 = vadd.f32 0.0, %v6428
      %v6430 = vpop.f32.mrf.mxu0
      %v6431 = vpop.f32.mrf.mxu0
      %v6432 = vadd.f32 0.0, %v6431
      %v6433 = vpop.f32.mrf.mxu0
      %6434 = vmatprep.mubr.bf16.mxu0 0
      %6435 = vmatmul.mubr.bf16.gmra.mxu0 %v5250
      %v6436 = vpop.f32.mrf.mxu0
      %v6437 = vadd.f32 0.0, %v6436
      %v6438 = vpop.f32.mrf.mxu0
      %v6439 = vpop.f32.mrf.mxu0
      %v6440 = vadd.f32 0.0, %v6439
      %v6441 = vpop.f32.mrf.mxu0
      %6442 = vmatprep.mubr.bf16.mxu0 0
      %6443 = vmatmul.mubr.bf16.gmra.mxu0 %v5251
      %v6444 = vpop.f32.mrf.mxu0
      %v6445 = vadd.f32 0.0, %v6444
      %v6446 = vpop.f32.mrf.mxu0
      %v6447 = vpop.f32.mrf.mxu0
      %v6448 = vadd.f32 0.0, %v6447
      %v6449 = vpop.f32.mrf.mxu0
      %6450 = vmatprep.mubr.bf16.mxu0 0
      %6451 = vmatmul.mubr.bf16.gmra.mxu0 %v5252
      %v6452 = vpop.f32.mrf.mxu0
      %v6453 = vadd.f32 0.0, %v6452
      %v6454 = vpop.f32.mrf.mxu0
      %v6455 = vpop.f32.mrf.mxu0
      %v6456 = vadd.f32 0.0, %v6455
      %v6457 = vpop.f32.mrf.mxu0
      %6458 = vmatprep.mubr.bf16.mxu0 0
      %6459 = vmatmul.mubr.bf16.gmra.mxu0 %v5253
      %v6460 = vpop.f32.mrf.mxu0
      %v6461 = vadd.f32 0.0, %v6460
      %v6462 = vpop.f32.mrf.mxu0
      %v6463 = vpop.f32.mrf.mxu0
      %v6464 = vadd.f32 0.0, %v6463
      %v6465 = vpop.f32.mrf.mxu0
      %6466 = vmatprep.mubr.bf16.mxu0 0
      %6467 = vmatmul.mubr.bf16.gmra.mxu0 %v5254
      %v6468 = vpop.f32.mrf.mxu0
      %v6469 = vadd.f32 0.0, %v6468
      %v6470 = vpop.f32.mrf.mxu0
      %v6471 = vpop.f32.mrf.mxu0
      %v6472 = vadd.f32 0.0, %v6471
      %v6473 = vpop.f32.mrf.mxu0
      %6474 = vmatprep.mubr.bf16.mxu0 0
      %6475 = vmatmul.mubr.bf16.gmra.mxu0 %v5255
      %v6476 = vpop.f32.mrf.mxu0
      %v6477 = vadd.f32 0.0, %v6476
      %v6478 = vpop.f32.mrf.mxu0
      %v6479 = vpop.f32.mrf.mxu0
      %v6480 = vadd.f32 0.0, %v6479
      %v6481 = vpop.f32.mrf.mxu0
      %6482 = vmatprep.mubr.bf16.mxu0 0
      %6483 = vmatmul.mubr.bf16.gmra.mxu0 %v5256
      %v6484 = vpop.f32.mrf.mxu0
      %v6485 = vadd.f32 0.0, %v6484
      %v6486 = vpop.f32.mrf.mxu0
      %v6487 = vpop.f32.mrf.mxu0
      %v6488 = vadd.f32 0.0, %v6487
      %v6489 = vpop.f32.mrf.mxu0
      %6490 = vmatprep.mubr.bf16.mxu0 0
      %6491 = vmatmul.mubr.bf16.gmra.mxu0 %v5257
      %v6492 = vpop.f32.mrf.mxu0
      %v6493 = vadd.f32 0.0, %v6492
      %v6494 = vpop.f32.mrf.mxu0
      %v6495 = vpop.f32.mrf.mxu0
      %v6496 = vadd.f32 0.0, %v6495
      %v6497 = vpop.f32.mrf.mxu0
      %6498 = vmatprep.mubr.bf16.mxu0 0
      %6499 = vmatmul.mubr.bf16.gmra.mxu0 %v5258
      %v6500 = vpop.f32.mrf.mxu0
      %v6501 = vadd.f32 0.0, %v6500
      %v6502 = vpop.f32.mrf.mxu0
      %v6503 = vpop.f32.mrf.mxu0
      %v6504 = vadd.f32 0.0, %v6503
      %v6505 = vpop.f32.mrf.mxu0
      %6506 = vmatprep.mubr.bf16.mxu0 0
      %6507 = vmatmul.mubr.bf16.gmra.mxu0 %v5259
      %v6508 = vpop.f32.mrf.mxu0
      %v6509 = vadd.f32 0.0, %v6508
      %v6510 = vpop.f32.mrf.mxu0
      %v6511 = vpop.f32.mrf.mxu0
      %v6512 = vadd.f32 0.0, %v6511
      %v6513 = vpop.f32.mrf.mxu0
      %6514 = vmatprep.mubr.bf16.mxu0 0
      %6515 = vmatmul.mubr.bf16.gmra.mxu0 %v5260
      %v6516 = vpop.f32.mrf.mxu0
      %v6517 = vadd.f32 0.0, %v6516
      %v6518 = vpop.f32.mrf.mxu0
      %v6519 = vpop.f32.mrf.mxu0
      %v6520 = vadd.f32 0.0, %v6519
      %v6521 = vpop.f32.mrf.mxu0
      %6522 = vmatprep.mubr.bf16.mxu0 0
      %6523 = vmatmul.mubr.bf16.gmra.mxu0 %v5261
      %v6524 = vpop.f32.mrf.mxu0
      %v6525 = vadd.f32 0.0, %v6524
      %v6526 = vpop.f32.mrf.mxu0
      %v6527 = vpop.f32.mrf.mxu0
      %v6528 = vadd.f32 0.0, %v6527
      %v6529 = vpop.f32.mrf.mxu0
      %6530 = vmatprep.mubr.bf16.mxu0 0
      %6531 = vmatmul.mubr.bf16.gmra.mxu0 %v6319
      %v6532 = vpop.f32.mrf.mxu0
      %v6533 = vadd.f32 0.0, %v6532
      %v6534 = vpop.f32.mrf.mxu0
      %v6535 = vpop.f32.mrf.mxu0
      %v6536 = vadd.f32 0.0, %v6535
      %v6537 = vpop.f32.mrf.mxu0
      %6538 = vmatprep.mubr.bf16.mxu0 0
      %6539 = vmatmul.mubr.bf16.gmra.mxu0 %v6320
      %v6540 = vpop.f32.mrf.mxu0
      %v6541 = vadd.f32 0.0, %v6540
      %v6542 = vpop.f32.mrf.mxu0
      %v6543 = vpop.f32.mrf.mxu0
      %v6544 = vadd.f32 0.0, %v6543
      %v6545 = vpop.f32.mrf.mxu0
      %6546 = vdwg.mxu0
      %v6547 = vld [vmem:[#allocation2] sm:$0xff]
      %v6548 = vld [vmem:[#allocation2 + $0x8] sm:$0xff]
      %v6549 = vld [vmem:[#allocation2 + $0x10] sm:$0xff]
      %v6550 = vld [vmem:[#allocation2 + $0x18] sm:$0xff]
      %v6551 = vld [vmem:[#allocation2 + $0x20] sm:$0xff]
      %v6552 = vld [vmem:[#allocation2 + $0x28] sm:$0xff]
      %v6553 = vld [vmem:[#allocation2 + $0x30] sm:$0xff]
      %v6554 = vld [vmem:[#allocation2 + $0x38] sm:$0xff]
      %v6555 = vld [vmem:[#allocation2 + $0x40] sm:$0xff]
      %v6556 = vld [vmem:[#allocation2 + $0x48] sm:$0xff]
      %v6557 = vld [vmem:[#allocation2 + $0x50] sm:$0xff]
      %v6558 = vld [vmem:[#allocation2 + $0x58] sm:$0xff]
      %v6559 = vld [vmem:[#allocation2 + $0x60] sm:$0xff]
      %v6560 = vld [vmem:[#allocation2 + $0x68] sm:$0xff]
      %v6561 = vld [vmem:[#allocation2 + $0x70] sm:$0xff]
      %v6562 = vld [vmem:[#allocation2 + $0x78] sm:$0xff]
      %v6563 = vld [vmem:[#allocation2 + $0x80] sm:$0xff]
      %v6564 = vld [vmem:[#allocation2 + $0x88] sm:$0xff]
      %v6565 = vld [vmem:[#allocation2 + $0x90] sm:$0xff]
      %v6566 = vld [vmem:[#allocation2 + $0x98] sm:$0xff]
      %v6567 = vld [vmem:[#allocation2 + $0xa0] sm:$0xff]
      %v6568 = vld [vmem:[#allocation2 + $0xa8] sm:$0xff]
      %v6569 = vld [vmem:[#allocation2 + $0xb0] sm:$0xff]
      %v6570 = vld [vmem:[#allocation2 + $0xb8] sm:$0xff]
      %v6571 = vld [vmem:[#allocation2 + $0xc0] sm:$0xff]
      %v6572 = vld [vmem:[#allocation2 + $0xc8] sm:$0xff]
      %v6573 = vld [vmem:[#allocation2 + $0xd0] sm:$0xff]
      %v6574 = vld [vmem:[#allocation2 + $0xd8] sm:$0xff]
      %v6575 = vld [vmem:[#allocation2 + $0xe0] sm:$0xff]
      %v6576 = vld [vmem:[#allocation2 + $0xe8] sm:$0xff]
      %v6577 = vld [vmem:[#allocation2 + $0xf0] sm:$0xff]
      %v6578 = vld [vmem:[#allocation2 + $0xf8] sm:$0xff]
      %v6579 = vadd.f32 %v6547, %v6421
      %v6580 = vadd.f32 %v6548, %v6424
      %v6581 = vadd.f32 %v6549, %v6429
      %v6582 = vadd.f32 %v6550, %v6432
      %v6583 = vadd.f32 %v6551, %v6437
      %v6584 = vadd.f32 %v6552, %v6440
      %v6585 = vadd.f32 %v6553, %v6445
      %v6586 = vadd.f32 %v6554, %v6448
      %v6587 = vadd.f32 %v6555, %v6453
      %v6588 = vadd.f32 %v6556, %v6456
      %v6589 = vadd.f32 %v6557, %v6461
      %v6590 = vadd.f32 %v6558, %v6464
      %v6591 = vadd.f32 %v6559, %v6469
      %v6592 = vadd.f32 %v6560, %v6472
      %v6593 = vadd.f32 %v6561, %v6477
      %v6594 = vadd.f32 %v6562, %v6480
      %v6595 = vadd.f32 %v6563, %v6485
      %v6596 = vadd.f32 %v6564, %v6488
      %v6597 = vadd.f32 %v6565, %v6493
      %v6598 = vadd.f32 %v6566, %v6496
      %v6599 = vadd.f32 %v6567, %v6501
      %v6600 = vadd.f32 %v6568, %v6504
      %v6601 = vadd.f32 %v6569, %v6509
      %v6602 = vadd.f32 %v6570, %v6512
      %v6603 = vadd.f32 %v6571, %v6517
      %v6604 = vadd.f32 %v6572, %v6520
      %v6605 = vadd.f32 %v6573, %v6525
      %v6606 = vadd.f32 %v6574, %v6528
      %v6607 = vadd.f32 %v6575, %v6533
      %v6608 = vadd.f32 %v6576, %v6536
      %v6609 = vadd.f32 %v6577, %v6541
      %v6610 = vadd.f32 %v6578, %v6544
      %6611 = vst [vmem:[#allocation2] sm:$0xff] %v6579
      %6612 = vst [vmem:[#allocation2 + $0x8] sm:$0xff] %v6580
      %6613 = vst [vmem:[#allocation2 + $0x10] sm:$0xff] %v6581
      %6614 = vst [vmem:[#allocation2 + $0x18] sm:$0xff] %v6582
      %6615 = vst [vmem:[#allocation2 + $0x20] sm:$0xff] %v6583
      %6616 = vst [vmem:[#allocation2 + $0x28] sm:$0xff] %v6584
      %6617 = vst [vmem:[#allocation2 + $0x30] sm:$0xff] %v6585
      %6618 = vst [vmem:[#allocation2 + $0x38] sm:$0xff] %v6586
      %6619 = vst [vmem:[#allocation2 + $0x40] sm:$0xff] %v6587
      %6620 = vst [vmem:[#allocation2 + $0x48] sm:$0xff] %v6588
      %6621 = vst [vmem:[#allocation2 + $0x50] sm:$0xff] %v6589
      %6622 = vst [vmem:[#allocation2 + $0x58] sm:$0xff] %v6590
      %6623 = vst [vmem:[#allocation2 + $0x60] sm:$0xff] %v6591
      %6624 = vst [vmem:[#allocation2 + $0x68] sm:$0xff] %v6592
      %6625 = vst [vmem:[#allocation2 + $0x70] sm:$0xff] %v6593
      %6626 = vst [vmem:[#allocation2 + $0x78] sm:$0xff] %v6594
      %6627 = vst [vmem:[#allocation2 + $0x80] sm:$0xff] %v6595
      %6628 = vst [vmem:[#allocation2 + $0x88] sm:$0xff] %v6596
      %6629 = vst [vmem:[#allocation2 + $0x90] sm:$0xff] %v6597
      %6630 = vst [vmem:[#allocation2 + $0x98] sm:$0xff] %v6598
      %6631 = vst [vmem:[#allocation2 + $0xa0] sm:$0xff] %v6599
      %6632 = vst [vmem:[#allocation2 + $0xa8] sm:$0xff] %v6600
      %6633 = vst [vmem:[#allocation2 + $0xb0] sm:$0xff] %v6601
      %6634 = vst [vmem:[#allocation2 + $0xb8] sm:$0xff] %v6602
      %6635 = vst [vmem:[#allocation2 + $0xc0] sm:$0xff] %v6603
      %6636 = vst [vmem:[#allocation2 + $0xc8] sm:$0xff] %v6604
      %6637 = vst [vmem:[#allocation2 + $0xd0] sm:$0xff] %v6605
      %6638 = vst [vmem:[#allocation2 + $0xd8] sm:$0xff] %v6606
      %6639 = vst [vmem:[#allocation2 + $0xe0] sm:$0xff] %v6607
      %6640 = vst [vmem:[#allocation2 + $0xe8] sm:$0xff] %v6608
      %6641 = vst [vmem:[#allocation2 + $0xf0] sm:$0xff] %v6609
      %6642 = vst [vmem:[#allocation2 + $0xf8] sm:$0xff] %v6610
      %v6643 = vrot.slane %v4901, 1
      %v6644 = vrot.slane %v4902, 1
      %v6645 = vrot.slane %v4903, 1
      %v6646 = vrot.slane %v4904, 1
      %v6647 = vsel %vm1190, %v6645, %v6646
      %v6648 = vsel %vm1190, %v6644, %v6645
      %v6649 = vsel %vm1190, %v6643, %v6644
      %v6650 = vsel %vm1190, %v5616, %v6643
      %v6651 = vpack.c.bf16 %v6649, %v6650
      %v6652 = vpack.c.bf16 %v6647, %v6648
      %s6653 = scalar_lea.vmem %s3, 320
      %v6654 = vld [vmem:[%s6653] sm:$0xf]
      %v6655 = vld [vmem:[%s6653 + $0x4] sm:$0xf]
      %v6656 = vld [vmem:[%s6653 + $0x8] sm:$0xf]
      %v6657 = vld [vmem:[%s6653 + $0xc] sm:$0xf]
      %v6658 = vld [vmem:[%s6653 + $0x10] sm:$0xf]
      %v6659 = vld [vmem:[%s6653 + $0x14] sm:$0xf]
      %v6660 = vld [vmem:[%s6653 + $0x18] sm:$0xf]
      %v6661 = vld [vmem:[%s6653 + $0x1c] sm:$0xf]
      %v6662 = vld [vmem:[%s6653 + $0x20] sm:$0xf]
      %v6663 = vld [vmem:[%s6653 + $0x24] sm:$0xf]
      %v6664 = vld [vmem:[%s6653 + $0x28] sm:$0xf]
      %v6665 = vld [vmem:[%s6653 + $0x2c] sm:$0xf]
      %v6666 = vld [vmem:[%s6653 + $0x30] sm:$0xf]
      %v6667 = vld [vmem:[%s6653 + $0x34] sm:$0xf]
      %v6668 = vld [vmem:[%s6653 + $0x38] sm:$0xf]
      %v6669 = vld [vmem:[%s6653 + $0x3c] sm:$0xf]
      %v6686 = vunpack.c.l.b16 %v6654
      %v6687 = vunpack.c.l.b16 %v6655
      %v6688 = vunpack.c.l.b16 %v6656
      %v6689 = vunpack.c.l.b16 %v6657
      %v6690 = vunpack.c.l.b16 %v6658
      %v6691 = vunpack.c.l.b16 %v6659
      %v6692 = vunpack.c.l.b16 %v6660
      %v6693 = vunpack.c.l.b16 %v6661
      %v6694 = vunpack.c.l.b16 %v6662
      %v6695 = vunpack.c.l.b16 %v6663
      %v6696 = vunpack.c.l.b16 %v6664
      %v6697 = vunpack.c.l.b16 %v6665
      %v6698 = vunpack.c.l.b16 %v6666
      %v6699 = vunpack.c.l.b16 %v6667
      %v6700 = vunpack.c.l.b16 %v6668
      %v6701 = vunpack.c.l.b16 %v6669
      %v6702 = vpack.c.b16 %v6687, %v6686
      %v6703 = vpack.c.b16 %v6689, %v6688
      %v6704 = vpack.c.b16 %v6691, %v6690
      %v6705 = vpack.c.b16 %v6693, %v6692
      %v6706 = vpack.c.b16 %v6695, %v6694
      %v6707 = vpack.c.b16 %v6697, %v6696
      %v6708 = vpack.c.b16 %v6699, %v6698
      %v6709 = vpack.c.b16 %v6701, %v6700
      %6718 = vmatprep.subr.bf16.mxu0 0
      %6719 = vmatpush1.bf16.msra.mxu0 %v6709
      %6720 = vmatprep.subr.bf16.mxu0 0
      %6721 = vmatpush1.bf16.msra.mxu0 %v6708
      %6722 = vmatprep.subr.bf16.mxu0 0
      %6723 = vmatpush1.bf16.msra.mxu0 %v6707
      %6724 = vmatprep.subr.bf16.mxu0 0
      %6725 = vmatpush1.bf16.msra.mxu0 %v6706
      %6726 = vmatprep.subr.bf16.mxu0 0
      %6727 = vmatpush1.bf16.msra.mxu0 %v6705
      %6728 = vmatprep.subr.bf16.mxu0 0
      %6729 = vmatpush1.bf16.msra.mxu0 %v6704
      %6730 = vmatprep.subr.bf16.mxu0 0
      %6731 = vmatpush1.bf16.msra.mxu0 %v6703
      %6732 = vmatprep.subr.bf16.mxu0 0
      %6733 = vmatpush1.bf16.msra.mxu0 %v6702
      %6734 = vmatprep.subr.bf16.mxu0 0
      %6735 = vmatpush2.bf16.msra.mxu0 0
      %6736 = vmatprep.subr.bf16.mxu0 0
      %6737 = vmatpush2.bf16.msra.mxu0 0
      %6738 = vmatprep.subr.bf16.mxu0 0
      %6739 = vmatpush2.bf16.msra.mxu0 0
      %6740 = vmatprep.subr.bf16.mxu0 0
      %6741 = vmatpush2.bf16.msra.mxu0 0
      %6742 = vmatprep.subr.bf16.mxu0 0
      %6743 = vmatpush2.bf16.msra.mxu0 0
      %6744 = vmatprep.subr.bf16.mxu0 0
      %6745 = vmatpush2.bf16.msra.mxu0 0
      %6746 = vmatprep.subr.bf16.mxu0 0
      %6747 = vmatpush2.bf16.msra.mxu0 0
      %6748 = vmatprep.subr.bf16.mxu0 0
      %6749 = vmatpush2.bf16.msra.mxu0 0
      %6750 = vmatprep.mubr.bf16.mxu0 0
      %6751 = vmatmul.mubr.bf16.gmra.mxu0 %v5651
      %v6752 = vpop.f32.mrf.mxu0
      %v6753 = vadd.f32 0.0, %v6752
      %v6754 = vpop.f32.mrf.mxu0
      %v6755 = vpop.f32.mrf.mxu0
      %v6756 = vadd.f32 0.0, %v6755
      %v6757 = vpop.f32.mrf.mxu0
      %6758 = vmatprep.mubr.bf16.mxu0 0
      %6759 = vmatmul.mubr.bf16.gmra.mxu0 %v5652
      %v6760 = vpop.f32.mrf.mxu0
      %v6761 = vadd.f32 0.0, %v6760
      %v6762 = vpop.f32.mrf.mxu0
      %v6763 = vpop.f32.mrf.mxu0
      %v6764 = vadd.f32 0.0, %v6763
      %v6765 = vpop.f32.mrf.mxu0
      %6766 = vmatprep.mubr.bf16.mxu0 0
      %6767 = vmatmul.mubr.bf16.gmra.mxu0 %v5653
      %v6768 = vpop.f32.mrf.mxu0
      %v6769 = vadd.f32 0.0, %v6768
      %v6770 = vpop.f32.mrf.mxu0
      %v6771 = vpop.f32.mrf.mxu0
      %v6772 = vadd.f32 0.0, %v6771
      %v6773 = vpop.f32.mrf.mxu0
      %6774 = vmatprep.mubr.bf16.mxu0 0
      %6775 = vmatmul.mubr.bf16.gmra.mxu0 %v5654
      %v6776 = vpop.f32.mrf.mxu0
      %v6777 = vadd.f32 0.0, %v6776
      %v6778 = vpop.f32.mrf.mxu0
      %v6779 = vpop.f32.mrf.mxu0
      %v6780 = vadd.f32 0.0, %v6779
      %v6781 = vpop.f32.mrf.mxu0
      %6782 = vmatprep.mubr.bf16.mxu0 0
      %6783 = vmatmul.mubr.bf16.gmra.mxu0 %v5655
      %v6784 = vpop.f32.mrf.mxu0
      %v6785 = vadd.f32 0.0, %v6784
      %v6786 = vpop.f32.mrf.mxu0
      %v6787 = vpop.f32.mrf.mxu0
      %v6788 = vadd.f32 0.0, %v6787
      %v6789 = vpop.f32.mrf.mxu0
      %6790 = vmatprep.mubr.bf16.mxu0 0
      %6791 = vmatmul.mubr.bf16.gmra.mxu0 %v5656
      %v6792 = vpop.f32.mrf.mxu0
      %v6793 = vadd.f32 0.0, %v6792
      %v6794 = vpop.f32.mrf.mxu0
      %v6795 = vpop.f32.mrf.mxu0
      %v6796 = vadd.f32 0.0, %v6795
      %v6797 = vpop.f32.mrf.mxu0
      %6798 = vmatprep.mubr.bf16.mxu0 0
      %6799 = vmatmul.mubr.bf16.gmra.mxu0 %v5657
      %v6800 = vpop.f32.mrf.mxu0
      %v6801 = vadd.f32 0.0, %v6800
      %v6802 = vpop.f32.mrf.mxu0
      %v6803 = vpop.f32.mrf.mxu0
      %v6804 = vadd.f32 0.0, %v6803
      %v6805 = vpop.f32.mrf.mxu0
      %6806 = vmatprep.mubr.bf16.mxu0 0
      %6807 = vmatmul.mubr.bf16.gmra.mxu0 %v5658
      %v6808 = vpop.f32.mrf.mxu0
      %v6809 = vadd.f32 0.0, %v6808
      %v6810 = vpop.f32.mrf.mxu0
      %v6811 = vpop.f32.mrf.mxu0
      %v6812 = vadd.f32 0.0, %v6811
      %v6813 = vpop.f32.mrf.mxu0
      %6814 = vmatprep.mubr.bf16.mxu0 0
      %6815 = vmatmul.mubr.bf16.gmra.mxu0 %v5659
      %v6816 = vpop.f32.mrf.mxu0
      %v6817 = vadd.f32 0.0, %v6816
      %v6818 = vpop.f32.mrf.mxu0
      %v6819 = vpop.f32.mrf.mxu0
      %v6820 = vadd.f32 0.0, %v6819
      %v6821 = vpop.f32.mrf.mxu0
      %6822 = vmatprep.mubr.bf16.mxu0 0
      %6823 = vmatmul.mubr.bf16.gmra.mxu0 %v5660
      %v6824 = vpop.f32.mrf.mxu0
      %v6825 = vadd.f32 0.0, %v6824
      %v6826 = vpop.f32.mrf.mxu0
      %v6827 = vpop.f32.mrf.mxu0
      %v6828 = vadd.f32 0.0, %v6827
      %v6829 = vpop.f32.mrf.mxu0
      %6830 = vmatprep.mubr.bf16.mxu0 0
      %6831 = vmatmul.mubr.bf16.gmra.mxu0 %v5661
      %v6832 = vpop.f32.mrf.mxu0
      %v6833 = vadd.f32 0.0, %v6832
      %v6834 = vpop.f32.mrf.mxu0
      %v6835 = vpop.f32.mrf.mxu0
      %v6836 = vadd.f32 0.0, %v6835
      %v6837 = vpop.f32.mrf.mxu0
      %6838 = vmatprep.mubr.bf16.mxu0 0
      %6839 = vmatmul.mubr.bf16.gmra.mxu0 %v5662
      %v6840 = vpop.f32.mrf.mxu0
      %v6841 = vadd.f32 0.0, %v6840
      %v6842 = vpop.f32.mrf.mxu0
      %v6843 = vpop.f32.mrf.mxu0
      %v6844 = vadd.f32 0.0, %v6843
      %v6845 = vpop.f32.mrf.mxu0
      %6846 = vmatprep.mubr.bf16.mxu0 0
      %6847 = vmatmul.mubr.bf16.gmra.mxu0 %v5663
      %v6848 = vpop.f32.mrf.mxu0
      %v6849 = vadd.f32 0.0, %v6848
      %v6850 = vpop.f32.mrf.mxu0
      %v6851 = vpop.f32.mrf.mxu0
      %v6852 = vadd.f32 0.0, %v6851
      %v6853 = vpop.f32.mrf.mxu0
      %6854 = vmatprep.mubr.bf16.mxu0 0
      %6855 = vmatmul.mubr.bf16.gmra.mxu0 %v5664
      %v6856 = vpop.f32.mrf.mxu0
      %v6857 = vadd.f32 0.0, %v6856
      %v6858 = vpop.f32.mrf.mxu0
      %v6859 = vpop.f32.mrf.mxu0
      %v6860 = vadd.f32 0.0, %v6859
      %v6861 = vpop.f32.mrf.mxu0
      %6862 = vmatprep.mubr.bf16.mxu0 0
      %6863 = vmatmul.mubr.bf16.gmra.mxu0 %v6651
      %v6864 = vpop.f32.mrf.mxu0
      %v6865 = vadd.f32 0.0, %v6864
      %v6866 = vpop.f32.mrf.mxu0
      %v6867 = vpop.f32.mrf.mxu0
      %v6868 = vadd.f32 0.0, %v6867
      %v6869 = vpop.f32.mrf.mxu0
      %6870 = vmatprep.mubr.bf16.mxu0 0
      %6871 = vmatmul.mubr.bf16.gmra.mxu0 %v6652
      %v6872 = vpop.f32.mrf.mxu0
      %v6873 = vadd.f32 0.0, %v6872
      %v6874 = vpop.f32.mrf.mxu0
      %v6875 = vpop.f32.mrf.mxu0
      %v6876 = vadd.f32 0.0, %v6875
      %v6877 = vpop.f32.mrf.mxu0
      %6878 = vdwg.mxu0
      %v6879 = vld [vmem:[#allocation2] sm:$0xff]
      %v6880 = vld [vmem:[#allocation2 + $0x8] sm:$0xff]
      %v6881 = vld [vmem:[#allocation2 + $0x10] sm:$0xff]
      %v6882 = vld [vmem:[#allocation2 + $0x18] sm:$0xff]
      %v6883 = vld [vmem:[#allocation2 + $0x20] sm:$0xff]
      %v6884 = vld [vmem:[#allocation2 + $0x28] sm:$0xff]
      %v6885 = vld [vmem:[#allocation2 + $0x30] sm:$0xff]
      %v6886 = vld [vmem:[#allocation2 + $0x38] sm:$0xff]
      %v6887 = vld [vmem:[#allocation2 + $0x40] sm:$0xff]
      %v6888 = vld [vmem:[#allocation2 + $0x48] sm:$0xff]
      %v6889 = vld [vmem:[#allocation2 + $0x50] sm:$0xff]
      %v6890 = vld [vmem:[#allocation2 + $0x58] sm:$0xff]
      %v6891 = vld [vmem:[#allocation2 + $0x60] sm:$0xff]
      %v6892 = vld [vmem:[#allocation2 + $0x68] sm:$0xff]
      %v6893 = vld [vmem:[#allocation2 + $0x70] sm:$0xff]
      %v6894 = vld [vmem:[#allocation2 + $0x78] sm:$0xff]
      %v6895 = vld [vmem:[#allocation2 + $0x80] sm:$0xff]
      %v6896 = vld [vmem:[#allocation2 + $0x88] sm:$0xff]
      %v6897 = vld [vmem:[#allocation2 + $0x90] sm:$0xff]
      %v6898 = vld [vmem:[#allocation2 + $0x98] sm:$0xff]
      %v6899 = vld [vmem:[#allocation2 + $0xa0] sm:$0xff]
      %v6900 = vld [vmem:[#allocation2 + $0xa8] sm:$0xff]
      %v6901 = vld [vmem:[#allocation2 + $0xb0] sm:$0xff]
      %v6902 = vld [vmem:[#allocation2 + $0xb8] sm:$0xff]
      %v6903 = vld [vmem:[#allocation2 + $0xc0] sm:$0xff]
      %v6904 = vld [vmem:[#allocation2 + $0xc8] sm:$0xff]
      %v6905 = vld [vmem:[#allocation2 + $0xd0] sm:$0xff]
      %v6906 = vld [vmem:[#allocation2 + $0xd8] sm:$0xff]
      %v6907 = vld [vmem:[#allocation2 + $0xe0] sm:$0xff]
      %v6908 = vld [vmem:[#allocation2 + $0xe8] sm:$0xff]
      %v6909 = vld [vmem:[#allocation2 + $0xf0] sm:$0xff]
      %v6910 = vld [vmem:[#allocation2 + $0xf8] sm:$0xff]
      %v6911 = vadd.f32 %v6879, %v6753
      %v6912 = vadd.f32 %v6880, %v6756
      %v6913 = vadd.f32 %v6881, %v6761
      %v6914 = vadd.f32 %v6882, %v6764
      %v6915 = vadd.f32 %v6883, %v6769
      %v6916 = vadd.f32 %v6884, %v6772
      %v6917 = vadd.f32 %v6885, %v6777
      %v6918 = vadd.f32 %v6886, %v6780
      %v6919 = vadd.f32 %v6887, %v6785
      %v6920 = vadd.f32 %v6888, %v6788
      %v6921 = vadd.f32 %v6889, %v6793
      %v6922 = vadd.f32 %v6890, %v6796
      %v6923 = vadd.f32 %v6891, %v6801
      %v6924 = vadd.f32 %v6892, %v6804
      %v6925 = vadd.f32 %v6893, %v6809
      %v6926 = vadd.f32 %v6894, %v6812
      %v6927 = vadd.f32 %v6895, %v6817
      %v6928 = vadd.f32 %v6896, %v6820
      %v6929 = vadd.f32 %v6897, %v6825
      %v6930 = vadd.f32 %v6898, %v6828
      %v6931 = vadd.f32 %v6899, %v6833
      %v6932 = vadd.f32 %v6900, %v6836
      %v6933 = vadd.f32 %v6901, %v6841
      %v6934 = vadd.f32 %v6902, %v6844
      %v6935 = vadd.f32 %v6903, %v6849
      %v6936 = vadd.f32 %v6904, %v6852
      %v6937 = vadd.f32 %v6905, %v6857
      %v6938 = vadd.f32 %v6906, %v6860
      %v6939 = vadd.f32 %v6907, %v6865
      %v6940 = vadd.f32 %v6908, %v6868
      %v6941 = vadd.f32 %v6909, %v6873
      %v6942 = vadd.f32 %v6910, %v6876
      %6943 = vst [vmem:[#allocation2] sm:$0xff] %v6911
      %6944 = vst [vmem:[#allocation2 + $0x8] sm:$0xff] %v6912
      %6945 = vst [vmem:[#allocation2 + $0x10] sm:$0xff] %v6913
      %6946 = vst [vmem:[#allocation2 + $0x18] sm:$0xff] %v6914
      %6947 = vst [vmem:[#allocation2 + $0x20] sm:$0xff] %v6915
      %6948 = vst [vmem:[#allocation2 + $0x28] sm:$0xff] %v6916
      %6949 = vst [vmem:[#allocation2 + $0x30] sm:$0xff] %v6917
      %6950 = vst [vmem:[#allocation2 + $0x38] sm:$0xff] %v6918
      %6951 = vst [vmem:[#allocation2 + $0x40] sm:$0xff] %v6919
      %6952 = vst [vmem:[#allocation2 + $0x48] sm:$0xff] %v6920
      %6953 = vst [vmem:[#allocation2 + $0x50] sm:$0xff] %v6921
      %6954 = vst [vmem:[#allocation2 + $0x58] sm:$0xff] %v6922
      %6955 = vst [vmem:[#allocation2 + $0x60] sm:$0xff] %v6923
      %6956 = vst [vmem:[#allocation2 + $0x68] sm:$0xff] %v6924
      %6957 = vst [vmem:[#allocation2 + $0x70] sm:$0xff] %v6925
      %6958 = vst [vmem:[#allocation2 + $0x78] sm:$0xff] %v6926
      %6959 = vst [vmem:[#allocation2 + $0x80] sm:$0xff] %v6927
      %6960 = vst [vmem:[#allocation2 + $0x88] sm:$0xff] %v6928
      %6961 = vst [vmem:[#allocation2 + $0x90] sm:$0xff] %v6929
      %6962 = vst [vmem:[#allocation2 + $0x98] sm:$0xff] %v6930
      %6963 = vst [vmem:[#allocation2 + $0xa0] sm:$0xff] %v6931
      %6964 = vst [vmem:[#allocation2 + $0xa8] sm:$0xff] %v6932
      %6965 = vst [vmem:[#allocation2 + $0xb0] sm:$0xff] %v6933
      %6966 = vst [vmem:[#allocation2 + $0xb8] sm:$0xff] %v6934
      %6967 = vst [vmem:[#allocation2 + $0xc0] sm:$0xff] %v6935
      %6968 = vst [vmem:[#allocation2 + $0xc8] sm:$0xff] %v6936
      %6969 = vst [vmem:[#allocation2 + $0xd0] sm:$0xff] %v6937
      %6970 = vst [vmem:[#allocation2 + $0xd8] sm:$0xff] %v6938
      %6971 = vst [vmem:[#allocation2 + $0xe0] sm:$0xff] %v6939
      %6972 = vst [vmem:[#allocation2 + $0xe8] sm:$0xff] %v6940
      %6973 = vst [vmem:[#allocation2 + $0xf0] sm:$0xff] %v6941
      %6974 = vst [vmem:[#allocation2 + $0xf8] sm:$0xff] %v6942
      %v6975 = vrot.slane %v4904, 7
      %v6976 = vrot.slane %v4905, 7
      %v6977 = vrot.slane %v4906, 7
      %v6978 = vsel %vm393, %v6977, %v4940
      %v6979 = vsel %vm393, %v6976, %v6977
      %v6980 = vsel %vm393, %v6975, %v6976
      %v6981 = vsel %vm393, %v5990, %v6975
      %v6982 = vpack.c.bf16 %v6980, %v6981
      %v6983 = vpack.c.bf16 %v6978, %v6979
      %s6984 = scalar_lea.vmem %s3, 384
      %v6985 = vld [vmem:[%s6984] sm:$0xf]
      %v6986 = vld [vmem:[%s6984 + $0x4] sm:$0xf]
      %v6987 = vld [vmem:[%s6984 + $0x8] sm:$0xf]
      %v6988 = vld [vmem:[%s6984 + $0xc] sm:$0xf]
      %v6989 = vld [vmem:[%s6984 + $0x10] sm:$0xf]
      %v6990 = vld [vmem:[%s6984 + $0x14] sm:$0xf]
      %v6991 = vld [vmem:[%s6984 + $0x18] sm:$0xf]
      %v6992 = vld [vmem:[%s6984 + $0x1c] sm:$0xf]
      %v6993 = vld [vmem:[%s6984 + $0x20] sm:$0xf]
      %v6994 = vld [vmem:[%s6984 + $0x24] sm:$0xf]
      %v6995 = vld [vmem:[%s6984 + $0x28] sm:$0xf]
      %v6996 = vld [vmem:[%s6984 + $0x2c] sm:$0xf]
      %v6997 = vld [vmem:[%s6984 + $0x30] sm:$0xf]
      %v6998 = vld [vmem:[%s6984 + $0x34] sm:$0xf]
      %v6999 = vld [vmem:[%s6984 + $0x38] sm:$0xf]
      %v7000 = vld [vmem:[%s6984 + $0x3c] sm:$0xf]
      %v7017 = vunpack.c.l.b16 %v6985
      %v7018 = vunpack.c.l.b16 %v6986
      %v7019 = vunpack.c.l.b16 %v6987
      %v7020 = vunpack.c.l.b16 %v6988
      %v7021 = vunpack.c.l.b16 %v6989
      %v7022 = vunpack.c.l.b16 %v6990
      %v7023 = vunpack.c.l.b16 %v6991
      %v7024 = vunpack.c.l.b16 %v6992
      %v7025 = vunpack.c.l.b16 %v6993
      %v7026 = vunpack.c.l.b16 %v6994
      %v7027 = vunpack.c.l.b16 %v6995
      %v7028 = vunpack.c.l.b16 %v6996
      %v7029 = vunpack.c.l.b16 %v6997
      %v7030 = vunpack.c.l.b16 %v6998
      %v7031 = vunpack.c.l.b16 %v6999
      %v7032 = vunpack.c.l.b16 %v7000
      %v7033 = vpack.c.b16 %v7018, %v7017
      %v7034 = vpack.c.b16 %v7020, %v7019
      %v7035 = vpack.c.b16 %v7022, %v7021
      %v7036 = vpack.c.b16 %v7024, %v7023
      %v7037 = vpack.c.b16 %v7026, %v7025
      %v7038 = vpack.c.b16 %v7028, %v7027
      %v7039 = vpack.c.b16 %v7030, %v7029
      %v7040 = vpack.c.b16 %v7032, %v7031
      %7049 = vmatprep.subr.bf16.mxu0 0
      %7050 = vmatpush1.bf16.msra.mxu0 %v7040
      %7051 = vmatprep.subr.bf16.mxu0 0
      %7052 = vmatpush1.bf16.msra.mxu0 %v7039
      %7053 = vmatprep.subr.bf16.mxu0 0
      %7054 = vmatpush1.bf16.msra.mxu0 %v7038
      %7055 = vmatprep.subr.bf16.mxu0 0
      %7056 = vmatpush1.bf16.msra.mxu0 %v7037
      %7057 = vmatprep.subr.bf16.mxu0 0
      %7058 = vmatpush1.bf16.msra.mxu0 %v7036
      %7059 = vmatprep.subr.bf16.mxu0 0
      %7060 = vmatpush1.bf16.msra.mxu0 %v7035
      %7061 = vmatprep.subr.bf16.mxu0 0
      %7062 = vmatpush1.bf16.msra.mxu0 %v7034
      %7063 = vmatprep.subr.bf16.mxu0 0
      %7064 = vmatpush1.bf16.msra.mxu0 %v7033
      %7065 = vmatprep.subr.bf16.mxu0 0
      %7066 = vmatpush2.bf16.msra.mxu0 0
      %7067 = vmatprep.subr.bf16.mxu0 0
      %7068 = vmatpush2.bf16.msra.mxu0 0
      %7069 = vmatprep.subr.bf16.mxu0 0
      %7070 = vmatpush2.bf16.msra.mxu0 0
      %7071 = vmatprep.subr.bf16.mxu0 0
      %7072 = vmatpush2.bf16.msra.mxu0 0
      %7073 = vmatprep.subr.bf16.mxu0 0
      %7074 = vmatpush2.bf16.msra.mxu0 0
      %7075 = vmatprep.subr.bf16.mxu0 0
      %7076 = vmatpush2.bf16.msra.mxu0 0
      %7077 = vmatprep.subr.bf16.mxu0 0
      %7078 = vmatpush2.bf16.msra.mxu0 0
      %7079 = vmatprep.subr.bf16.mxu0 0
      %7080 = vmatpush2.bf16.msra.mxu0 0
      %7081 = vmatprep.mubr.bf16.mxu0 0
      %7082 = vmatmul.mubr.bf16.gmra.mxu0 %v4977
      %v7083 = vpop.f32.mrf.mxu0
      %v7084 = vadd.f32 0.0, %v7083
      %v7085 = vpop.f32.mrf.mxu0
      %v7086 = vpop.f32.mrf.mxu0
      %v7087 = vadd.f32 0.0, %v7086
      %v7088 = vpop.f32.mrf.mxu0
      %7089 = vmatprep.mubr.bf16.mxu0 0
      %7090 = vmatmul.mubr.bf16.gmra.mxu0 %v4978
      %v7091 = vpop.f32.mrf.mxu0
      %v7092 = vadd.f32 0.0, %v7091
      %v7093 = vpop.f32.mrf.mxu0
      %v7094 = vpop.f32.mrf.mxu0
      %v7095 = vadd.f32 0.0, %v7094
      %v7096 = vpop.f32.mrf.mxu0
      %7097 = vmatprep.mubr.bf16.mxu0 0
      %7098 = vmatmul.mubr.bf16.gmra.mxu0 %v4979
      %v7099 = vpop.f32.mrf.mxu0
      %v7100 = vadd.f32 0.0, %v7099
      %v7101 = vpop.f32.mrf.mxu0
      %v7102 = vpop.f32.mrf.mxu0
      %v7103 = vadd.f32 0.0, %v7102
      %v7104 = vpop.f32.mrf.mxu0
      %7105 = vmatprep.mubr.bf16.mxu0 0
      %7106 = vmatmul.mubr.bf16.gmra.mxu0 %v4980
      %v7107 = vpop.f32.mrf.mxu0
      %v7108 = vadd.f32 0.0, %v7107
      %v7109 = vpop.f32.mrf.mxu0
      %v7110 = vpop.f32.mrf.mxu0
      %v7111 = vadd.f32 0.0, %v7110
      %v7112 = vpop.f32.mrf.mxu0
      %7113 = vmatprep.mubr.bf16.mxu0 0
      %7114 = vmatmul.mubr.bf16.gmra.mxu0 %v4981
      %v7115 = vpop.f32.mrf.mxu0
      %v7116 = vadd.f32 0.0, %v7115
      %v7117 = vpop.f32.mrf.mxu0
      %v7118 = vpop.f32.mrf.mxu0
      %v7119 = vadd.f32 0.0, %v7118
      %v7120 = vpop.f32.mrf.mxu0
      %7121 = vmatprep.mubr.bf16.mxu0 0
      %7122 = vmatmul.mubr.bf16.gmra.mxu0 %v4982
      %v7123 = vpop.f32.mrf.mxu0
      %v7124 = vadd.f32 0.0, %v7123
      %v7125 = vpop.f32.mrf.mxu0
      %v7126 = vpop.f32.mrf.mxu0
      %v7127 = vadd.f32 0.0, %v7126
      %v7128 = vpop.f32.mrf.mxu0
      %7129 = vmatprep.mubr.bf16.mxu0 0
      %7130 = vmatmul.mubr.bf16.gmra.mxu0 %v4983
      %v7131 = vpop.f32.mrf.mxu0
      %v7132 = vadd.f32 0.0, %v7131
      %v7133 = vpop.f32.mrf.mxu0
      %v7134 = vpop.f32.mrf.mxu0
      %v7135 = vadd.f32 0.0, %v7134
      %v7136 = vpop.f32.mrf.mxu0
      %7137 = vmatprep.mubr.bf16.mxu0 0
      %7138 = vmatmul.mubr.bf16.gmra.mxu0 %v4984
      %v7139 = vpop.f32.mrf.mxu0
      %v7140 = vadd.f32 0.0, %v7139
      %v7141 = vpop.f32.mrf.mxu0
      %v7142 = vpop.f32.mrf.mxu0
      %v7143 = vadd.f32 0.0, %v7142
      %v7144 = vpop.f32.mrf.mxu0
      %7145 = vmatprep.mubr.bf16.mxu0 0
      %7146 = vmatmul.mubr.bf16.gmra.mxu0 %v4985
      %v7147 = vpop.f32.mrf.mxu0
      %v7148 = vadd.f32 0.0, %v7147
      %v7149 = vpop.f32.mrf.mxu0
      %v7150 = vpop.f32.mrf.mxu0
      %v7151 = vadd.f32 0.0, %v7150
      %v7152 = vpop.f32.mrf.mxu0
      %7153 = vmatprep.mubr.bf16.mxu0 0
      %7154 = vmatmul.mubr.bf16.gmra.mxu0 %v4986
      %v7155 = vpop.f32.mrf.mxu0
      %v7156 = vadd.f32 0.0, %v7155
      %v7157 = vpop.f32.mrf.mxu0
      %v7158 = vpop.f32.mrf.mxu0
      %v7159 = vadd.f32 0.0, %v7158
      %v7160 = vpop.f32.mrf.mxu0
      %7161 = vmatprep.mubr.bf16.mxu0 0
      %7162 = vmatmul.mubr.bf16.gmra.mxu0 %v4987
      %v7163 = vpop.f32.mrf.mxu0
      %v7164 = vadd.f32 0.0, %v7163
      %v7165 = vpop.f32.mrf.mxu0
      %v7166 = vpop.f32.mrf.mxu0
      %v7167 = vadd.f32 0.0, %v7166
      %v7168 = vpop.f32.mrf.mxu0
      %7169 = vmatprep.mubr.bf16.mxu0 0
      %7170 = vmatmul.mubr.bf16.gmra.mxu0 %v4988
      %v7171 = vpop.f32.mrf.mxu0
      %v7172 = vadd.f32 0.0, %v7171
      %v7173 = vpop.f32.mrf.mxu0
      %v7174 = vpop.f32.mrf.mxu0
      %v7175 = vadd.f32 0.0, %v7174
      %v7176 = vpop.f32.mrf.mxu0
      %7177 = vmatprep.mubr.bf16.mxu0 0
      %7178 = vmatmul.mubr.bf16.gmra.mxu0 %v5995
      %v7179 = vpop.f32.mrf.mxu0
      %v7180 = vadd.f32 0.0, %v7179
      %v7181 = vpop.f32.mrf.mxu0
      %v7182 = vpop.f32.mrf.mxu0
      %v7183 = vadd.f32 0.0, %v7182
      %v7184 = vpop.f32.mrf.mxu0
      %7185 = vmatprep.mubr.bf16.mxu0 0
      %7186 = vmatmul.mubr.bf16.gmra.mxu0 %v5996
      %v7187 = vpop.f32.mrf.mxu0
      %v7188 = vadd.f32 0.0, %v7187
      %v7189 = vpop.f32.mrf.mxu0
      %v7190 = vpop.f32.mrf.mxu0
      %v7191 = vadd.f32 0.0, %v7190
      %v7192 = vpop.f32.mrf.mxu0
      %7193 = vmatprep.mubr.bf16.mxu0 0
      %7194 = vmatmul.mubr.bf16.gmra.mxu0 %v6982
      %v7195 = vpop.f32.mrf.mxu0
      %v7196 = vadd.f32 0.0, %v7195
      %v7197 = vpop.f32.mrf.mxu0
      %v7198 = vpop.f32.mrf.mxu0
      %v7199 = vadd.f32 0.0, %v7198
      %v7200 = vpop.f32.mrf.mxu0
      %7201 = vmatprep.mubr.bf16.mxu0 0
      %7202 = vmatmul.mubr.bf16.gmra.mxu0 %v6983
      %v7203 = vpop.f32.mrf.mxu0
      %v7204 = vadd.f32 0.0, %v7203
      %v7205 = vpop.f32.mrf.mxu0
      %v7206 = vpop.f32.mrf.mxu0
      %v7207 = vadd.f32 0.0, %v7206
      %v7208 = vpop.f32.mrf.mxu0
      %7209 = vdwg.mxu0
      %v7210 = vld [vmem:[#allocation2] sm:$0xff]
      %v7211 = vld [vmem:[#allocation2 + $0x8] sm:$0xff]
      %v7212 = vld [vmem:[#allocation2 + $0x10] sm:$0xff]
      %v7213 = vld [vmem:[#allocation2 + $0x18] sm:$0xff]
      %v7214 = vld [vmem:[#allocation2 + $0x20] sm:$0xff]
      %v7215 = vld [vmem:[#allocation2 + $0x28] sm:$0xff]
      %v7216 = vld [vmem:[#allocation2 + $0x30] sm:$0xff]
      %v7217 = vld [vmem:[#allocation2 + $0x38] sm:$0xff]
      %v7218 = vld [vmem:[#allocation2 + $0x40] sm:$0xff]
      %v7219 = vld [vmem:[#allocation2 + $0x48] sm:$0xff]
      %v7220 = vld [vmem:[#allocation2 + $0x50] sm:$0xff]
      %v7221 = vld [vmem:[#allocation2 + $0x58] sm:$0xff]
      %v7222 = vld [vmem:[#allocation2 + $0x60] sm:$0xff]
      %v7223 = vld [vmem:[#allocation2 + $0x68] sm:$0xff]
      %v7224 = vld [vmem:[#allocation2 + $0x70] sm:$0xff]
      %v7225 = vld [vmem:[#allocation2 + $0x78] sm:$0xff]
      %v7226 = vld [vmem:[#allocation2 + $0x80] sm:$0xff]
      %v7227 = vld [vmem:[#allocation2 + $0x88] sm:$0xff]
      %v7228 = vld [vmem:[#allocation2 + $0x90] sm:$0xff]
      %v7229 = vld [vmem:[#allocation2 + $0x98] sm:$0xff]
      %v7230 = vld [vmem:[#allocation2 + $0xa0] sm:$0xff]
      %v7231 = vld [vmem:[#allocation2 + $0xa8] sm:$0xff]
      %v7232 = vld [vmem:[#allocation2 + $0xb0] sm:$0xff]
      %v7233 = vld [vmem:[#allocation2 + $0xb8] sm:$0xff]
      %v7234 = vld [vmem:[#allocation2 + $0xc0] sm:$0xff]
      %v7235 = vld [vmem:[#allocation2 + $0xc8] sm:$0xff]
      %v7236 = vld [vmem:[#allocation2 + $0xd0] sm:$0xff]
      %v7237 = vld [vmem:[#allocation2 + $0xd8] sm:$0xff]
      %v7238 = vld [vmem:[#allocation2 + $0xe0] sm:$0xff]
      %v7239 = vld [vmem:[#allocation2 + $0xe8] sm:$0xff]
      %v7240 = vld [vmem:[#allocation2 + $0xf0] sm:$0xff]
      %v7241 = vld [vmem:[#allocation2 + $0xf8] sm:$0xff]
      %v7242 = vadd.f32 %v7210, %v7084
      %v7243 = vadd.f32 %v7211, %v7087
      %v7244 = vadd.f32 %v7212, %v7092
      %v7245 = vadd.f32 %v7213, %v7095
      %v7246 = vadd.f32 %v7214, %v7100
      %v7247 = vadd.f32 %v7215, %v7103
      %v7248 = vadd.f32 %v7216, %v7108
      %v7249 = vadd.f32 %v7217, %v7111
      %v7250 = vadd.f32 %v7218, %v7116
      %v7251 = vadd.f32 %v7219, %v7119
      %v7252 = vadd.f32 %v7220, %v7124
      %v7253 = vadd.f32 %v7221, %v7127
      %v7254 = vadd.f32 %v7222, %v7132
      %v7255 = vadd.f32 %v7223, %v7135
      %v7256 = vadd.f32 %v7224, %v7140
      %v7257 = vadd.f32 %v7225, %v7143
      %v7258 = vadd.f32 %v7226, %v7148
      %v7259 = vadd.f32 %v7227, %v7151
      %v7260 = vadd.f32 %v7228, %v7156
      %v7261 = vadd.f32 %v7229, %v7159
      %v7262 = vadd.f32 %v7230, %v7164
      %v7263 = vadd.f32 %v7231, %v7167
      %v7264 = vadd.f32 %v7232, %v7172
      %v7265 = vadd.f32 %v7233, %v7175
      %v7266 = vadd.f32 %v7234, %v7180
      %v7267 = vadd.f32 %v7235, %v7183
      %v7268 = vadd.f32 %v7236, %v7188
      %v7269 = vadd.f32 %v7237, %v7191
      %v7270 = vadd.f32 %v7238, %v7196
      %v7271 = vadd.f32 %v7239, %v7199
      %v7272 = vadd.f32 %v7240, %v7204
      %v7273 = vadd.f32 %v7241, %v7207
      %7274 = vst [vmem:[#allocation2] sm:$0xff] %v7242
      %7275 = vst [vmem:[#allocation2 + $0x8] sm:$0xff] %v7243
      %7276 = vst [vmem:[#allocation2 + $0x10] sm:$0xff] %v7244
      %7277 = vst [vmem:[#allocation2 + $0x18] sm:$0xff] %v7245
      %7278 = vst [vmem:[#allocation2 + $0x20] sm:$0xff] %v7246
      %7279 = vst [vmem:[#allocation2 + $0x28] sm:$0xff] %v7247
      %7280 = vst [vmem:[#allocation2 + $0x30] sm:$0xff] %v7248
      %7281 = vst [vmem:[#allocation2 + $0x38] sm:$0xff] %v7249
      %7282 = vst [vmem:[#allocation2 + $0x40] sm:$0xff] %v7250
      %7283 = vst [vmem:[#allocation2 + $0x48] sm:$0xff] %v7251
      %7284 = vst [vmem:[#allocation2 + $0x50] sm:$0xff] %v7252
      %7285 = vst [vmem:[#allocation2 + $0x58] sm:$0xff] %v7253
      %7286 = vst [vmem:[#allocation2 + $0x60] sm:$0xff] %v7254
      %7287 = vst [vmem:[#allocation2 + $0x68] sm:$0xff] %v7255
      %7288 = vst [vmem:[#allocation2 + $0x70] sm:$0xff] %v7256
      %7289 = vst [vmem:[#allocation2 + $0x78] sm:$0xff] %v7257
      %7290 = vst [vmem:[#allocation2 + $0x80] sm:$0xff] %v7258
      %7291 = vst [vmem:[#allocation2 + $0x88] sm:$0xff] %v7259
      %7292 = vst [vmem:[#allocation2 + $0x90] sm:$0xff] %v7260
      %7293 = vst [vmem:[#allocation2 + $0x98] sm:$0xff] %v7261
      %7294 = vst [vmem:[#allocation2 + $0xa0] sm:$0xff] %v7262
      %7295 = vst [vmem:[#allocation2 + $0xa8] sm:$0xff] %v7263
      %7296 = vst [vmem:[#allocation2 + $0xb0] sm:$0xff] %v7264
      %7297 = vst [vmem:[#allocation2 + $0xb8] sm:$0xff] %v7265
      %7298 = vst [vmem:[#allocation2 + $0xc0] sm:$0xff] %v7266
      %7299 = vst [vmem:[#allocation2 + $0xc8] sm:$0xff] %v7267
      %7300 = vst [vmem:[#allocation2 + $0xd0] sm:$0xff] %v7268
      %7301 = vst [vmem:[#allocation2 + $0xd8] sm:$0xff] %v7269
      %7302 = vst [vmem:[#allocation2 + $0xe0] sm:$0xff] %v7270
      %7303 = vst [vmem:[#allocation2 + $0xe8] sm:$0xff] %v7271
      %7304 = vst [vmem:[#allocation2 + $0xf0] sm:$0xff] %v7272
      %7305 = vst [vmem:[#allocation2 + $0xf8] sm:$0xff] %v7273
      %v7306 = vpack.c.bf16 %v4905, %v4904
      %v7307 = vpack.c.bf16 %v4907, %v4906
      %s7308 = scalar_lea.vmem %s3, 448
      %v7309 = vld [vmem:[%s7308] sm:$0xf]
      %v7310 = vld [vmem:[%s7308 + $0x4] sm:$0xf]
      %v7311 = vld [vmem:[%s7308 + $0x8] sm:$0xf]
      %v7312 = vld [vmem:[%s7308 + $0xc] sm:$0xf]
      %v7313 = vld [vmem:[%s7308 + $0x10] sm:$0xf]
      %v7314 = vld [vmem:[%s7308 + $0x14] sm:$0xf]
      %v7315 = vld [vmem:[%s7308 + $0x18] sm:$0xf]
      %v7316 = vld [vmem:[%s7308 + $0x1c] sm:$0xf]
      %v7317 = vld [vmem:[%s7308 + $0x20] sm:$0xf]
      %v7318 = vld [vmem:[%s7308 + $0x24] sm:$0xf]
      %v7319 = vld [vmem:[%s7308 + $0x28] sm:$0xf]
      %v7320 = vld [vmem:[%s7308 + $0x2c] sm:$0xf]
      %v7321 = vld [vmem:[%s7308 + $0x30] sm:$0xf]
      %v7322 = vld [vmem:[%s7308 + $0x34] sm:$0xf]
      %v7323 = vld [vmem:[%s7308 + $0x38] sm:$0xf]
      %v7324 = vld [vmem:[%s7308 + $0x3c] sm:$0xf]
      %v7341 = vunpack.c.l.b16 %v7309
      %v7342 = vunpack.c.l.b16 %v7310
      %v7343 = vunpack.c.l.b16 %v7311
      %v7344 = vunpack.c.l.b16 %v7312
      %v7345 = vunpack.c.l.b16 %v7313
      %v7346 = vunpack.c.l.b16 %v7314
      %v7347 = vunpack.c.l.b16 %v7315
      %v7348 = vunpack.c.l.b16 %v7316
      %v7349 = vunpack.c.l.b16 %v7317
      %v7350 = vunpack.c.l.b16 %v7318
      %v7351 = vunpack.c.l.b16 %v7319
      %v7352 = vunpack.c.l.b16 %v7320
      %v7353 = vunpack.c.l.b16 %v7321
      %v7354 = vunpack.c.l.b16 %v7322
      %v7355 = vunpack.c.l.b16 %v7323
      %v7356 = vunpack.c.l.b16 %v7324
      %v7357 = vpack.c.b16 %v7342, %v7341
      %v7358 = vpack.c.b16 %v7344, %v7343
      %v7359 = vpack.c.b16 %v7346, %v7345
      %v7360 = vpack.c.b16 %v7348, %v7347
      %v7361 = vpack.c.b16 %v7350, %v7349
      %v7362 = vpack.c.b16 %v7352, %v7351
      %v7363 = vpack.c.b16 %v7354, %v7353
      %v7364 = vpack.c.b16 %v7356, %v7355
      %7373 = vmatprep.subr.bf16.mxu0 0
      %7374 = vmatpush1.bf16.msra.mxu0 %v7364
      %7375 = vmatprep.subr.bf16.mxu0 0
      %7376 = vmatpush1.bf16.msra.mxu0 %v7363
      %7377 = vmatprep.subr.bf16.mxu0 0
      %7378 = vmatpush1.bf16.msra.mxu0 %v7362
      %7379 = vmatprep.subr.bf16.mxu0 0
      %7380 = vmatpush1.bf16.msra.mxu0 %v7361
      %7381 = vmatprep.subr.bf16.mxu0 0
      %7382 = vmatpush1.bf16.msra.mxu0 %v7360
      %7383 = vmatprep.subr.bf16.mxu0 0
      %7384 = vmatpush1.bf16.msra.mxu0 %v7359
      %7385 = vmatprep.subr.bf16.mxu0 0
      %7386 = vmatpush1.bf16.msra.mxu0 %v7358
      %7387 = vmatprep.subr.bf16.mxu0 0
      %7388 = vmatpush1.bf16.msra.mxu0 %v7357
      %7389 = vmatprep.subr.bf16.mxu0 0
      %7390 = vmatpush2.bf16.msra.mxu0 0
      %7391 = vmatprep.subr.bf16.mxu0 0
      %7392 = vmatpush2.bf16.msra.mxu0 0
      %7393 = vmatprep.subr.bf16.mxu0 0
      %7394 = vmatpush2.bf16.msra.mxu0 0
      %7395 = vmatprep.subr.bf16.mxu0 0
      %7396 = vmatpush2.bf16.msra.mxu0 0
      %7397 = vmatprep.subr.bf16.mxu0 0
      %7398 = vmatpush2.bf16.msra.mxu0 0
      %7399 = vmatprep.subr.bf16.mxu0 0
      %7400 = vmatpush2.bf16.msra.mxu0 0
      %7401 = vmatprep.subr.bf16.mxu0 0
      %7402 = vmatpush2.bf16.msra.mxu0 0
      %7403 = vmatprep.subr.bf16.mxu0 0
      %7404 = vmatpush2.bf16.msra.mxu0 0
      %7405 = vmatprep.mubr.bf16.mxu0 0
      %7406 = vmatmul.mubr.bf16.gmra.mxu0 %v5250
      %v7407 = vpop.f32.mrf.mxu0
      %v7408 = vadd.f32 0.0, %v7407
      %v7409 = vpop.f32.mrf.mxu0
      %v7410 = vpop.f32.mrf.mxu0
      %v7411 = vadd.f32 0.0, %v7410
      %v7412 = vpop.f32.mrf.mxu0
      %7413 = vmatprep.mubr.bf16.mxu0 0
      %7414 = vmatmul.mubr.bf16.gmra.mxu0 %v5251
      %v7415 = vpop.f32.mrf.mxu0
      %v7416 = vadd.f32 0.0, %v7415
      %v7417 = vpop.f32.mrf.mxu0
      %v7418 = vpop.f32.mrf.mxu0
      %v7419 = vadd.f32 0.0, %v7418
      %v7420 = vpop.f32.mrf.mxu0
      %7421 = vmatprep.mubr.bf16.mxu0 0
      %7422 = vmatmul.mubr.bf16.gmra.mxu0 %v5252
      %v7423 = vpop.f32.mrf.mxu0
      %v7424 = vadd.f32 0.0, %v7423
      %v7425 = vpop.f32.mrf.mxu0
      %v7426 = vpop.f32.mrf.mxu0
      %v7427 = vadd.f32 0.0, %v7426
      %v7428 = vpop.f32.mrf.mxu0
      %7429 = vmatprep.mubr.bf16.mxu0 0
      %7430 = vmatmul.mubr.bf16.gmra.mxu0 %v5253
      %v7431 = vpop.f32.mrf.mxu0
      %v7432 = vadd.f32 0.0, %v7431
      %v7433 = vpop.f32.mrf.mxu0
      %v7434 = vpop.f32.mrf.mxu0
      %v7435 = vadd.f32 0.0, %v7434
      %v7436 = vpop.f32.mrf.mxu0
      %7437 = vmatprep.mubr.bf16.mxu0 0
      %7438 = vmatmul.mubr.bf16.gmra.mxu0 %v5254
      %v7439 = vpop.f32.mrf.mxu0
      %v7440 = vadd.f32 0.0, %v7439
      %v7441 = vpop.f32.mrf.mxu0
      %v7442 = vpop.f32.mrf.mxu0
      %v7443 = vadd.f32 0.0, %v7442
      %v7444 = vpop.f32.mrf.mxu0
      %7445 = vmatprep.mubr.bf16.mxu0 0
      %7446 = vmatmul.mubr.bf16.gmra.mxu0 %v5255
      %v7447 = vpop.f32.mrf.mxu0
      %v7448 = vadd.f32 0.0, %v7447
      %v7449 = vpop.f32.mrf.mxu0
      %v7450 = vpop.f32.mrf.mxu0
      %v7451 = vadd.f32 0.0, %v7450
      %v7452 = vpop.f32.mrf.mxu0
      %7453 = vmatprep.mubr.bf16.mxu0 0
      %7454 = vmatmul.mubr.bf16.gmra.mxu0 %v5256
      %v7455 = vpop.f32.mrf.mxu0
      %v7456 = vadd.f32 0.0, %v7455
      %v7457 = vpop.f32.mrf.mxu0
      %v7458 = vpop.f32.mrf.mxu0
      %v7459 = vadd.f32 0.0, %v7458
      %v7460 = vpop.f32.mrf.mxu0
      %7461 = vmatprep.mubr.bf16.mxu0 0
      %7462 = vmatmul.mubr.bf16.gmra.mxu0 %v5257
      %v7463 = vpop.f32.mrf.mxu0
      %v7464 = vadd.f32 0.0, %v7463
      %v7465 = vpop.f32.mrf.mxu0
      %v7466 = vpop.f32.mrf.mxu0
      %v7467 = vadd.f32 0.0, %v7466
      %v7468 = vpop.f32.mrf.mxu0
      %7469 = vmatprep.mubr.bf16.mxu0 0
      %7470 = vmatmul.mubr.bf16.gmra.mxu0 %v5258
      %v7471 = vpop.f32.mrf.mxu0
      %v7472 = vadd.f32 0.0, %v7471
      %v7473 = vpop.f32.mrf.mxu0
      %v7474 = vpop.f32.mrf.mxu0
      %v7475 = vadd.f32 0.0, %v7474
      %v7476 = vpop.f32.mrf.mxu0
      %7477 = vmatprep.mubr.bf16.mxu0 0
      %7478 = vmatmul.mubr.bf16.gmra.mxu0 %v5259
      %v7479 = vpop.f32.mrf.mxu0
      %v7480 = vadd.f32 0.0, %v7479
      %v7481 = vpop.f32.mrf.mxu0
      %v7482 = vpop.f32.mrf.mxu0
      %v7483 = vadd.f32 0.0, %v7482
      %v7484 = vpop.f32.mrf.mxu0
      %7485 = vmatprep.mubr.bf16.mxu0 0
      %7486 = vmatmul.mubr.bf16.gmra.mxu0 %v5260
      %v7487 = vpop.f32.mrf.mxu0
      %v7488 = vadd.f32 0.0, %v7487
      %v7489 = vpop.f32.mrf.mxu0
      %v7490 = vpop.f32.mrf.mxu0
      %v7491 = vadd.f32 0.0, %v7490
      %v7492 = vpop.f32.mrf.mxu0
      %7493 = vmatprep.mubr.bf16.mxu0 0
      %7494 = vmatmul.mubr.bf16.gmra.mxu0 %v5261
      %v7495 = vpop.f32.mrf.mxu0
      %v7496 = vadd.f32 0.0, %v7495
      %v7497 = vpop.f32.mrf.mxu0
      %v7498 = vpop.f32.mrf.mxu0
      %v7499 = vadd.f32 0.0, %v7498
      %v7500 = vpop.f32.mrf.mxu0
      %7501 = vmatprep.mubr.bf16.mxu0 0
      %7502 = vmatmul.mubr.bf16.gmra.mxu0 %v6319
      %v7503 = vpop.f32.mrf.mxu0
      %v7504 = vadd.f32 0.0, %v7503
      %v7505 = vpop.f32.mrf.mxu0
      %v7506 = vpop.f32.mrf.mxu0
      %v7507 = vadd.f32 0.0, %v7506
      %v7508 = vpop.f32.mrf.mxu0
      %7509 = vmatprep.mubr.bf16.mxu0 0
      %7510 = vmatmul.mubr.bf16.gmra.mxu0 %v6320
      %v7511 = vpop.f32.mrf.mxu0
      %v7512 = vadd.f32 0.0, %v7511
      %v7513 = vpop.f32.mrf.mxu0
      %v7514 = vpop.f32.mrf.mxu0
      %v7515 = vadd.f32 0.0, %v7514
      %v7516 = vpop.f32.mrf.mxu0
      %7517 = vmatprep.mubr.bf16.mxu0 0
      %7518 = vmatmul.mubr.bf16.gmra.mxu0 %v7306
      %v7519 = vpop.f32.mrf.mxu0
      %v7520 = vadd.f32 0.0, %v7519
      %v7521 = vpop.f32.mrf.mxu0
      %v7522 = vpop.f32.mrf.mxu0
      %v7523 = vadd.f32 0.0, %v7522
      %v7524 = vpop.f32.mrf.mxu0
      %7525 = vmatprep.mubr.bf16.mxu0 0
      %7526 = vmatmul.mubr.bf16.gmra.mxu0 %v7307
      %v7527 = vpop.f32.mrf.mxu0
      %v7528 = vadd.f32 0.0, %v7527
      %v7529 = vpop.f32.mrf.mxu0
      %v7530 = vpop.f32.mrf.mxu0
      %v7531 = vadd.f32 0.0, %v7530
      %v7532 = vpop.f32.mrf.mxu0
      %7533 = vdwg.mxu0
      %v7534 = vld [vmem:[#allocation2] sm:$0xff]
      %v7535 = vld [vmem:[#allocation2 + $0x8] sm:$0xff]
      %v7536 = vld [vmem:[#allocation2 + $0x10] sm:$0xff]
      %v7537 = vld [vmem:[#allocation2 + $0x18] sm:$0xff]
      %v7538 = vld [vmem:[#allocation2 + $0x20] sm:$0xff]
      %v7539 = vld [vmem:[#allocation2 + $0x28] sm:$0xff]
      %v7540 = vld [vmem:[#allocation2 + $0x30] sm:$0xff]
      %v7541 = vld [vmem:[#allocation2 + $0x38] sm:$0xff]
      %v7542 = vld [vmem:[#allocation2 + $0x40] sm:$0xff]
      %v7543 = vld [vmem:[#allocation2 + $0x48] sm:$0xff]
      %v7544 = vld [vmem:[#allocation2 + $0x50] sm:$0xff]
      %v7545 = vld [vmem:[#allocation2 + $0x58] sm:$0xff]
      %v7546 = vld [vmem:[#allocation2 + $0x60] sm:$0xff]
      %v7547 = vld [vmem:[#allocation2 + $0x68] sm:$0xff]
      %v7548 = vld [vmem:[#allocation2 + $0x70] sm:$0xff]
      %v7549 = vld [vmem:[#allocation2 + $0x78] sm:$0xff]
      %v7550 = vld [vmem:[#allocation2 + $0x80] sm:$0xff]
      %v7551 = vld [vmem:[#allocation2 + $0x88] sm:$0xff]
      %v7552 = vld [vmem:[#allocation2 + $0x90] sm:$0xff]
      %v7553 = vld [vmem:[#allocation2 + $0x98] sm:$0xff]
      %v7554 = vld [vmem:[#allocation2 + $0xa0] sm:$0xff]
      %v7555 = vld [vmem:[#allocation2 + $0xa8] sm:$0xff]
      %v7556 = vld [vmem:[#allocation2 + $0xb0] sm:$0xff]
      %v7557 = vld [vmem:[#allocation2 + $0xb8] sm:$0xff]
      %v7558 = vld [vmem:[#allocation2 + $0xc0] sm:$0xff]
      %v7559 = vld [vmem:[#allocation2 + $0xc8] sm:$0xff]
      %v7560 = vld [vmem:[#allocation2 + $0xd0] sm:$0xff]
      %v7561 = vld [vmem:[#allocation2 + $0xd8] sm:$0xff]
      %v7562 = vld [vmem:[#allocation2 + $0xe0] sm:$0xff]
      %v7563 = vld [vmem:[#allocation2 + $0xe8] sm:$0xff]
      %v7564 = vld [vmem:[#allocation2 + $0xf0] sm:$0xff]
      %v7565 = vld [vmem:[#allocation2 + $0xf8] sm:$0xff]
      %v7566 = vadd.f32 %v7534, %v7408
      %v7567 = vadd.f32 %v7535, %v7411
      %v7568 = vadd.f32 %v7536, %v7416
      %v7569 = vadd.f32 %v7537, %v7419
      %v7570 = vadd.f32 %v7538, %v7424
      %v7571 = vadd.f32 %v7539, %v7427
      %v7572 = vadd.f32 %v7540, %v7432
      %v7573 = vadd.f32 %v7541, %v7435
      %v7574 = vadd.f32 %v7542, %v7440
      %v7575 = vadd.f32 %v7543, %v7443
      %v7576 = vadd.f32 %v7544, %v7448
      %v7577 = vadd.f32 %v7545, %v7451
      %v7578 = vadd.f32 %v7546, %v7456
      %v7579 = vadd.f32 %v7547, %v7459
      %v7580 = vadd.f32 %v7548, %v7464
      %v7581 = vadd.f32 %v7549, %v7467
      %v7582 = vadd.f32 %v7550, %v7472
      %v7583 = vadd.f32 %v7551, %v7475
      %v7584 = vadd.f32 %v7552, %v7480
      %v7585 = vadd.f32 %v7553, %v7483
      %v7586 = vadd.f32 %v7554, %v7488
      %v7587 = vadd.f32 %v7555, %v7491
      %v7588 = vadd.f32 %v7556, %v7496
      %v7589 = vadd.f32 %v7557, %v7499
      %v7590 = vadd.f32 %v7558, %v7504
      %v7591 = vadd.f32 %v7559, %v7507
      %v7592 = vadd.f32 %v7560, %v7512
      %v7593 = vadd.f32 %v7561, %v7515
      %v7594 = vadd.f32 %v7562, %v7520
      %v7595 = vadd.f32 %v7563, %v7523
      %v7596 = vadd.f32 %v7564, %v7528
      %v7597 = vadd.f32 %v7565, %v7531
      %7598 = vst [vmem:[#allocation2] sm:$0xff] %v7566
      %7599 = vst [vmem:[#allocation2 + $0x8] sm:$0xff] %v7567
      %7600 = vst [vmem:[#allocation2 + $0x10] sm:$0xff] %v7568
      %7601 = vst [vmem:[#allocation2 + $0x18] sm:$0xff] %v7569
      %7602 = vst [vmem:[#allocation2 + $0x20] sm:$0xff] %v7570
      %7603 = vst [vmem:[#allocation2 + $0x28] sm:$0xff] %v7571
      %7604 = vst [vmem:[#allocation2 + $0x30] sm:$0xff] %v7572
      %7605 = vst [vmem:[#allocation2 + $0x38] sm:$0xff] %v7573
      %7606 = vst [vmem:[#allocation2 + $0x40] sm:$0xff] %v7574
      %7607 = vst [vmem:[#allocation2 + $0x48] sm:$0xff] %v7575
      %7608 = vst [vmem:[#allocation2 + $0x50] sm:$0xff] %v7576
      %7609 = vst [vmem:[#allocation2 + $0x58] sm:$0xff] %v7577
      %7610 = vst [vmem:[#allocation2 + $0x60] sm:$0xff] %v7578
      %7611 = vst [vmem:[#allocation2 + $0x68] sm:$0xff] %v7579
      %7612 = vst [vmem:[#allocation2 + $0x70] sm:$0xff] %v7580
      %7613 = vst [vmem:[#allocation2 + $0x78] sm:$0xff] %v7581
      %7614 = vst [vmem:[#allocation2 + $0x80] sm:$0xff] %v7582
      %7615 = vst [vmem:[#allocation2 + $0x88] sm:$0xff] %v7583
      %7616 = vst [vmem:[#allocation2 + $0x90] sm:$0xff] %v7584
      %7617 = vst [vmem:[#allocation2 + $0x98] sm:$0xff] %v7585
      %7618 = vst [vmem:[#allocation2 + $0xa0] sm:$0xff] %v7586
      %7619 = vst [vmem:[#allocation2 + $0xa8] sm:$0xff] %v7587
      %7620 = vst [vmem:[#allocation2 + $0xb0] sm:$0xff] %v7588
      %7621 = vst [vmem:[#allocation2 + $0xb8] sm:$0xff] %v7589
      %7622 = vst [vmem:[#allocation2 + $0xc0] sm:$0xff] %v7590
      %7623 = vst [vmem:[#allocation2 + $0xc8] sm:$0xff] %v7591
      %7624 = vst [vmem:[#allocation2 + $0xd0] sm:$0xff] %v7592
      %7625 = vst [vmem:[#allocation2 + $0xd8] sm:$0xff] %v7593
      %7626 = vst [vmem:[#allocation2 + $0xe0] sm:$0xff] %v7594
      %7627 = vst [vmem:[#allocation2 + $0xe8] sm:$0xff] %v7595
      %7628 = vst [vmem:[#allocation2 + $0xf0] sm:$0xff] %v7596
      %7629 = vst [vmem:[#allocation2 + $0xf8] sm:$0xff] %v7597
      %v7630 = vrot.slane %v4905, 1
      %v7631 = vrot.slane %v4906, 1
      %v7632 = vrot.slane %v4907, 1
      %v7633 = vsel %vm1190, %v7631, %v7632
      %v7634 = vsel %vm1190, %v7630, %v7631
      %v7635 = vsel %vm1190, %v6646, %v7630
      %v7636 = vsel %vm1190, %v7632, %v5584
      %v7637 = vpack.c.bf16 %v7634, %v7635
      %v7638 = vpack.c.bf16 %v7636, %v7633
      %s7639 = scalar_lea.vmem %s3, 512
      %v7640 = vld [vmem:[%s7639] sm:$0xf]
      %v7641 = vld [vmem:[%s7639 + $0x4] sm:$0xf]
      %v7642 = vld [vmem:[%s7639 + $0x8] sm:$0xf]
      %v7643 = vld [vmem:[%s7639 + $0xc] sm:$0xf]
      %v7644 = vld [vmem:[%s7639 + $0x10] sm:$0xf]
      %v7645 = vld [vmem:[%s7639 + $0x14] sm:$0xf]
      %v7646 = vld [vmem:[%s7639 + $0x18] sm:$0xf]
      %v7647 = vld [vmem:[%s7639 + $0x1c] sm:$0xf]
      %v7648 = vld [vmem:[%s7639 + $0x20] sm:$0xf]
      %v7649 = vld [vmem:[%s7639 + $0x24] sm:$0xf]
      %v7650 = vld [vmem:[%s7639 + $0x28] sm:$0xf]
      %v7651 = vld [vmem:[%s7639 + $0x2c] sm:$0xf]
      %v7652 = vld [vmem:[%s7639 + $0x30] sm:$0xf]
      %v7653 = vld [vmem:[%s7639 + $0x34] sm:$0xf]
      %v7654 = vld [vmem:[%s7639 + $0x38] sm:$0xf]
      %v7655 = vld [vmem:[%s7639 + $0x3c] sm:$0xf]
      %v7672 = vunpack.c.l.b16 %v7640
      %v7673 = vunpack.c.l.b16 %v7641
      %v7674 = vunpack.c.l.b16 %v7642
      %v7675 = vunpack.c.l.b16 %v7643
      %v7676 = vunpack.c.l.b16 %v7644
      %v7677 = vunpack.c.l.b16 %v7645
      %v7678 = vunpack.c.l.b16 %v7646
      %v7679 = vunpack.c.l.b16 %v7647
      %v7680 = vunpack.c.l.b16 %v7648
      %v7681 = vunpack.c.l.b16 %v7649
      %v7682 = vunpack.c.l.b16 %v7650
      %v7683 = vunpack.c.l.b16 %v7651
      %v7684 = vunpack.c.l.b16 %v7652
      %v7685 = vunpack.c.l.b16 %v7653
      %v7686 = vunpack.c.l.b16 %v7654
      %v7687 = vunpack.c.l.b16 %v7655
      %v7688 = vpack.c.b16 %v7673, %v7672
      %v7689 = vpack.c.b16 %v7675, %v7674
      %v7690 = vpack.c.b16 %v7677, %v7676
      %v7691 = vpack.c.b16 %v7679, %v7678
      %v7692 = vpack.c.b16 %v7681, %v7680
      %v7693 = vpack.c.b16 %v7683, %v7682
      %v7694 = vpack.c.b16 %v7685, %v7684
      %v7695 = vpack.c.b16 %v7687, %v7686
      %7704 = vmatprep.subr.bf16.mxu0 0
      %7705 = vmatpush1.bf16.msra.mxu0 %v7695
      %7706 = vmatprep.subr.bf16.mxu0 0
      %7707 = vmatpush1.bf16.msra.mxu0 %v7694
      %7708 = vmatprep.subr.bf16.mxu0 0
      %7709 = vmatpush1.bf16.msra.mxu0 %v7693
      %7710 = vmatprep.subr.bf16.mxu0 0
      %7711 = vmatpush1.bf16.msra.mxu0 %v7692
      %7712 = vmatprep.subr.bf16.mxu0 0
      %7713 = vmatpush1.bf16.msra.mxu0 %v7691
      %7714 = vmatprep.subr.bf16.mxu0 0
      %7715 = vmatpush1.bf16.msra.mxu0 %v7690
      %7716 = vmatprep.subr.bf16.mxu0 0
      %7717 = vmatpush1.bf16.msra.mxu0 %v7689
      %7718 = vmatprep.subr.bf16.mxu0 0
      %7719 = vmatpush1.bf16.msra.mxu0 %v7688
      %7720 = vmatprep.subr.bf16.mxu0 0
      %7721 = vmatpush2.bf16.msra.mxu0 0
      %7722 = vmatprep.subr.bf16.mxu0 0
      %7723 = vmatpush2.bf16.msra.mxu0 0
      %7724 = vmatprep.subr.bf16.mxu0 0
      %7725 = vmatpush2.bf16.msra.mxu0 0
      %7726 = vmatprep.subr.bf16.mxu0 0
      %7727 = vmatpush2.bf16.msra.mxu0 0
      %7728 = vmatprep.subr.bf16.mxu0 0
      %7729 = vmatpush2.bf16.msra.mxu0 0
      %7730 = vmatprep.subr.bf16.mxu0 0
      %7731 = vmatpush2.bf16.msra.mxu0 0
      %7732 = vmatprep.subr.bf16.mxu0 0
      %7733 = vmatpush2.bf16.msra.mxu0 0
      %7734 = vmatprep.subr.bf16.mxu0 0
      %7735 = vmatpush2.bf16.msra.mxu0 0
      %7736 = vmatprep.mubr.bf16.mxu0 0
      %7737 = vmatmul.mubr.bf16.gmra.mxu0 %v5653
      %v7738 = vpop.f32.mrf.mxu0
      %v7739 = vadd.f32 0.0, %v7738
      %v7740 = vpop.f32.mrf.mxu0
      %v7741 = vpop.f32.mrf.mxu0
      %v7742 = vadd.f32 0.0, %v7741
      %v7743 = vpop.f32.mrf.mxu0
      %7744 = vmatprep.mubr.bf16.mxu0 0
      %7745 = vmatmul.mubr.bf16.gmra.mxu0 %v5654
      %v7746 = vpop.f32.mrf.mxu0
      %v7747 = vadd.f32 0.0, %v7746
      %v7748 = vpop.f32.mrf.mxu0
      %v7749 = vpop.f32.mrf.mxu0
      %v7750 = vadd.f32 0.0, %v7749
      %v7751 = vpop.f32.mrf.mxu0
      %7752 = vmatprep.mubr.bf16.mxu0 0
      %7753 = vmatmul.mubr.bf16.gmra.mxu0 %v5655
      %v7754 = vpop.f32.mrf.mxu0
      %v7755 = vadd.f32 0.0, %v7754
      %v7756 = vpop.f32.mrf.mxu0
      %v7757 = vpop.f32.mrf.mxu0
      %v7758 = vadd.f32 0.0, %v7757
      %v7759 = vpop.f32.mrf.mxu0
      %7760 = vmatprep.mubr.bf16.mxu0 0
      %7761 = vmatmul.mubr.bf16.gmra.mxu0 %v5656
      %v7762 = vpop.f32.mrf.mxu0
      %v7763 = vadd.f32 0.0, %v7762
      %v7764 = vpop.f32.mrf.mxu0
      %v7765 = vpop.f32.mrf.mxu0
      %v7766 = vadd.f32 0.0, %v7765
      %v7767 = vpop.f32.mrf.mxu0
      %7768 = vmatprep.mubr.bf16.mxu0 0
      %7769 = vmatmul.mubr.bf16.gmra.mxu0 %v5657
      %v7770 = vpop.f32.mrf.mxu0
      %v7771 = vadd.f32 0.0, %v7770
      %v7772 = vpop.f32.mrf.mxu0
      %v7773 = vpop.f32.mrf.mxu0
      %v7774 = vadd.f32 0.0, %v7773
      %v7775 = vpop.f32.mrf.mxu0
      %7776 = vmatprep.mubr.bf16.mxu0 0
      %7777 = vmatmul.mubr.bf16.gmra.mxu0 %v5658
      %v7778 = vpop.f32.mrf.mxu0
      %v7779 = vadd.f32 0.0, %v7778
      %v7780 = vpop.f32.mrf.mxu0
      %v7781 = vpop.f32.mrf.mxu0
      %v7782 = vadd.f32 0.0, %v7781
      %v7783 = vpop.f32.mrf.mxu0
      %7784 = vmatprep.mubr.bf16.mxu0 0
      %7785 = vmatmul.mubr.bf16.gmra.mxu0 %v5659
      %v7786 = vpop.f32.mrf.mxu0
      %v7787 = vadd.f32 0.0, %v7786
      %v7788 = vpop.f32.mrf.mxu0
      %v7789 = vpop.f32.mrf.mxu0
      %v7790 = vadd.f32 0.0, %v7789
      %v7791 = vpop.f32.mrf.mxu0
      %7792 = vmatprep.mubr.bf16.mxu0 0
      %7793 = vmatmul.mubr.bf16.gmra.mxu0 %v5660
      %v7794 = vpop.f32.mrf.mxu0
      %v7795 = vadd.f32 0.0, %v7794
      %v7796 = vpop.f32.mrf.mxu0
      %v7797 = vpop.f32.mrf.mxu0
      %v7798 = vadd.f32 0.0, %v7797
      %v7799 = vpop.f32.mrf.mxu0
      %7800 = vmatprep.mubr.bf16.mxu0 0
      %7801 = vmatmul.mubr.bf16.gmra.mxu0 %v5661
      %v7802 = vpop.f32.mrf.mxu0
      %v7803 = vadd.f32 0.0, %v7802
      %v7804 = vpop.f32.mrf.mxu0
      %v7805 = vpop.f32.mrf.mxu0
      %v7806 = vadd.f32 0.0, %v7805
      %v7807 = vpop.f32.mrf.mxu0
      %7808 = vmatprep.mubr.bf16.mxu0 0
      %7809 = vmatmul.mubr.bf16.gmra.mxu0 %v5662
      %v7810 = vpop.f32.mrf.mxu0
      %v7811 = vadd.f32 0.0, %v7810
      %v7812 = vpop.f32.mrf.mxu0
      %v7813 = vpop.f32.mrf.mxu0
      %v7814 = vadd.f32 0.0, %v7813
      %v7815 = vpop.f32.mrf.mxu0
      %7816 = vmatprep.mubr.bf16.mxu0 0
      %7817 = vmatmul.mubr.bf16.gmra.mxu0 %v5663
      %v7818 = vpop.f32.mrf.mxu0
      %v7819 = vadd.f32 0.0, %v7818
      %v7820 = vpop.f32.mrf.mxu0
      %v7821 = vpop.f32.mrf.mxu0
      %v7822 = vadd.f32 0.0, %v7821
      %v7823 = vpop.f32.mrf.mxu0
      %7824 = vmatprep.mubr.bf16.mxu0 0
      %7825 = vmatmul.mubr.bf16.gmra.mxu0 %v5664
      %v7826 = vpop.f32.mrf.mxu0
      %v7827 = vadd.f32 0.0, %v7826
      %v7828 = vpop.f32.mrf.mxu0
      %v7829 = vpop.f32.mrf.mxu0
      %v7830 = vadd.f32 0.0, %v7829
      %v7831 = vpop.f32.mrf.mxu0
      %7832 = vmatprep.mubr.bf16.mxu0 0
      %7833 = vmatmul.mubr.bf16.gmra.mxu0 %v6651
      %v7834 = vpop.f32.mrf.mxu0
      %v7835 = vadd.f32 0.0, %v7834
      %v7836 = vpop.f32.mrf.mxu0
      %v7837 = vpop.f32.mrf.mxu0
      %v7838 = vadd.f32 0.0, %v7837
      %v7839 = vpop.f32.mrf.mxu0
      %7840 = vmatprep.mubr.bf16.mxu0 0
      %7841 = vmatmul.mubr.bf16.gmra.mxu0 %v6652
      %v7842 = vpop.f32.mrf.mxu0
      %v7843 = vadd.f32 0.0, %v7842
      %v7844 = vpop.f32.mrf.mxu0
      %v7845 = vpop.f32.mrf.mxu0
      %v7846 = vadd.f32 0.0, %v7845
      %v7847 = vpop.f32.mrf.mxu0
      %7848 = vmatprep.mubr.bf16.mxu0 0
      %7849 = vmatmul.mubr.bf16.gmra.mxu0 %v7637
      %v7850 = vpop.f32.mrf.mxu0
      %v7851 = vadd.f32 0.0, %v7850
      %v7852 = vpop.f32.mrf.mxu0
      %v7853 = vpop.f32.mrf.mxu0
      %v7854 = vadd.f32 0.0, %v7853
      %v7855 = vpop.f32.mrf.mxu0
      %7856 = vmatprep.mubr.bf16.mxu0 0
      %7857 = vmatmul.mubr.bf16.gmra.mxu0 %v7638
      %v7858 = vpop.f32.mrf.mxu0
      %v7859 = vadd.f32 0.0, %v7858
      %v7860 = vpop.f32.mrf.mxu0
      %v7861 = vpop.f32.mrf.mxu0
      %v7862 = vadd.f32 0.0, %v7861
      %v7863 = vpop.f32.mrf.mxu0
      %7864 = vdwg.mxu0
      %v7865 = vld [vmem:[#allocation2] sm:$0xff]
      %v7866 = vld [vmem:[#allocation2 + $0x8] sm:$0xff]
      %v7867 = vld [vmem:[#allocation2 + $0x10] sm:$0xff]
      %v7868 = vld [vmem:[#allocation2 + $0x18] sm:$0xff]
      %v7869 = vld [vmem:[#allocation2 + $0x20] sm:$0xff]
      %v7870 = vld [vmem:[#allocation2 + $0x28] sm:$0xff]
      %v7871 = vld [vmem:[#allocation2 + $0x30] sm:$0xff]
      %v7872 = vld [vmem:[#allocation2 + $0x38] sm:$0xff]
      %v7873 = vld [vmem:[#allocation2 + $0x40] sm:$0xff]
      %v7874 = vld [vmem:[#allocation2 + $0x48] sm:$0xff]
      %v7875 = vld [vmem:[#allocation2 + $0x50] sm:$0xff]
      %v7876 = vld [vmem:[#allocation2 + $0x58] sm:$0xff]
      %v7877 = vld [vmem:[#allocation2 + $0x60] sm:$0xff]
      %v7878 = vld [vmem:[#allocation2 + $0x68] sm:$0xff]
      %v7879 = vld [vmem:[#allocation2 + $0x70] sm:$0xff]
      %v7880 = vld [vmem:[#allocation2 + $0x78] sm:$0xff]
      %v7881 = vld [vmem:[#allocation2 + $0x80] sm:$0xff]
      %v7882 = vld [vmem:[#allocation2 + $0x88] sm:$0xff]
      %v7883 = vld [vmem:[#allocation2 + $0x90] sm:$0xff]
      %v7884 = vld [vmem:[#allocation2 + $0x98] sm:$0xff]
      %v7885 = vld [vmem:[#allocation2 + $0xa0] sm:$0xff]
      %v7886 = vld [vmem:[#allocation2 + $0xa8] sm:$0xff]
      %v7887 = vld [vmem:[#allocation2 + $0xb0] sm:$0xff]
      %v7888 = vld [vmem:[#allocation2 + $0xb8] sm:$0xff]
      %v7889 = vld [vmem:[#allocation2 + $0xc0] sm:$0xff]
      %v7890 = vld [vmem:[#allocation2 + $0xc8] sm:$0xff]
      %v7891 = vld [vmem:[#allocation2 + $0xd0] sm:$0xff]
      %v7892 = vld [vmem:[#allocation2 + $0xd8] sm:$0xff]
      %v7893 = vld [vmem:[#allocation2 + $0xe0] sm:$0xff]
      %v7894 = vld [vmem:[#allocation2 + $0xe8] sm:$0xff]
      %v7895 = vld [vmem:[#allocation2 + $0xf0] sm:$0xff]
      %v7896 = vld [vmem:[#allocation2 + $0xf8] sm:$0xff]
      %v7897 = vadd.f32 %v7865, %v7739
      %v7898 = vadd.f32 %v7866, %v7742
      %v7899 = vadd.f32 %v7867, %v7747
      %v7900 = vadd.f32 %v7868, %v7750
      %v7901 = vadd.f32 %v7869, %v7755
      %v7902 = vadd.f32 %v7870, %v7758
      %v7903 = vadd.f32 %v7871, %v7763
      %v7904 = vadd.f32 %v7872, %v7766
      %v7905 = vadd.f32 %v7873, %v7771
      %v7906 = vadd.f32 %v7874, %v7774
      %v7907 = vadd.f32 %v7875, %v7779
      %v7908 = vadd.f32 %v7876, %v7782
      %v7909 = vadd.f32 %v7877, %v7787
      %v7910 = vadd.f32 %v7878, %v7790
      %v7911 = vadd.f32 %v7879, %v7795
      %v7912 = vadd.f32 %v7880, %v7798
      %v7913 = vadd.f32 %v7881, %v7803
      %v7914 = vadd.f32 %v7882, %v7806
      %v7915 = vadd.f32 %v7883, %v7811
      %v7916 = vadd.f32 %v7884, %v7814
      %v7917 = vadd.f32 %v7885, %v7819
      %v7918 = vadd.f32 %v7886, %v7822
      %v7919 = vadd.f32 %v7887, %v7827
      %v7920 = vadd.f32 %v7888, %v7830
      %v7921 = vadd.f32 %v7889, %v7835
      %v7922 = vadd.f32 %v7890, %v7838
      %v7923 = vadd.f32 %v7891, %v7843
      %v7924 = vadd.f32 %v7892, %v7846
      %v7925 = vadd.f32 %v7893, %v7851
      %v7926 = vadd.f32 %v7894, %v7854
      %v7927 = vadd.f32 %v7895, %v7859
      %v7928 = vadd.f32 %v7896, %v7862
      %7929 = vst [vmem:[#allocation2] sm:$0xff] %v7897
      %7930 = vst [vmem:[#allocation2 + $0x8] sm:$0xff] %v7898
      %7931 = vst [vmem:[#allocation2 + $0x10] sm:$0xff] %v7899
      %7932 = vst [vmem:[#allocation2 + $0x18] sm:$0xff] %v7900
      %7933 = vst [vmem:[#allocation2 + $0x20] sm:$0xff] %v7901
      %7934 = vst [vmem:[#allocation2 + $0x28] sm:$0xff] %v7902
      %7935 = vst [vmem:[#allocation2 + $0x30] sm:$0xff] %v7903
      %7936 = vst [vmem:[#allocation2 + $0x38] sm:$0xff] %v7904
      %7937 = vst [vmem:[#allocation2 + $0x40] sm:$0xff] %v7905
      %7938 = vst [vmem:[#allocation2 + $0x48] sm:$0xff] %v7906
      %7939 = vst [vmem:[#allocation2 + $0x50] sm:$0xff] %v7907
      %7940 = vst [vmem:[#allocation2 + $0x58] sm:$0xff] %v7908
      %7941 = vst [vmem:[#allocation2 + $0x60] sm:$0xff] %v7909
      %7942 = vst [vmem:[#allocation2 + $0x68] sm:$0xff] %v7910
      %7943 = vst [vmem:[#allocation2 + $0x70] sm:$0xff] %v7911
      %7944 = vst [vmem:[#allocation2 + $0x78] sm:$0xff] %v7912
      %7945 = vst [vmem:[#allocation2 + $0x80] sm:$0xff] %v7913
      %7946 = vst [vmem:[#allocation2 + $0x88] sm:$0xff] %v7914
      %7947 = vst [vmem:[#allocation2 + $0x90] sm:$0xff] %v7915
      %7948 = vst [vmem:[#allocation2 + $0x98] sm:$0xff] %v7916
      %7949 = vst [vmem:[#allocation2 + $0xa0] sm:$0xff] %v7917
      %7950 = vst [vmem:[#allocation2 + $0xa8] sm:$0xff] %v7918
      %7951 = vst [vmem:[#allocation2 + $0xb0] sm:$0xff] %v7919
      %7952 = vst [vmem:[#allocation2 + $0xb8] sm:$0xff] %v7920
      %7953 = vst [vmem:[#allocation2 + $0xc0] sm:$0xff] %v7921
      %7954 = vst [vmem:[#allocation2 + $0xc8] sm:$0xff] %v7922
      %7955 = vst [vmem:[#allocation2 + $0xd0] sm:$0xff] %v7923
      %7956 = vst [vmem:[#allocation2 + $0xd8] sm:$0xff] %v7924
      %7957 = vst [vmem:[#allocation2 + $0xe0] sm:$0xff] %v7925
      %7958 = vst [vmem:[#allocation2 + $0xe8] sm:$0xff] %v7926
      %7959 = vst [vmem:[#allocation2 + $0xf0] sm:$0xff] %v7927
      %7960 = vst [vmem:[#allocation2 + $0xf8] sm:$0xff] %v7928
      %v7961 = vld [vmem:[#allocation2] sm:$0xff]
      %v7962 = vld [vmem:[#allocation2 + $0x8] sm:$0xff]
      %v7963 = vld [vmem:[#allocation2 + $0x10] sm:$0xff]
      %v7964 = vld [vmem:[#allocation2 + $0x18] sm:$0xff]
      %v7965 = vld [vmem:[#allocation2 + $0x20] sm:$0xff]
      %v7966 = vld [vmem:[#allocation2 + $0x28] sm:$0xff]
      %v7967 = vld [vmem:[#allocation2 + $0x30] sm:$0xff]
      %v7968 = vld [vmem:[#allocation2 + $0x38] sm:$0xff]
      %v7969 = vld [vmem:[#allocation2 + $0x40] sm:$0xff]
      %v7970 = vld [vmem:[#allocation2 + $0x48] sm:$0xff]
      %v7971 = vld [vmem:[#allocation2 + $0x50] sm:$0xff]
      %v7972 = vld [vmem:[#allocation2 + $0x58] sm:$0xff]
      %v7973 = vld [vmem:[#allocation2 + $0x60] sm:$0xff]
      %v7974 = vld [vmem:[#allocation2 + $0x68] sm:$0xff]
      %v7975 = vld [vmem:[#allocation2 + $0x70] sm:$0xff]
      %v7976 = vld [vmem:[#allocation2 + $0x78] sm:$0xff]
      %v7977 = vld [vmem:[#allocation2 + $0x80] sm:$0xff]
      %v7978 = vld [vmem:[#allocation2 + $0x88] sm:$0xff]
      %v7979 = vld [vmem:[#allocation2 + $0x90] sm:$0xff]
      %v7980 = vld [vmem:[#allocation2 + $0x98] sm:$0xff]
      %v7981 = vld [vmem:[#allocation2 + $0xa0] sm:$0xff]
      %v7982 = vld [vmem:[#allocation2 + $0xa8] sm:$0xff]
      %v7983 = vld [vmem:[#allocation2 + $0xb0] sm:$0xff]
      %v7984 = vld [vmem:[#allocation2 + $0xb8] sm:$0xff]
      %v7985 = vld [vmem:[#allocation2 + $0xc0] sm:$0xff]
      %v7986 = vld [vmem:[#allocation2 + $0xc8] sm:$0xff]
      %v7987 = vld [vmem:[#allocation2 + $0xd0] sm:$0xff]
      %v7988 = vld [vmem:[#allocation2 + $0xd8] sm:$0xff]
      %v7989 = vld [vmem:[#allocation2 + $0xe0] sm:$0xff]
      %v7990 = vld [vmem:[#allocation2 + $0xe8] sm:$0xff]
      %v7991 = vld [vmem:[#allocation2 + $0xf0] sm:$0xff]
      %v7992 = vld [vmem:[#allocation2 + $0xf8] sm:$0xff]
      %v7993 = vld [vmem:[%s4] sm:$0x1]
      %v7995 = vlaneseq
      %v7996 = vshrl.u32 %v7995, 7
      %v7997 = vsub.s32 0, %v7996
      %v7998 = vrot.slane %v7993, %v7997
      %v8000 = vadd.f32 %v7961, %v7998
      %v8001 = vadd.f32 %v7962, %v7998
      %v8002 = vadd.f32 %v7963, %v7998
      %v8003 = vadd.f32 %v7964, %v7998
      %v8004 = vadd.f32 %v7965, %v7998
      %v8005 = vadd.f32 %v7966, %v7998
      %v8006 = vadd.f32 %v7967, %v7998
      %v8007 = vadd.f32 %v7968, %v7998
      %v8008 = vadd.f32 %v7969, %v7998
      %v8009 = vadd.f32 %v7970, %v7998
      %v8010 = vadd.f32 %v7971, %v7998
      %v8011 = vadd.f32 %v7972, %v7998
      %v8012 = vadd.f32 %v7973, %v7998
      %v8013 = vadd.f32 %v7974, %v7998
      %v8014 = vadd.f32 %v7975, %v7998
      %v8015 = vadd.f32 %v7976, %v7998
      %v8016 = vadd.f32 %v7977, %v7998
      %v8017 = vadd.f32 %v7978, %v7998
      %v8018 = vadd.f32 %v7979, %v7998
      %v8019 = vadd.f32 %v7980, %v7998
      %v8020 = vadd.f32 %v7981, %v7998
      %v8021 = vadd.f32 %v7982, %v7998
      %v8022 = vadd.f32 %v7983, %v7998
      %v8023 = vadd.f32 %v7984, %v7998
      %v8024 = vadd.f32 %v7985, %v7998
      %v8025 = vadd.f32 %v7986, %v7998
      %v8026 = vadd.f32 %v7987, %v7998
      %v8027 = vadd.f32 %v7988, %v7998
      %v8028 = vadd.f32 %v7989, %v7998
      %v8029 = vadd.f32 %v7990, %v7998
      %v8030 = vadd.f32 %v7991, %v7998
      %v8031 = vadd.f32 %v7992, %v7998
      %v8032 = vmax.f32 %v8000, 0.0
      %v8033 = vmax.f32 %v8001, 0.0
      %v8034 = vmax.f32 %v8002, 0.0
      %v8035 = vmax.f32 %v8003, 0.0
      %v8036 = vmax.f32 %v8004, 0.0
      %v8037 = vmax.f32 %v8005, 0.0
      %v8038 = vmax.f32 %v8006, 0.0
      %v8039 = vmax.f32 %v8007, 0.0
      %v8040 = vmax.f32 %v8008, 0.0
      %v8041 = vmax.f32 %v8009, 0.0
      %v8042 = vmax.f32 %v8010, 0.0
      %v8043 = vmax.f32 %v8011, 0.0
      %v8044 = vmax.f32 %v8012, 0.0
      %v8045 = vmax.f32 %v8013, 0.0
      %v8046 = vmax.f32 %v8014, 0.0
      %v8047 = vmax.f32 %v8015, 0.0
      %v8048 = vmax.f32 %v8016, 0.0
      %v8049 = vmax.f32 %v8017, 0.0
      %v8050 = vmax.f32 %v8018, 0.0
      %v8051 = vmax.f32 %v8019, 0.0
      %v8052 = vmax.f32 %v8020, 0.0
      %v8053 = vmax.f32 %v8021, 0.0
      %v8054 = vmax.f32 %v8022, 0.0
      %v8055 = vmax.f32 %v8023, 0.0
      %v8056 = vmax.f32 %v8024, 0.0
      %v8057 = vmax.f32 %v8025, 0.0
      %v8058 = vmax.f32 %v8026, 0.0
      %v8059 = vmax.f32 %v8027, 0.0
      %v8060 = vmax.f32 %v8028, 0.0
      %v8061 = vmax.f32 %v8029, 0.0
      %v8062 = vmax.f32 %v8030, 0.0
      %v8063 = vmax.f32 %v8031, 0.0
      %8064 = vst [vmem:[%s246] sm:$0xff] %v8032
      %8065 = vst [vmem:[%s246 + $0x8] sm:$0xff] %v8033
      %8066 = vst [vmem:[%s246 + $0x10] sm:$0xff] %v8034
      %8067 = vst [vmem:[%s246 + $0x18] sm:$0xff] %v8035
      %8068 = vst [vmem:[%s246 + $0x20] sm:$0xff] %v8036
      %8069 = vst [vmem:[%s246 + $0x28] sm:$0xff] %v8037
      %8070 = vst [vmem:[%s246 + $0x30] sm:$0xff] %v8038
      %8071 = vst [vmem:[%s246 + $0x38] sm:$0xff] %v8039
      %8072 = vst [vmem:[%s246 + $0x40] sm:$0xff] %v8040
      %8073 = vst [vmem:[%s246 + $0x48] sm:$0xff] %v8041
      %8074 = vst [vmem:[%s246 + $0x50] sm:$0xff] %v8042
      %8075 = vst [vmem:[%s246 + $0x58] sm:$0xff] %v8043
      %8076 = vst [vmem:[%s246 + $0x60] sm:$0xff] %v8044
      %8077 = vst [vmem:[%s246 + $0x68] sm:$0xff] %v8045
      %8078 = vst [vmem:[%s246 + $0x70] sm:$0xff] %v8046
      %8079 = vst [vmem:[%s246 + $0x78] sm:$0xff] %v8047
      %8080 = vst [vmem:[%s246 + $0x80] sm:$0xff] %v8048
      %8081 = vst [vmem:[%s246 + $0x88] sm:$0xff] %v8049
      %8082 = vst [vmem:[%s246 + $0x90] sm:$0xff] %v8050
      %8083 = vst [vmem:[%s246 + $0x98] sm:$0xff] %v8051
      %8084 = vst [vmem:[%s246 + $0xa0] sm:$0xff] %v8052
      %8085 = vst [vmem:[%s246 + $0xa8] sm:$0xff] %v8053
      %8086 = vst [vmem:[%s246 + $0xb0] sm:$0xff] %v8054
      %8087 = vst [vmem:[%s246 + $0xb8] sm:$0xff] %v8055
      %8088 = vst [vmem:[%s246 + $0xc0] sm:$0xff] %v8056
      %8089 = vst [vmem:[%s246 + $0xc8] sm:$0xff] %v8057
      %8090 = vst [vmem:[%s246 + $0xd0] sm:$0xff] %v8058
      %8091 = vst [vmem:[%s246 + $0xd8] sm:$0xff] %v8059
      %8092 = vst [vmem:[%s246 + $0xe0] sm:$0xff] %v8060
      %8093 = vst [vmem:[%s246 + $0xe8] sm:$0xff] %v8061
      %8094 = vst [vmem:[%s246 + $0xf0] sm:$0xff] %v8062
      %8095 = vst [vmem:[%s246 + $0xf8] sm:$0xff] %v8063
      %s8096 = smul.u32 32, %s21
      %p8097 = scmp.lt.s32.totalorder %s20, 1
      %s8098 = scalar_select %p8097, %s20, 1
      %p8099 = scmp.lt.s32.totalorder %s8096, 63
      %s8100 = scalar_select %p8099, %s8096, 63
      %s8101 = smul.addr %s8098, 64
      %s8102 = sadd.s32 %s8100, %s8101
      %s8103 = smul.addr %s8102, 8
      %s8104 = scalar_lea.vmem %s5, %s8103
      // Predicated region
      $region41: #{double_conv.1} parent=39 // pred_check
        %p8105 = pneg %p158
      $region42: #{double_conv.1} parent=39 // pred_check_branch
        %8107 = sbr.rel (%p8105) target = $region44
      $region43: #{double_conv.1} parent=39 // pred_region
        %s8108 = smul.u32 32, %s21
      $region44: #{double_conv.1} parent=39 // pred_fallthru
        _
    $region40: #{double_conv.1} parent=5 // pred_fallthru
      _
    %p8109 = scmp.le.s32.totalorder 2, %s11
    // Predicated region
    $region45: #{double_conv.1} parent=5 // pred_check
      %p8110 = pneg %p8109
    $region46: #{double_conv.1} parent=5 // pred_check_branch
      %8112 = sbr.rel (%p8110) target = $region48
    $region47: #{double_conv.1} parent=5 // pred_region
      %s8113 = ssub.s32 %s11, 2
      // Predicated region
      $region49: #{double_conv.1} parent=47 // pred_check
        %p8114 = pneg %p164
      $region50: #{double_conv.1} parent=47 // pred_check_branch
        %8116 = sbr.rel (%p8114) target = $region52
      $region51: #{double_conv.1} parent=47 // pred_region
        %s8117 = smul.u32 32, %s23
        %p8118 = scmp.lt.s32.totalorder %s22, 1
        %s8119 = scalar_select %p8118, %s22, 1
        %p8120 = scmp.lt.s32.totalorder %s8117, 63
        %s8121 = scalar_select %p8120, %s8117, 63
        %s8122 = smul.addr %s8119, 64
        %s8123 = sadd.s32 %s8121, %s8122
        %s8124 = smul.addr %s8123, 8
        %s8125 = scalar_lea.vmem %s5, %s8124
      $region52: #{double_conv.1} parent=47 // pred_fallthru
        _
    $region48: #{double_conv.1} parent=5 // pred_fallthru
      _
  $region6: #{double_conv.1} parent=0 // loop_footer
    %s15 = sadd.s32 1, %s11
  $region7: #{double_conv.1} parent=0 // loop_footer_branch
    %10 = sbr.rel target = $region3
  $region8: #{double_conv.1} parent=0 // loop_exit
    _

</llo_original>
